<compile_context>
chip_gen: v7x
topology: tpu7x:2x2x1
jax: 0.10.0
libtpu: 0.0.40
codegen_flags: <defaults>
</compile_context>

<pallas_src>
import functools

import jax
import jax.numpy as jnp
from jax.experimental import pallas as pl
from jax.experimental.pallas import tpu as pltpu


def _round_up(v, m):
    return (v + m - 1) // m * m


def _pick_co_block(c_out, max_block=8):
    """Largest divisor of c_out that is <= max_block."""
    for b in range(min(c_out, max_block), 0, -1):
        if c_out % b == 0:
            return b
    return 1


def _downsample_kernel(w_ref, x_ref, o_ref, *, c_in, co_block, h2, wo):
    """One grid step = (batch n, block of co_block conv-output channels).

    w_ref : SMEM f32 (C_out*C_in*9,)      flattened PyTorch OIHW conv weight
    x_ref : VMEM (1, C_in*4, h2+1, wo+1)  zero-padded 2x2 parity planes:
              x_ref[0, ci*4 + ra*2 + rb, u, v] == x_pad[n, ci, 2u+ra, 2v+rb]
    o_ref : VMEM (1, co_block*4, h2, wo)  PixelUnshuffled output channels
              [cb*co_block*4, (cb+1)*co_block*4), lane-padded to wo
    """
    cb = pl.program_id(1)
    f32 = jnp.float32

    for co_l in range(co_block):
        # Dynamic scalar offset of this output channel's weights in SMEM.
        w_base = (cb * co_block + co_l) * (c_in * 9)

        # 4 parity accumulators, (i, j) = PixelUnshuffle sub-pixel position.
        acc = [[jnp.zeros((h2, wo), f32) for _ in range(2)] for _ in range(2)]

        for ci in range(c_in):
            for ra in range(2):
                for rb in range(2):
                    # Stream one parity plane at a time (live vregs stay at
                    # ~4 accumulators + 4 views regardless of C_in).
                    p = x_ref[0, ci * 4 + ra * 2 + rb]        # (h2+1, wo+1)
                    # 4 shifted views, built once per plane and reused by every
                    # tap that touches this plane.
                    v = [[p[qa:qa + h2, qb:qb + wo] for qb in range(2)]
                         for qa in range(2)]
                    for i in range(2):
                        for di in range(3):
                            if (i + di) % 2 != ra:
                                continue
                            qa = (i + di) // 2
                            for j in range(2):
                                for dj in range(3):
                                    if (j + dj) % 2 != rb:
                                        continue
                                    qb = (j + dj) // 2
                                    wv = w_ref[w_base + ci * 9 + di * 3 + dj]
                                    acc[i][j] = acc[i][j] + wv * v[qa][qb]

        for i in range(2):
            for j in range(2):
                o_ref[0, co_l * 4 + i * 2 + j, :, :] = (
                    acc[i][j].astype(o_ref.dtype))


def downsample(x, w):
    """Downsample forward pass.

    x : (N, C_in, H, W)        activations (NCHW, like PyTorch)
    w : (C_out, C_in, 3, 3)    Conv2d weight (OIHW), C_out = C_in // 2, no bias
    returns (N, 4*C_out, H//2, W//2)  ==  (N, 2*C_in, H//2, W//2)
    """
    N, C_in, H, W = x.shape
    C_out = w.shape[0]
    assert w.shape == (C_out, C_in, 3, 3)
    assert H % 2 == 0 and W % 2 == 0, "PixelUnshuffle(2) needs even H, W"
    H2, W2 = H // 2, W // 2

    wo = _round_up(W2, 128)   # lane-dense accumulator / output width
    wi = wo + 1               # +1 halo column for the column-shifted view

    # Conv halo (padding=1) + 2x2 spatial parity split + right lane pad, done
    # as a single XLA layout pass over x:
    #   x_split[n, ci*4 + ra*2 + rb, u, v] = x_pad[n, ci, 2u+ra, 2v+rb]
    x_pad = jnp.pad(x, ((0, 0), (0, 0), (1, 1), (1, 2 * wi - W - 1)))
    x_split = (
        x_pad.reshape(N, C_in, H2 + 1, 2, wi, 2)
        .transpose(0, 1, 3, 5, 2, 4)
        .reshape(N, C_in * 4, H2 + 1, wi)
    )
    w_flat = w.reshape(C_out * C_in * 9).astype(jnp.float32)

    co_block = _pick_co_block(C_out)
    n_cb = C_out // co_block

    kernel = functools.partial(
        _downsample_kernel, c_in=C_in, co_block=co_block, h2=H2, wo=wo)

    itemsize = jnp.dtype(x.dtype).itemsize
    cost = pl.CostEstimate(
        flops=int(2 * N * C_out * 4 * C_in * 9 * H2 * wo),
        transcendentals=0,
        bytes_accessed=int(N * C_in * 4 * (H2 + 1) * wi * itemsize
                           + N * C_out * 4 * H2 * wo * itemsize
                           + C_out * C_in * 9 * 4),
    )

    out_padded = pl.pallas_call(
        kernel,
        out_shape=jax.ShapeDtypeStruct((N, C_out * 4, H2, wo), x.dtype),
        grid_spec=pltpu.PrefetchScalarGridSpec(
            num_scalar_prefetch=0,
            grid=(N, n_cb),
            in_specs=[
                # Flattened weights in SMEM (1-D avoids SMEM padding blowup).
                pl.BlockSpec(memory_space=pltpu.MemorySpace.SMEM),
                # One batch element's parity planes; block index only depends
                # on n, so the block is reused (no re-DMA) across co-blocks.
                pl.BlockSpec((1, C_in * 4, H2 + 1, wi),
                             lambda n, cb: (n, 0, 0, 0)),
            ],
            out_specs=pl.BlockSpec((1, co_block * 4, H2, wo),
                                   lambda n, cb: (n, cb, 0, 0)),
        ),
        compiler_params=pltpu.CompilerParams(
            dimension_semantics=("parallel", "parallel"),
            vmem_limit_bytes=64 * 1024 * 1024,
        ),
        cost_estimate=cost,
    )(w_flat, x_split)

    if wo == W2:
        return out_padded
    return out_padded[..., :W2]


def _reference(x, w):
    """Pure-JAX reference: Conv2d(3x3, stride 1, pad 1, no bias) + PixelUnshuffle(2)."""
    N, C_in, H, W = x.shape
    C_out = w.shape[0]
    xp = jnp.pad(x.astype(jnp.float32), ((0, 0), (0, 0), (1, 1), (1, 1)))
    y = jnp.zeros((N, C_out, H, W), jnp.float32)
    for di in range(3):
        for dj in range(3):
            patch = xp[:, None, :, di:di + H, dj:dj + W]          # (N,1,Cin,H,W)
            wk = w[None, :, :, di, dj, None, None].astype(jnp.float32)
            y = y + jnp.sum(patch * wk, axis=2)
    y = y.reshape(N, C_out, H // 2, 2, W // 2, 2).transpose(0, 1, 3, 5, 2, 4)
    y = y.reshape(N, C_out * 4, H // 2, W // 2)
    return y.astype(x.dtype)


if __name__ == "__main__":
    key = jax.random.PRNGKey(0)
    kx, kw, kx2, kw2 = jax.random.split(key, 4)

    # Primary check: Downsample(n_feat=4) on (2, 4, 16, 16) -> (2, 8, 8, 8).
    N, n_feat, H, W = 2, 4, 16, 16
    C_out = n_feat // 2
    x = jax.random.normal(kx, (N, n_feat, H, W), dtype=jnp.float32)
    w = jax.random.normal(kw, (C_out, n_feat, 3, 3), dtype=jnp.float32) * 0.1

    out = jax.block_until_ready(downsample(x, w))
    ref = _reference(x, w)
    assert out.shape == (N, 2 * n_feat, H // 2, W // 2), out.shape
    assert out.dtype == x.dtype
    assert jnp.allclose(out, ref, atol=1e-4, rtol=1e-4), (
        "max abs err %f" % float(jnp.max(jnp.abs(out - ref))))

    # Secondary check: different channel / spatial sizes (exercises the
    # co-blocking and the lane-padding + slice path).
    Nb, nfb, Hb, Wb = 1, 6, 20, 36
    xb = jax.random.normal(kx2, (Nb, nfb, Hb, Wb), dtype=jnp.float32)
    wb = jax.random.normal(kw2, (nfb // 2, nfb, 3, 3), dtype=jnp.float32) * 0.1
    out_b = jax.block_until_ready(downsample(xb, wb))
    ref_b = _reference(xb, wb)
    assert out_b.shape == (Nb, 2 * nfb, Hb // 2, Wb // 2), out_b.shape
    assert jnp.allclose(out_b, ref_b, atol=1e-4, rtol=1e-4), (
        "max abs err %f" % float(jnp.max(jnp.abs(out_b - ref_b))))

    # bf16 activations: planes stay bf16 in-kernel, f32 accumulation.
    x16 = x.astype(jnp.bfloat16)
    out16 = jax.block_until_ready(downsample(x16, w))
    ref16 = _reference(x16, w)
    assert out16.dtype == jnp.bfloat16
    assert jnp.allclose(out16.astype(jnp.float32), ref16.astype(jnp.float32),
                        atol=5e-2, rtol=5e-2)

    print("KERNEL_OK")
</pallas_src>

<mosaic_0001>
module attributes {stable_mosaic.version = 11 : i64} {
  func.func @_downsample_kernel(%arg0: i32, %arg1: i32, %arg2: memref<72xf32, #tpu.memory_space<smem>>, %arg3: memref<1x16x9x129xf32, #tpu.memory_space<vmem>>, %arg4: memref<1x8x8x128xf32, #tpu.memory_space<vmem>>) attributes {dimension_semantics = [#tpu.dimension_semantics<parallel>, #tpu.dimension_semantics<parallel>], iteration_bounds = array<i64: 2, 1>, scalar_prefetch = 0 : i64, scratch_operands = 0 : i64, tpu.core_type = #tpu.core_type<tc>, window_params = [{transform_indices = @transform_0, window_bounds = array<i64: 72>}, {transform_indices = @transform_1, window_bounds = array<i64: 1, 16, 9, 129>}, {transform_indices = @transform_2, window_bounds = array<i64: 1, 8, 8, 128>}]} {
    %c2_i32 = arith.constant 2 : i32
    %0 = arith.muli %arg1, %c2_i32 : i32
    %c0_i32 = arith.constant 0 : i32
    %1 = arith.addi %0, %c0_i32 : i32
    %c36_i32 = arith.constant 36 : i32
    %2 = arith.muli %1, %c36_i32 : i32
    %cst = arith.constant 0.000000e+00 : f32
    %3 = vector.broadcast %cst : f32 to vector<8x128xf32>
    %cst_0 = arith.constant 0.000000e+00 : f32
    %4 = vector.broadcast %cst_0 : f32 to vector<8x128xf32>
    %cst_1 = arith.constant 0.000000e+00 : f32
    %5 = vector.broadcast %cst_1 : f32 to vector<8x128xf32>
    %cst_2 = arith.constant 0.000000e+00 : f32
    %6 = vector.broadcast %cst_2 : f32 to vector<8x128xf32>
    %c0 = arith.constant 0 : index
    %c0_3 = arith.constant 0 : index
    %c0_4 = arith.constant 0 : index
    %c0_5 = arith.constant 0 : index
    %7 = vector.load %arg3[%c0, %c0_3, %c0_4, %c0_5] : memref<1x16x9x129xf32, #tpu.memory_space<vmem>>, vector<1x1x9x129xf32>
    %8 = vector.shape_cast %7 : vector<1x1x9x129xf32> to vector<9x129xf32>
    %9 = vector.extract_strided_slice %8 {offsets = [0, 0], sizes = [8, 128], strides = [1, 1]} : vector<9x129xf32> to vector<8x128xf32>
    %10 = vector.extract_strided_slice %8 {offsets = [0, 1], sizes = [8, 128], strides = [1, 1]} : vector<9x129xf32> to vector<8x128xf32>
    %11 = vector.extract_strided_slice %8 {offsets = [1, 0], sizes = [8, 128], strides = [1, 1]} : vector<9x129xf32> to vector<8x128xf32>
    %12 = vector.extract_strided_slice %8 {offsets = [1, 1], sizes = [8, 128], strides = [1, 1]} : vector<9x129xf32> to vector<8x128xf32>
    %c0_i32_6 = arith.constant 0 : i32
    %13 = arith.addi %2, %c0_i32_6 : i32
    %c0_i32_7 = arith.constant 0 : i32
    %14 = arith.addi %13, %c0_i32_7 : i32
    %c0_i32_8 = arith.constant 0 : i32
    %15 = arith.addi %14, %c0_i32_8 : i32
    %16 = arith.index_cast %15 : i32 to index
    %17 = memref.load %arg2[%16] : memref<72xf32, #tpu.memory_space<smem>>
    %18 = vector.broadcast %17 : f32 to vector<8x128xf32>
    %19 = arith.mulf %18, %9 : vector<8x128xf32>
    %20 = arith.addf %3, %19 : vector<8x128xf32>
    %c0_i32_9 = arith.constant 0 : i32
    %21 = arith.addi %2, %c0_i32_9 : i32
    %c0_i32_10 = arith.constant 0 : i32
    %22 = arith.addi %21, %c0_i32_10 : i32
    %c2_i32_11 = arith.constant 2 : i32
    %23 = arith.addi %22, %c2_i32_11 : i32
    %24 = arith.index_cast %23 : i32 to index
    %25 = memref.load %arg2[%24] : memref<72xf32, #tpu.memory_space<smem>>
    %26 = vector.broadcast %25 : f32 to vector<8x128xf32>
    %27 = arith.mulf %26, %10 : vector<8x128xf32>
    %28 = arith.addf %20, %27 : vector<8x128xf32>
    %c0_i32_12 = arith.constant 0 : i32
    %29 = arith.addi %2, %c0_i32_12 : i32
    %c0_i32_13 = arith.constant 0 : i32
    %30 = arith.addi %29, %c0_i32_13 : i32
    %c1_i32 = arith.constant 1 : i32
    %31 = arith.addi %30, %c1_i32 : i32
    %32 = arith.index_cast %31 : i32 to index
    %33 = memref.load %arg2[%32] : memref<72xf32, #tpu.memory_space<smem>>
    %34 = vector.broadcast %33 : f32 to vector<8x128xf32>
    %35 = arith.mulf %34, %10 : vector<8x128xf32>
    %36 = arith.addf %4, %35 : vector<8x128xf32>
    %c0_i32_14 = arith.constant 0 : i32
    %37 = arith.addi %2, %c0_i32_14 : i32
    %c6_i32 = arith.constant 6 : i32
    %38 = arith.addi %37, %c6_i32 : i32
    %c0_i32_15 = arith.constant 0 : i32
    %39 = arith.addi %38, %c0_i32_15 : i32
    %40 = arith.index_cast %39 : i32 to index
    %41 = memref.load %arg2[%40] : memref<72xf32, #tpu.memory_space<smem>>
    %42 = vector.broadcast %41 : f32 to vector<8x128xf32>
    %43 = arith.mulf %42, %11 : vector<8x128xf32>
    %44 = arith.addf %28, %43 : vector<8x128xf32>
    %c0_i32_16 = arith.constant 0 : i32
    %45 = arith.addi %2, %c0_i32_16 : i32
    %c6_i32_17 = arith.constant 6 : i32
    %46 = arith.addi %45, %c6_i32_17 : i32
    %c2_i32_18 = arith.constant 2 : i32
    %47 = arith.addi %46, %c2_i32_18 : i32
    %48 = arith.index_cast %47 : i32 to index
    %49 = memref.load %arg2[%48] : memref<72xf32, #tpu.memory_space<smem>>
    %50 = vector.broadcast %49 : f32 to vector<8x128xf32>
    %51 = arith.mulf %50, %12 : vector<8x128xf32>
    %52 = arith.addf %44, %51 : vector<8x128xf32>
    %c0_i32_19 = arith.constant 0 : i32
    %53 = arith.addi %2, %c0_i32_19 : i32
    %c6_i32_20 = arith.constant 6 : i32
    %54 = arith.addi %53, %c6_i32_20 : i32
    %c1_i32_21 = arith.constant 1 : i32
    %55 = arith.addi %54, %c1_i32_21 : i32
    %56 = arith.index_cast %55 : i32 to index
    %57 = memref.load %arg2[%56] : memref<72xf32, #tpu.memory_space<smem>>
    %58 = vector.broadcast %57 : f32 to vector<8x128xf32>
    %59 = arith.mulf %58, %12 : vector<8x128xf32>
    %60 = arith.addf %36, %59 : vector<8x128xf32>
    %c0_i32_22 = arith.constant 0 : i32
    %61 = arith.addi %2, %c0_i32_22 : i32
    %c3_i32 = arith.constant 3 : i32
    %62 = arith.addi %61, %c3_i32 : i32
    %c0_i32_23 = arith.constant 0 : i32
    %63 = arith.addi %62, %c0_i32_23 : i32
    %64 = arith.index_cast %63 : i32 to index
    %65 = memref.load %arg2[%64] : memref<72xf32, #tpu.memory_space<smem>>
    %66 = vector.broadcast %65 : f32 to vector<8x128xf32>
    %67 = arith.mulf %66, %11 : vector<8x128xf32>
    %68 = arith.addf %5, %67 : vector<8x128xf32>
    %c0_i32_24 = arith.constant 0 : i32
    %69 = arith.addi %2, %c0_i32_24 : i32
    %c3_i32_25 = arith.constant 3 : i32
    %70 = arith.addi %69, %c3_i32_25 : i32
    %c2_i32_26 = arith.constant 2 : i32
    %71 = arith.addi %70, %c2_i32_26 : i32
    %72 = arith.index_cast %71 : i32 to index
    %73 = memref.load %arg2[%72] : memref<72xf32, #tpu.memory_space<smem>>
    %74 = vector.broadcast %73 : f32 to vector<8x128xf32>
    %75 = arith.mulf %74, %12 : vector<8x128xf32>
    %76 = arith.addf %68, %75 : vector<8x128xf32>
    %c0_i32_27 = arith.constant 0 : i32
    %77 = arith.addi %2, %c0_i32_27 : i32
    %c3_i32_28 = arith.constant 3 : i32
    %78 = arith.addi %77, %c3_i32_28 : i32
    %c1_i32_29 = arith.constant 1 : i32
    %79 = arith.addi %78, %c1_i32_29 : i32
    %80 = arith.index_cast %79 : i32 to index
    %81 = memref.load %arg2[%80] : memref<72xf32, #tpu.memory_space<smem>>
    %82 = vector.broadcast %81 : f32 to vector<8x128xf32>
    %83 = arith.mulf %82, %12 : vector<8x128xf32>
    %84 = arith.addf %6, %83 : vector<8x128xf32>
    %c0_30 = arith.constant 0 : index
    %c1 = arith.constant 1 : index
    %c0_31 = arith.constant 0 : index
    %c0_32 = arith.constant 0 : index
    %85 = vector.load %arg3[%c0_30, %c1, %c0_31, %c0_32] : memref<1x16x9x129xf32, #tpu.memory_space<vmem>>, vector<1x1x9x129xf32>
    %86 = vector.shape_cast %85 : vector<1x1x9x129xf32> to vector<9x129xf32>
    %87 = vector.extract_strided_slice %86 {offsets = [0, 0], sizes = [8, 128], strides = [1, 1]} : vector<9x129xf32> to vector<8x128xf32>
    %88 = vector.extract_strided_slice %86 {offsets = [0, 1], sizes = [8, 128], strides = [1, 1]} : vector<9x129xf32> to vector<8x128xf32>
    %89 = vector.extract_strided_slice %86 {offsets = [1, 0], sizes = [8, 128], strides = [1, 1]} : vector<9x129xf32> to vector<8x128xf32>
    %90 = vector.extract_strided_slice %86 {offsets = [1, 1], sizes = [8, 128], strides = [1, 1]} : vector<9x129xf32> to vector<8x128xf32>
    %c0_i32_33 = arith.constant 0 : i32
    %91 = arith.addi %2, %c0_i32_33 : i32
    %c0_i32_34 = arith.constant 0 : i32
    %92 = arith.addi %91, %c0_i32_34 : i32
    %c1_i32_35 = arith.constant 1 : i32
    %93 = arith.addi %92, %c1_i32_35 : i32
    %94 = arith.index_cast %93 : i32 to index
    %95 = memref.load %arg2[%94] : memref<72xf32, #tpu.memory_space<smem>>
    %96 = vector.broadcast %95 : f32 to vector<8x128xf32>
    %97 = arith.mulf %96, %87 : vector<8x128xf32>
    %98 = arith.addf %52, %97 : vector<8x128xf32>
    %c0_i32_36 = arith.constant 0 : i32
    %99 = arith.addi %2, %c0_i32_36 : i32
    %c0_i32_37 = arith.constant 0 : i32
    %100 = arith.addi %99, %c0_i32_37 : i32
    %c0_i32_38 = arith.constant 0 : i32
    %101 = arith.addi %100, %c0_i32_38 : i32
    %102 = arith.index_cast %101 : i32 to index
    %103 = memref.load %arg2[%102] : memref<72xf32, #tpu.memory_space<smem>>
    %104 = vector.broadcast %103 : f32 to vector<8x128xf32>
    %105 = arith.mulf %104, %87 : vector<8x128xf32>
    %106 = arith.addf %60, %105 : vector<8x128xf32>
    %c0_i32_39 = arith.constant 0 : i32
    %107 = arith.addi %2, %c0_i32_39 : i32
    %c0_i32_40 = arith.constant 0 : i32
    %108 = arith.addi %107, %c0_i32_40 : i32
    %c2_i32_41 = arith.constant 2 : i32
    %109 = arith.addi %108, %c2_i32_41 : i32
    %110 = arith.index_cast %109 : i32 to index
    %111 = memref.load %arg2[%110] : memref<72xf32, #tpu.memory_space<smem>>
    %112 = vector.broadcast %111 : f32 to vector<8x128xf32>
    %113 = arith.mulf %112, %88 : vector<8x128xf32>
    %114 = arith.addf %106, %113 : vector<8x128xf32>
    %c0_i32_42 = arith.constant 0 : i32
    %115 = arith.addi %2, %c0_i32_42 : i32
    %c6_i32_43 = arith.constant 6 : i32
    %116 = arith.addi %115, %c6_i32_43 : i32
    %c1_i32_44 = arith.constant 1 : i32
    %117 = arith.addi %116, %c1_i32_44 : i32
    %118 = arith.index_cast %117 : i32 to index
    %119 = memref.load %arg2[%118] : memref<72xf32, #tpu.memory_space<smem>>
    %120 = vector.broadcast %119 : f32 to vector<8x128xf32>
    %121 = arith.mulf %120, %89 : vector<8x128xf32>
    %122 = arith.addf %98, %121 : vector<8x128xf32>
    %c0_i32_45 = arith.constant 0 : i32
    %123 = arith.addi %2, %c0_i32_45 : i32
    %c6_i32_46 = arith.constant 6 : i32
    %124 = arith.addi %123, %c6_i32_46 : i32
    %c0_i32_47 = arith.constant 0 : i32
    %125 = arith.addi %124, %c0_i32_47 : i32
    %126 = arith.index_cast %125 : i32 to index
    %127 = memref.load %arg2[%126] : memref<72xf32, #tpu.memory_space<smem>>
    %128 = vector.broadcast %127 : f32 to vector<8x128xf32>
    %129 = arith.mulf %128, %89 : vector<8x128xf32>
    %130 = arith.addf %114, %129 : vector<8x128xf32>
    %c0_i32_48 = arith.constant 0 : i32
    %131 = arith.addi %2, %c0_i32_48 : i32
    %c6_i32_49 = arith.constant 6 : i32
    %132 = arith.addi %131, %c6_i32_49 : i32
    %c2_i32_50 = arith.constant 2 : i32
    %133 = arith.addi %132, %c2_i32_50 : i32
    %134 = arith.index_cast %133 : i32 to index
    %135 = memref.load %arg2[%134] : memref<72xf32, #tpu.memory_space<smem>>
    %136 = vector.broadcast %135 : f32 to vector<8x128xf32>
    %137 = arith.mulf %136, %90 : vector<8x128xf32>
    %138 = arith.addf %130, %137 : vector<8x128xf32>
    %c0_i32_51 = arith.constant 0 : i32
    %139 = arith.addi %2, %c0_i32_51 : i32
    %c3_i32_52 = arith.constant 3 : i32
    %140 = arith.addi %139, %c3_i32_52 : i32
    %c1_i32_53 = arith.constant 1 : i32
    %141 = arith.addi %140, %c1_i32_53 : i32
    %142 = arith.index_cast %141 : i32 to index
    %143 = memref.load %arg2[%142] : memref<72xf32, #tpu.memory_space<smem>>
    %144 = vector.broadcast %143 : f32 to vector<8x128xf32>
    %145 = arith.mulf %144, %89 : vector<8x128xf32>
    %146 = arith.addf %76, %145 : vector<8x128xf32>
    %c0_i32_54 = arith.constant 0 : i32
    %147 = arith.addi %2, %c0_i32_54 : i32
    %c3_i32_55 = arith.constant 3 : i32
    %148 = arith.addi %147, %c3_i32_55 : i32
    %c0_i32_56 = arith.constant 0 : i32
    %149 = arith.addi %148, %c0_i32_56 : i32
    %150 = arith.index_cast %149 : i32 to index
    %151 = memref.load %arg2[%150] : memref<72xf32, #tpu.memory_space<smem>>
    %152 = vector.broadcast %151 : f32 to vector<8x128xf32>
    %153 = arith.mulf %152, %89 : vector<8x128xf32>
    %154 = arith.addf %84, %153 : vector<8x128xf32>
    %c0_i32_57 = arith.constant 0 : i32
    %155 = arith.addi %2, %c0_i32_57 : i32
    %c3_i32_58 = arith.constant 3 : i32
    %156 = arith.addi %155, %c3_i32_58 : i32
    %c2_i32_59 = arith.constant 2 : i32
    %157 = arith.addi %156, %c2_i32_59 : i32
    %158 = arith.index_cast %157 : i32 to index
    %159 = memref.load %arg2[%158] : memref<72xf32, #tpu.memory_space<smem>>
    %160 = vector.broadcast %159 : f32 to vector<8x128xf32>
    %161 = arith.mulf %160, %90 : vector<8x128xf32>
    %162 = arith.addf %154, %161 : vector<8x128xf32>
    %c0_60 = arith.constant 0 : index
    %c2 = arith.constant 2 : index
    %c0_61 = arith.constant 0 : index
    %c0_62 = arith.constant 0 : index
    %163 = vector.load %arg3[%c0_60, %c2, %c0_61, %c0_62] : memref<1x16x9x129xf32, #tpu.memory_space<vmem>>, vector<1x1x9x129xf32>
    %164 = vector.shape_cast %163 : vector<1x1x9x129xf32> to vector<9x129xf32>
    %165 = vector.extract_strided_slice %164 {offsets = [0, 0], sizes = [8, 128], strides = [1, 1]} : vector<9x129xf32> to vector<8x128xf32>
    %166 = vector.extract_strided_slice %164 {offsets = [0, 1], sizes = [8, 128], strides = [1, 1]} : vector<9x129xf32> to vector<8x128xf32>
    %167 = vector.extract_strided_slice %164 {offsets = [1, 0], sizes = [8, 128], strides = [1, 1]} : vector<9x129xf32> to vector<8x128xf32>
    %168 = vector.extract_strided_slice %164 {offsets = [1, 1], sizes = [8, 128], strides = [1, 1]} : vector<9x129xf32> to vector<8x128xf32>
    %c0_i32_63 = arith.constant 0 : i32
    %169 = arith.addi %2, %c0_i32_63 : i32
    %c3_i32_64 = arith.constant 3 : i32
    %170 = arith.addi %169, %c3_i32_64 : i32
    %c0_i32_65 = arith.constant 0 : i32
    %171 = arith.addi %170, %c0_i32_65 : i32
    %172 = arith.index_cast %171 : i32 to index
    %173 = memref.load %arg2[%172] : memref<72xf32, #tpu.memory_space<smem>>
    %174 = vector.broadcast %173 : f32 to vector<8x128xf32>
    %175 = arith.mulf %174, %165 : vector<8x128xf32>
    %176 = arith.addf %122, %175 : vector<8x128xf32>
    %c0_i32_66 = arith.constant 0 : i32
    %177 = arith.addi %2, %c0_i32_66 : i32
    %c3_i32_67 = arith.constant 3 : i32
    %178 = arith.addi %177, %c3_i32_67 : i32
    %c2_i32_68 = arith.constant 2 : i32
    %179 = arith.addi %178, %c2_i32_68 : i32
    %180 = arith.index_cast %179 : i32 to index
    %181 = memref.load %arg2[%180] : memref<72xf32, #tpu.memory_space<smem>>
    %182 = vector.broadcast %181 : f32 to vector<8x128xf32>
    %183 = arith.mulf %182, %166 : vector<8x128xf32>
    %184 = arith.addf %176, %183 : vector<8x128xf32>
    %c0_i32_69 = arith.constant 0 : i32
    %185 = arith.addi %2, %c0_i32_69 : i32
    %c3_i32_70 = arith.constant 3 : i32
    %186 = arith.addi %185, %c3_i32_70 : i32
    %c1_i32_71 = arith.constant 1 : i32
    %187 = arith.addi %186, %c1_i32_71 : i32
    %188 = arith.index_cast %187 : i32 to index
    %189 = memref.load %arg2[%188] : memref<72xf32, #tpu.memory_space<smem>>
    %190 = vector.broadcast %189 : f32 to vector<8x128xf32>
    %191 = arith.mulf %190, %166 : vector<8x128xf32>
    %192 = arith.addf %138, %191 : vector<8x128xf32>
    %c0_i32_72 = arith.constant 0 : i32
    %193 = arith.addi %2, %c0_i32_72 : i32
    %c0_i32_73 = arith.constant 0 : i32
    %194 = arith.addi %193, %c0_i32_73 : i32
    %c0_i32_74 = arith.constant 0 : i32
    %195 = arith.addi %194, %c0_i32_74 : i32
    %196 = arith.index_cast %195 : i32 to index
    %197 = memref.load %arg2[%196] : memref<72xf32, #tpu.memory_space<smem>>
    %198 = vector.broadcast %197 : f32 to vector<8x128xf32>
    %199 = arith.mulf %198, %165 : vector<8x128xf32>
    %200 = arith.addf %146, %199 : vector<8x128xf32>
    %c0_i32_75 = arith.constant 0 : i32
    %201 = arith.addi %2, %c0_i32_75 : i32
    %c0_i32_76 = arith.constant 0 : i32
    %202 = arith.addi %201, %c0_i32_76 : i32
    %c2_i32_77 = arith.constant 2 : i32
    %203 = arith.addi %202, %c2_i32_77 : i32
    %204 = arith.index_cast %203 : i32 to index
    %205 = memref.load %arg2[%204] : memref<72xf32, #tpu.memory_space<smem>>
    %206 = vector.broadcast %205 : f32 to vector<8x128xf32>
    %207 = arith.mulf %206, %166 : vector<8x128xf32>
    %208 = arith.addf %200, %207 : vector<8x128xf32>
    %c0_i32_78 = arith.constant 0 : i32
    %209 = arith.addi %2, %c0_i32_78 : i32
    %c0_i32_79 = arith.constant 0 : i32
    %210 = arith.addi %209, %c0_i32_79 : i32
    %c1_i32_80 = arith.constant 1 : i32
    %211 = arith.addi %210, %c1_i32_80 : i32
    %212 = arith.index_cast %211 : i32 to index
    %213 = memref.load %arg2[%212] : memref<72xf32, #tpu.memory_space<smem>>
    %214 = vector.broadcast %213 : f32 to vector<8x128xf32>
    %215 = arith.mulf %214, %166 : vector<8x128xf32>
    %216 = arith.addf %162, %215 : vector<8x128xf32>
    %c0_i32_81 = arith.constant 0 : i32
    %217 = arith.addi %2, %c0_i32_81 : i32
    %c6_i32_82 = arith.constant 6 : i32
    %218 = arith.addi %217, %c6_i32_82 : i32
    %c0_i32_83 = arith.constant 0 : i32
    %219 = arith.addi %218, %c0_i32_83 : i32
    %220 = arith.index_cast %219 : i32 to index
    %221 = memref.load %arg2[%220] : memref<72xf32, #tpu.memory_space<smem>>
    %222 = vector.broadcast %221 : f32 to vector<8x128xf32>
    %223 = arith.mulf %222, %167 : vector<8x128xf32>
    %224 = arith.addf %208, %223 : vector<8x128xf32>
    %c0_i32_84 = arith.constant 0 : i32
    %225 = arith.addi %2, %c0_i32_84 : i32
    %c6_i32_85 = arith.constant 6 : i32
    %226 = arith.addi %225, %c6_i32_85 : i32
    %c2_i32_86 = arith.constant 2 : i32
    %227 = arith.addi %226, %c2_i32_86 : i32
    %228 = arith.index_cast %227 : i32 to index
    %229 = memref.load %arg2[%228] : memref<72xf32, #tpu.memory_space<smem>>
    %230 = vector.broadcast %229 : f32 to vector<8x128xf32>
    %231 = arith.mulf %230, %168 : vector<8x128xf32>
    %232 = arith.addf %224, %231 : vector<8x128xf32>
    %c0_i32_87 = arith.constant 0 : i32
    %233 = arith.addi %2, %c0_i32_87 : i32
    %c6_i32_88 = arith.constant 6 : i32
    %234 = arith.addi %233, %c6_i32_88 : i32
    %c1_i32_89 = arith.constant 1 : i32
    %235 = arith.addi %234, %c1_i32_89 : i32
    %236 = arith.index_cast %235 : i32 to index
    %237 = memref.load %arg2[%236] : memref<72xf32, #tpu.memory_space<smem>>
    %238 = vector.broadcast %237 : f32 to vector<8x128xf32>
    %239 = arith.mulf %238, %168 : vector<8x128xf32>
    %240 = arith.addf %216, %239 : vector<8x128xf32>
    %c0_90 = arith.constant 0 : index
    %c3 = arith.constant 3 : index
    %c0_91 = arith.constant 0 : index
    %c0_92 = arith.constant 0 : index
    %241 = vector.load %arg3[%c0_90, %c3, %c0_91, %c0_92] : memref<1x16x9x129xf32, #tpu.memory_space<vmem>>, vector<1x1x9x129xf32>
    %242 = vector.shape_cast %241 : vector<1x1x9x129xf32> to vector<9x129xf32>
    %243 = vector.extract_strided_slice %242 {offsets = [0, 0], sizes = [8, 128], strides = [1, 1]} : vector<9x129xf32> to vector<8x128xf32>
    %244 = vector.extract_strided_slice %242 {offsets = [0, 1], sizes = [8, 128], strides = [1, 1]} : vector<9x129xf32> to vector<8x128xf32>
    %245 = vector.extract_strided_slice %242 {offsets = [1, 0], sizes = [8, 128], strides = [1, 1]} : vector<9x129xf32> to vector<8x128xf32>
    %246 = vector.extract_strided_slice %242 {offsets = [1, 1], sizes = [8, 128], strides = [1, 1]} : vector<9x129xf32> to vector<8x128xf32>
    %c0_i32_93 = arith.constant 0 : i32
    %247 = arith.addi %2, %c0_i32_93 : i32
    %c3_i32_94 = arith.constant 3 : i32
    %248 = arith.addi %247, %c3_i32_94 : i32
    %c1_i32_95 = arith.constant 1 : i32
    %249 = arith.addi %248, %c1_i32_95 : i32
    %250 = arith.index_cast %249 : i32 to index
    %251 = memref.load %arg2[%250] : memref<72xf32, #tpu.memory_space<smem>>
    %252 = vector.broadcast %251 : f32 to vector<8x128xf32>
    %253 = arith.mulf %252, %243 : vector<8x128xf32>
    %254 = arith.addf %184, %253 : vector<8x128xf32>
    %c0_i32_96 = arith.constant 0 : i32
    %255 = arith.addi %2, %c0_i32_96 : i32
    %c3_i32_97 = arith.constant 3 : i32
    %256 = arith.addi %255, %c3_i32_97 : i32
    %c0_i32_98 = arith.constant 0 : i32
    %257 = arith.addi %256, %c0_i32_98 : i32
    %258 = arith.index_cast %257 : i32 to index
    %259 = memref.load %arg2[%258] : memref<72xf32, #tpu.memory_space<smem>>
    %260 = vector.broadcast %259 : f32 to vector<8x128xf32>
    %261 = arith.mulf %260, %243 : vector<8x128xf32>
    %262 = arith.addf %192, %261 : vector<8x128xf32>
    %c0_i32_99 = arith.constant 0 : i32
    %263 = arith.addi %2, %c0_i32_99 : i32
    %c3_i32_100 = arith.constant 3 : i32
    %264 = arith.addi %263, %c3_i32_100 : i32
    %c2_i32_101 = arith.constant 2 : i32
    %265 = arith.addi %264, %c2_i32_101 : i32
    %266 = arith.index_cast %265 : i32 to index
    %267 = memref.load %arg2[%266] : memref<72xf32, #tpu.memory_space<smem>>
    %268 = vector.broadcast %267 : f32 to vector<8x128xf32>
    %269 = arith.mulf %268, %244 : vector<8x128xf32>
    %270 = arith.addf %262, %269 : vector<8x128xf32>
    %c0_i32_102 = arith.constant 0 : i32
    %271 = arith.addi %2, %c0_i32_102 : i32
    %c0_i32_103 = arith.constant 0 : i32
    %272 = arith.addi %271, %c0_i32_103 : i32
    %c1_i32_104 = arith.constant 1 : i32
    %273 = arith.addi %272, %c1_i32_104 : i32
    %274 = arith.index_cast %273 : i32 to index
    %275 = memref.load %arg2[%274] : memref<72xf32, #tpu.memory_space<smem>>
    %276 = vector.broadcast %275 : f32 to vector<8x128xf32>
    %277 = arith.mulf %276, %243 : vector<8x128xf32>
    %278 = arith.addf %232, %277 : vector<8x128xf32>
    %c0_i32_105 = arith.constant 0 : i32
    %279 = arith.addi %2, %c0_i32_105 : i32
    %c0_i32_106 = arith.constant 0 : i32
    %280 = arith.addi %279, %c0_i32_106 : i32
    %c0_i32_107 = arith.constant 0 : i32
    %281 = arith.addi %280, %c0_i32_107 : i32
    %282 = arith.index_cast %281 : i32 to index
    %283 = memref.load %arg2[%282] : memref<72xf32, #tpu.memory_space<smem>>
    %284 = vector.broadcast %283 : f32 to vector<8x128xf32>
    %285 = arith.mulf %284, %243 : vector<8x128xf32>
    %286 = arith.addf %240, %285 : vector<8x128xf32>
    %c0_i32_108 = arith.constant 0 : i32
    %287 = arith.addi %2, %c0_i32_108 : i32
    %c0_i32_109 = arith.constant 0 : i32
    %288 = arith.addi %287, %c0_i32_109 : i32
    %c2_i32_110 = arith.constant 2 : i32
    %289 = arith.addi %288, %c2_i32_110 : i32
    %290 = arith.index_cast %289 : i32 to index
    %291 = memref.load %arg2[%290] : memref<72xf32, #tpu.memory_space<smem>>
    %292 = vector.broadcast %291 : f32 to vector<8x128xf32>
    %293 = arith.mulf %292, %244 : vector<8x128xf32>
    %294 = arith.addf %286, %293 : vector<8x128xf32>
    %c0_i32_111 = arith.constant 0 : i32
    %295 = arith.addi %2, %c0_i32_111 : i32
    %c6_i32_112 = arith.constant 6 : i32
    %296 = arith.addi %295, %c6_i32_112 : i32
    %c1_i32_113 = arith.constant 1 : i32
    %297 = arith.addi %296, %c1_i32_113 : i32
    %298 = arith.index_cast %297 : i32 to index
    %299 = memref.load %arg2[%298] : memref<72xf32, #tpu.memory_space<smem>>
    %300 = vector.broadcast %299 : f32 to vector<8x128xf32>
    %301 = arith.mulf %300, %245 : vector<8x128xf32>
    %302 = arith.addf %278, %301 : vector<8x128xf32>
    %c0_i32_114 = arith.constant 0 : i32
    %303 = arith.addi %2, %c0_i32_114 : i32
    %c6_i32_115 = arith.constant 6 : i32
    %304 = arith.addi %303, %c6_i32_115 : i32
    %c0_i32_116 = arith.constant 0 : i32
    %305 = arith.addi %304, %c0_i32_116 : i32
    %306 = arith.index_cast %305 : i32 to index
    %307 = memref.load %arg2[%306] : memref<72xf32, #tpu.memory_space<smem>>
    %308 = vector.broadcast %307 : f32 to vector<8x128xf32>
    %309 = arith.mulf %308, %245 : vector<8x128xf32>
    %310 = arith.addf %294, %309 : vector<8x128xf32>
    %c0_i32_117 = arith.constant 0 : i32
    %311 = arith.addi %2, %c0_i32_117 : i32
    %c6_i32_118 = arith.constant 6 : i32
    %312 = arith.addi %311, %c6_i32_118 : i32
    %c2_i32_119 = arith.constant 2 : i32
    %313 = arith.addi %312, %c2_i32_119 : i32
    %314 = arith.index_cast %313 : i32 to index
    %315 = memref.load %arg2[%314] : memref<72xf32, #tpu.memory_space<smem>>
    %316 = vector.broadcast %315 : f32 to vector<8x128xf32>
    %317 = arith.mulf %316, %246 : vector<8x128xf32>
    %318 = arith.addf %310, %317 : vector<8x128xf32>
    %c0_120 = arith.constant 0 : index
    %c4 = arith.constant 4 : index
    %c0_121 = arith.constant 0 : index
    %c0_122 = arith.constant 0 : index
    %319 = vector.load %arg3[%c0_120, %c4, %c0_121, %c0_122] : memref<1x16x9x129xf32, #tpu.memory_space<vmem>>, vector<1x1x9x129xf32>
    %320 = vector.shape_cast %319 : vector<1x1x9x129xf32> to vector<9x129xf32>
    %321 = vector.extract_strided_slice %320 {offsets = [0, 0], sizes = [8, 128], strides = [1, 1]} : vector<9x129xf32> to vector<8x128xf32>
    %322 = vector.extract_strided_slice %320 {offsets = [0, 1], sizes = [8, 128], strides = [1, 1]} : vector<9x129xf32> to vector<8x128xf32>
    %323 = vector.extract_strided_slice %320 {offsets = [1, 0], sizes = [8, 128], strides = [1, 1]} : vector<9x129xf32> to vector<8x128xf32>
    %324 = vector.extract_strided_slice %320 {offsets = [1, 1], sizes = [8, 128], strides = [1, 1]} : vector<9x129xf32> to vector<8x128xf32>
    %c9_i32 = arith.constant 9 : i32
    %325 = arith.addi %2, %c9_i32 : i32
    %c0_i32_123 = arith.constant 0 : i32
    %326 = arith.addi %325, %c0_i32_123 : i32
    %c0_i32_124 = arith.constant 0 : i32
    %327 = arith.addi %326, %c0_i32_124 : i32
    %328 = arith.index_cast %327 : i32 to index
    %329 = memref.load %arg2[%328] : memref<72xf32, #tpu.memory_space<smem>>
    %330 = vector.broadcast %329 : f32 to vector<8x128xf32>
    %331 = arith.mulf %330, %321 : vector<8x128xf32>
    %332 = arith.addf %254, %331 : vector<8x128xf32>
    %c9_i32_125 = arith.constant 9 : i32
    %333 = arith.addi %2, %c9_i32_125 : i32
    %c0_i32_126 = arith.constant 0 : i32
    %334 = arith.addi %333, %c0_i32_126 : i32
    %c2_i32_127 = arith.constant 2 : i32
    %335 = arith.addi %334, %c2_i32_127 : i32
    %336 = arith.index_cast %335 : i32 to index
    %337 = memref.load %arg2[%336] : memref<72xf32, #tpu.memory_space<smem>>
    %338 = vector.broadcast %337 : f32 to vector<8x128xf32>
    %339 = arith.mulf %338, %322 : vector<8x128xf32>
    %340 = arith.addf %332, %339 : vector<8x128xf32>
    %c9_i32_128 = arith.constant 9 : i32
    %341 = arith.addi %2, %c9_i32_128 : i32
    %c0_i32_129 = arith.constant 0 : i32
    %342 = arith.addi %341, %c0_i32_129 : i32
    %c1_i32_130 = arith.constant 1 : i32
    %343 = arith.addi %342, %c1_i32_130 : i32
    %344 = arith.index_cast %343 : i32 to index
    %345 = memref.load %arg2[%344] : memref<72xf32, #tpu.memory_space<smem>>
    %346 = vector.broadcast %345 : f32 to vector<8x128xf32>
    %347 = arith.mulf %346, %322 : vector<8x128xf32>
    %348 = arith.addf %270, %347 : vector<8x128xf32>
    %c9_i32_131 = arith.constant 9 : i32
    %349 = arith.addi %2, %c9_i32_131 : i32
    %c6_i32_132 = arith.constant 6 : i32
    %350 = arith.addi %349, %c6_i32_132 : i32
    %c0_i32_133 = arith.constant 0 : i32
    %351 = arith.addi %350, %c0_i32_133 : i32
    %352 = arith.index_cast %351 : i32 to index
    %353 = memref.load %arg2[%352] : memref<72xf32, #tpu.memory_space<smem>>
    %354 = vector.broadcast %353 : f32 to vector<8x128xf32>
    %355 = arith.mulf %354, %323 : vector<8x128xf32>
    %356 = arith.addf %340, %355 : vector<8x128xf32>
    %c9_i32_134 = arith.constant 9 : i32
    %357 = arith.addi %2, %c9_i32_134 : i32
    %c6_i32_135 = arith.constant 6 : i32
    %358 = arith.addi %357, %c6_i32_135 : i32
    %c2_i32_136 = arith.constant 2 : i32
    %359 = arith.addi %358, %c2_i32_136 : i32
    %360 = arith.index_cast %359 : i32 to index
    %361 = memref.load %arg2[%360] : memref<72xf32, #tpu.memory_space<smem>>
    %362 = vector.broadcast %361 : f32 to vector<8x128xf32>
    %363 = arith.mulf %362, %324 : vector<8x128xf32>
    %364 = arith.addf %356, %363 : vector<8x128xf32>
    %c9_i32_137 = arith.constant 9 : i32
    %365 = arith.addi %2, %c9_i32_137 : i32
    %c6_i32_138 = arith.constant 6 : i32
    %366 = arith.addi %365, %c6_i32_138 : i32
    %c1_i32_139 = arith.constant 1 : i32
    %367 = arith.addi %366, %c1_i32_139 : i32
    %368 = arith.index_cast %367 : i32 to index
    %369 = memref.load %arg2[%368] : memref<72xf32, #tpu.memory_space<smem>>
    %370 = vector.broadcast %369 : f32 to vector<8x128xf32>
    %371 = arith.mulf %370, %324 : vector<8x128xf32>
    %372 = arith.addf %348, %371 : vector<8x128xf32>
    %c9_i32_140 = arith.constant 9 : i32
    %373 = arith.addi %2, %c9_i32_140 : i32
    %c3_i32_141 = arith.constant 3 : i32
    %374 = arith.addi %373, %c3_i32_141 : i32
    %c0_i32_142 = arith.constant 0 : i32
    %375 = arith.addi %374, %c0_i32_142 : i32
    %376 = arith.index_cast %375 : i32 to index
    %377 = memref.load %arg2[%376] : memref<72xf32, #tpu.memory_space<smem>>
    %378 = vector.broadcast %377 : f32 to vector<8x128xf32>
    %379 = arith.mulf %378, %323 : vector<8x128xf32>
    %380 = arith.addf %302, %379 : vector<8x128xf32>
    %c9_i32_143 = arith.constant 9 : i32
    %381 = arith.addi %2, %c9_i32_143 : i32
    %c3_i32_144 = arith.constant 3 : i32
    %382 = arith.addi %381, %c3_i32_144 : i32
    %c2_i32_145 = arith.constant 2 : i32
    %383 = arith.addi %382, %c2_i32_145 : i32
    %384 = arith.index_cast %383 : i32 to index
    %385 = memref.load %arg2[%384] : memref<72xf32, #tpu.memory_space<smem>>
    %386 = vector.broadcast %385 : f32 to vector<8x128xf32>
    %387 = arith.mulf %386, %324 : vector<8x128xf32>
    %388 = arith.addf %380, %387 : vector<8x128xf32>
    %c9_i32_146 = arith.constant 9 : i32
    %389 = arith.addi %2, %c9_i32_146 : i32
    %c3_i32_147 = arith.constant 3 : i32
    %390 = arith.addi %389, %c3_i32_147 : i32
    %c1_i32_148 = arith.constant 1 : i32
    %391 = arith.addi %390, %c1_i32_148 : i32
    %392 = arith.index_cast %391 : i32 to index
    %393 = memref.load %arg2[%392] : memref<72xf32, #tpu.memory_space<smem>>
    %394 = vector.broadcast %393 : f32 to vector<8x128xf32>
    %395 = arith.mulf %394, %324 : vector<8x128xf32>
    %396 = arith.addf %318, %395 : vector<8x128xf32>
    %c0_149 = arith.constant 0 : index
    %c5 = arith.constant 5 : index
    %c0_150 = arith.constant 0 : index
    %c0_151 = arith.constant 0 : index
    %397 = vector.load %arg3[%c0_149, %c5, %c0_150, %c0_151] : memref<1x16x9x129xf32, #tpu.memory_space<vmem>>, vector<1x1x9x129xf32>
    %398 = vector.shape_cast %397 : vector<1x1x9x129xf32> to vector<9x129xf32>
    %399 = vector.extract_strided_slice %398 {offsets = [0, 0], sizes = [8, 128], strides = [1, 1]} : vector<9x129xf32> to vector<8x128xf32>
    %400 = vector.extract_strided_slice %398 {offsets = [0, 1], sizes = [8, 128], strides = [1, 1]} : vector<9x129xf32> to vector<8x128xf32>
    %401 = vector.extract_strided_slice %398 {offsets = [1, 0], sizes = [8, 128], strides = [1, 1]} : vector<9x129xf32> to vector<8x128xf32>
    %402 = vector.extract_strided_slice %398 {offsets = [1, 1], sizes = [8, 128], strides = [1, 1]} : vector<9x129xf32> to vector<8x128xf32>
    %c9_i32_152 = arith.constant 9 : i32
    %403 = arith.addi %2, %c9_i32_152 : i32
    %c0_i32_153 = arith.constant 0 : i32
    %404 = arith.addi %403, %c0_i32_153 : i32
    %c1_i32_154 = arith.constant 1 : i32
    %405 = arith.addi %404, %c1_i32_154 : i32
    %406 = arith.index_cast %405 : i32 to index
    %407 = memref.load %arg2[%406] : memref<72xf32, #tpu.memory_space<smem>>
    %408 = vector.broadcast %407 : f32 to vector<8x128xf32>
    %409 = arith.mulf %408, %399 : vector<8x128xf32>
    %410 = arith.addf %364, %409 : vector<8x128xf32>
    %c9_i32_155 = arith.constant 9 : i32
    %411 = arith.addi %2, %c9_i32_155 : i32
    %c0_i32_156 = arith.constant 0 : i32
    %412 = arith.addi %411, %c0_i32_156 : i32
    %c0_i32_157 = arith.constant 0 : i32
    %413 = arith.addi %412, %c0_i32_157 : i32
    %414 = arith.index_cast %413 : i32 to index
    %415 = memref.load %arg2[%414] : memref<72xf32, #tpu.memory_space<smem>>
    %416 = vector.broadcast %415 : f32 to vector<8x128xf32>
    %417 = arith.mulf %416, %399 : vector<8x128xf32>
    %418 = arith.addf %372, %417 : vector<8x128xf32>
    %c9_i32_158 = arith.constant 9 : i32
    %419 = arith.addi %2, %c9_i32_158 : i32
    %c0_i32_159 = arith.constant 0 : i32
    %420 = arith.addi %419, %c0_i32_159 : i32
    %c2_i32_160 = arith.constant 2 : i32
    %421 = arith.addi %420, %c2_i32_160 : i32
    %422 = arith.index_cast %421 : i32 to index
    %423 = memref.load %arg2[%422] : memref<72xf32, #tpu.memory_space<smem>>
    %424 = vector.broadcast %423 : f32 to vector<8x128xf32>
    %425 = arith.mulf %424, %400 : vector<8x128xf32>
    %426 = arith.addf %418, %425 : vector<8x128xf32>
    %c9_i32_161 = arith.constant 9 : i32
    %427 = arith.addi %2, %c9_i32_161 : i32
    %c6_i32_162 = arith.constant 6 : i32
    %428 = arith.addi %427, %c6_i32_162 : i32
    %c1_i32_163 = arith.constant 1 : i32
    %429 = arith.addi %428, %c1_i32_163 : i32
    %430 = arith.index_cast %429 : i32 to index
    %431 = memref.load %arg2[%430] : memref<72xf32, #tpu.memory_space<smem>>
    %432 = vector.broadcast %431 : f32 to vector<8x128xf32>
    %433 = arith.mulf %432, %401 : vector<8x128xf32>
    %434 = arith.addf %410, %433 : vector<8x128xf32>
    %c9_i32_164 = arith.constant 9 : i32
    %435 = arith.addi %2, %c9_i32_164 : i32
    %c6_i32_165 = arith.constant 6 : i32
    %436 = arith.addi %435, %c6_i32_165 : i32
    %c0_i32_166 = arith.constant 0 : i32
    %437 = arith.addi %436, %c0_i32_166 : i32
    %438 = arith.index_cast %437 : i32 to index
    %439 = memref.load %arg2[%438] : memref<72xf32, #tpu.memory_space<smem>>
    %440 = vector.broadcast %439 : f32 to vector<8x128xf32>
    %441 = arith.mulf %440, %401 : vector<8x128xf32>
    %442 = arith.addf %426, %441 : vector<8x128xf32>
    %c9_i32_167 = arith.constant 9 : i32
    %443 = arith.addi %2, %c9_i32_167 : i32
    %c6_i32_168 = arith.constant 6 : i32
    %444 = arith.addi %443, %c6_i32_168 : i32
    %c2_i32_169 = arith.constant 2 : i32
    %445 = arith.addi %444, %c2_i32_169 : i32
    %446 = arith.index_cast %445 : i32 to index
    %447 = memref.load %arg2[%446] : memref<72xf32, #tpu.memory_space<smem>>
    %448 = vector.broadcast %447 : f32 to vector<8x128xf32>
    %449 = arith.mulf %448, %402 : vector<8x128xf32>
    %450 = arith.addf %442, %449 : vector<8x128xf32>
    %c9_i32_170 = arith.constant 9 : i32
    %451 = arith.addi %2, %c9_i32_170 : i32
    %c3_i32_171 = arith.constant 3 : i32
    %452 = arith.addi %451, %c3_i32_171 : i32
    %c1_i32_172 = arith.constant 1 : i32
    %453 = arith.addi %452, %c1_i32_172 : i32
    %454 = arith.index_cast %453 : i32 to index
    %455 = memref.load %arg2[%454] : memref<72xf32, #tpu.memory_space<smem>>
    %456 = vector.broadcast %455 : f32 to vector<8x128xf32>
    %457 = arith.mulf %456, %401 : vector<8x128xf32>
    %458 = arith.addf %388, %457 : vector<8x128xf32>
    %c9_i32_173 = arith.constant 9 : i32
    %459 = arith.addi %2, %c9_i32_173 : i32
    %c3_i32_174 = arith.constant 3 : i32
    %460 = arith.addi %459, %c3_i32_174 : i32
    %c0_i32_175 = arith.constant 0 : i32
    %461 = arith.addi %460, %c0_i32_175 : i32
    %462 = arith.index_cast %461 : i32 to index
    %463 = memref.load %arg2[%462] : memref<72xf32, #tpu.memory_space<smem>>
    %464 = vector.broadcast %463 : f32 to vector<8x128xf32>
    %465 = arith.mulf %464, %401 : vector<8x128xf32>
    %466 = arith.addf %396, %465 : vector<8x128xf32>
    %c9_i32_176 = arith.constant 9 : i32
    %467 = arith.addi %2, %c9_i32_176 : i32
    %c3_i32_177 = arith.constant 3 : i32
    %468 = arith.addi %467, %c3_i32_177 : i32
    %c2_i32_178 = arith.constant 2 : i32
    %469 = arith.addi %468, %c2_i32_178 : i32
    %470 = arith.index_cast %469 : i32 to index
    %471 = memref.load %arg2[%470] : memref<72xf32, #tpu.memory_space<smem>>
    %472 = vector.broadcast %471 : f32 to vector<8x128xf32>
    %473 = arith.mulf %472, %402 : vector<8x128xf32>
    %474 = arith.addf %466, %473 : vector<8x128xf32>
    %c0_179 = arith.constant 0 : index
    %c6 = arith.constant 6 : index
    %c0_180 = arith.constant 0 : index
    %c0_181 = arith.constant 0 : index
    %475 = vector.load %arg3[%c0_179, %c6, %c0_180, %c0_181] : memref<1x16x9x129xf32, #tpu.memory_space<vmem>>, vector<1x1x9x129xf32>
    %476 = vector.shape_cast %475 : vector<1x1x9x129xf32> to vector<9x129xf32>
    %477 = vector.extract_strided_slice %476 {offsets = [0, 0], sizes = [8, 128], strides = [1, 1]} : vector<9x129xf32> to vector<8x128xf32>
    %478 = vector.extract_strided_slice %476 {offsets = [0, 1], sizes = [8, 128], strides = [1, 1]} : vector<9x129xf32> to vector<8x128xf32>
    %479 = vector.extract_strided_slice %476 {offsets = [1, 0], sizes = [8, 128], strides = [1, 1]} : vector<9x129xf32> to vector<8x128xf32>
    %480 = vector.extract_strided_slice %476 {offsets = [1, 1], sizes = [8, 128], strides = [1, 1]} : vector<9x129xf32> to vector<8x128xf32>
    %c9_i32_182 = arith.constant 9 : i32
    %481 = arith.addi %2, %c9_i32_182 : i32
    %c3_i32_183 = arith.constant 3 : i32
    %482 = arith.addi %481, %c3_i32_183 : i32
    %c0_i32_184 = arith.constant 0 : i32
    %483 = arith.addi %482, %c0_i32_184 : i32
    %484 = arith.index_cast %483 : i32 to index
    %485 = memref.load %arg2[%484] : memref<72xf32, #tpu.memory_space<smem>>
    %486 = vector.broadcast %485 : f32 to vector<8x128xf32>
    %487 = arith.mulf %486, %477 : vector<8x128xf32>
    %488 = arith.addf %434, %487 : vector<8x128xf32>
    %c9_i32_185 = arith.constant 9 : i32
    %489 = arith.addi %2, %c9_i32_185 : i32
    %c3_i32_186 = arith.constant 3 : i32
    %490 = arith.addi %489, %c3_i32_186 : i32
    %c2_i32_187 = arith.constant 2 : i32
    %491 = arith.addi %490, %c2_i32_187 : i32
    %492 = arith.index_cast %491 : i32 to index
    %493 = memref.load %arg2[%492] : memref<72xf32, #tpu.memory_space<smem>>
    %494 = vector.broadcast %493 : f32 to vector<8x128xf32>
    %495 = arith.mulf %494, %478 : vector<8x128xf32>
    %496 = arith.addf %488, %495 : vector<8x128xf32>
    %c9_i32_188 = arith.constant 9 : i32
    %497 = arith.addi %2, %c9_i32_188 : i32
    %c3_i32_189 = arith.constant 3 : i32
    %498 = arith.addi %497, %c3_i32_189 : i32
    %c1_i32_190 = arith.constant 1 : i32
    %499 = arith.addi %498, %c1_i32_190 : i32
    %500 = arith.index_cast %499 : i32 to index
    %501 = memref.load %arg2[%500] : memref<72xf32, #tpu.memory_space<smem>>
    %502 = vector.broadcast %501 : f32 to vector<8x128xf32>
    %503 = arith.mulf %502, %478 : vector<8x128xf32>
    %504 = arith.addf %450, %503 : vector<8x128xf32>
    %c9_i32_191 = arith.constant 9 : i32
    %505 = arith.addi %2, %c9_i32_191 : i32
    %c0_i32_192 = arith.constant 0 : i32
    %506 = arith.addi %505, %c0_i32_192 : i32
    %c0_i32_193 = arith.constant 0 : i32
    %507 = arith.addi %506, %c0_i32_193 : i32
    %508 = arith.index_cast %507 : i32 to index
    %509 = memref.load %arg2[%508] : memref<72xf32, #tpu.memory_space<smem>>
    %510 = vector.broadcast %509 : f32 to vector<8x128xf32>
    %511 = arith.mulf %510, %477 : vector<8x128xf32>
    %512 = arith.addf %458, %511 : vector<8x128xf32>
    %c9_i32_194 = arith.constant 9 : i32
    %513 = arith.addi %2, %c9_i32_194 : i32
    %c0_i32_195 = arith.constant 0 : i32
    %514 = arith.addi %513, %c0_i32_195 : i32
    %c2_i32_196 = arith.constant 2 : i32
    %515 = arith.addi %514, %c2_i32_196 : i32
    %516 = arith.index_cast %515 : i32 to index
    %517 = memref.load %arg2[%516] : memref<72xf32, #tpu.memory_space<smem>>
    %518 = vector.broadcast %517 : f32 to vector<8x128xf32>
    %519 = arith.mulf %518, %478 : vector<8x128xf32>
    %520 = arith.addf %512, %519 : vector<8x128xf32>
    %c9_i32_197 = arith.constant 9 : i32
    %521 = arith.addi %2, %c9_i32_197 : i32
    %c0_i32_198 = arith.constant 0 : i32
    %522 = arith.addi %521, %c0_i32_198 : i32
    %c1_i32_199 = arith.constant 1 : i32
    %523 = arith.addi %522, %c1_i32_199 : i32
    %524 = arith.index_cast %523 : i32 to index
    %525 = memref.load %arg2[%524] : memref<72xf32, #tpu.memory_space<smem>>
    %526 = vector.broadcast %525 : f32 to vector<8x128xf32>
    %527 = arith.mulf %526, %478 : vector<8x128xf32>
    %528 = arith.addf %474, %527 : vector<8x128xf32>
    %c9_i32_200 = arith.constant 9 : i32
    %529 = arith.addi %2, %c9_i32_200 : i32
    %c6_i32_201 = arith.constant 6 : i32
    %530 = arith.addi %529, %c6_i32_201 : i32
    %c0_i32_202 = arith.constant 0 : i32
    %531 = arith.addi %530, %c0_i32_202 : i32
    %532 = arith.index_cast %531 : i32 to index
    %533 = memref.load %arg2[%532] : memref<72xf32, #tpu.memory_space<smem>>
    %534 = vector.broadcast %533 : f32 to vector<8x128xf32>
    %535 = arith.mulf %534, %479 : vector<8x128xf32>
    %536 = arith.addf %520, %535 : vector<8x128xf32>
    %c9_i32_203 = arith.constant 9 : i32
    %537 = arith.addi %2, %c9_i32_203 : i32
    %c6_i32_204 = arith.constant 6 : i32
    %538 = arith.addi %537, %c6_i32_204 : i32
    %c2_i32_205 = arith.constant 2 : i32
    %539 = arith.addi %538, %c2_i32_205 : i32
    %540 = arith.index_cast %539 : i32 to index
    %541 = memref.load %arg2[%540] : memref<72xf32, #tpu.memory_space<smem>>
    %542 = vector.broadcast %541 : f32 to vector<8x128xf32>
    %543 = arith.mulf %542, %480 : vector<8x128xf32>
    %544 = arith.addf %536, %543 : vector<8x128xf32>
    %c9_i32_206 = arith.constant 9 : i32
    %545 = arith.addi %2, %c9_i32_206 : i32
    %c6_i32_207 = arith.constant 6 : i32
    %546 = arith.addi %545, %c6_i32_207 : i32
    %c1_i32_208 = arith.constant 1 : i32
    %547 = arith.addi %546, %c1_i32_208 : i32
    %548 = arith.index_cast %547 : i32 to index
    %549 = memref.load %arg2[%548] : memref<72xf32, #tpu.memory_space<smem>>
    %550 = vector.broadcast %549 : f32 to vector<8x128xf32>
    %551 = arith.mulf %550, %480 : vector<8x128xf32>
    %552 = arith.addf %528, %551 : vector<8x128xf32>
    %c0_209 = arith.constant 0 : index
    %c7 = arith.constant 7 : index
    %c0_210 = arith.constant 0 : index
    %c0_211 = arith.constant 0 : index
    %553 = vector.load %arg3[%c0_209, %c7, %c0_210, %c0_211] : memref<1x16x9x129xf32, #tpu.memory_space<vmem>>, vector<1x1x9x129xf32>
    %554 = vector.shape_cast %553 : vector<1x1x9x129xf32> to vector<9x129xf32>
    %555 = vector.extract_strided_slice %554 {offsets = [0, 0], sizes = [8, 128], strides = [1, 1]} : vector<9x129xf32> to vector<8x128xf32>
    %556 = vector.extract_strided_slice %554 {offsets = [0, 1], sizes = [8, 128], strides = [1, 1]} : vector<9x129xf32> to vector<8x128xf32>
    %557 = vector.extract_strided_slice %554 {offsets = [1, 0], sizes = [8, 128], strides = [1, 1]} : vector<9x129xf32> to vector<8x128xf32>
    %558 = vector.extract_strided_slice %554 {offsets = [1, 1], sizes = [8, 128], strides = [1, 1]} : vector<9x129xf32> to vector<8x128xf32>
    %c9_i32_212 = arith.constant 9 : i32
    %559 = arith.addi %2, %c9_i32_212 : i32
    %c3_i32_213 = arith.constant 3 : i32
    %560 = arith.addi %559, %c3_i32_213 : i32
    %c1_i32_214 = arith.constant 1 : i32
    %561 = arith.addi %560, %c1_i32_214 : i32
    %562 = arith.index_cast %561 : i32 to index
    %563 = memref.load %arg2[%562] : memref<72xf32, #tpu.memory_space<smem>>
    %564 = vector.broadcast %563 : f32 to vector<8x128xf32>
    %565 = arith.mulf %564, %555 : vector<8x128xf32>
    %566 = arith.addf %496, %565 : vector<8x128xf32>
    %c9_i32_215 = arith.constant 9 : i32
    %567 = arith.addi %2, %c9_i32_215 : i32
    %c3_i32_216 = arith.constant 3 : i32
    %568 = arith.addi %567, %c3_i32_216 : i32
    %c0_i32_217 = arith.constant 0 : i32
    %569 = arith.addi %568, %c0_i32_217 : i32
    %570 = arith.index_cast %569 : i32 to index
    %571 = memref.load %arg2[%570] : memref<72xf32, #tpu.memory_space<smem>>
    %572 = vector.broadcast %571 : f32 to vector<8x128xf32>
    %573 = arith.mulf %572, %555 : vector<8x128xf32>
    %574 = arith.addf %504, %573 : vector<8x128xf32>
    %c9_i32_218 = arith.constant 9 : i32
    %575 = arith.addi %2, %c9_i32_218 : i32
    %c3_i32_219 = arith.constant 3 : i32
    %576 = arith.addi %575, %c3_i32_219 : i32
    %c2_i32_220 = arith.constant 2 : i32
    %577 = arith.addi %576, %c2_i32_220 : i32
    %578 = arith.index_cast %577 : i32 to index
    %579 = memref.load %arg2[%578] : memref<72xf32, #tpu.memory_space<smem>>
    %580 = vector.broadcast %579 : f32 to vector<8x128xf32>
    %581 = arith.mulf %580, %556 : vector<8x128xf32>
    %582 = arith.addf %574, %581 : vector<8x128xf32>
    %c9_i32_221 = arith.constant 9 : i32
    %583 = arith.addi %2, %c9_i32_221 : i32
    %c0_i32_222 = arith.constant 0 : i32
    %584 = arith.addi %583, %c0_i32_222 : i32
    %c1_i32_223 = arith.constant 1 : i32
    %585 = arith.addi %584, %c1_i32_223 : i32
    %586 = arith.index_cast %585 : i32 to index
    %587 = memref.load %arg2[%586] : memref<72xf32, #tpu.memory_space<smem>>
    %588 = vector.broadcast %587 : f32 to vector<8x128xf32>
    %589 = arith.mulf %588, %555 : vector<8x128xf32>
    %590 = arith.addf %544, %589 : vector<8x128xf32>
    %c9_i32_224 = arith.constant 9 : i32
    %591 = arith.addi %2, %c9_i32_224 : i32
    %c0_i32_225 = arith.constant 0 : i32
    %592 = arith.addi %591, %c0_i32_225 : i32
    %c0_i32_226 = arith.constant 0 : i32
    %593 = arith.addi %592, %c0_i32_226 : i32
    %594 = arith.index_cast %593 : i32 to index
    %595 = memref.load %arg2[%594] : memref<72xf32, #tpu.memory_space<smem>>
    %596 = vector.broadcast %595 : f32 to vector<8x128xf32>
    %597 = arith.mulf %596, %555 : vector<8x128xf32>
    %598 = arith.addf %552, %597 : vector<8x128xf32>
    %c9_i32_227 = arith.constant 9 : i32
    %599 = arith.addi %2, %c9_i32_227 : i32
    %c0_i32_228 = arith.constant 0 : i32
    %600 = arith.addi %599, %c0_i32_228 : i32
    %c2_i32_229 = arith.constant 2 : i32
    %601 = arith.addi %600, %c2_i32_229 : i32
    %602 = arith.index_cast %601 : i32 to index
    %603 = memref.load %arg2[%602] : memref<72xf32, #tpu.memory_space<smem>>
    %604 = vector.broadcast %603 : f32 to vector<8x128xf32>
    %605 = arith.mulf %604, %556 : vector<8x128xf32>
    %606 = arith.addf %598, %605 : vector<8x128xf32>
    %c9_i32_230 = arith.constant 9 : i32
    %607 = arith.addi %2, %c9_i32_230 : i32
    %c6_i32_231 = arith.constant 6 : i32
    %608 = arith.addi %607, %c6_i32_231 : i32
    %c1_i32_232 = arith.constant 1 : i32
    %609 = arith.addi %608, %c1_i32_232 : i32
    %610 = arith.index_cast %609 : i32 to index
    %611 = memref.load %arg2[%610] : memref<72xf32, #tpu.memory_space<smem>>
    %612 = vector.broadcast %611 : f32 to vector<8x128xf32>
    %613 = arith.mulf %612, %557 : vector<8x128xf32>
    %614 = arith.addf %590, %613 : vector<8x128xf32>
    %c9_i32_233 = arith.constant 9 : i32
    %615 = arith.addi %2, %c9_i32_233 : i32
    %c6_i32_234 = arith.constant 6 : i32
    %616 = arith.addi %615, %c6_i32_234 : i32
    %c0_i32_235 = arith.constant 0 : i32
    %617 = arith.addi %616, %c0_i32_235 : i32
    %618 = arith.index_cast %617 : i32 to index
    %619 = memref.load %arg2[%618] : memref<72xf32, #tpu.memory_space<smem>>
    %620 = vector.broadcast %619 : f32 to vector<8x128xf32>
    %621 = arith.mulf %620, %557 : vector<8x128xf32>
    %622 = arith.addf %606, %621 : vector<8x128xf32>
    %c9_i32_236 = arith.constant 9 : i32
    %623 = arith.addi %2, %c9_i32_236 : i32
    %c6_i32_237 = arith.constant 6 : i32
    %624 = arith.addi %623, %c6_i32_237 : i32
    %c2_i32_238 = arith.constant 2 : i32
    %625 = arith.addi %624, %c2_i32_238 : i32
    %626 = arith.index_cast %625 : i32 to index
    %627 = memref.load %arg2[%626] : memref<72xf32, #tpu.memory_space<smem>>
    %628 = vector.broadcast %627 : f32 to vector<8x128xf32>
    %629 = arith.mulf %628, %558 : vector<8x128xf32>
    %630 = arith.addf %622, %629 : vector<8x128xf32>
    %c0_239 = arith.constant 0 : index
    %c8 = arith.constant 8 : index
    %c0_240 = arith.constant 0 : index
    %c0_241 = arith.constant 0 : index
    %631 = vector.load %arg3[%c0_239, %c8, %c0_240, %c0_241] : memref<1x16x9x129xf32, #tpu.memory_space<vmem>>, vector<1x1x9x129xf32>
    %632 = vector.shape_cast %631 : vector<1x1x9x129xf32> to vector<9x129xf32>
    %633 = vector.extract_strided_slice %632 {offsets = [0, 0], sizes = [8, 128], strides = [1, 1]} : vector<9x129xf32> to vector<8x128xf32>
    %634 = vector.extract_strided_slice %632 {offsets = [0, 1], sizes = [8, 128], strides = [1, 1]} : vector<9x129xf32> to vector<8x128xf32>
    %635 = vector.extract_strided_slice %632 {offsets = [1, 0], sizes = [8, 128], strides = [1, 1]} : vector<9x129xf32> to vector<8x128xf32>
    %636 = vector.extract_strided_slice %632 {offsets = [1, 1], sizes = [8, 128], strides = [1, 1]} : vector<9x129xf32> to vector<8x128xf32>
    %c18_i32 = arith.constant 18 : i32
    %637 = arith.addi %2, %c18_i32 : i32
    %c0_i32_242 = arith.constant 0 : i32
    %638 = arith.addi %637, %c0_i32_242 : i32
    %c0_i32_243 = arith.constant 0 : i32
    %639 = arith.addi %638, %c0_i32_243 : i32
    %640 = arith.index_cast %639 : i32 to index
    %641 = memref.load %arg2[%640] : memref<72xf32, #tpu.memory_space<smem>>
    %642 = vector.broadcast %641 : f32 to vector<8x128xf32>
    %643 = arith.mulf %642, %633 : vector<8x128xf32>
    %644 = arith.addf %566, %643 : vector<8x128xf32>
    %c18_i32_244 = arith.constant 18 : i32
    %645 = arith.addi %2, %c18_i32_244 : i32
    %c0_i32_245 = arith.constant 0 : i32
    %646 = arith.addi %645, %c0_i32_245 : i32
    %c2_i32_246 = arith.constant 2 : i32
    %647 = arith.addi %646, %c2_i32_246 : i32
    %648 = arith.index_cast %647 : i32 to index
    %649 = memref.load %arg2[%648] : memref<72xf32, #tpu.memory_space<smem>>
    %650 = vector.broadcast %649 : f32 to vector<8x128xf32>
    %651 = arith.mulf %650, %634 : vector<8x128xf32>
    %652 = arith.addf %644, %651 : vector<8x128xf32>
    %c18_i32_247 = arith.constant 18 : i32
    %653 = arith.addi %2, %c18_i32_247 : i32
    %c0_i32_248 = arith.constant 0 : i32
    %654 = arith.addi %653, %c0_i32_248 : i32
    %c1_i32_249 = arith.constant 1 : i32
    %655 = arith.addi %654, %c1_i32_249 : i32
    %656 = arith.index_cast %655 : i32 to index
    %657 = memref.load %arg2[%656] : memref<72xf32, #tpu.memory_space<smem>>
    %658 = vector.broadcast %657 : f32 to vector<8x128xf32>
    %659 = arith.mulf %658, %634 : vector<8x128xf32>
    %660 = arith.addf %582, %659 : vector<8x128xf32>
    %c18_i32_250 = arith.constant 18 : i32
    %661 = arith.addi %2, %c18_i32_250 : i32
    %c6_i32_251 = arith.constant 6 : i32
    %662 = arith.addi %661, %c6_i32_251 : i32
    %c0_i32_252 = arith.constant 0 : i32
    %663 = arith.addi %662, %c0_i32_252 : i32
    %664 = arith.index_cast %663 : i32 to index
    %665 = memref.load %arg2[%664] : memref<72xf32, #tpu.memory_space<smem>>
    %666 = vector.broadcast %665 : f32 to vector<8x128xf32>
    %667 = arith.mulf %666, %635 : vector<8x128xf32>
    %668 = arith.addf %652, %667 : vector<8x128xf32>
    %c18_i32_253 = arith.constant 18 : i32
    %669 = arith.addi %2, %c18_i32_253 : i32
    %c6_i32_254 = arith.constant 6 : i32
    %670 = arith.addi %669, %c6_i32_254 : i32
    %c2_i32_255 = arith.constant 2 : i32
    %671 = arith.addi %670, %c2_i32_255 : i32
    %672 = arith.index_cast %671 : i32 to index
    %673 = memref.load %arg2[%672] : memref<72xf32, #tpu.memory_space<smem>>
    %674 = vector.broadcast %673 : f32 to vector<8x128xf32>
    %675 = arith.mulf %674, %636 : vector<8x128xf32>
    %676 = arith.addf %668, %675 : vector<8x128xf32>
    %c18_i32_256 = arith.constant 18 : i32
    %677 = arith.addi %2, %c18_i32_256 : i32
    %c6_i32_257 = arith.constant 6 : i32
    %678 = arith.addi %677, %c6_i32_257 : i32
    %c1_i32_258 = arith.constant 1 : i32
    %679 = arith.addi %678, %c1_i32_258 : i32
    %680 = arith.index_cast %679 : i32 to index
    %681 = memref.load %arg2[%680] : memref<72xf32, #tpu.memory_space<smem>>
    %682 = vector.broadcast %681 : f32 to vector<8x128xf32>
    %683 = arith.mulf %682, %636 : vector<8x128xf32>
    %684 = arith.addf %660, %683 : vector<8x128xf32>
    %c18_i32_259 = arith.constant 18 : i32
    %685 = arith.addi %2, %c18_i32_259 : i32
    %c3_i32_260 = arith.constant 3 : i32
    %686 = arith.addi %685, %c3_i32_260 : i32
    %c0_i32_261 = arith.constant 0 : i32
    %687 = arith.addi %686, %c0_i32_261 : i32
    %688 = arith.index_cast %687 : i32 to index
    %689 = memref.load %arg2[%688] : memref<72xf32, #tpu.memory_space<smem>>
    %690 = vector.broadcast %689 : f32 to vector<8x128xf32>
    %691 = arith.mulf %690, %635 : vector<8x128xf32>
    %692 = arith.addf %614, %691 : vector<8x128xf32>
    %c18_i32_262 = arith.constant 18 : i32
    %693 = arith.addi %2, %c18_i32_262 : i32
    %c3_i32_263 = arith.constant 3 : i32
    %694 = arith.addi %693, %c3_i32_263 : i32
    %c2_i32_264 = arith.constant 2 : i32
    %695 = arith.addi %694, %c2_i32_264 : i32
    %696 = arith.index_cast %695 : i32 to index
    %697 = memref.load %arg2[%696] : memref<72xf32, #tpu.memory_space<smem>>
    %698 = vector.broadcast %697 : f32 to vector<8x128xf32>
    %699 = arith.mulf %698, %636 : vector<8x128xf32>
    %700 = arith.addf %692, %699 : vector<8x128xf32>
    %c18_i32_265 = arith.constant 18 : i32
    %701 = arith.addi %2, %c18_i32_265 : i32
    %c3_i32_266 = arith.constant 3 : i32
    %702 = arith.addi %701, %c3_i32_266 : i32
    %c1_i32_267 = arith.constant 1 : i32
    %703 = arith.addi %702, %c1_i32_267 : i32
    %704 = arith.index_cast %703 : i32 to index
    %705 = memref.load %arg2[%704] : memref<72xf32, #tpu.memory_space<smem>>
    %706 = vector.broadcast %705 : f32 to vector<8x128xf32>
    %707 = arith.mulf %706, %636 : vector<8x128xf32>
    %708 = arith.addf %630, %707 : vector<8x128xf32>
    %c0_268 = arith.constant 0 : index
    %c9 = arith.constant 9 : index
    %c0_269 = arith.constant 0 : index
    %c0_270 = arith.constant 0 : index
    %709 = vector.load %arg3[%c0_268, %c9, %c0_269, %c0_270] : memref<1x16x9x129xf32, #tpu.memory_space<vmem>>, vector<1x1x9x129xf32>
    %710 = vector.shape_cast %709 : vector<1x1x9x129xf32> to vector<9x129xf32>
    %711 = vector.extract_strided_slice %710 {offsets = [0, 0], sizes = [8, 128], strides = [1, 1]} : vector<9x129xf32> to vector<8x128xf32>
    %712 = vector.extract_strided_slice %710 {offsets = [0, 1], sizes = [8, 128], strides = [1, 1]} : vector<9x129xf32> to vector<8x128xf32>
    %713 = vector.extract_strided_slice %710 {offsets = [1, 0], sizes = [8, 128], strides = [1, 1]} : vector<9x129xf32> to vector<8x128xf32>
    %714 = vector.extract_strided_slice %710 {offsets = [1, 1], sizes = [8, 128], strides = [1, 1]} : vector<9x129xf32> to vector<8x128xf32>
    %c18_i32_271 = arith.constant 18 : i32
    %715 = arith.addi %2, %c18_i32_271 : i32
    %c0_i32_272 = arith.constant 0 : i32
    %716 = arith.addi %715, %c0_i32_272 : i32
    %c1_i32_273 = arith.constant 1 : i32
    %717 = arith.addi %716, %c1_i32_273 : i32
    %718 = arith.index_cast %717 : i32 to index
    %719 = memref.load %arg2[%718] : memref<72xf32, #tpu.memory_space<smem>>
    %720 = vector.broadcast %719 : f32 to vector<8x128xf32>
    %721 = arith.mulf %720, %711 : vector<8x128xf32>
    %722 = arith.addf %676, %721 : vector<8x128xf32>
    %c18_i32_274 = arith.constant 18 : i32
    %723 = arith.addi %2, %c18_i32_274 : i32
    %c0_i32_275 = arith.constant 0 : i32
    %724 = arith.addi %723, %c0_i32_275 : i32
    %c0_i32_276 = arith.constant 0 : i32
    %725 = arith.addi %724, %c0_i32_276 : i32
    %726 = arith.index_cast %725 : i32 to index
    %727 = memref.load %arg2[%726] : memref<72xf32, #tpu.memory_space<smem>>
    %728 = vector.broadcast %727 : f32 to vector<8x128xf32>
    %729 = arith.mulf %728, %711 : vector<8x128xf32>
    %730 = arith.addf %684, %729 : vector<8x128xf32>
    %c18_i32_277 = arith.constant 18 : i32
    %731 = arith.addi %2, %c18_i32_277 : i32
    %c0_i32_278 = arith.constant 0 : i32
    %732 = arith.addi %731, %c0_i32_278 : i32
    %c2_i32_279 = arith.constant 2 : i32
    %733 = arith.addi %732, %c2_i32_279 : i32
    %734 = arith.index_cast %733 : i32 to index
    %735 = memref.load %arg2[%734] : memref<72xf32, #tpu.memory_space<smem>>
    %736 = vector.broadcast %735 : f32 to vector<8x128xf32>
    %737 = arith.mulf %736, %712 : vector<8x128xf32>
    %738 = arith.addf %730, %737 : vector<8x128xf32>
    %c18_i32_280 = arith.constant 18 : i32
    %739 = arith.addi %2, %c18_i32_280 : i32
    %c6_i32_281 = arith.constant 6 : i32
    %740 = arith.addi %739, %c6_i32_281 : i32
    %c1_i32_282 = arith.constant 1 : i32
    %741 = arith.addi %740, %c1_i32_282 : i32
    %742 = arith.index_cast %741 : i32 to index
    %743 = memref.load %arg2[%742] : memref<72xf32, #tpu.memory_space<smem>>
    %744 = vector.broadcast %743 : f32 to vector<8x128xf32>
    %745 = arith.mulf %744, %713 : vector<8x128xf32>
    %746 = arith.addf %722, %745 : vector<8x128xf32>
    %c18_i32_283 = arith.constant 18 : i32
    %747 = arith.addi %2, %c18_i32_283 : i32
    %c6_i32_284 = arith.constant 6 : i32
    %748 = arith.addi %747, %c6_i32_284 : i32
    %c0_i32_285 = arith.constant 0 : i32
    %749 = arith.addi %748, %c0_i32_285 : i32
    %750 = arith.index_cast %749 : i32 to index
    %751 = memref.load %arg2[%750] : memref<72xf32, #tpu.memory_space<smem>>
    %752 = vector.broadcast %751 : f32 to vector<8x128xf32>
    %753 = arith.mulf %752, %713 : vector<8x128xf32>
    %754 = arith.addf %738, %753 : vector<8x128xf32>
    %c18_i32_286 = arith.constant 18 : i32
    %755 = arith.addi %2, %c18_i32_286 : i32
    %c6_i32_287 = arith.constant 6 : i32
    %756 = arith.addi %755, %c6_i32_287 : i32
    %c2_i32_288 = arith.constant 2 : i32
    %757 = arith.addi %756, %c2_i32_288 : i32
    %758 = arith.index_cast %757 : i32 to index
    %759 = memref.load %arg2[%758] : memref<72xf32, #tpu.memory_space<smem>>
    %760 = vector.broadcast %759 : f32 to vector<8x128xf32>
    %761 = arith.mulf %760, %714 : vector<8x128xf32>
    %762 = arith.addf %754, %761 : vector<8x128xf32>
    %c18_i32_289 = arith.constant 18 : i32
    %763 = arith.addi %2, %c18_i32_289 : i32
    %c3_i32_290 = arith.constant 3 : i32
    %764 = arith.addi %763, %c3_i32_290 : i32
    %c1_i32_291 = arith.constant 1 : i32
    %765 = arith.addi %764, %c1_i32_291 : i32
    %766 = arith.index_cast %765 : i32 to index
    %767 = memref.load %arg2[%766] : memref<72xf32, #tpu.memory_space<smem>>
    %768 = vector.broadcast %767 : f32 to vector<8x128xf32>
    %769 = arith.mulf %768, %713 : vector<8x128xf32>
    %770 = arith.addf %700, %769 : vector<8x128xf32>
    %c18_i32_292 = arith.constant 18 : i32
    %771 = arith.addi %2, %c18_i32_292 : i32
    %c3_i32_293 = arith.constant 3 : i32
    %772 = arith.addi %771, %c3_i32_293 : i32
    %c0_i32_294 = arith.constant 0 : i32
    %773 = arith.addi %772, %c0_i32_294 : i32
    %774 = arith.index_cast %773 : i32 to index
    %775 = memref.load %arg2[%774] : memref<72xf32, #tpu.memory_space<smem>>
    %776 = vector.broadcast %775 : f32 to vector<8x128xf32>
    %777 = arith.mulf %776, %713 : vector<8x128xf32>
    %778 = arith.addf %708, %777 : vector<8x128xf32>
    %c18_i32_295 = arith.constant 18 : i32
    %779 = arith.addi %2, %c18_i32_295 : i32
    %c3_i32_296 = arith.constant 3 : i32
    %780 = arith.addi %779, %c3_i32_296 : i32
    %c2_i32_297 = arith.constant 2 : i32
    %781 = arith.addi %780, %c2_i32_297 : i32
    %782 = arith.index_cast %781 : i32 to index
    %783 = memref.load %arg2[%782] : memref<72xf32, #tpu.memory_space<smem>>
    %784 = vector.broadcast %783 : f32 to vector<8x128xf32>
    %785 = arith.mulf %784, %714 : vector<8x128xf32>
    %786 = arith.addf %778, %785 : vector<8x128xf32>
    %c0_298 = arith.constant 0 : index
    %c10 = arith.constant 10 : index
    %c0_299 = arith.constant 0 : index
    %c0_300 = arith.constant 0 : index
    %787 = vector.load %arg3[%c0_298, %c10, %c0_299, %c0_300] : memref<1x16x9x129xf32, #tpu.memory_space<vmem>>, vector<1x1x9x129xf32>
    %788 = vector.shape_cast %787 : vector<1x1x9x129xf32> to vector<9x129xf32>
    %789 = vector.extract_strided_slice %788 {offsets = [0, 0], sizes = [8, 128], strides = [1, 1]} : vector<9x129xf32> to vector<8x128xf32>
    %790 = vector.extract_strided_slice %788 {offsets = [0, 1], sizes = [8, 128], strides = [1, 1]} : vector<9x129xf32> to vector<8x128xf32>
    %791 = vector.extract_strided_slice %788 {offsets = [1, 0], sizes = [8, 128], strides = [1, 1]} : vector<9x129xf32> to vector<8x128xf32>
    %792 = vector.extract_strided_slice %788 {offsets = [1, 1], sizes = [8, 128], strides = [1, 1]} : vector<9x129xf32> to vector<8x128xf32>
    %c18_i32_301 = arith.constant 18 : i32
    %793 = arith.addi %2, %c18_i32_301 : i32
    %c3_i32_302 = arith.constant 3 : i32
    %794 = arith.addi %793, %c3_i32_302 : i32
    %c0_i32_303 = arith.constant 0 : i32
    %795 = arith.addi %794, %c0_i32_303 : i32
    %796 = arith.index_cast %795 : i32 to index
    %797 = memref.load %arg2[%796] : memref<72xf32, #tpu.memory_space<smem>>
    %798 = vector.broadcast %797 : f32 to vector<8x128xf32>
    %799 = arith.mulf %798, %789 : vector<8x128xf32>
    %800 = arith.addf %746, %799 : vector<8x128xf32>
    %c18_i32_304 = arith.constant 18 : i32
    %801 = arith.addi %2, %c18_i32_304 : i32
    %c3_i32_305 = arith.constant 3 : i32
    %802 = arith.addi %801, %c3_i32_305 : i32
    %c2_i32_306 = arith.constant 2 : i32
    %803 = arith.addi %802, %c2_i32_306 : i32
    %804 = arith.index_cast %803 : i32 to index
    %805 = memref.load %arg2[%804] : memref<72xf32, #tpu.memory_space<smem>>
    %806 = vector.broadcast %805 : f32 to vector<8x128xf32>
    %807 = arith.mulf %806, %790 : vector<8x128xf32>
    %808 = arith.addf %800, %807 : vector<8x128xf32>
    %c18_i32_307 = arith.constant 18 : i32
    %809 = arith.addi %2, %c18_i32_307 : i32
    %c3_i32_308 = arith.constant 3 : i32
    %810 = arith.addi %809, %c3_i32_308 : i32
    %c1_i32_309 = arith.constant 1 : i32
    %811 = arith.addi %810, %c1_i32_309 : i32
    %812 = arith.index_cast %811 : i32 to index
    %813 = memref.load %arg2[%812] : memref<72xf32, #tpu.memory_space<smem>>
    %814 = vector.broadcast %813 : f32 to vector<8x128xf32>
    %815 = arith.mulf %814, %790 : vector<8x128xf32>
    %816 = arith.addf %762, %815 : vector<8x128xf32>
    %c18_i32_310 = arith.constant 18 : i32
    %817 = arith.addi %2, %c18_i32_310 : i32
    %c0_i32_311 = arith.constant 0 : i32
    %818 = arith.addi %817, %c0_i32_311 : i32
    %c0_i32_312 = arith.constant 0 : i32
    %819 = arith.addi %818, %c0_i32_312 : i32
    %820 = arith.index_cast %819 : i32 to index
    %821 = memref.load %arg2[%820] : memref<72xf32, #tpu.memory_space<smem>>
    %822 = vector.broadcast %821 : f32 to vector<8x128xf32>
    %823 = arith.mulf %822, %789 : vector<8x128xf32>
    %824 = arith.addf %770, %823 : vector<8x128xf32>
    %c18_i32_313 = arith.constant 18 : i32
    %825 = arith.addi %2, %c18_i32_313 : i32
    %c0_i32_314 = arith.constant 0 : i32
    %826 = arith.addi %825, %c0_i32_314 : i32
    %c2_i32_315 = arith.constant 2 : i32
    %827 = arith.addi %826, %c2_i32_315 : i32
    %828 = arith.index_cast %827 : i32 to index
    %829 = memref.load %arg2[%828] : memref<72xf32, #tpu.memory_space<smem>>
    %830 = vector.broadcast %829 : f32 to vector<8x128xf32>
    %831 = arith.mulf %830, %790 : vector<8x128xf32>
    %832 = arith.addf %824, %831 : vector<8x128xf32>
    %c18_i32_316 = arith.constant 18 : i32
    %833 = arith.addi %2, %c18_i32_316 : i32
    %c0_i32_317 = arith.constant 0 : i32
    %834 = arith.addi %833, %c0_i32_317 : i32
    %c1_i32_318 = arith.constant 1 : i32
    %835 = arith.addi %834, %c1_i32_318 : i32
    %836 = arith.index_cast %835 : i32 to index
    %837 = memref.load %arg2[%836] : memref<72xf32, #tpu.memory_space<smem>>
    %838 = vector.broadcast %837 : f32 to vector<8x128xf32>
    %839 = arith.mulf %838, %790 : vector<8x128xf32>
    %840 = arith.addf %786, %839 : vector<8x128xf32>
    %c18_i32_319 = arith.constant 18 : i32
    %841 = arith.addi %2, %c18_i32_319 : i32
    %c6_i32_320 = arith.constant 6 : i32
    %842 = arith.addi %841, %c6_i32_320 : i32
    %c0_i32_321 = arith.constant 0 : i32
    %843 = arith.addi %842, %c0_i32_321 : i32
    %844 = arith.index_cast %843 : i32 to index
    %845 = memref.load %arg2[%844] : memref<72xf32, #tpu.memory_space<smem>>
    %846 = vector.broadcast %845 : f32 to vector<8x128xf32>
    %847 = arith.mulf %846, %791 : vector<8x128xf32>
    %848 = arith.addf %832, %847 : vector<8x128xf32>
    %c18_i32_322 = arith.constant 18 : i32
    %849 = arith.addi %2, %c18_i32_322 : i32
    %c6_i32_323 = arith.constant 6 : i32
    %850 = arith.addi %849, %c6_i32_323 : i32
    %c2_i32_324 = arith.constant 2 : i32
    %851 = arith.addi %850, %c2_i32_324 : i32
    %852 = arith.index_cast %851 : i32 to index
    %853 = memref.load %arg2[%852] : memref<72xf32, #tpu.memory_space<smem>>
    %854 = vector.broadcast %853 : f32 to vector<8x128xf32>
    %855 = arith.mulf %854, %792 : vector<8x128xf32>
    %856 = arith.addf %848, %855 : vector<8x128xf32>
    %c18_i32_325 = arith.constant 18 : i32
    %857 = arith.addi %2, %c18_i32_325 : i32
    %c6_i32_326 = arith.constant 6 : i32
    %858 = arith.addi %857, %c6_i32_326 : i32
    %c1_i32_327 = arith.constant 1 : i32
    %859 = arith.addi %858, %c1_i32_327 : i32
    %860 = arith.index_cast %859 : i32 to index
    %861 = memref.load %arg2[%860] : memref<72xf32, #tpu.memory_space<smem>>
    %862 = vector.broadcast %861 : f32 to vector<8x128xf32>
    %863 = arith.mulf %862, %792 : vector<8x128xf32>
    %864 = arith.addf %840, %863 : vector<8x128xf32>
    %c0_328 = arith.constant 0 : index
    %c11 = arith.constant 11 : index
    %c0_329 = arith.constant 0 : index
    %c0_330 = arith.constant 0 : index
    %865 = vector.load %arg3[%c0_328, %c11, %c0_329, %c0_330] : memref<1x16x9x129xf32, #tpu.memory_space<vmem>>, vector<1x1x9x129xf32>
    %866 = vector.shape_cast %865 : vector<1x1x9x129xf32> to vector<9x129xf32>
    %867 = vector.extract_strided_slice %866 {offsets = [0, 0], sizes = [8, 128], strides = [1, 1]} : vector<9x129xf32> to vector<8x128xf32>
    %868 = vector.extract_strided_slice %866 {offsets = [0, 1], sizes = [8, 128], strides = [1, 1]} : vector<9x129xf32> to vector<8x128xf32>
    %869 = vector.extract_strided_slice %866 {offsets = [1, 0], sizes = [8, 128], strides = [1, 1]} : vector<9x129xf32> to vector<8x128xf32>
    %870 = vector.extract_strided_slice %866 {offsets = [1, 1], sizes = [8, 128], strides = [1, 1]} : vector<9x129xf32> to vector<8x128xf32>
    %c18_i32_331 = arith.constant 18 : i32
    %871 = arith.addi %2, %c18_i32_331 : i32
    %c3_i32_332 = arith.constant 3 : i32
    %872 = arith.addi %871, %c3_i32_332 : i32
    %c1_i32_333 = arith.constant 1 : i32
    %873 = arith.addi %872, %c1_i32_333 : i32
    %874 = arith.index_cast %873 : i32 to index
    %875 = memref.load %arg2[%874] : memref<72xf32, #tpu.memory_space<smem>>
    %876 = vector.broadcast %875 : f32 to vector<8x128xf32>
    %877 = arith.mulf %876, %867 : vector<8x128xf32>
    %878 = arith.addf %808, %877 : vector<8x128xf32>
    %c18_i32_334 = arith.constant 18 : i32
    %879 = arith.addi %2, %c18_i32_334 : i32
    %c3_i32_335 = arith.constant 3 : i32
    %880 = arith.addi %879, %c3_i32_335 : i32
    %c0_i32_336 = arith.constant 0 : i32
    %881 = arith.addi %880, %c0_i32_336 : i32
    %882 = arith.index_cast %881 : i32 to index
    %883 = memref.load %arg2[%882] : memref<72xf32, #tpu.memory_space<smem>>
    %884 = vector.broadcast %883 : f32 to vector<8x128xf32>
    %885 = arith.mulf %884, %867 : vector<8x128xf32>
    %886 = arith.addf %816, %885 : vector<8x128xf32>
    %c18_i32_337 = arith.constant 18 : i32
    %887 = arith.addi %2, %c18_i32_337 : i32
    %c3_i32_338 = arith.constant 3 : i32
    %888 = arith.addi %887, %c3_i32_338 : i32
    %c2_i32_339 = arith.constant 2 : i32
    %889 = arith.addi %888, %c2_i32_339 : i32
    %890 = arith.index_cast %889 : i32 to index
    %891 = memref.load %arg2[%890] : memref<72xf32, #tpu.memory_space<smem>>
    %892 = vector.broadcast %891 : f32 to vector<8x128xf32>
    %893 = arith.mulf %892, %868 : vector<8x128xf32>
    %894 = arith.addf %886, %893 : vector<8x128xf32>
    %c18_i32_340 = arith.constant 18 : i32
    %895 = arith.addi %2, %c18_i32_340 : i32
    %c0_i32_341 = arith.constant 0 : i32
    %896 = arith.addi %895, %c0_i32_341 : i32
    %c1_i32_342 = arith.constant 1 : i32
    %897 = arith.addi %896, %c1_i32_342 : i32
    %898 = arith.index_cast %897 : i32 to index
    %899 = memref.load %arg2[%898] : memref<72xf32, #tpu.memory_space<smem>>
    %900 = vector.broadcast %899 : f32 to vector<8x128xf32>
    %901 = arith.mulf %900, %867 : vector<8x128xf32>
    %902 = arith.addf %856, %901 : vector<8x128xf32>
    %c18_i32_343 = arith.constant 18 : i32
    %903 = arith.addi %2, %c18_i32_343 : i32
    %c0_i32_344 = arith.constant 0 : i32
    %904 = arith.addi %903, %c0_i32_344 : i32
    %c0_i32_345 = arith.constant 0 : i32
    %905 = arith.addi %904, %c0_i32_345 : i32
    %906 = arith.index_cast %905 : i32 to index
    %907 = memref.load %arg2[%906] : memref<72xf32, #tpu.memory_space<smem>>
    %908 = vector.broadcast %907 : f32 to vector<8x128xf32>
    %909 = arith.mulf %908, %867 : vector<8x128xf32>
    %910 = arith.addf %864, %909 : vector<8x128xf32>
    %c18_i32_346 = arith.constant 18 : i32
    %911 = arith.addi %2, %c18_i32_346 : i32
    %c0_i32_347 = arith.constant 0 : i32
    %912 = arith.addi %911, %c0_i32_347 : i32
    %c2_i32_348 = arith.constant 2 : i32
    %913 = arith.addi %912, %c2_i32_348 : i32
    %914 = arith.index_cast %913 : i32 to index
    %915 = memref.load %arg2[%914] : memref<72xf32, #tpu.memory_space<smem>>
    %916 = vector.broadcast %915 : f32 to vector<8x128xf32>
    %917 = arith.mulf %916, %868 : vector<8x128xf32>
    %918 = arith.addf %910, %917 : vector<8x128xf32>
    %c18_i32_349 = arith.constant 18 : i32
    %919 = arith.addi %2, %c18_i32_349 : i32
    %c6_i32_350 = arith.constant 6 : i32
    %920 = arith.addi %919, %c6_i32_350 : i32
    %c1_i32_351 = arith.constant 1 : i32
    %921 = arith.addi %920, %c1_i32_351 : i32
    %922 = arith.index_cast %921 : i32 to index
    %923 = memref.load %arg2[%922] : memref<72xf32, #tpu.memory_space<smem>>
    %924 = vector.broadcast %923 : f32 to vector<8x128xf32>
    %925 = arith.mulf %924, %869 : vector<8x128xf32>
    %926 = arith.addf %902, %925 : vector<8x128xf32>
    %c18_i32_352 = arith.constant 18 : i32
    %927 = arith.addi %2, %c18_i32_352 : i32
    %c6_i32_353 = arith.constant 6 : i32
    %928 = arith.addi %927, %c6_i32_353 : i32
    %c0_i32_354 = arith.constant 0 : i32
    %929 = arith.addi %928, %c0_i32_354 : i32
    %930 = arith.index_cast %929 : i32 to index
    %931 = memref.load %arg2[%930] : memref<72xf32, #tpu.memory_space<smem>>
    %932 = vector.broadcast %931 : f32 to vector<8x128xf32>
    %933 = arith.mulf %932, %869 : vector<8x128xf32>
    %934 = arith.addf %918, %933 : vector<8x128xf32>
    %c18_i32_355 = arith.constant 18 : i32
    %935 = arith.addi %2, %c18_i32_355 : i32
    %c6_i32_356 = arith.constant 6 : i32
    %936 = arith.addi %935, %c6_i32_356 : i32
    %c2_i32_357 = arith.constant 2 : i32
    %937 = arith.addi %936, %c2_i32_357 : i32
    %938 = arith.index_cast %937 : i32 to index
    %939 = memref.load %arg2[%938] : memref<72xf32, #tpu.memory_space<smem>>
    %940 = vector.broadcast %939 : f32 to vector<8x128xf32>
    %941 = arith.mulf %940, %870 : vector<8x128xf32>
    %942 = arith.addf %934, %941 : vector<8x128xf32>
    %c0_358 = arith.constant 0 : index
    %c12 = arith.constant 12 : index
    %c0_359 = arith.constant 0 : index
    %c0_360 = arith.constant 0 : index
    %943 = vector.load %arg3[%c0_358, %c12, %c0_359, %c0_360] : memref<1x16x9x129xf32, #tpu.memory_space<vmem>>, vector<1x1x9x129xf32>
    %944 = vector.shape_cast %943 : vector<1x1x9x129xf32> to vector<9x129xf32>
    %945 = vector.extract_strided_slice %944 {offsets = [0, 0], sizes = [8, 128], strides = [1, 1]} : vector<9x129xf32> to vector<8x128xf32>
    %946 = vector.extract_strided_slice %944 {offsets = [0, 1], sizes = [8, 128], strides = [1, 1]} : vector<9x129xf32> to vector<8x128xf32>
    %947 = vector.extract_strided_slice %944 {offsets = [1, 0], sizes = [8, 128], strides = [1, 1]} : vector<9x129xf32> to vector<8x128xf32>
    %948 = vector.extract_strided_slice %944 {offsets = [1, 1], sizes = [8, 128], strides = [1, 1]} : vector<9x129xf32> to vector<8x128xf32>
    %c27_i32 = arith.constant 27 : i32
    %949 = arith.addi %2, %c27_i32 : i32
    %c0_i32_361 = arith.constant 0 : i32
    %950 = arith.addi %949, %c0_i32_361 : i32
    %c0_i32_362 = arith.constant 0 : i32
    %951 = arith.addi %950, %c0_i32_362 : i32
    %952 = arith.index_cast %951 : i32 to index
    %953 = memref.load %arg2[%952] : memref<72xf32, #tpu.memory_space<smem>>
    %954 = vector.broadcast %953 : f32 to vector<8x128xf32>
    %955 = arith.mulf %954, %945 : vector<8x128xf32>
    %956 = arith.addf %878, %955 : vector<8x128xf32>
    %c27_i32_363 = arith.constant 27 : i32
    %957 = arith.addi %2, %c27_i32_363 : i32
    %c0_i32_364 = arith.constant 0 : i32
    %958 = arith.addi %957, %c0_i32_364 : i32
    %c2_i32_365 = arith.constant 2 : i32
    %959 = arith.addi %958, %c2_i32_365 : i32
    %960 = arith.index_cast %959 : i32 to index
    %961 = memref.load %arg2[%960] : memref<72xf32, #tpu.memory_space<smem>>
    %962 = vector.broadcast %961 : f32 to vector<8x128xf32>
    %963 = arith.mulf %962, %946 : vector<8x128xf32>
    %964 = arith.addf %956, %963 : vector<8x128xf32>
    %c27_i32_366 = arith.constant 27 : i32
    %965 = arith.addi %2, %c27_i32_366 : i32
    %c0_i32_367 = arith.constant 0 : i32
    %966 = arith.addi %965, %c0_i32_367 : i32
    %c1_i32_368 = arith.constant 1 : i32
    %967 = arith.addi %966, %c1_i32_368 : i32
    %968 = arith.index_cast %967 : i32 to index
    %969 = memref.load %arg2[%968] : memref<72xf32, #tpu.memory_space<smem>>
    %970 = vector.broadcast %969 : f32 to vector<8x128xf32>
    %971 = arith.mulf %970, %946 : vector<8x128xf32>
    %972 = arith.addf %894, %971 : vector<8x128xf32>
    %c27_i32_369 = arith.constant 27 : i32
    %973 = arith.addi %2, %c27_i32_369 : i32
    %c6_i32_370 = arith.constant 6 : i32
    %974 = arith.addi %973, %c6_i32_370 : i32
    %c0_i32_371 = arith.constant 0 : i32
    %975 = arith.addi %974, %c0_i32_371 : i32
    %976 = arith.index_cast %975 : i32 to index
    %977 = memref.load %arg2[%976] : memref<72xf32, #tpu.memory_space<smem>>
    %978 = vector.broadcast %977 : f32 to vector<8x128xf32>
    %979 = arith.mulf %978, %947 : vector<8x128xf32>
    %980 = arith.addf %964, %979 : vector<8x128xf32>
    %c27_i32_372 = arith.constant 27 : i32
    %981 = arith.addi %2, %c27_i32_372 : i32
    %c6_i32_373 = arith.constant 6 : i32
    %982 = arith.addi %981, %c6_i32_373 : i32
    %c2_i32_374 = arith.constant 2 : i32
    %983 = arith.addi %982, %c2_i32_374 : i32
    %984 = arith.index_cast %983 : i32 to index
    %985 = memref.load %arg2[%984] : memref<72xf32, #tpu.memory_space<smem>>
    %986 = vector.broadcast %985 : f32 to vector<8x128xf32>
    %987 = arith.mulf %986, %948 : vector<8x128xf32>
    %988 = arith.addf %980, %987 : vector<8x128xf32>
    %c27_i32_375 = arith.constant 27 : i32
    %989 = arith.addi %2, %c27_i32_375 : i32
    %c6_i32_376 = arith.constant 6 : i32
    %990 = arith.addi %989, %c6_i32_376 : i32
    %c1_i32_377 = arith.constant 1 : i32
    %991 = arith.addi %990, %c1_i32_377 : i32
    %992 = arith.index_cast %991 : i32 to index
    %993 = memref.load %arg2[%992] : memref<72xf32, #tpu.memory_space<smem>>
    %994 = vector.broadcast %993 : f32 to vector<8x128xf32>
    %995 = arith.mulf %994, %948 : vector<8x128xf32>
    %996 = arith.addf %972, %995 : vector<8x128xf32>
    %c27_i32_378 = arith.constant 27 : i32
    %997 = arith.addi %2, %c27_i32_378 : i32
    %c3_i32_379 = arith.constant 3 : i32
    %998 = arith.addi %997, %c3_i32_379 : i32
    %c0_i32_380 = arith.constant 0 : i32
    %999 = arith.addi %998, %c0_i32_380 : i32
    %1000 = arith.index_cast %999 : i32 to index
    %1001 = memref.load %arg2[%1000] : memref<72xf32, #tpu.memory_space<smem>>
    %1002 = vector.broadcast %1001 : f32 to vector<8x128xf32>
    %1003 = arith.mulf %1002, %947 : vector<8x128xf32>
    %1004 = arith.addf %926, %1003 : vector<8x128xf32>
    %c27_i32_381 = arith.constant 27 : i32
    %1005 = arith.addi %2, %c27_i32_381 : i32
    %c3_i32_382 = arith.constant 3 : i32
    %1006 = arith.addi %1005, %c3_i32_382 : i32
    %c2_i32_383 = arith.constant 2 : i32
    %1007 = arith.addi %1006, %c2_i32_383 : i32
    %1008 = arith.index_cast %1007 : i32 to index
    %1009 = memref.load %arg2[%1008] : memref<72xf32, #tpu.memory_space<smem>>
    %1010 = vector.broadcast %1009 : f32 to vector<8x128xf32>
    %1011 = arith.mulf %1010, %948 : vector<8x128xf32>
    %1012 = arith.addf %1004, %1011 : vector<8x128xf32>
    %c27_i32_384 = arith.constant 27 : i32
    %1013 = arith.addi %2, %c27_i32_384 : i32
    %c3_i32_385 = arith.constant 3 : i32
    %1014 = arith.addi %1013, %c3_i32_385 : i32
    %c1_i32_386 = arith.constant 1 : i32
    %1015 = arith.addi %1014, %c1_i32_386 : i32
    %1016 = arith.index_cast %1015 : i32 to index
    %1017 = memref.load %arg2[%1016] : memref<72xf32, #tpu.memory_space<smem>>
    %1018 = vector.broadcast %1017 : f32 to vector<8x128xf32>
    %1019 = arith.mulf %1018, %948 : vector<8x128xf32>
    %1020 = arith.addf %942, %1019 : vector<8x128xf32>
    %c0_387 = arith.constant 0 : index
    %c13 = arith.constant 13 : index
    %c0_388 = arith.constant 0 : index
    %c0_389 = arith.constant 0 : index
    %1021 = vector.load %arg3[%c0_387, %c13, %c0_388, %c0_389] : memref<1x16x9x129xf32, #tpu.memory_space<vmem>>, vector<1x1x9x129xf32>
    %1022 = vector.shape_cast %1021 : vector<1x1x9x129xf32> to vector<9x129xf32>
    %1023 = vector.extract_strided_slice %1022 {offsets = [0, 0], sizes = [8, 128], strides = [1, 1]} : vector<9x129xf32> to vector<8x128xf32>
    %1024 = vector.extract_strided_slice %1022 {offsets = [0, 1], sizes = [8, 128], strides = [1, 1]} : vector<9x129xf32> to vector<8x128xf32>
    %1025 = vector.extract_strided_slice %1022 {offsets = [1, 0], sizes = [8, 128], strides = [1, 1]} : vector<9x129xf32> to vector<8x128xf32>
    %1026 = vector.extract_strided_slice %1022 {offsets = [1, 1], sizes = [8, 128], strides = [1, 1]} : vector<9x129xf32> to vector<8x128xf32>
    %c27_i32_390 = arith.constant 27 : i32
    %1027 = arith.addi %2, %c27_i32_390 : i32
    %c0_i32_391 = arith.constant 0 : i32
    %1028 = arith.addi %1027, %c0_i32_391 : i32
    %c1_i32_392 = arith.constant 1 : i32
    %1029 = arith.addi %1028, %c1_i32_392 : i32
    %1030 = arith.index_cast %1029 : i32 to index
    %1031 = memref.load %arg2[%1030] : memref<72xf32, #tpu.memory_space<smem>>
    %1032 = vector.broadcast %1031 : f32 to vector<8x128xf32>
    %1033 = arith.mulf %1032, %1023 : vector<8x128xf32>
    %1034 = arith.addf %988, %1033 : vector<8x128xf32>
    %c27_i32_393 = arith.constant 27 : i32
    %1035 = arith.addi %2, %c27_i32_393 : i32
    %c0_i32_394 = arith.constant 0 : i32
    %1036 = arith.addi %1035, %c0_i32_394 : i32
    %c0_i32_395 = arith.constant 0 : i32
    %1037 = arith.addi %1036, %c0_i32_395 : i32
    %1038 = arith.index_cast %1037 : i32 to index
    %1039 = memref.load %arg2[%1038] : memref<72xf32, #tpu.memory_space<smem>>
    %1040 = vector.broadcast %1039 : f32 to vector<8x128xf32>
    %1041 = arith.mulf %1040, %1023 : vector<8x128xf32>
    %1042 = arith.addf %996, %1041 : vector<8x128xf32>
    %c27_i32_396 = arith.constant 27 : i32
    %1043 = arith.addi %2, %c27_i32_396 : i32
    %c0_i32_397 = arith.constant 0 : i32
    %1044 = arith.addi %1043, %c0_i32_397 : i32
    %c2_i32_398 = arith.constant 2 : i32
    %1045 = arith.addi %1044, %c2_i32_398 : i32
    %1046 = arith.index_cast %1045 : i32 to index
    %1047 = memref.load %arg2[%1046] : memref<72xf32, #tpu.memory_space<smem>>
    %1048 = vector.broadcast %1047 : f32 to vector<8x128xf32>
    %1049 = arith.mulf %1048, %1024 : vector<8x128xf32>
    %1050 = arith.addf %1042, %1049 : vector<8x128xf32>
    %c27_i32_399 = arith.constant 27 : i32
    %1051 = arith.addi %2, %c27_i32_399 : i32
    %c6_i32_400 = arith.constant 6 : i32
    %1052 = arith.addi %1051, %c6_i32_400 : i32
    %c1_i32_401 = arith.constant 1 : i32
    %1053 = arith.addi %1052, %c1_i32_401 : i32
    %1054 = arith.index_cast %1053 : i32 to index
    %1055 = memref.load %arg2[%1054] : memref<72xf32, #tpu.memory_space<smem>>
    %1056 = vector.broadcast %1055 : f32 to vector<8x128xf32>
    %1057 = arith.mulf %1056, %1025 : vector<8x128xf32>
    %1058 = arith.addf %1034, %1057 : vector<8x128xf32>
    %c27_i32_402 = arith.constant 27 : i32
    %1059 = arith.addi %2, %c27_i32_402 : i32
    %c6_i32_403 = arith.constant 6 : i32
    %1060 = arith.addi %1059, %c6_i32_403 : i32
    %c0_i32_404 = arith.constant 0 : i32
    %1061 = arith.addi %1060, %c0_i32_404 : i32
    %1062 = arith.index_cast %1061 : i32 to index
    %1063 = memref.load %arg2[%1062] : memref<72xf32, #tpu.memory_space<smem>>
    %1064 = vector.broadcast %1063 : f32 to vector<8x128xf32>
    %1065 = arith.mulf %1064, %1025 : vector<8x128xf32>
    %1066 = arith.addf %1050, %1065 : vector<8x128xf32>
    %c27_i32_405 = arith.constant 27 : i32
    %1067 = arith.addi %2, %c27_i32_405 : i32
    %c6_i32_406 = arith.constant 6 : i32
    %1068 = arith.addi %1067, %c6_i32_406 : i32
    %c2_i32_407 = arith.constant 2 : i32
    %1069 = arith.addi %1068, %c2_i32_407 : i32
    %1070 = arith.index_cast %1069 : i32 to index
    %1071 = memref.load %arg2[%1070] : memref<72xf32, #tpu.memory_space<smem>>
    %1072 = vector.broadcast %1071 : f32 to vector<8x128xf32>
    %1073 = arith.mulf %1072, %1026 : vector<8x128xf32>
    %1074 = arith.addf %1066, %1073 : vector<8x128xf32>
    %c27_i32_408 = arith.constant 27 : i32
    %1075 = arith.addi %2, %c27_i32_408 : i32
    %c3_i32_409 = arith.constant 3 : i32
    %1076 = arith.addi %1075, %c3_i32_409 : i32
    %c1_i32_410 = arith.constant 1 : i32
    %1077 = arith.addi %1076, %c1_i32_410 : i32
    %1078 = arith.index_cast %1077 : i32 to index
    %1079 = memref.load %arg2[%1078] : memref<72xf32, #tpu.memory_space<smem>>
    %1080 = vector.broadcast %1079 : f32 to vector<8x128xf32>
    %1081 = arith.mulf %1080, %1025 : vector<8x128xf32>
    %1082 = arith.addf %1012, %1081 : vector<8x128xf32>
    %c27_i32_411 = arith.constant 27 : i32
    %1083 = arith.addi %2, %c27_i32_411 : i32
    %c3_i32_412 = arith.constant 3 : i32
    %1084 = arith.addi %1083, %c3_i32_412 : i32
    %c0_i32_413 = arith.constant 0 : i32
    %1085 = arith.addi %1084, %c0_i32_413 : i32
    %1086 = arith.index_cast %1085 : i32 to index
    %1087 = memref.load %arg2[%1086] : memref<72xf32, #tpu.memory_space<smem>>
    %1088 = vector.broadcast %1087 : f32 to vector<8x128xf32>
    %1089 = arith.mulf %1088, %1025 : vector<8x128xf32>
    %1090 = arith.addf %1020, %1089 : vector<8x128xf32>
    %c27_i32_414 = arith.constant 27 : i32
    %1091 = arith.addi %2, %c27_i32_414 : i32
    %c3_i32_415 = arith.constant 3 : i32
    %1092 = arith.addi %1091, %c3_i32_415 : i32
    %c2_i32_416 = arith.constant 2 : i32
    %1093 = arith.addi %1092, %c2_i32_416 : i32
    %1094 = arith.index_cast %1093 : i32 to index
    %1095 = memref.load %arg2[%1094] : memref<72xf32, #tpu.memory_space<smem>>
    %1096 = vector.broadcast %1095 : f32 to vector<8x128xf32>
    %1097 = arith.mulf %1096, %1026 : vector<8x128xf32>
    %1098 = arith.addf %1090, %1097 : vector<8x128xf32>
    %c0_417 = arith.constant 0 : index
    %c14 = arith.constant 14 : index
    %c0_418 = arith.constant 0 : index
    %c0_419 = arith.constant 0 : index
    %1099 = vector.load %arg3[%c0_417, %c14, %c0_418, %c0_419] : memref<1x16x9x129xf32, #tpu.memory_space<vmem>>, vector<1x1x9x129xf32>
    %1100 = vector.shape_cast %1099 : vector<1x1x9x129xf32> to vector<9x129xf32>
    %1101 = vector.extract_strided_slice %1100 {offsets = [0, 0], sizes = [8, 128], strides = [1, 1]} : vector<9x129xf32> to vector<8x128xf32>
    %1102 = vector.extract_strided_slice %1100 {offsets = [0, 1], sizes = [8, 128], strides = [1, 1]} : vector<9x129xf32> to vector<8x128xf32>
    %1103 = vector.extract_strided_slice %1100 {offsets = [1, 0], sizes = [8, 128], strides = [1, 1]} : vector<9x129xf32> to vector<8x128xf32>
    %1104 = vector.extract_strided_slice %1100 {offsets = [1, 1], sizes = [8, 128], strides = [1, 1]} : vector<9x129xf32> to vector<8x128xf32>
    %c27_i32_420 = arith.constant 27 : i32
    %1105 = arith.addi %2, %c27_i32_420 : i32
    %c3_i32_421 = arith.constant 3 : i32
    %1106 = arith.addi %1105, %c3_i32_421 : i32
    %c0_i32_422 = arith.constant 0 : i32
    %1107 = arith.addi %1106, %c0_i32_422 : i32
    %1108 = arith.index_cast %1107 : i32 to index
    %1109 = memref.load %arg2[%1108] : memref<72xf32, #tpu.memory_space<smem>>
    %1110 = vector.broadcast %1109 : f32 to vector<8x128xf32>
    %1111 = arith.mulf %1110, %1101 : vector<8x128xf32>
    %1112 = arith.addf %1058, %1111 : vector<8x128xf32>
    %c27_i32_423 = arith.constant 27 : i32
    %1113 = arith.addi %2, %c27_i32_423 : i32
    %c3_i32_424 = arith.constant 3 : i32
    %1114 = arith.addi %1113, %c3_i32_424 : i32
    %c2_i32_425 = arith.constant 2 : i32
    %1115 = arith.addi %1114, %c2_i32_425 : i32
    %1116 = arith.index_cast %1115 : i32 to index
    %1117 = memref.load %arg2[%1116] : memref<72xf32, #tpu.memory_space<smem>>
    %1118 = vector.broadcast %1117 : f32 to vector<8x128xf32>
    %1119 = arith.mulf %1118, %1102 : vector<8x128xf32>
    %1120 = arith.addf %1112, %1119 : vector<8x128xf32>
    %c27_i32_426 = arith.constant 27 : i32
    %1121 = arith.addi %2, %c27_i32_426 : i32
    %c3_i32_427 = arith.constant 3 : i32
    %1122 = arith.addi %1121, %c3_i32_427 : i32
    %c1_i32_428 = arith.constant 1 : i32
    %1123 = arith.addi %1122, %c1_i32_428 : i32
    %1124 = arith.index_cast %1123 : i32 to index
    %1125 = memref.load %arg2[%1124] : memref<72xf32, #tpu.memory_space<smem>>
    %1126 = vector.broadcast %1125 : f32 to vector<8x128xf32>
    %1127 = arith.mulf %1126, %1102 : vector<8x128xf32>
    %1128 = arith.addf %1074, %1127 : vector<8x128xf32>
    %c27_i32_429 = arith.constant 27 : i32
    %1129 = arith.addi %2, %c27_i32_429 : i32
    %c0_i32_430 = arith.constant 0 : i32
    %1130 = arith.addi %1129, %c0_i32_430 : i32
    %c0_i32_431 = arith.constant 0 : i32
    %1131 = arith.addi %1130, %c0_i32_431 : i32
    %1132 = arith.index_cast %1131 : i32 to index
    %1133 = memref.load %arg2[%1132] : memref<72xf32, #tpu.memory_space<smem>>
    %1134 = vector.broadcast %1133 : f32 to vector<8x128xf32>
    %1135 = arith.mulf %1134, %1101 : vector<8x128xf32>
    %1136 = arith.addf %1082, %1135 : vector<8x128xf32>
    %c27_i32_432 = arith.constant 27 : i32
    %1137 = arith.addi %2, %c27_i32_432 : i32
    %c0_i32_433 = arith.constant 0 : i32
    %1138 = arith.addi %1137, %c0_i32_433 : i32
    %c2_i32_434 = arith.constant 2 : i32
    %1139 = arith.addi %1138, %c2_i32_434 : i32
    %1140 = arith.index_cast %1139 : i32 to index
    %1141 = memref.load %arg2[%1140] : memref<72xf32, #tpu.memory_space<smem>>
    %1142 = vector.broadcast %1141 : f32 to vector<8x128xf32>
    %1143 = arith.mulf %1142, %1102 : vector<8x128xf32>
    %1144 = arith.addf %1136, %1143 : vector<8x128xf32>
    %c27_i32_435 = arith.constant 27 : i32
    %1145 = arith.addi %2, %c27_i32_435 : i32
    %c0_i32_436 = arith.constant 0 : i32
    %1146 = arith.addi %1145, %c0_i32_436 : i32
    %c1_i32_437 = arith.constant 1 : i32
    %1147 = arith.addi %1146, %c1_i32_437 : i32
    %1148 = arith.index_cast %1147 : i32 to index
    %1149 = memref.load %arg2[%1148] : memref<72xf32, #tpu.memory_space<smem>>
    %1150 = vector.broadcast %1149 : f32 to vector<8x128xf32>
    %1151 = arith.mulf %1150, %1102 : vector<8x128xf32>
    %1152 = arith.addf %1098, %1151 : vector<8x128xf32>
    %c27_i32_438 = arith.constant 27 : i32
    %1153 = arith.addi %2, %c27_i32_438 : i32
    %c6_i32_439 = arith.constant 6 : i32
    %1154 = arith.addi %1153, %c6_i32_439 : i32
    %c0_i32_440 = arith.constant 0 : i32
    %1155 = arith.addi %1154, %c0_i32_440 : i32
    %1156 = arith.index_cast %1155 : i32 to index
    %1157 = memref.load %arg2[%1156] : memref<72xf32, #tpu.memory_space<smem>>
    %1158 = vector.broadcast %1157 : f32 to vector<8x128xf32>
    %1159 = arith.mulf %1158, %1103 : vector<8x128xf32>
    %1160 = arith.addf %1144, %1159 : vector<8x128xf32>
    %c27_i32_441 = arith.constant 27 : i32
    %1161 = arith.addi %2, %c27_i32_441 : i32
    %c6_i32_442 = arith.constant 6 : i32
    %1162 = arith.addi %1161, %c6_i32_442 : i32
    %c2_i32_443 = arith.constant 2 : i32
    %1163 = arith.addi %1162, %c2_i32_443 : i32
    %1164 = arith.index_cast %1163 : i32 to index
    %1165 = memref.load %arg2[%1164] : memref<72xf32, #tpu.memory_space<smem>>
    %1166 = vector.broadcast %1165 : f32 to vector<8x128xf32>
    %1167 = arith.mulf %1166, %1104 : vector<8x128xf32>
    %1168 = arith.addf %1160, %1167 : vector<8x128xf32>
    %c27_i32_444 = arith.constant 27 : i32
    %1169 = arith.addi %2, %c27_i32_444 : i32
    %c6_i32_445 = arith.constant 6 : i32
    %1170 = arith.addi %1169, %c6_i32_445 : i32
    %c1_i32_446 = arith.constant 1 : i32
    %1171 = arith.addi %1170, %c1_i32_446 : i32
    %1172 = arith.index_cast %1171 : i32 to index
    %1173 = memref.load %arg2[%1172] : memref<72xf32, #tpu.memory_space<smem>>
    %1174 = vector.broadcast %1173 : f32 to vector<8x128xf32>
    %1175 = arith.mulf %1174, %1104 : vector<8x128xf32>
    %1176 = arith.addf %1152, %1175 : vector<8x128xf32>
    %c0_447 = arith.constant 0 : index
    %c15 = arith.constant 15 : index
    %c0_448 = arith.constant 0 : index
    %c0_449 = arith.constant 0 : index
    %1177 = vector.load %arg3[%c0_447, %c15, %c0_448, %c0_449] : memref<1x16x9x129xf32, #tpu.memory_space<vmem>>, vector<1x1x9x129xf32>
    %1178 = vector.shape_cast %1177 : vector<1x1x9x129xf32> to vector<9x129xf32>
    %1179 = vector.extract_strided_slice %1178 {offsets = [0, 0], sizes = [8, 128], strides = [1, 1]} : vector<9x129xf32> to vector<8x128xf32>
    %1180 = vector.extract_strided_slice %1178 {offsets = [0, 1], sizes = [8, 128], strides = [1, 1]} : vector<9x129xf32> to vector<8x128xf32>
    %1181 = vector.extract_strided_slice %1178 {offsets = [1, 0], sizes = [8, 128], strides = [1, 1]} : vector<9x129xf32> to vector<8x128xf32>
    %1182 = vector.extract_strided_slice %1178 {offsets = [1, 1], sizes = [8, 128], strides = [1, 1]} : vector<9x129xf32> to vector<8x128xf32>
    %c27_i32_450 = arith.constant 27 : i32
    %1183 = arith.addi %2, %c27_i32_450 : i32
    %c3_i32_451 = arith.constant 3 : i32
    %1184 = arith.addi %1183, %c3_i32_451 : i32
    %c1_i32_452 = arith.constant 1 : i32
    %1185 = arith.addi %1184, %c1_i32_452 : i32
    %1186 = arith.index_cast %1185 : i32 to index
    %1187 = memref.load %arg2[%1186] : memref<72xf32, #tpu.memory_space<smem>>
    %1188 = vector.broadcast %1187 : f32 to vector<8x128xf32>
    %1189 = arith.mulf %1188, %1179 : vector<8x128xf32>
    %1190 = arith.addf %1120, %1189 : vector<8x128xf32>
    %c27_i32_453 = arith.constant 27 : i32
    %1191 = arith.addi %2, %c27_i32_453 : i32
    %c3_i32_454 = arith.constant 3 : i32
    %1192 = arith.addi %1191, %c3_i32_454 : i32
    %c0_i32_455 = arith.constant 0 : i32
    %1193 = arith.addi %1192, %c0_i32_455 : i32
    %1194 = arith.index_cast %1193 : i32 to index
    %1195 = memref.load %arg2[%1194] : memref<72xf32, #tpu.memory_space<smem>>
    %1196 = vector.broadcast %1195 : f32 to vector<8x128xf32>
    %1197 = arith.mulf %1196, %1179 : vector<8x128xf32>
    %1198 = arith.addf %1128, %1197 : vector<8x128xf32>
    %c27_i32_456 = arith.constant 27 : i32
    %1199 = arith.addi %2, %c27_i32_456 : i32
    %c3_i32_457 = arith.constant 3 : i32
    %1200 = arith.addi %1199, %c3_i32_457 : i32
    %c2_i32_458 = arith.constant 2 : i32
    %1201 = arith.addi %1200, %c2_i32_458 : i32
    %1202 = arith.index_cast %1201 : i32 to index
    %1203 = memref.load %arg2[%1202] : memref<72xf32, #tpu.memory_space<smem>>
    %1204 = vector.broadcast %1203 : f32 to vector<8x128xf32>
    %1205 = arith.mulf %1204, %1180 : vector<8x128xf32>
    %1206 = arith.addf %1198, %1205 : vector<8x128xf32>
    %c27_i32_459 = arith.constant 27 : i32
    %1207 = arith.addi %2, %c27_i32_459 : i32
    %c0_i32_460 = arith.constant 0 : i32
    %1208 = arith.addi %1207, %c0_i32_460 : i32
    %c1_i32_461 = arith.constant 1 : i32
    %1209 = arith.addi %1208, %c1_i32_461 : i32
    %1210 = arith.index_cast %1209 : i32 to index
    %1211 = memref.load %arg2[%1210] : memref<72xf32, #tpu.memory_space<smem>>
    %1212 = vector.broadcast %1211 : f32 to vector<8x128xf32>
    %1213 = arith.mulf %1212, %1179 : vector<8x128xf32>
    %1214 = arith.addf %1168, %1213 : vector<8x128xf32>
    %c27_i32_462 = arith.constant 27 : i32
    %1215 = arith.addi %2, %c27_i32_462 : i32
    %c0_i32_463 = arith.constant 0 : i32
    %1216 = arith.addi %1215, %c0_i32_463 : i32
    %c0_i32_464 = arith.constant 0 : i32
    %1217 = arith.addi %1216, %c0_i32_464 : i32
    %1218 = arith.index_cast %1217 : i32 to index
    %1219 = memref.load %arg2[%1218] : memref<72xf32, #tpu.memory_space<smem>>
    %1220 = vector.broadcast %1219 : f32 to vector<8x128xf32>
    %1221 = arith.mulf %1220, %1179 : vector<8x128xf32>
    %1222 = arith.addf %1176, %1221 : vector<8x128xf32>
    %c27_i32_465 = arith.constant 27 : i32
    %1223 = arith.addi %2, %c27_i32_465 : i32
    %c0_i32_466 = arith.constant 0 : i32
    %1224 = arith.addi %1223, %c0_i32_466 : i32
    %c2_i32_467 = arith.constant 2 : i32
    %1225 = arith.addi %1224, %c2_i32_467 : i32
    %1226 = arith.index_cast %1225 : i32 to index
    %1227 = memref.load %arg2[%1226] : memref<72xf32, #tpu.memory_space<smem>>
    %1228 = vector.broadcast %1227 : f32 to vector<8x128xf32>
    %1229 = arith.mulf %1228, %1180 : vector<8x128xf32>
    %1230 = arith.addf %1222, %1229 : vector<8x128xf32>
    %c27_i32_468 = arith.constant 27 : i32
    %1231 = arith.addi %2, %c27_i32_468 : i32
    %c6_i32_469 = arith.constant 6 : i32
    %1232 = arith.addi %1231, %c6_i32_469 : i32
    %c1_i32_470 = arith.constant 1 : i32
    %1233 = arith.addi %1232, %c1_i32_470 : i32
    %1234 = arith.index_cast %1233 : i32 to index
    %1235 = memref.load %arg2[%1234] : memref<72xf32, #tpu.memory_space<smem>>
    %1236 = vector.broadcast %1235 : f32 to vector<8x128xf32>
    %1237 = arith.mulf %1236, %1181 : vector<8x128xf32>
    %1238 = arith.addf %1214, %1237 : vector<8x128xf32>
    %c27_i32_471 = arith.constant 27 : i32
    %1239 = arith.addi %2, %c27_i32_471 : i32
    %c6_i32_472 = arith.constant 6 : i32
    %1240 = arith.addi %1239, %c6_i32_472 : i32
    %c0_i32_473 = arith.constant 0 : i32
    %1241 = arith.addi %1240, %c0_i32_473 : i32
    %1242 = arith.index_cast %1241 : i32 to index
    %1243 = memref.load %arg2[%1242] : memref<72xf32, #tpu.memory_space<smem>>
    %1244 = vector.broadcast %1243 : f32 to vector<8x128xf32>
    %1245 = arith.mulf %1244, %1181 : vector<8x128xf32>
    %1246 = arith.addf %1230, %1245 : vector<8x128xf32>
    %c27_i32_474 = arith.constant 27 : i32
    %1247 = arith.addi %2, %c27_i32_474 : i32
    %c6_i32_475 = arith.constant 6 : i32
    %1248 = arith.addi %1247, %c6_i32_475 : i32
    %c2_i32_476 = arith.constant 2 : i32
    %1249 = arith.addi %1248, %c2_i32_476 : i32
    %1250 = arith.index_cast %1249 : i32 to index
    %1251 = memref.load %arg2[%1250] : memref<72xf32, #tpu.memory_space<smem>>
    %1252 = vector.broadcast %1251 : f32 to vector<8x128xf32>
    %1253 = arith.mulf %1252, %1182 : vector<8x128xf32>
    %1254 = arith.addf %1246, %1253 : vector<8x128xf32>
    %c0_477 = arith.constant 0 : index
    %c0_478 = arith.constant 0 : index
    %c0_479 = arith.constant 0 : index
    %c0_480 = arith.constant 0 : index
    %1255 = vector.load %arg4[%c0_477, %c0_478, %c0_479, %c0_480] : memref<1x8x8x128xf32, #tpu.memory_space<vmem>>, vector<1x1x8x128xf32>
    %1256 = vector.shape_cast %1255 : vector<1x1x8x128xf32> to vector<8x128xf32>
    %1257 = vector.shape_cast %1190 : vector<8x128xf32> to vector<1x1x8x128xf32>
    tpu.vector_store %arg4[%c0_477, %c0_478, %c0_479, %c0_480], %1257 {strides = array<i32>} : memref<1x8x8x128xf32, #tpu.memory_space<vmem>>, vector<1x1x8x128xf32>,
    %c0_481 = arith.constant 0 : index
    %c1_482 = arith.constant 1 : index
    %c0_483 = arith.constant 0 : index
    %c0_484 = arith.constant 0 : index
    %1258 = vector.load %arg4[%c0_481, %c1_482, %c0_483, %c0_484] : memref<1x8x8x128xf32, #tpu.memory_space<vmem>>, vector<1x1x8x128xf32>
    %1259 = vector.shape_cast %1258 : vector<1x1x8x128xf32> to vector<8x128xf32>
    %1260 = vector.shape_cast %1206 : vector<8x128xf32> to vector<1x1x8x128xf32>
    tpu.vector_store %arg4[%c0_481, %c1_482, %c0_483, %c0_484], %1260 {strides = array<i32>} : memref<1x8x8x128xf32, #tpu.memory_space<vmem>>, vector<1x1x8x128xf32>,
    %c0_485 = arith.constant 0 : index
    %c2_486 = arith.constant 2 : index
    %c0_487 = arith.constant 0 : index
    %c0_488 = arith.constant 0 : index
    %1261 = vector.load %arg4[%c0_485, %c2_486, %c0_487, %c0_488] : memref<1x8x8x128xf32, #tpu.memory_space<vmem>>, vector<1x1x8x128xf32>
    %1262 = vector.shape_cast %1261 : vector<1x1x8x128xf32> to vector<8x128xf32>
    %1263 = vector.shape_cast %1238 : vector<8x128xf32> to vector<1x1x8x128xf32>
    tpu.vector_store %arg4[%c0_485, %c2_486, %c0_487, %c0_488], %1263 {strides = array<i32>} : memref<1x8x8x128xf32, #tpu.memory_space<vmem>>, vector<1x1x8x128xf32>,
    %c0_489 = arith.constant 0 : index
    %c3_490 = arith.constant 3 : index
    %c0_491 = arith.constant 0 : index
    %c0_492 = arith.constant 0 : index
    %1264 = vector.load %arg4[%c0_489, %c3_490, %c0_491, %c0_492] : memref<1x8x8x128xf32, #tpu.memory_space<vmem>>, vector<1x1x8x128xf32>
    %1265 = vector.shape_cast %1264 : vector<1x1x8x128xf32> to vector<8x128xf32>
    %1266 = vector.shape_cast %1254 : vector<8x128xf32> to vector<1x1x8x128xf32>
    tpu.vector_store %arg4[%c0_489, %c3_490, %c0_491, %c0_492], %1266 {strides = array<i32>} : memref<1x8x8x128xf32, #tpu.memory_space<vmem>>, vector<1x1x8x128xf32>,
    %c2_i32_493 = arith.constant 2 : i32
    %1267 = arith.muli %arg1, %c2_i32_493 : i32
    %c1_i32_494 = arith.constant 1 : i32
    %1268 = arith.addi %1267, %c1_i32_494 : i32
    %c36_i32_495 = arith.constant 36 : i32
    %1269 = arith.muli %1268, %c36_i32_495 : i32
    %cst_496 = arith.constant 0.000000e+00 : f32
    %1270 = vector.broadcast %cst_496 : f32 to vector<8x128xf32>
    %cst_497 = arith.constant 0.000000e+00 : f32
    %1271 = vector.broadcast %cst_497 : f32 to vector<8x128xf32>
    %cst_498 = arith.constant 0.000000e+00 : f32
    %1272 = vector.broadcast %cst_498 : f32 to vector<8x128xf32>
    %cst_499 = arith.constant 0.000000e+00 : f32
    %1273 = vector.broadcast %cst_499 : f32 to vector<8x128xf32>
    %c0_500 = arith.constant 0 : index
    %c0_501 = arith.constant 0 : index
    %c0_502 = arith.constant 0 : index
    %c0_503 = arith.constant 0 : index
    %1274 = vector.load %arg3[%c0_500, %c0_501, %c0_502, %c0_503] : memref<1x16x9x129xf32, #tpu.memory_space<vmem>>, vector<1x1x9x129xf32>
    %1275 = vector.shape_cast %1274 : vector<1x1x9x129xf32> to vector<9x129xf32>
    %1276 = vector.extract_strided_slice %1275 {offsets = [0, 0], sizes = [8, 128], strides = [1, 1]} : vector<9x129xf32> to vector<8x128xf32>
    %1277 = vector.extract_strided_slice %1275 {offsets = [0, 1], sizes = [8, 128], strides = [1, 1]} : vector<9x129xf32> to vector<8x128xf32>
    %1278 = vector.extract_strided_slice %1275 {offsets = [1, 0], sizes = [8, 128], strides = [1, 1]} : vector<9x129xf32> to vector<8x128xf32>
    %1279 = vector.extract_strided_slice %1275 {offsets = [1, 1], sizes = [8, 128], strides = [1, 1]} : vector<9x129xf32> to vector<8x128xf32>
    %c0_i32_504 = arith.constant 0 : i32
    %1280 = arith.addi %1269, %c0_i32_504 : i32
    %c0_i32_505 = arith.constant 0 : i32
    %1281 = arith.addi %1280, %c0_i32_505 : i32
    %c0_i32_506 = arith.constant 0 : i32
    %1282 = arith.addi %1281, %c0_i32_506 : i32
    %1283 = arith.index_cast %1282 : i32 to index
    %1284 = memref.load %arg2[%1283] : memref<72xf32, #tpu.memory_space<smem>>
    %1285 = vector.broadcast %1284 : f32 to vector<8x128xf32>
    %1286 = arith.mulf %1285, %1276 : vector<8x128xf32>
    %1287 = arith.addf %1270, %1286 : vector<8x128xf32>
    %c0_i32_507 = arith.constant 0 : i32
    %1288 = arith.addi %1269, %c0_i32_507 : i32
    %c0_i32_508 = arith.constant 0 : i32
    %1289 = arith.addi %1288, %c0_i32_508 : i32
    %c2_i32_509 = arith.constant 2 : i32
    %1290 = arith.addi %1289, %c2_i32_509 : i32
    %1291 = arith.index_cast %1290 : i32 to index
    %1292 = memref.load %arg2[%1291] : memref<72xf32, #tpu.memory_space<smem>>
    %1293 = vector.broadcast %1292 : f32 to vector<8x128xf32>
    %1294 = arith.mulf %1293, %1277 : vector<8x128xf32>
    %1295 = arith.addf %1287, %1294 : vector<8x128xf32>
    %c0_i32_510 = arith.constant 0 : i32
    %1296 = arith.addi %1269, %c0_i32_510 : i32
    %c0_i32_511 = arith.constant 0 : i32
    %1297 = arith.addi %1296, %c0_i32_511 : i32
    %c1_i32_512 = arith.constant 1 : i32
    %1298 = arith.addi %1297, %c1_i32_512 : i32
    %1299 = arith.index_cast %1298 : i32 to index
    %1300 = memref.load %arg2[%1299] : memref<72xf32, #tpu.memory_space<smem>>
    %1301 = vector.broadcast %1300 : f32 to vector<8x128xf32>
    %1302 = arith.mulf %1301, %1277 : vector<8x128xf32>
    %1303 = arith.addf %1271, %1302 : vector<8x128xf32>
    %c0_i32_513 = arith.constant 0 : i32
    %1304 = arith.addi %1269, %c0_i32_513 : i32
    %c6_i32_514 = arith.constant 6 : i32
    %1305 = arith.addi %1304, %c6_i32_514 : i32
    %c0_i32_515 = arith.constant 0 : i32
    %1306 = arith.addi %1305, %c0_i32_515 : i32
    %1307 = arith.index_cast %1306 : i32 to index
    %1308 = memref.load %arg2[%1307] : memref<72xf32, #tpu.memory_space<smem>>
    %1309 = vector.broadcast %1308 : f32 to vector<8x128xf32>
    %1310 = arith.mulf %1309, %1278 : vector<8x128xf32>
    %1311 = arith.addf %1295, %1310 : vector<8x128xf32>
    %c0_i32_516 = arith.constant 0 : i32
    %1312 = arith.addi %1269, %c0_i32_516 : i32
    %c6_i32_517 = arith.constant 6 : i32
    %1313 = arith.addi %1312, %c6_i32_517 : i32
    %c2_i32_518 = arith.constant 2 : i32
    %1314 = arith.addi %1313, %c2_i32_518 : i32
    %1315 = arith.index_cast %1314 : i32 to index
    %1316 = memref.load %arg2[%1315] : memref<72xf32, #tpu.memory_space<smem>>
    %1317 = vector.broadcast %1316 : f32 to vector<8x128xf32>
    %1318 = arith.mulf %1317, %1279 : vector<8x128xf32>
    %1319 = arith.addf %1311, %1318 : vector<8x128xf32>
    %c0_i32_519 = arith.constant 0 : i32
    %1320 = arith.addi %1269, %c0_i32_519 : i32
    %c6_i32_520 = arith.constant 6 : i32
    %1321 = arith.addi %1320, %c6_i32_520 : i32
    %c1_i32_521 = arith.constant 1 : i32
    %1322 = arith.addi %1321, %c1_i32_521 : i32
    %1323 = arith.index_cast %1322 : i32 to index
    %1324 = memref.load %arg2[%1323] : memref<72xf32, #tpu.memory_space<smem>>
    %1325 = vector.broadcast %1324 : f32 to vector<8x128xf32>
    %1326 = arith.mulf %1325, %1279 : vector<8x128xf32>
    %1327 = arith.addf %1303, %1326 : vector<8x128xf32>
    %c0_i32_522 = arith.constant 0 : i32
    %1328 = arith.addi %1269, %c0_i32_522 : i32
    %c3_i32_523 = arith.constant 3 : i32
    %1329 = arith.addi %1328, %c3_i32_523 : i32
    %c0_i32_524 = arith.constant 0 : i32
    %1330 = arith.addi %1329, %c0_i32_524 : i32
    %1331 = arith.index_cast %1330 : i32 to index
    %1332 = memref.load %arg2[%1331] : memref<72xf32, #tpu.memory_space<smem>>
    %1333 = vector.broadcast %1332 : f32 to vector<8x128xf32>
    %1334 = arith.mulf %1333, %1278 : vector<8x128xf32>
    %1335 = arith.addf %1272, %1334 : vector<8x128xf32>
    %c0_i32_525 = arith.constant 0 : i32
    %1336 = arith.addi %1269, %c0_i32_525 : i32
    %c3_i32_526 = arith.constant 3 : i32
    %1337 = arith.addi %1336, %c3_i32_526 : i32
    %c2_i32_527 = arith.constant 2 : i32
    %1338 = arith.addi %1337, %c2_i32_527 : i32
    %1339 = arith.index_cast %1338 : i32 to index
    %1340 = memref.load %arg2[%1339] : memref<72xf32, #tpu.memory_space<smem>>
    %1341 = vector.broadcast %1340 : f32 to vector<8x128xf32>
    %1342 = arith.mulf %1341, %1279 : vector<8x128xf32>
    %1343 = arith.addf %1335, %1342 : vector<8x128xf32>
    %c0_i32_528 = arith.constant 0 : i32
    %1344 = arith.addi %1269, %c0_i32_528 : i32
    %c3_i32_529 = arith.constant 3 : i32
    %1345 = arith.addi %1344, %c3_i32_529 : i32
    %c1_i32_530 = arith.constant 1 : i32
    %1346 = arith.addi %1345, %c1_i32_530 : i32
    %1347 = arith.index_cast %1346 : i32 to index
    %1348 = memref.load %arg2[%1347] : memref<72xf32, #tpu.memory_space<smem>>
    %1349 = vector.broadcast %1348 : f32 to vector<8x128xf32>
    %1350 = arith.mulf %1349, %1279 : vector<8x128xf32>
    %1351 = arith.addf %1273, %1350 : vector<8x128xf32>
    %c0_531 = arith.constant 0 : index
    %c1_532 = arith.constant 1 : index
    %c0_533 = arith.constant 0 : index
    %c0_534 = arith.constant 0 : index
    %1352 = vector.load %arg3[%c0_531, %c1_532, %c0_533, %c0_534] : memref<1x16x9x129xf32, #tpu.memory_space<vmem>>, vector<1x1x9x129xf32>
    %1353 = vector.shape_cast %1352 : vector<1x1x9x129xf32> to vector<9x129xf32>
    %1354 = vector.extract_strided_slice %1353 {offsets = [0, 0], sizes = [8, 128], strides = [1, 1]} : vector<9x129xf32> to vector<8x128xf32>
    %1355 = vector.extract_strided_slice %1353 {offsets = [0, 1], sizes = [8, 128], strides = [1, 1]} : vector<9x129xf32> to vector<8x128xf32>
    %1356 = vector.extract_strided_slice %1353 {offsets = [1, 0], sizes = [8, 128], strides = [1, 1]} : vector<9x129xf32> to vector<8x128xf32>
    %1357 = vector.extract_strided_slice %1353 {offsets = [1, 1], sizes = [8, 128], strides = [1, 1]} : vector<9x129xf32> to vector<8x128xf32>
    %c0_i32_535 = arith.constant 0 : i32
    %1358 = arith.addi %1269, %c0_i32_535 : i32
    %c0_i32_536 = arith.constant 0 : i32
    %1359 = arith.addi %1358, %c0_i32_536 : i32
    %c1_i32_537 = arith.constant 1 : i32
    %1360 = arith.addi %1359, %c1_i32_537 : i32
    %1361 = arith.index_cast %1360 : i32 to index
    %1362 = memref.load %arg2[%1361] : memref<72xf32, #tpu.memory_space<smem>>
    %1363 = vector.broadcast %1362 : f32 to vector<8x128xf32>
    %1364 = arith.mulf %1363, %1354 : vector<8x128xf32>
    %1365 = arith.addf %1319, %1364 : vector<8x128xf32>
    %c0_i32_538 = arith.constant 0 : i32
    %1366 = arith.addi %1269, %c0_i32_538 : i32
    %c0_i32_539 = arith.constant 0 : i32
    %1367 = arith.addi %1366, %c0_i32_539 : i32
    %c0_i32_540 = arith.constant 0 : i32
    %1368 = arith.addi %1367, %c0_i32_540 : i32
    %1369 = arith.index_cast %1368 : i32 to index
    %1370 = memref.load %arg2[%1369] : memref<72xf32, #tpu.memory_space<smem>>
    %1371 = vector.broadcast %1370 : f32 to vector<8x128xf32>
    %1372 = arith.mulf %1371, %1354 : vector<8x128xf32>
    %1373 = arith.addf %1327, %1372 : vector<8x128xf32>
    %c0_i32_541 = arith.constant 0 : i32
    %1374 = arith.addi %1269, %c0_i32_541 : i32
    %c0_i32_542 = arith.constant 0 : i32
    %1375 = arith.addi %1374, %c0_i32_542 : i32
    %c2_i32_543 = arith.constant 2 : i32
    %1376 = arith.addi %1375, %c2_i32_543 : i32
    %1377 = arith.index_cast %1376 : i32 to index
    %1378 = memref.load %arg2[%1377] : memref<72xf32, #tpu.memory_space<smem>>
    %1379 = vector.broadcast %1378 : f32 to vector<8x128xf32>
    %1380 = arith.mulf %1379, %1355 : vector<8x128xf32>
    %1381 = arith.addf %1373, %1380 : vector<8x128xf32>
    %c0_i32_544 = arith.constant 0 : i32
    %1382 = arith.addi %1269, %c0_i32_544 : i32
    %c6_i32_545 = arith.constant 6 : i32
    %1383 = arith.addi %1382, %c6_i32_545 : i32
    %c1_i32_546 = arith.constant 1 : i32
    %1384 = arith.addi %1383, %c1_i32_546 : i32
    %1385 = arith.index_cast %1384 : i32 to index
    %1386 = memref.load %arg2[%1385] : memref<72xf32, #tpu.memory_space<smem>>
    %1387 = vector.broadcast %1386 : f32 to vector<8x128xf32>
    %1388 = arith.mulf %1387, %1356 : vector<8x128xf32>
    %1389 = arith.addf %1365, %1388 : vector<8x128xf32>
    %c0_i32_547 = arith.constant 0 : i32
    %1390 = arith.addi %1269, %c0_i32_547 : i32
    %c6_i32_548 = arith.constant 6 : i32
    %1391 = arith.addi %1390, %c6_i32_548 : i32
    %c0_i32_549 = arith.constant 0 : i32
    %1392 = arith.addi %1391, %c0_i32_549 : i32
    %1393 = arith.index_cast %1392 : i32 to index
    %1394 = memref.load %arg2[%1393] : memref<72xf32, #tpu.memory_space<smem>>
    %1395 = vector.broadcast %1394 : f32 to vector<8x128xf32>
    %1396 = arith.mulf %1395, %1356 : vector<8x128xf32>
    %1397 = arith.addf %1381, %1396 : vector<8x128xf32>
    %c0_i32_550 = arith.constant 0 : i32
    %1398 = arith.addi %1269, %c0_i32_550 : i32
    %c6_i32_551 = arith.constant 6 : i32
    %1399 = arith.addi %1398, %c6_i32_551 : i32
    %c2_i32_552 = arith.constant 2 : i32
    %1400 = arith.addi %1399, %c2_i32_552 : i32
    %1401 = arith.index_cast %1400 : i32 to index
    %1402 = memref.load %arg2[%1401] : memref<72xf32, #tpu.memory_space<smem>>
    %1403 = vector.broadcast %1402 : f32 to vector<8x128xf32>
    %1404 = arith.mulf %1403, %1357 : vector<8x128xf32>
    %1405 = arith.addf %1397, %1404 : vector<8x128xf32>
    %c0_i32_553 = arith.constant 0 : i32
    %1406 = arith.addi %1269, %c0_i32_553 : i32
    %c3_i32_554 = arith.constant 3 : i32
    %1407 = arith.addi %1406, %c3_i32_554 : i32
    %c1_i32_555 = arith.constant 1 : i32
    %1408 = arith.addi %1407, %c1_i32_555 : i32
    %1409 = arith.index_cast %1408 : i32 to index
    %1410 = memref.load %arg2[%1409] : memref<72xf32, #tpu.memory_space<smem>>
    %1411 = vector.broadcast %1410 : f32 to vector<8x128xf32>
    %1412 = arith.mulf %1411, %1356 : vector<8x128xf32>
    %1413 = arith.addf %1343, %1412 : vector<8x128xf32>
    %c0_i32_556 = arith.constant 0 : i32
    %1414 = arith.addi %1269, %c0_i32_556 : i32
    %c3_i32_557 = arith.constant 3 : i32
    %1415 = arith.addi %1414, %c3_i32_557 : i32
    %c0_i32_558 = arith.constant 0 : i32
    %1416 = arith.addi %1415, %c0_i32_558 : i32
    %1417 = arith.index_cast %1416 : i32 to index
    %1418 = memref.load %arg2[%1417] : memref<72xf32, #tpu.memory_space<smem>>
    %1419 = vector.broadcast %1418 : f32 to vector<8x128xf32>
    %1420 = arith.mulf %1419, %1356 : vector<8x128xf32>
    %1421 = arith.addf %1351, %1420 : vector<8x128xf32>
    %c0_i32_559 = arith.constant 0 : i32
    %1422 = arith.addi %1269, %c0_i32_559 : i32
    %c3_i32_560 = arith.constant 3 : i32
    %1423 = arith.addi %1422, %c3_i32_560 : i32
    %c2_i32_561 = arith.constant 2 : i32
    %1424 = arith.addi %1423, %c2_i32_561 : i32
    %1425 = arith.index_cast %1424 : i32 to index
    %1426 = memref.load %arg2[%1425] : memref<72xf32, #tpu.memory_space<smem>>
    %1427 = vector.broadcast %1426 : f32 to vector<8x128xf32>
    %1428 = arith.mulf %1427, %1357 : vector<8x128xf32>
    %1429 = arith.addf %1421, %1428 : vector<8x128xf32>
    %c0_562 = arith.constant 0 : index
    %c2_563 = arith.constant 2 : index
    %c0_564 = arith.constant 0 : index
    %c0_565 = arith.constant 0 : index
    %1430 = vector.load %arg3[%c0_562, %c2_563, %c0_564, %c0_565] : memref<1x16x9x129xf32, #tpu.memory_space<vmem>>, vector<1x1x9x129xf32>
    %1431 = vector.shape_cast %1430 : vector<1x1x9x129xf32> to vector<9x129xf32>
    %1432 = vector.extract_strided_slice %1431 {offsets = [0, 0], sizes = [8, 128], strides = [1, 1]} : vector<9x129xf32> to vector<8x128xf32>
    %1433 = vector.extract_strided_slice %1431 {offsets = [0, 1], sizes = [8, 128], strides = [1, 1]} : vector<9x129xf32> to vector<8x128xf32>
    %1434 = vector.extract_strided_slice %1431 {offsets = [1, 0], sizes = [8, 128], strides = [1, 1]} : vector<9x129xf32> to vector<8x128xf32>
    %1435 = vector.extract_strided_slice %1431 {offsets = [1, 1], sizes = [8, 128], strides = [1, 1]} : vector<9x129xf32> to vector<8x128xf32>
    %c0_i32_566 = arith.constant 0 : i32
    %1436 = arith.addi %1269, %c0_i32_566 : i32
    %c3_i32_567 = arith.constant 3 : i32
    %1437 = arith.addi %1436, %c3_i32_567 : i32
    %c0_i32_568 = arith.constant 0 : i32
    %1438 = arith.addi %1437, %c0_i32_568 : i32
    %1439 = arith.index_cast %1438 : i32 to index
    %1440 = memref.load %arg2[%1439] : memref<72xf32, #tpu.memory_space<smem>>
    %1441 = vector.broadcast %1440 : f32 to vector<8x128xf32>
    %1442 = arith.mulf %1441, %1432 : vector<8x128xf32>
    %1443 = arith.addf %1389, %1442 : vector<8x128xf32>
    %c0_i32_569 = arith.constant 0 : i32
    %1444 = arith.addi %1269, %c0_i32_569 : i32
    %c3_i32_570 = arith.constant 3 : i32
    %1445 = arith.addi %1444, %c3_i32_570 : i32
    %c2_i32_571 = arith.constant 2 : i32
    %1446 = arith.addi %1445, %c2_i32_571 : i32
    %1447 = arith.index_cast %1446 : i32 to index
    %1448 = memref.load %arg2[%1447] : memref<72xf32, #tpu.memory_space<smem>>
    %1449 = vector.broadcast %1448 : f32 to vector<8x128xf32>
    %1450 = arith.mulf %1449, %1433 : vector<8x128xf32>
    %1451 = arith.addf %1443, %1450 : vector<8x128xf32>
    %c0_i32_572 = arith.constant 0 : i32
    %1452 = arith.addi %1269, %c0_i32_572 : i32
    %c3_i32_573 = arith.constant 3 : i32
    %1453 = arith.addi %1452, %c3_i32_573 : i32
    %c1_i32_574 = arith.constant 1 : i32
    %1454 = arith.addi %1453, %c1_i32_574 : i32
    %1455 = arith.index_cast %1454 : i32 to index
    %1456 = memref.load %arg2[%1455] : memref<72xf32, #tpu.memory_space<smem>>
    %1457 = vector.broadcast %1456 : f32 to vector<8x128xf32>
    %1458 = arith.mulf %1457, %1433 : vector<8x128xf32>
    %1459 = arith.addf %1405, %1458 : vector<8x128xf32>
    %c0_i32_575 = arith.constant 0 : i32
    %1460 = arith.addi %1269, %c0_i32_575 : i32
    %c0_i32_576 = arith.constant 0 : i32
    %1461 = arith.addi %1460, %c0_i32_576 : i32
    %c0_i32_577 = arith.constant 0 : i32
    %1462 = arith.addi %1461, %c0_i32_577 : i32
    %1463 = arith.index_cast %1462 : i32 to index
    %1464 = memref.load %arg2[%1463] : memref<72xf32, #tpu.memory_space<smem>>
    %1465 = vector.broadcast %1464 : f32 to vector<8x128xf32>
    %1466 = arith.mulf %1465, %1432 : vector<8x128xf32>
    %1467 = arith.addf %1413, %1466 : vector<8x128xf32>
    %c0_i32_578 = arith.constant 0 : i32
    %1468 = arith.addi %1269, %c0_i32_578 : i32
    %c0_i32_579 = arith.constant 0 : i32
    %1469 = arith.addi %1468, %c0_i32_579 : i32
    %c2_i32_580 = arith.constant 2 : i32
    %1470 = arith.addi %1469, %c2_i32_580 : i32
    %1471 = arith.index_cast %1470 : i32 to index
    %1472 = memref.load %arg2[%1471] : memref<72xf32, #tpu.memory_space<smem>>
    %1473 = vector.broadcast %1472 : f32 to vector<8x128xf32>
    %1474 = arith.mulf %1473, %1433 : vector<8x128xf32>
    %1475 = arith.addf %1467, %1474 : vector<8x128xf32>
    %c0_i32_581 = arith.constant 0 : i32
    %1476 = arith.addi %1269, %c0_i32_581 : i32
    %c0_i32_582 = arith.constant 0 : i32
    %1477 = arith.addi %1476, %c0_i32_582 : i32
    %c1_i32_583 = arith.constant 1 : i32
    %1478 = arith.addi %1477, %c1_i32_583 : i32
    %1479 = arith.index_cast %1478 : i32 to index
    %1480 = memref.load %arg2[%1479] : memref<72xf32, #tpu.memory_space<smem>>
    %1481 = vector.broadcast %1480 : f32 to vector<8x128xf32>
    %1482 = arith.mulf %1481, %1433 : vector<8x128xf32>
    %1483 = arith.addf %1429, %1482 : vector<8x128xf32>
    %c0_i32_584 = arith.constant 0 : i32
    %1484 = arith.addi %1269, %c0_i32_584 : i32
    %c6_i32_585 = arith.constant 6 : i32
    %1485 = arith.addi %1484, %c6_i32_585 : i32
    %c0_i32_586 = arith.constant 0 : i32
    %1486 = arith.addi %1485, %c0_i32_586 : i32
    %1487 = arith.index_cast %1486 : i32 to index
    %1488 = memref.load %arg2[%1487] : memref<72xf32, #tpu.memory_space<smem>>
    %1489 = vector.broadcast %1488 : f32 to vector<8x128xf32>
    %1490 = arith.mulf %1489, %1434 : vector<8x128xf32>
    %1491 = arith.addf %1475, %1490 : vector<8x128xf32>
    %c0_i32_587 = arith.constant 0 : i32
    %1492 = arith.addi %1269, %c0_i32_587 : i32
    %c6_i32_588 = arith.constant 6 : i32
    %1493 = arith.addi %1492, %c6_i32_588 : i32
    %c2_i32_589 = arith.constant 2 : i32
    %1494 = arith.addi %1493, %c2_i32_589 : i32
    %1495 = arith.index_cast %1494 : i32 to index
    %1496 = memref.load %arg2[%1495] : memref<72xf32, #tpu.memory_space<smem>>
    %1497 = vector.broadcast %1496 : f32 to vector<8x128xf32>
    %1498 = arith.mulf %1497, %1435 : vector<8x128xf32>
    %1499 = arith.addf %1491, %1498 : vector<8x128xf32>
    %c0_i32_590 = arith.constant 0 : i32
    %1500 = arith.addi %1269, %c0_i32_590 : i32
    %c6_i32_591 = arith.constant 6 : i32
    %1501 = arith.addi %1500, %c6_i32_591 : i32
    %c1_i32_592 = arith.constant 1 : i32
    %1502 = arith.addi %1501, %c1_i32_592 : i32
    %1503 = arith.index_cast %1502 : i32 to index
    %1504 = memref.load %arg2[%1503] : memref<72xf32, #tpu.memory_space<smem>>
    %1505 = vector.broadcast %1504 : f32 to vector<8x128xf32>
    %1506 = arith.mulf %1505, %1435 : vector<8x128xf32>
    %1507 = arith.addf %1483, %1506 : vector<8x128xf32>
    %c0_593 = arith.constant 0 : index
    %c3_594 = arith.constant 3 : index
    %c0_595 = arith.constant 0 : index
    %c0_596 = arith.constant 0 : index
    %1508 = vector.load %arg3[%c0_593, %c3_594, %c0_595, %c0_596] : memref<1x16x9x129xf32, #tpu.memory_space<vmem>>, vector<1x1x9x129xf32>
    %1509 = vector.shape_cast %1508 : vector<1x1x9x129xf32> to vector<9x129xf32>
    %1510 = vector.extract_strided_slice %1509 {offsets = [0, 0], sizes = [8, 128], strides = [1, 1]} : vector<9x129xf32> to vector<8x128xf32>
    %1511 = vector.extract_strided_slice %1509 {offsets = [0, 1], sizes = [8, 128], strides = [1, 1]} : vector<9x129xf32> to vector<8x128xf32>
    %1512 = vector.extract_strided_slice %1509 {offsets = [1, 0], sizes = [8, 128], strides = [1, 1]} : vector<9x129xf32> to vector<8x128xf32>
    %1513 = vector.extract_strided_slice %1509 {offsets = [1, 1], sizes = [8, 128], strides = [1, 1]} : vector<9x129xf32> to vector<8x128xf32>
    %c0_i32_597 = arith.constant 0 : i32
    %1514 = arith.addi %1269, %c0_i32_597 : i32
    %c3_i32_598 = arith.constant 3 : i32
    %1515 = arith.addi %1514, %c3_i32_598 : i32
    %c1_i32_599 = arith.constant 1 : i32
    %1516 = arith.addi %1515, %c1_i32_599 : i32
    %1517 = arith.index_cast %1516 : i32 to index
    %1518 = memref.load %arg2[%1517] : memref<72xf32, #tpu.memory_space<smem>>
    %1519 = vector.broadcast %1518 : f32 to vector<8x128xf32>
    %1520 = arith.mulf %1519, %1510 : vector<8x128xf32>
    %1521 = arith.addf %1451, %1520 : vector<8x128xf32>
    %c0_i32_600 = arith.constant 0 : i32
    %1522 = arith.addi %1269, %c0_i32_600 : i32
    %c3_i32_601 = arith.constant 3 : i32
    %1523 = arith.addi %1522, %c3_i32_601 : i32
    %c0_i32_602 = arith.constant 0 : i32
    %1524 = arith.addi %1523, %c0_i32_602 : i32
    %1525 = arith.index_cast %1524 : i32 to index
    %1526 = memref.load %arg2[%1525] : memref<72xf32, #tpu.memory_space<smem>>
    %1527 = vector.broadcast %1526 : f32 to vector<8x128xf32>
    %1528 = arith.mulf %1527, %1510 : vector<8x128xf32>
    %1529 = arith.addf %1459, %1528 : vector<8x128xf32>
    %c0_i32_603 = arith.constant 0 : i32
    %1530 = arith.addi %1269, %c0_i32_603 : i32
    %c3_i32_604 = arith.constant 3 : i32
    %1531 = arith.addi %1530, %c3_i32_604 : i32
    %c2_i32_605 = arith.constant 2 : i32
    %1532 = arith.addi %1531, %c2_i32_605 : i32
    %1533 = arith.index_cast %1532 : i32 to index
    %1534 = memref.load %arg2[%1533] : memref<72xf32, #tpu.memory_space<smem>>
    %1535 = vector.broadcast %1534 : f32 to vector<8x128xf32>
    %1536 = arith.mulf %1535, %1511 : vector<8x128xf32>
    %1537 = arith.addf %1529, %1536 : vector<8x128xf32>
    %c0_i32_606 = arith.constant 0 : i32
    %1538 = arith.addi %1269, %c0_i32_606 : i32
    %c0_i32_607 = arith.constant 0 : i32
    %1539 = arith.addi %1538, %c0_i32_607 : i32
    %c1_i32_608 = arith.constant 1 : i32
    %1540 = arith.addi %1539, %c1_i32_608 : i32
    %1541 = arith.index_cast %1540 : i32 to index
    %1542 = memref.load %arg2[%1541] : memref<72xf32, #tpu.memory_space<smem>>
    %1543 = vector.broadcast %1542 : f32 to vector<8x128xf32>
    %1544 = arith.mulf %1543, %1510 : vector<8x128xf32>
    %1545 = arith.addf %1499, %1544 : vector<8x128xf32>
    %c0_i32_609 = arith.constant 0 : i32
    %1546 = arith.addi %1269, %c0_i32_609 : i32
    %c0_i32_610 = arith.constant 0 : i32
    %1547 = arith.addi %1546, %c0_i32_610 : i32
    %c0_i32_611 = arith.constant 0 : i32
    %1548 = arith.addi %1547, %c0_i32_611 : i32
    %1549 = arith.index_cast %1548 : i32 to index
    %1550 = memref.load %arg2[%1549] : memref<72xf32, #tpu.memory_space<smem>>
    %1551 = vector.broadcast %1550 : f32 to vector<8x128xf32>
    %1552 = arith.mulf %1551, %1510 : vector<8x128xf32>
    %1553 = arith.addf %1507, %1552 : vector<8x128xf32>
    %c0_i32_612 = arith.constant 0 : i32
    %1554 = arith.addi %1269, %c0_i32_612 : i32
    %c0_i32_613 = arith.constant 0 : i32
    %1555 = arith.addi %1554, %c0_i32_613 : i32
    %c2_i32_614 = arith.constant 2 : i32
    %1556 = arith.addi %1555, %c2_i32_614 : i32
    %1557 = arith.index_cast %1556 : i32 to index
    %1558 = memref.load %arg2[%1557] : memref<72xf32, #tpu.memory_space<smem>>
    %1559 = vector.broadcast %1558 : f32 to vector<8x128xf32>
    %1560 = arith.mulf %1559, %1511 : vector<8x128xf32>
    %1561 = arith.addf %1553, %1560 : vector<8x128xf32>
    %c0_i32_615 = arith.constant 0 : i32
    %1562 = arith.addi %1269, %c0_i32_615 : i32
    %c6_i32_616 = arith.constant 6 : i32
    %1563 = arith.addi %1562, %c6_i32_616 : i32
    %c1_i32_617 = arith.constant 1 : i32
    %1564 = arith.addi %1563, %c1_i32_617 : i32
    %1565 = arith.index_cast %1564 : i32 to index
    %1566 = memref.load %arg2[%1565] : memref<72xf32, #tpu.memory_space<smem>>
    %1567 = vector.broadcast %1566 : f32 to vector<8x128xf32>
    %1568 = arith.mulf %1567, %1512 : vector<8x128xf32>
    %1569 = arith.addf %1545, %1568 : vector<8x128xf32>
    %c0_i32_618 = arith.constant 0 : i32
    %1570 = arith.addi %1269, %c0_i32_618 : i32
    %c6_i32_619 = arith.constant 6 : i32
    %1571 = arith.addi %1570, %c6_i32_619 : i32
    %c0_i32_620 = arith.constant 0 : i32
    %1572 = arith.addi %1571, %c0_i32_620 : i32
    %1573 = arith.index_cast %1572 : i32 to index
    %1574 = memref.load %arg2[%1573] : memref<72xf32, #tpu.memory_space<smem>>
    %1575 = vector.broadcast %1574 : f32 to vector<8x128xf32>
    %1576 = arith.mulf %1575, %1512 : vector<8x128xf32>
    %1577 = arith.addf %1561, %1576 : vector<8x128xf32>
    %c0_i32_621 = arith.constant 0 : i32
    %1578 = arith.addi %1269, %c0_i32_621 : i32
    %c6_i32_622 = arith.constant 6 : i32
    %1579 = arith.addi %1578, %c6_i32_622 : i32
    %c2_i32_623 = arith.constant 2 : i32
    %1580 = arith.addi %1579, %c2_i32_623 : i32
    %1581 = arith.index_cast %1580 : i32 to index
    %1582 = memref.load %arg2[%1581] : memref<72xf32, #tpu.memory_space<smem>>
    %1583 = vector.broadcast %1582 : f32 to vector<8x128xf32>
    %1584 = arith.mulf %1583, %1513 : vector<8x128xf32>
    %1585 = arith.addf %1577, %1584 : vector<8x128xf32>
    %c0_624 = arith.constant 0 : index
    %c4_625 = arith.constant 4 : index
    %c0_626 = arith.constant 0 : index
    %c0_627 = arith.constant 0 : index
    %1586 = vector.load %arg3[%c0_624, %c4_625, %c0_626, %c0_627] : memref<1x16x9x129xf32, #tpu.memory_space<vmem>>, vector<1x1x9x129xf32>
    %1587 = vector.shape_cast %1586 : vector<1x1x9x129xf32> to vector<9x129xf32>
    %1588 = vector.extract_strided_slice %1587 {offsets = [0, 0], sizes = [8, 128], strides = [1, 1]} : vector<9x129xf32> to vector<8x128xf32>
    %1589 = vector.extract_strided_slice %1587 {offsets = [0, 1], sizes = [8, 128], strides = [1, 1]} : vector<9x129xf32> to vector<8x128xf32>
    %1590 = vector.extract_strided_slice %1587 {offsets = [1, 0], sizes = [8, 128], strides = [1, 1]} : vector<9x129xf32> to vector<8x128xf32>
    %1591 = vector.extract_strided_slice %1587 {offsets = [1, 1], sizes = [8, 128], strides = [1, 1]} : vector<9x129xf32> to vector<8x128xf32>
    %c9_i32_628 = arith.constant 9 : i32
    %1592 = arith.addi %1269, %c9_i32_628 : i32
    %c0_i32_629 = arith.constant 0 : i32
    %1593 = arith.addi %1592, %c0_i32_629 : i32
    %c0_i32_630 = arith.constant 0 : i32
    %1594 = arith.addi %1593, %c0_i32_630 : i32
    %1595 = arith.index_cast %1594 : i32 to index
    %1596 = memref.load %arg2[%1595] : memref<72xf32, #tpu.memory_space<smem>>
    %1597 = vector.broadcast %1596 : f32 to vector<8x128xf32>
    %1598 = arith.mulf %1597, %1588 : vector<8x128xf32>
    %1599 = arith.addf %1521, %1598 : vector<8x128xf32>
    %c9_i32_631 = arith.constant 9 : i32
    %1600 = arith.addi %1269, %c9_i32_631 : i32
    %c0_i32_632 = arith.constant 0 : i32
    %1601 = arith.addi %1600, %c0_i32_632 : i32
    %c2_i32_633 = arith.constant 2 : i32
    %1602 = arith.addi %1601, %c2_i32_633 : i32
    %1603 = arith.index_cast %1602 : i32 to index
    %1604 = memref.load %arg2[%1603] : memref<72xf32, #tpu.memory_space<smem>>
    %1605 = vector.broadcast %1604 : f32 to vector<8x128xf32>
    %1606 = arith.mulf %1605, %1589 : vector<8x128xf32>
    %1607 = arith.addf %1599, %1606 : vector<8x128xf32>
    %c9_i32_634 = arith.constant 9 : i32
    %1608 = arith.addi %1269, %c9_i32_634 : i32
    %c0_i32_635 = arith.constant 0 : i32
    %1609 = arith.addi %1608, %c0_i32_635 : i32
    %c1_i32_636 = arith.constant 1 : i32
    %1610 = arith.addi %1609, %c1_i32_636 : i32
    %1611 = arith.index_cast %1610 : i32 to index
    %1612 = memref.load %arg2[%1611] : memref<72xf32, #tpu.memory_space<smem>>
    %1613 = vector.broadcast %1612 : f32 to vector<8x128xf32>
    %1614 = arith.mulf %1613, %1589 : vector<8x128xf32>
    %1615 = arith.addf %1537, %1614 : vector<8x128xf32>
    %c9_i32_637 = arith.constant 9 : i32
    %1616 = arith.addi %1269, %c9_i32_637 : i32
    %c6_i32_638 = arith.constant 6 : i32
    %1617 = arith.addi %1616, %c6_i32_638 : i32
    %c0_i32_639 = arith.constant 0 : i32
    %1618 = arith.addi %1617, %c0_i32_639 : i32
    %1619 = arith.index_cast %1618 : i32 to index
    %1620 = memref.load %arg2[%1619] : memref<72xf32, #tpu.memory_space<smem>>
    %1621 = vector.broadcast %1620 : f32 to vector<8x128xf32>
    %1622 = arith.mulf %1621, %1590 : vector<8x128xf32>
    %1623 = arith.addf %1607, %1622 : vector<8x128xf32>
    %c9_i32_640 = arith.constant 9 : i32
    %1624 = arith.addi %1269, %c9_i32_640 : i32
    %c6_i32_641 = arith.constant 6 : i32
    %1625 = arith.addi %1624, %c6_i32_641 : i32
    %c2_i32_642 = arith.constant 2 : i32
    %1626 = arith.addi %1625, %c2_i32_642 : i32
    %1627 = arith.index_cast %1626 : i32 to index
    %1628 = memref.load %arg2[%1627] : memref<72xf32, #tpu.memory_space<smem>>
    %1629 = vector.broadcast %1628 : f32 to vector<8x128xf32>
    %1630 = arith.mulf %1629, %1591 : vector<8x128xf32>
    %1631 = arith.addf %1623, %1630 : vector<8x128xf32>
    %c9_i32_643 = arith.constant 9 : i32
    %1632 = arith.addi %1269, %c9_i32_643 : i32
    %c6_i32_644 = arith.constant 6 : i32
    %1633 = arith.addi %1632, %c6_i32_644 : i32
    %c1_i32_645 = arith.constant 1 : i32
    %1634 = arith.addi %1633, %c1_i32_645 : i32
    %1635 = arith.index_cast %1634 : i32 to index
    %1636 = memref.load %arg2[%1635] : memref<72xf32, #tpu.memory_space<smem>>
    %1637 = vector.broadcast %1636 : f32 to vector<8x128xf32>
    %1638 = arith.mulf %1637, %1591 : vector<8x128xf32>
    %1639 = arith.addf %1615, %1638 : vector<8x128xf32>
    %c9_i32_646 = arith.constant 9 : i32
    %1640 = arith.addi %1269, %c9_i32_646 : i32
    %c3_i32_647 = arith.constant 3 : i32
    %1641 = arith.addi %1640, %c3_i32_647 : i32
    %c0_i32_648 = arith.constant 0 : i32
    %1642 = arith.addi %1641, %c0_i32_648 : i32
    %1643 = arith.index_cast %1642 : i32 to index
    %1644 = memref.load %arg2[%1643] : memref<72xf32, #tpu.memory_space<smem>>
    %1645 = vector.broadcast %1644 : f32 to vector<8x128xf32>
    %1646 = arith.mulf %1645, %1590 : vector<8x128xf32>
    %1647 = arith.addf %1569, %1646 : vector<8x128xf32>
    %c9_i32_649 = arith.constant 9 : i32
    %1648 = arith.addi %1269, %c9_i32_649 : i32
    %c3_i32_650 = arith.constant 3 : i32
    %1649 = arith.addi %1648, %c3_i32_650 : i32
    %c2_i32_651 = arith.constant 2 : i32
    %1650 = arith.addi %1649, %c2_i32_651 : i32
    %1651 = arith.index_cast %1650 : i32 to index
    %1652 = memref.load %arg2[%1651] : memref<72xf32, #tpu.memory_space<smem>>
    %1653 = vector.broadcast %1652 : f32 to vector<8x128xf32>
    %1654 = arith.mulf %1653, %1591 : vector<8x128xf32>
    %1655 = arith.addf %1647, %1654 : vector<8x128xf32>
    %c9_i32_652 = arith.constant 9 : i32
    %1656 = arith.addi %1269, %c9_i32_652 : i32
    %c3_i32_653 = arith.constant 3 : i32
    %1657 = arith.addi %1656, %c3_i32_653 : i32
    %c1_i32_654 = arith.constant 1 : i32
    %1658 = arith.addi %1657, %c1_i32_654 : i32
    %1659 = arith.index_cast %1658 : i32 to index
    %1660 = memref.load %arg2[%1659] : memref<72xf32, #tpu.memory_space<smem>>
    %1661 = vector.broadcast %1660 : f32 to vector<8x128xf32>
    %1662 = arith.mulf %1661, %1591 : vector<8x128xf32>
    %1663 = arith.addf %1585, %1662 : vector<8x128xf32>
    %c0_655 = arith.constant 0 : index
    %c5_656 = arith.constant 5 : index
    %c0_657 = arith.constant 0 : index
    %c0_658 = arith.constant 0 : index
    %1664 = vector.load %arg3[%c0_655, %c5_656, %c0_657, %c0_658] : memref<1x16x9x129xf32, #tpu.memory_space<vmem>>, vector<1x1x9x129xf32>
    %1665 = vector.shape_cast %1664 : vector<1x1x9x129xf32> to vector<9x129xf32>
    %1666 = vector.extract_strided_slice %1665 {offsets = [0, 0], sizes = [8, 128], strides = [1, 1]} : vector<9x129xf32> to vector<8x128xf32>
    %1667 = vector.extract_strided_slice %1665 {offsets = [0, 1], sizes = [8, 128], strides = [1, 1]} : vector<9x129xf32> to vector<8x128xf32>
    %1668 = vector.extract_strided_slice %1665 {offsets = [1, 0], sizes = [8, 128], strides = [1, 1]} : vector<9x129xf32> to vector<8x128xf32>
    %1669 = vector.extract_strided_slice %1665 {offsets = [1, 1], sizes = [8, 128], strides = [1, 1]} : vector<9x129xf32> to vector<8x128xf32>
    %c9_i32_659 = arith.constant 9 : i32
    %1670 = arith.addi %1269, %c9_i32_659 : i32
    %c0_i32_660 = arith.constant 0 : i32
    %1671 = arith.addi %1670, %c0_i32_660 : i32
    %c1_i32_661 = arith.constant 1 : i32
    %1672 = arith.addi %1671, %c1_i32_661 : i32
    %1673 = arith.index_cast %1672 : i32 to index
    %1674 = memref.load %arg2[%1673] : memref<72xf32, #tpu.memory_space<smem>>
    %1675 = vector.broadcast %1674 : f32 to vector<8x128xf32>
    %1676 = arith.mulf %1675, %1666 : vector<8x128xf32>
    %1677 = arith.addf %1631, %1676 : vector<8x128xf32>
    %c9_i32_662 = arith.constant 9 : i32
    %1678 = arith.addi %1269, %c9_i32_662 : i32
    %c0_i32_663 = arith.constant 0 : i32
    %1679 = arith.addi %1678, %c0_i32_663 : i32
    %c0_i32_664 = arith.constant 0 : i32
    %1680 = arith.addi %1679, %c0_i32_664 : i32
    %1681 = arith.index_cast %1680 : i32 to index
    %1682 = memref.load %arg2[%1681] : memref<72xf32, #tpu.memory_space<smem>>
    %1683 = vector.broadcast %1682 : f32 to vector<8x128xf32>
    %1684 = arith.mulf %1683, %1666 : vector<8x128xf32>
    %1685 = arith.addf %1639, %1684 : vector<8x128xf32>
    %c9_i32_665 = arith.constant 9 : i32
    %1686 = arith.addi %1269, %c9_i32_665 : i32
    %c0_i32_666 = arith.constant 0 : i32
    %1687 = arith.addi %1686, %c0_i32_666 : i32
    %c2_i32_667 = arith.constant 2 : i32
    %1688 = arith.addi %1687, %c2_i32_667 : i32
    %1689 = arith.index_cast %1688 : i32 to index
    %1690 = memref.load %arg2[%1689] : memref<72xf32, #tpu.memory_space<smem>>
    %1691 = vector.broadcast %1690 : f32 to vector<8x128xf32>
    %1692 = arith.mulf %1691, %1667 : vector<8x128xf32>
    %1693 = arith.addf %1685, %1692 : vector<8x128xf32>
    %c9_i32_668 = arith.constant 9 : i32
    %1694 = arith.addi %1269, %c9_i32_668 : i32
    %c6_i32_669 = arith.constant 6 : i32
    %1695 = arith.addi %1694, %c6_i32_669 : i32
    %c1_i32_670 = arith.constant 1 : i32
    %1696 = arith.addi %1695, %c1_i32_670 : i32
    %1697 = arith.index_cast %1696 : i32 to index
    %1698 = memref.load %arg2[%1697] : memref<72xf32, #tpu.memory_space<smem>>
    %1699 = vector.broadcast %1698 : f32 to vector<8x128xf32>
    %1700 = arith.mulf %1699, %1668 : vector<8x128xf32>
    %1701 = arith.addf %1677, %1700 : vector<8x128xf32>
    %c9_i32_671 = arith.constant 9 : i32
    %1702 = arith.addi %1269, %c9_i32_671 : i32
    %c6_i32_672 = arith.constant 6 : i32
    %1703 = arith.addi %1702, %c6_i32_672 : i32
    %c0_i32_673 = arith.constant 0 : i32
    %1704 = arith.addi %1703, %c0_i32_673 : i32
    %1705 = arith.index_cast %1704 : i32 to index
    %1706 = memref.load %arg2[%1705] : memref<72xf32, #tpu.memory_space<smem>>
    %1707 = vector.broadcast %1706 : f32 to vector<8x128xf32>
    %1708 = arith.mulf %1707, %1668 : vector<8x128xf32>
    %1709 = arith.addf %1693, %1708 : vector<8x128xf32>
    %c9_i32_674 = arith.constant 9 : i32
    %1710 = arith.addi %1269, %c9_i32_674 : i32
    %c6_i32_675 = arith.constant 6 : i32
    %1711 = arith.addi %1710, %c6_i32_675 : i32
    %c2_i32_676 = arith.constant 2 : i32
    %1712 = arith.addi %1711, %c2_i32_676 : i32
    %1713 = arith.index_cast %1712 : i32 to index
    %1714 = memref.load %arg2[%1713] : memref<72xf32, #tpu.memory_space<smem>>
    %1715 = vector.broadcast %1714 : f32 to vector<8x128xf32>
    %1716 = arith.mulf %1715, %1669 : vector<8x128xf32>
    %1717 = arith.addf %1709, %1716 : vector<8x128xf32>
    %c9_i32_677 = arith.constant 9 : i32
    %1718 = arith.addi %1269, %c9_i32_677 : i32
    %c3_i32_678 = arith.constant 3 : i32
    %1719 = arith.addi %1718, %c3_i32_678 : i32
    %c1_i32_679 = arith.constant 1 : i32
    %1720 = arith.addi %1719, %c1_i32_679 : i32
    %1721 = arith.index_cast %1720 : i32 to index
    %1722 = memref.load %arg2[%1721] : memref<72xf32, #tpu.memory_space<smem>>
    %1723 = vector.broadcast %1722 : f32 to vector<8x128xf32>
    %1724 = arith.mulf %1723, %1668 : vector<8x128xf32>
    %1725 = arith.addf %1655, %1724 : vector<8x128xf32>
    %c9_i32_680 = arith.constant 9 : i32
    %1726 = arith.addi %1269, %c9_i32_680 : i32
    %c3_i32_681 = arith.constant 3 : i32
    %1727 = arith.addi %1726, %c3_i32_681 : i32
    %c0_i32_682 = arith.constant 0 : i32
    %1728 = arith.addi %1727, %c0_i32_682 : i32
    %1729 = arith.index_cast %1728 : i32 to index
    %1730 = memref.load %arg2[%1729] : memref<72xf32, #tpu.memory_space<smem>>
    %1731 = vector.broadcast %1730 : f32 to vector<8x128xf32>
    %1732 = arith.mulf %1731, %1668 : vector<8x128xf32>
    %1733 = arith.addf %1663, %1732 : vector<8x128xf32>
    %c9_i32_683 = arith.constant 9 : i32
    %1734 = arith.addi %1269, %c9_i32_683 : i32
    %c3_i32_684 = arith.constant 3 : i32
    %1735 = arith.addi %1734, %c3_i32_684 : i32
    %c2_i32_685 = arith.constant 2 : i32
    %1736 = arith.addi %1735, %c2_i32_685 : i32
    %1737 = arith.index_cast %1736 : i32 to index
    %1738 = memref.load %arg2[%1737] : memref<72xf32, #tpu.memory_space<smem>>
    %1739 = vector.broadcast %1738 : f32 to vector<8x128xf32>
    %1740 = arith.mulf %1739, %1669 : vector<8x128xf32>
    %1741 = arith.addf %1733, %1740 : vector<8x128xf32>
    %c0_686 = arith.constant 0 : index
    %c6_687 = arith.constant 6 : index
    %c0_688 = arith.constant 0 : index
    %c0_689 = arith.constant 0 : index
    %1742 = vector.load %arg3[%c0_686, %c6_687, %c0_688, %c0_689] : memref<1x16x9x129xf32, #tpu.memory_space<vmem>>, vector<1x1x9x129xf32>
    %1743 = vector.shape_cast %1742 : vector<1x1x9x129xf32> to vector<9x129xf32>
    %1744 = vector.extract_strided_slice %1743 {offsets = [0, 0], sizes = [8, 128], strides = [1, 1]} : vector<9x129xf32> to vector<8x128xf32>
    %1745 = vector.extract_strided_slice %1743 {offsets = [0, 1], sizes = [8, 128], strides = [1, 1]} : vector<9x129xf32> to vector<8x128xf32>
    %1746 = vector.extract_strided_slice %1743 {offsets = [1, 0], sizes = [8, 128], strides = [1, 1]} : vector<9x129xf32> to vector<8x128xf32>
    %1747 = vector.extract_strided_slice %1743 {offsets = [1, 1], sizes = [8, 128], strides = [1, 1]} : vector<9x129xf32> to vector<8x128xf32>
    %c9_i32_690 = arith.constant 9 : i32
    %1748 = arith.addi %1269, %c9_i32_690 : i32
    %c3_i32_691 = arith.constant 3 : i32
    %1749 = arith.addi %1748, %c3_i32_691 : i32
    %c0_i32_692 = arith.constant 0 : i32
    %1750 = arith.addi %1749, %c0_i32_692 : i32
    %1751 = arith.index_cast %1750 : i32 to index
    %1752 = memref.load %arg2[%1751] : memref<72xf32, #tpu.memory_space<smem>>
    %1753 = vector.broadcast %1752 : f32 to vector<8x128xf32>
    %1754 = arith.mulf %1753, %1744 : vector<8x128xf32>
    %1755 = arith.addf %1701, %1754 : vector<8x128xf32>
    %c9_i32_693 = arith.constant 9 : i32
    %1756 = arith.addi %1269, %c9_i32_693 : i32
    %c3_i32_694 = arith.constant 3 : i32
    %1757 = arith.addi %1756, %c3_i32_694 : i32
    %c2_i32_695 = arith.constant 2 : i32
    %1758 = arith.addi %1757, %c2_i32_695 : i32
    %1759 = arith.index_cast %1758 : i32 to index
    %1760 = memref.load %arg2[%1759] : memref<72xf32, #tpu.memory_space<smem>>
    %1761 = vector.broadcast %1760 : f32 to vector<8x128xf32>
    %1762 = arith.mulf %1761, %1745 : vector<8x128xf32>
    %1763 = arith.addf %1755, %1762 : vector<8x128xf32>
    %c9_i32_696 = arith.constant 9 : i32
    %1764 = arith.addi %1269, %c9_i32_696 : i32
    %c3_i32_697 = arith.constant 3 : i32
    %1765 = arith.addi %1764, %c3_i32_697 : i32
    %c1_i32_698 = arith.constant 1 : i32
    %1766 = arith.addi %1765, %c1_i32_698 : i32
    %1767 = arith.index_cast %1766 : i32 to index
    %1768 = memref.load %arg2[%1767] : memref<72xf32, #tpu.memory_space<smem>>
    %1769 = vector.broadcast %1768 : f32 to vector<8x128xf32>
    %1770 = arith.mulf %1769, %1745 : vector<8x128xf32>
    %1771 = arith.addf %1717, %1770 : vector<8x128xf32>
    %c9_i32_699 = arith.constant 9 : i32
    %1772 = arith.addi %1269, %c9_i32_699 : i32
    %c0_i32_700 = arith.constant 0 : i32
    %1773 = arith.addi %1772, %c0_i32_700 : i32
    %c0_i32_701 = arith.constant 0 : i32
    %1774 = arith.addi %1773, %c0_i32_701 : i32
    %1775 = arith.index_cast %1774 : i32 to index
    %1776 = memref.load %arg2[%1775] : memref<72xf32, #tpu.memory_space<smem>>
    %1777 = vector.broadcast %1776 : f32 to vector<8x128xf32>
    %1778 = arith.mulf %1777, %1744 : vector<8x128xf32>
    %1779 = arith.addf %1725, %1778 : vector<8x128xf32>
    %c9_i32_702 = arith.constant 9 : i32
    %1780 = arith.addi %1269, %c9_i32_702 : i32
    %c0_i32_703 = arith.constant 0 : i32
    %1781 = arith.addi %1780, %c0_i32_703 : i32
    %c2_i32_704 = arith.constant 2 : i32
    %1782 = arith.addi %1781, %c2_i32_704 : i32
    %1783 = arith.index_cast %1782 : i32 to index
    %1784 = memref.load %arg2[%1783] : memref<72xf32, #tpu.memory_space<smem>>
    %1785 = vector.broadcast %1784 : f32 to vector<8x128xf32>
    %1786 = arith.mulf %1785, %1745 : vector<8x128xf32>
    %1787 = arith.addf %1779, %1786 : vector<8x128xf32>
    %c9_i32_705 = arith.constant 9 : i32
    %1788 = arith.addi %1269, %c9_i32_705 : i32
    %c0_i32_706 = arith.constant 0 : i32
    %1789 = arith.addi %1788, %c0_i32_706 : i32
    %c1_i32_707 = arith.constant 1 : i32
    %1790 = arith.addi %1789, %c1_i32_707 : i32
    %1791 = arith.index_cast %1790 : i32 to index
    %1792 = memref.load %arg2[%1791] : memref<72xf32, #tpu.memory_space<smem>>
    %1793 = vector.broadcast %1792 : f32 to vector<8x128xf32>
    %1794 = arith.mulf %1793, %1745 : vector<8x128xf32>
    %1795 = arith.addf %1741, %1794 : vector<8x128xf32>
    %c9_i32_708 = arith.constant 9 : i32
    %1796 = arith.addi %1269, %c9_i32_708 : i32
    %c6_i32_709 = arith.constant 6 : i32
    %1797 = arith.addi %1796, %c6_i32_709 : i32
    %c0_i32_710 = arith.constant 0 : i32
    %1798 = arith.addi %1797, %c0_i32_710 : i32
    %1799 = arith.index_cast %1798 : i32 to index
    %1800 = memref.load %arg2[%1799] : memref<72xf32, #tpu.memory_space<smem>>
    %1801 = vector.broadcast %1800 : f32 to vector<8x128xf32>
    %1802 = arith.mulf %1801, %1746 : vector<8x128xf32>
    %1803 = arith.addf %1787, %1802 : vector<8x128xf32>
    %c9_i32_711 = arith.constant 9 : i32
    %1804 = arith.addi %1269, %c9_i32_711 : i32
    %c6_i32_712 = arith.constant 6 : i32
    %1805 = arith.addi %1804, %c6_i32_712 : i32
    %c2_i32_713 = arith.constant 2 : i32
    %1806 = arith.addi %1805, %c2_i32_713 : i32
    %1807 = arith.index_cast %1806 : i32 to index
    %1808 = memref.load %arg2[%1807] : memref<72xf32, #tpu.memory_space<smem>>
    %1809 = vector.broadcast %1808 : f32 to vector<8x128xf32>
    %1810 = arith.mulf %1809, %1747 : vector<8x128xf32>
    %1811 = arith.addf %1803, %1810 : vector<8x128xf32>
    %c9_i32_714 = arith.constant 9 : i32
    %1812 = arith.addi %1269, %c9_i32_714 : i32
    %c6_i32_715 = arith.constant 6 : i32
    %1813 = arith.addi %1812, %c6_i32_715 : i32
    %c1_i32_716 = arith.constant 1 : i32
    %1814 = arith.addi %1813, %c1_i32_716 : i32
    %1815 = arith.index_cast %1814 : i32 to index
    %1816 = memref.load %arg2[%1815] : memref<72xf32, #tpu.memory_space<smem>>
    %1817 = vector.broadcast %1816 : f32 to vector<8x128xf32>
    %1818 = arith.mulf %1817, %1747 : vector<8x128xf32>
    %1819 = arith.addf %1795, %1818 : vector<8x128xf32>
    %c0_717 = arith.constant 0 : index
    %c7_718 = arith.constant 7 : index
    %c0_719 = arith.constant 0 : index
    %c0_720 = arith.constant 0 : index
    %1820 = vector.load %arg3[%c0_717, %c7_718, %c0_719, %c0_720] : memref<1x16x9x129xf32, #tpu.memory_space<vmem>>, vector<1x1x9x129xf32>
    %1821 = vector.shape_cast %1820 : vector<1x1x9x129xf32> to vector<9x129xf32>
    %1822 = vector.extract_strided_slice %1821 {offsets = [0, 0], sizes = [8, 128], strides = [1, 1]} : vector<9x129xf32> to vector<8x128xf32>
    %1823 = vector.extract_strided_slice %1821 {offsets = [0, 1], sizes = [8, 128], strides = [1, 1]} : vector<9x129xf32> to vector<8x128xf32>
    %1824 = vector.extract_strided_slice %1821 {offsets = [1, 0], sizes = [8, 128], strides = [1, 1]} : vector<9x129xf32> to vector<8x128xf32>
    %1825 = vector.extract_strided_slice %1821 {offsets = [1, 1], sizes = [8, 128], strides = [1, 1]} : vector<9x129xf32> to vector<8x128xf32>
    %c9_i32_721 = arith.constant 9 : i32
    %1826 = arith.addi %1269, %c9_i32_721 : i32
    %c3_i32_722 = arith.constant 3 : i32
    %1827 = arith.addi %1826, %c3_i32_722 : i32
    %c1_i32_723 = arith.constant 1 : i32
    %1828 = arith.addi %1827, %c1_i32_723 : i32
    %1829 = arith.index_cast %1828 : i32 to index
    %1830 = memref.load %arg2[%1829] : memref<72xf32, #tpu.memory_space<smem>>
    %1831 = vector.broadcast %1830 : f32 to vector<8x128xf32>
    %1832 = arith.mulf %1831, %1822 : vector<8x128xf32>
    %1833 = arith.addf %1763, %1832 : vector<8x128xf32>
    %c9_i32_724 = arith.constant 9 : i32
    %1834 = arith.addi %1269, %c9_i32_724 : i32
    %c3_i32_725 = arith.constant 3 : i32
    %1835 = arith.addi %1834, %c3_i32_725 : i32
    %c0_i32_726 = arith.constant 0 : i32
    %1836 = arith.addi %1835, %c0_i32_726 : i32
    %1837 = arith.index_cast %1836 : i32 to index
    %1838 = memref.load %arg2[%1837] : memref<72xf32, #tpu.memory_space<smem>>
    %1839 = vector.broadcast %1838 : f32 to vector<8x128xf32>
    %1840 = arith.mulf %1839, %1822 : vector<8x128xf32>
    %1841 = arith.addf %1771, %1840 : vector<8x128xf32>
    %c9_i32_727 = arith.constant 9 : i32
    %1842 = arith.addi %1269, %c9_i32_727 : i32
    %c3_i32_728 = arith.constant 3 : i32
    %1843 = arith.addi %1842, %c3_i32_728 : i32
    %c2_i32_729 = arith.constant 2 : i32
    %1844 = arith.addi %1843, %c2_i32_729 : i32
    %1845 = arith.index_cast %1844 : i32 to index
    %1846 = memref.load %arg2[%1845] : memref<72xf32, #tpu.memory_space<smem>>
    %1847 = vector.broadcast %1846 : f32 to vector<8x128xf32>
    %1848 = arith.mulf %1847, %1823 : vector<8x128xf32>
    %1849 = arith.addf %1841, %1848 : vector<8x128xf32>
    %c9_i32_730 = arith.constant 9 : i32
    %1850 = arith.addi %1269, %c9_i32_730 : i32
    %c0_i32_731 = arith.constant 0 : i32
    %1851 = arith.addi %1850, %c0_i32_731 : i32
    %c1_i32_732 = arith.constant 1 : i32
    %1852 = arith.addi %1851, %c1_i32_732 : i32
    %1853 = arith.index_cast %1852 : i32 to index
    %1854 = memref.load %arg2[%1853] : memref<72xf32, #tpu.memory_space<smem>>
    %1855 = vector.broadcast %1854 : f32 to vector<8x128xf32>
    %1856 = arith.mulf %1855, %1822 : vector<8x128xf32>
    %1857 = arith.addf %1811, %1856 : vector<8x128xf32>
    %c9_i32_733 = arith.constant 9 : i32
    %1858 = arith.addi %1269, %c9_i32_733 : i32
    %c0_i32_734 = arith.constant 0 : i32
    %1859 = arith.addi %1858, %c0_i32_734 : i32
    %c0_i32_735 = arith.constant 0 : i32
    %1860 = arith.addi %1859, %c0_i32_735 : i32
    %1861 = arith.index_cast %1860 : i32 to index
    %1862 = memref.load %arg2[%1861] : memref<72xf32, #tpu.memory_space<smem>>
    %1863 = vector.broadcast %1862 : f32 to vector<8x128xf32>
    %1864 = arith.mulf %1863, %1822 : vector<8x128xf32>
    %1865 = arith.addf %1819, %1864 : vector<8x128xf32>
    %c9_i32_736 = arith.constant 9 : i32
    %1866 = arith.addi %1269, %c9_i32_736 : i32
    %c0_i32_737 = arith.constant 0 : i32
    %1867 = arith.addi %1866, %c0_i32_737 : i32
    %c2_i32_738 = arith.constant 2 : i32
    %1868 = arith.addi %1867, %c2_i32_738 : i32
    %1869 = arith.index_cast %1868 : i32 to index
    %1870 = memref.load %arg2[%1869] : memref<72xf32, #tpu.memory_space<smem>>
    %1871 = vector.broadcast %1870 : f32 to vector<8x128xf32>
    %1872 = arith.mulf %1871, %1823 : vector<8x128xf32>
    %1873 = arith.addf %1865, %1872 : vector<8x128xf32>
    %c9_i32_739 = arith.constant 9 : i32
    %1874 = arith.addi %1269, %c9_i32_739 : i32
    %c6_i32_740 = arith.constant 6 : i32
    %1875 = arith.addi %1874, %c6_i32_740 : i32
    %c1_i32_741 = arith.constant 1 : i32
    %1876 = arith.addi %1875, %c1_i32_741 : i32
    %1877 = arith.index_cast %1876 : i32 to index
    %1878 = memref.load %arg2[%1877] : memref<72xf32, #tpu.memory_space<smem>>
    %1879 = vector.broadcast %1878 : f32 to vector<8x128xf32>
    %1880 = arith.mulf %1879, %1824 : vector<8x128xf32>
    %1881 = arith.addf %1857, %1880 : vector<8x128xf32>
    %c9_i32_742 = arith.constant 9 : i32
    %1882 = arith.addi %1269, %c9_i32_742 : i32
    %c6_i32_743 = arith.constant 6 : i32
    %1883 = arith.addi %1882, %c6_i32_743 : i32
    %c0_i32_744 = arith.constant 0 : i32
    %1884 = arith.addi %1883, %c0_i32_744 : i32
    %1885 = arith.index_cast %1884 : i32 to index
    %1886 = memref.load %arg2[%1885] : memref<72xf32, #tpu.memory_space<smem>>
    %1887 = vector.broadcast %1886 : f32 to vector<8x128xf32>
    %1888 = arith.mulf %1887, %1824 : vector<8x128xf32>
    %1889 = arith.addf %1873, %1888 : vector<8x128xf32>
    %c9_i32_745 = arith.constant 9 : i32
    %1890 = arith.addi %1269, %c9_i32_745 : i32
    %c6_i32_746 = arith.constant 6 : i32
    %1891 = arith.addi %1890, %c6_i32_746 : i32
    %c2_i32_747 = arith.constant 2 : i32
    %1892 = arith.addi %1891, %c2_i32_747 : i32
    %1893 = arith.index_cast %1892 : i32 to index
    %1894 = memref.load %arg2[%1893] : memref<72xf32, #tpu.memory_space<smem>>
    %1895 = vector.broadcast %1894 : f32 to vector<8x128xf32>
    %1896 = arith.mulf %1895, %1825 : vector<8x128xf32>
    %1897 = arith.addf %1889, %1896 : vector<8x128xf32>
    %c0_748 = arith.constant 0 : index
    %c8_749 = arith.constant 8 : index
    %c0_750 = arith.constant 0 : index
    %c0_751 = arith.constant 0 : index
    %1898 = vector.load %arg3[%c0_748, %c8_749, %c0_750, %c0_751] : memref<1x16x9x129xf32, #tpu.memory_space<vmem>>, vector<1x1x9x129xf32>
    %1899 = vector.shape_cast %1898 : vector<1x1x9x129xf32> to vector<9x129xf32>
    %1900 = vector.extract_strided_slice %1899 {offsets = [0, 0], sizes = [8, 128], strides = [1, 1]} : vector<9x129xf32> to vector<8x128xf32>
    %1901 = vector.extract_strided_slice %1899 {offsets = [0, 1], sizes = [8, 128], strides = [1, 1]} : vector<9x129xf32> to vector<8x128xf32>
    %1902 = vector.extract_strided_slice %1899 {offsets = [1, 0], sizes = [8, 128], strides = [1, 1]} : vector<9x129xf32> to vector<8x128xf32>
    %1903 = vector.extract_strided_slice %1899 {offsets = [1, 1], sizes = [8, 128], strides = [1, 1]} : vector<9x129xf32> to vector<8x128xf32>
    %c18_i32_752 = arith.constant 18 : i32
    %1904 = arith.addi %1269, %c18_i32_752 : i32
    %c0_i32_753 = arith.constant 0 : i32
    %1905 = arith.addi %1904, %c0_i32_753 : i32
    %c0_i32_754 = arith.constant 0 : i32
    %1906 = arith.addi %1905, %c0_i32_754 : i32
    %1907 = arith.index_cast %1906 : i32 to index
    %1908 = memref.load %arg2[%1907] : memref<72xf32, #tpu.memory_space<smem>>
    %1909 = vector.broadcast %1908 : f32 to vector<8x128xf32>
    %1910 = arith.mulf %1909, %1900 : vector<8x128xf32>
    %1911 = arith.addf %1833, %1910 : vector<8x128xf32>
    %c18_i32_755 = arith.constant 18 : i32
    %1912 = arith.addi %1269, %c18_i32_755 : i32
    %c0_i32_756 = arith.constant 0 : i32
    %1913 = arith.addi %1912, %c0_i32_756 : i32
    %c2_i32_757 = arith.constant 2 : i32
    %1914 = arith.addi %1913, %c2_i32_757 : i32
    %1915 = arith.index_cast %1914 : i32 to index
    %1916 = memref.load %arg2[%1915] : memref<72xf32, #tpu.memory_space<smem>>
    %1917 = vector.broadcast %1916 : f32 to vector<8x128xf32>
    %1918 = arith.mulf %1917, %1901 : vector<8x128xf32>
    %1919 = arith.addf %1911, %1918 : vector<8x128xf32>
    %c18_i32_758 = arith.constant 18 : i32
    %1920 = arith.addi %1269, %c18_i32_758 : i32
    %c0_i32_759 = arith.constant 0 : i32
    %1921 = arith.addi %1920, %c0_i32_759 : i32
    %c1_i32_760 = arith.constant 1 : i32
    %1922 = arith.addi %1921, %c1_i32_760 : i32
    %1923 = arith.index_cast %1922 : i32 to index
    %1924 = memref.load %arg2[%1923] : memref<72xf32, #tpu.memory_space<smem>>
    %1925 = vector.broadcast %1924 : f32 to vector<8x128xf32>
    %1926 = arith.mulf %1925, %1901 : vector<8x128xf32>
    %1927 = arith.addf %1849, %1926 : vector<8x128xf32>
    %c18_i32_761 = arith.constant 18 : i32
    %1928 = arith.addi %1269, %c18_i32_761 : i32
    %c6_i32_762 = arith.constant 6 : i32
    %1929 = arith.addi %1928, %c6_i32_762 : i32
    %c0_i32_763 = arith.constant 0 : i32
    %1930 = arith.addi %1929, %c0_i32_763 : i32
    %1931 = arith.index_cast %1930 : i32 to index
    %1932 = memref.load %arg2[%1931] : memref<72xf32, #tpu.memory_space<smem>>
    %1933 = vector.broadcast %1932 : f32 to vector<8x128xf32>
    %1934 = arith.mulf %1933, %1902 : vector<8x128xf32>
    %1935 = arith.addf %1919, %1934 : vector<8x128xf32>
    %c18_i32_764 = arith.constant 18 : i32
    %1936 = arith.addi %1269, %c18_i32_764 : i32
    %c6_i32_765 = arith.constant 6 : i32
    %1937 = arith.addi %1936, %c6_i32_765 : i32
    %c2_i32_766 = arith.constant 2 : i32
    %1938 = arith.addi %1937, %c2_i32_766 : i32
    %1939 = arith.index_cast %1938 : i32 to index
    %1940 = memref.load %arg2[%1939] : memref<72xf32, #tpu.memory_space<smem>>
    %1941 = vector.broadcast %1940 : f32 to vector<8x128xf32>
    %1942 = arith.mulf %1941, %1903 : vector<8x128xf32>
    %1943 = arith.addf %1935, %1942 : vector<8x128xf32>
    %c18_i32_767 = arith.constant 18 : i32
    %1944 = arith.addi %1269, %c18_i32_767 : i32
    %c6_i32_768 = arith.constant 6 : i32
    %1945 = arith.addi %1944, %c6_i32_768 : i32
    %c1_i32_769 = arith.constant 1 : i32
    %1946 = arith.addi %1945, %c1_i32_769 : i32
    %1947 = arith.index_cast %1946 : i32 to index
    %1948 = memref.load %arg2[%1947] : memref<72xf32, #tpu.memory_space<smem>>
    %1949 = vector.broadcast %1948 : f32 to vector<8x128xf32>
    %1950 = arith.mulf %1949, %1903 : vector<8x128xf32>
    %1951 = arith.addf %1927, %1950 : vector<8x128xf32>
    %c18_i32_770 = arith.constant 18 : i32
    %1952 = arith.addi %1269, %c18_i32_770 : i32
    %c3_i32_771 = arith.constant 3 : i32
    %1953 = arith.addi %1952, %c3_i32_771 : i32
    %c0_i32_772 = arith.constant 0 : i32
    %1954 = arith.addi %1953, %c0_i32_772 : i32
    %1955 = arith.index_cast %1954 : i32 to index
    %1956 = memref.load %arg2[%1955] : memref<72xf32, #tpu.memory_space<smem>>
    %1957 = vector.broadcast %1956 : f32 to vector<8x128xf32>
    %1958 = arith.mulf %1957, %1902 : vector<8x128xf32>
    %1959 = arith.addf %1881, %1958 : vector<8x128xf32>
    %c18_i32_773 = arith.constant 18 : i32
    %1960 = arith.addi %1269, %c18_i32_773 : i32
    %c3_i32_774 = arith.constant 3 : i32
    %1961 = arith.addi %1960, %c3_i32_774 : i32
    %c2_i32_775 = arith.constant 2 : i32
    %1962 = arith.addi %1961, %c2_i32_775 : i32
    %1963 = arith.index_cast %1962 : i32 to index
    %1964 = memref.load %arg2[%1963] : memref<72xf32, #tpu.memory_space<smem>>
    %1965 = vector.broadcast %1964 : f32 to vector<8x128xf32>
    %1966 = arith.mulf %1965, %1903 : vector<8x128xf32>
    %1967 = arith.addf %1959, %1966 : vector<8x128xf32>
    %c18_i32_776 = arith.constant 18 : i32
    %1968 = arith.addi %1269, %c18_i32_776 : i32
    %c3_i32_777 = arith.constant 3 : i32
    %1969 = arith.addi %1968, %c3_i32_777 : i32
    %c1_i32_778 = arith.constant 1 : i32
    %1970 = arith.addi %1969, %c1_i32_778 : i32
    %1971 = arith.index_cast %1970 : i32 to index
    %1972 = memref.load %arg2[%1971] : memref<72xf32, #tpu.memory_space<smem>>
    %1973 = vector.broadcast %1972 : f32 to vector<8x128xf32>
    %1974 = arith.mulf %1973, %1903 : vector<8x128xf32>
    %1975 = arith.addf %1897, %1974 : vector<8x128xf32>
    %c0_779 = arith.constant 0 : index
    %c9_780 = arith.constant 9 : index
    %c0_781 = arith.constant 0 : index
    %c0_782 = arith.constant 0 : index
    %1976 = vector.load %arg3[%c0_779, %c9_780, %c0_781, %c0_782] : memref<1x16x9x129xf32, #tpu.memory_space<vmem>>, vector<1x1x9x129xf32>
    %1977 = vector.shape_cast %1976 : vector<1x1x9x129xf32> to vector<9x129xf32>
    %1978 = vector.extract_strided_slice %1977 {offsets = [0, 0], sizes = [8, 128], strides = [1, 1]} : vector<9x129xf32> to vector<8x128xf32>
    %1979 = vector.extract_strided_slice %1977 {offsets = [0, 1], sizes = [8, 128], strides = [1, 1]} : vector<9x129xf32> to vector<8x128xf32>
    %1980 = vector.extract_strided_slice %1977 {offsets = [1, 0], sizes = [8, 128], strides = [1, 1]} : vector<9x129xf32> to vector<8x128xf32>
    %1981 = vector.extract_strided_slice %1977 {offsets = [1, 1], sizes = [8, 128], strides = [1, 1]} : vector<9x129xf32> to vector<8x128xf32>
    %c18_i32_783 = arith.constant 18 : i32
    %1982 = arith.addi %1269, %c18_i32_783 : i32
    %c0_i32_784 = arith.constant 0 : i32
    %1983 = arith.addi %1982, %c0_i32_784 : i32
    %c1_i32_785 = arith.constant 1 : i32
    %1984 = arith.addi %1983, %c1_i32_785 : i32
    %1985 = arith.index_cast %1984 : i32 to index
    %1986 = memref.load %arg2[%1985] : memref<72xf32, #tpu.memory_space<smem>>
    %1987 = vector.broadcast %1986 : f32 to vector<8x128xf32>
    %1988 = arith.mulf %1987, %1978 : vector<8x128xf32>
    %1989 = arith.addf %1943, %1988 : vector<8x128xf32>
    %c18_i32_786 = arith.constant 18 : i32
    %1990 = arith.addi %1269, %c18_i32_786 : i32
    %c0_i32_787 = arith.constant 0 : i32
    %1991 = arith.addi %1990, %c0_i32_787 : i32
    %c0_i32_788 = arith.constant 0 : i32
    %1992 = arith.addi %1991, %c0_i32_788 : i32
    %1993 = arith.index_cast %1992 : i32 to index
    %1994 = memref.load %arg2[%1993] : memref<72xf32, #tpu.memory_space<smem>>
    %1995 = vector.broadcast %1994 : f32 to vector<8x128xf32>
    %1996 = arith.mulf %1995, %1978 : vector<8x128xf32>
    %1997 = arith.addf %1951, %1996 : vector<8x128xf32>
    %c18_i32_789 = arith.constant 18 : i32
    %1998 = arith.addi %1269, %c18_i32_789 : i32
    %c0_i32_790 = arith.constant 0 : i32
    %1999 = arith.addi %1998, %c0_i32_790 : i32
    %c2_i32_791 = arith.constant 2 : i32
    %2000 = arith.addi %1999, %c2_i32_791 : i32
    %2001 = arith.index_cast %2000 : i32 to index
    %2002 = memref.load %arg2[%2001] : memref<72xf32, #tpu.memory_space<smem>>
    %2003 = vector.broadcast %2002 : f32 to vector<8x128xf32>
    %2004 = arith.mulf %2003, %1979 : vector<8x128xf32>
    %2005 = arith.addf %1997, %2004 : vector<8x128xf32>
    %c18_i32_792 = arith.constant 18 : i32
    %2006 = arith.addi %1269, %c18_i32_792 : i32
    %c6_i32_793 = arith.constant 6 : i32
    %2007 = arith.addi %2006, %c6_i32_793 : i32
    %c1_i32_794 = arith.constant 1 : i32
    %2008 = arith.addi %2007, %c1_i32_794 : i32
    %2009 = arith.index_cast %2008 : i32 to index
    %2010 = memref.load %arg2[%2009] : memref<72xf32, #tpu.memory_space<smem>>
    %2011 = vector.broadcast %2010 : f32 to vector<8x128xf32>
    %2012 = arith.mulf %2011, %1980 : vector<8x128xf32>
    %2013 = arith.addf %1989, %2012 : vector<8x128xf32>
    %c18_i32_795 = arith.constant 18 : i32
    %2014 = arith.addi %1269, %c18_i32_795 : i32
    %c6_i32_796 = arith.constant 6 : i32
    %2015 = arith.addi %2014, %c6_i32_796 : i32
    %c0_i32_797 = arith.constant 0 : i32
    %2016 = arith.addi %2015, %c0_i32_797 : i32
    %2017 = arith.index_cast %2016 : i32 to index
    %2018 = memref.load %arg2[%2017] : memref<72xf32, #tpu.memory_space<smem>>
    %2019 = vector.broadcast %2018 : f32 to vector<8x128xf32>
    %2020 = arith.mulf %2019, %1980 : vector<8x128xf32>
    %2021 = arith.addf %2005, %2020 : vector<8x128xf32>
    %c18_i32_798 = arith.constant 18 : i32
    %2022 = arith.addi %1269, %c18_i32_798 : i32
    %c6_i32_799 = arith.constant 6 : i32
    %2023 = arith.addi %2022, %c6_i32_799 : i32
    %c2_i32_800 = arith.constant 2 : i32
    %2024 = arith.addi %2023, %c2_i32_800 : i32
    %2025 = arith.index_cast %2024 : i32 to index
    %2026 = memref.load %arg2[%2025] : memref<72xf32, #tpu.memory_space<smem>>
    %2027 = vector.broadcast %2026 : f32 to vector<8x128xf32>
    %2028 = arith.mulf %2027, %1981 : vector<8x128xf32>
    %2029 = arith.addf %2021, %2028 : vector<8x128xf32>
    %c18_i32_801 = arith.constant 18 : i32
    %2030 = arith.addi %1269, %c18_i32_801 : i32
    %c3_i32_802 = arith.constant 3 : i32
    %2031 = arith.addi %2030, %c3_i32_802 : i32
    %c1_i32_803 = arith.constant 1 : i32
    %2032 = arith.addi %2031, %c1_i32_803 : i32
    %2033 = arith.index_cast %2032 : i32 to index
    %2034 = memref.load %arg2[%2033] : memref<72xf32, #tpu.memory_space<smem>>
    %2035 = vector.broadcast %2034 : f32 to vector<8x128xf32>
    %2036 = arith.mulf %2035, %1980 : vector<8x128xf32>
    %2037 = arith.addf %1967, %2036 : vector<8x128xf32>
    %c18_i32_804 = arith.constant 18 : i32
    %2038 = arith.addi %1269, %c18_i32_804 : i32
    %c3_i32_805 = arith.constant 3 : i32
    %2039 = arith.addi %2038, %c3_i32_805 : i32
    %c0_i32_806 = arith.constant 0 : i32
    %2040 = arith.addi %2039, %c0_i32_806 : i32
    %2041 = arith.index_cast %2040 : i32 to index
    %2042 = memref.load %arg2[%2041] : memref<72xf32, #tpu.memory_space<smem>>
    %2043 = vector.broadcast %2042 : f32 to vector<8x128xf32>
    %2044 = arith.mulf %2043, %1980 : vector<8x128xf32>
    %2045 = arith.addf %1975, %2044 : vector<8x128xf32>
    %c18_i32_807 = arith.constant 18 : i32
    %2046 = arith.addi %1269, %c18_i32_807 : i32
    %c3_i32_808 = arith.constant 3 : i32
    %2047 = arith.addi %2046, %c3_i32_808 : i32
    %c2_i32_809 = arith.constant 2 : i32
    %2048 = arith.addi %2047, %c2_i32_809 : i32
    %2049 = arith.index_cast %2048 : i32 to index
    %2050 = memref.load %arg2[%2049] : memref<72xf32, #tpu.memory_space<smem>>
    %2051 = vector.broadcast %2050 : f32 to vector<8x128xf32>
    %2052 = arith.mulf %2051, %1981 : vector<8x128xf32>
    %2053 = arith.addf %2045, %2052 : vector<8x128xf32>
    %c0_810 = arith.constant 0 : index
    %c10_811 = arith.constant 10 : index
    %c0_812 = arith.constant 0 : index
    %c0_813 = arith.constant 0 : index
    %2054 = vector.load %arg3[%c0_810, %c10_811, %c0_812, %c0_813] : memref<1x16x9x129xf32, #tpu.memory_space<vmem>>, vector<1x1x9x129xf32>
    %2055 = vector.shape_cast %2054 : vector<1x1x9x129xf32> to vector<9x129xf32>
    %2056 = vector.extract_strided_slice %2055 {offsets = [0, 0], sizes = [8, 128], strides = [1, 1]} : vector<9x129xf32> to vector<8x128xf32>
    %2057 = vector.extract_strided_slice %2055 {offsets = [0, 1], sizes = [8, 128], strides = [1, 1]} : vector<9x129xf32> to vector<8x128xf32>
    %2058 = vector.extract_strided_slice %2055 {offsets = [1, 0], sizes = [8, 128], strides = [1, 1]} : vector<9x129xf32> to vector<8x128xf32>
    %2059 = vector.extract_strided_slice %2055 {offsets = [1, 1], sizes = [8, 128], strides = [1, 1]} : vector<9x129xf32> to vector<8x128xf32>
    %c18_i32_814 = arith.constant 18 : i32
    %2060 = arith.addi %1269, %c18_i32_814 : i32
    %c3_i32_815 = arith.constant 3 : i32
    %2061 = arith.addi %2060, %c3_i32_815 : i32
    %c0_i32_816 = arith.constant 0 : i32
    %2062 = arith.addi %2061, %c0_i32_816 : i32
    %2063 = arith.index_cast %2062 : i32 to index
    %2064 = memref.load %arg2[%2063] : memref<72xf32, #tpu.memory_space<smem>>
    %2065 = vector.broadcast %2064 : f32 to vector<8x128xf32>
    %2066 = arith.mulf %2065, %2056 : vector<8x128xf32>
    %2067 = arith.addf %2013, %2066 : vector<8x128xf32>
    %c18_i32_817 = arith.constant 18 : i32
    %2068 = arith.addi %1269, %c18_i32_817 : i32
    %c3_i32_818 = arith.constant 3 : i32
    %2069 = arith.addi %2068, %c3_i32_818 : i32
    %c2_i32_819 = arith.constant 2 : i32
    %2070 = arith.addi %2069, %c2_i32_819 : i32
    %2071 = arith.index_cast %2070 : i32 to index
    %2072 = memref.load %arg2[%2071] : memref<72xf32, #tpu.memory_space<smem>>
    %2073 = vector.broadcast %2072 : f32 to vector<8x128xf32>
    %2074 = arith.mulf %2073, %2057 : vector<8x128xf32>
    %2075 = arith.addf %2067, %2074 : vector<8x128xf32>
    %c18_i32_820 = arith.constant 18 : i32
    %2076 = arith.addi %1269, %c18_i32_820 : i32
    %c3_i32_821 = arith.constant 3 : i32
    %2077 = arith.addi %2076, %c3_i32_821 : i32
    %c1_i32_822 = arith.constant 1 : i32
    %2078 = arith.addi %2077, %c1_i32_822 : i32
    %2079 = arith.index_cast %2078 : i32 to index
    %2080 = memref.load %arg2[%2079] : memref<72xf32, #tpu.memory_space<smem>>
    %2081 = vector.broadcast %2080 : f32 to vector<8x128xf32>
    %2082 = arith.mulf %2081, %2057 : vector<8x128xf32>
    %2083 = arith.addf %2029, %2082 : vector<8x128xf32>
    %c18_i32_823 = arith.constant 18 : i32
    %2084 = arith.addi %1269, %c18_i32_823 : i32
    %c0_i32_824 = arith.constant 0 : i32
    %2085 = arith.addi %2084, %c0_i32_824 : i32
    %c0_i32_825 = arith.constant 0 : i32
    %2086 = arith.addi %2085, %c0_i32_825 : i32
    %2087 = arith.index_cast %2086 : i32 to index
    %2088 = memref.load %arg2[%2087] : memref<72xf32, #tpu.memory_space<smem>>
    %2089 = vector.broadcast %2088 : f32 to vector<8x128xf32>
    %2090 = arith.mulf %2089, %2056 : vector<8x128xf32>
    %2091 = arith.addf %2037, %2090 : vector<8x128xf32>
    %c18_i32_826 = arith.constant 18 : i32
    %2092 = arith.addi %1269, %c18_i32_826 : i32
    %c0_i32_827 = arith.constant 0 : i32
    %2093 = arith.addi %2092, %c0_i32_827 : i32
    %c2_i32_828 = arith.constant 2 : i32
    %2094 = arith.addi %2093, %c2_i32_828 : i32
    %2095 = arith.index_cast %2094 : i32 to index
    %2096 = memref.load %arg2[%2095] : memref<72xf32, #tpu.memory_space<smem>>
    %2097 = vector.broadcast %2096 : f32 to vector<8x128xf32>
    %2098 = arith.mulf %2097, %2057 : vector<8x128xf32>
    %2099 = arith.addf %2091, %2098 : vector<8x128xf32>
    %c18_i32_829 = arith.constant 18 : i32
    %2100 = arith.addi %1269, %c18_i32_829 : i32
    %c0_i32_830 = arith.constant 0 : i32
    %2101 = arith.addi %2100, %c0_i32_830 : i32
    %c1_i32_831 = arith.constant 1 : i32
    %2102 = arith.addi %2101, %c1_i32_831 : i32
    %2103 = arith.index_cast %2102 : i32 to index
    %2104 = memref.load %arg2[%2103] : memref<72xf32, #tpu.memory_space<smem>>
    %2105 = vector.broadcast %2104 : f32 to vector<8x128xf32>
    %2106 = arith.mulf %2105, %2057 : vector<8x128xf32>
    %2107 = arith.addf %2053, %2106 : vector<8x128xf32>
    %c18_i32_832 = arith.constant 18 : i32
    %2108 = arith.addi %1269, %c18_i32_832 : i32
    %c6_i32_833 = arith.constant 6 : i32
    %2109 = arith.addi %2108, %c6_i32_833 : i32
    %c0_i32_834 = arith.constant 0 : i32
    %2110 = arith.addi %2109, %c0_i32_834 : i32
    %2111 = arith.index_cast %2110 : i32 to index
    %2112 = memref.load %arg2[%2111] : memref<72xf32, #tpu.memory_space<smem>>
    %2113 = vector.broadcast %2112 : f32 to vector<8x128xf32>
    %2114 = arith.mulf %2113, %2058 : vector<8x128xf32>
    %2115 = arith.addf %2099, %2114 : vector<8x128xf32>
    %c18_i32_835 = arith.constant 18 : i32
    %2116 = arith.addi %1269, %c18_i32_835 : i32
    %c6_i32_836 = arith.constant 6 : i32
    %2117 = arith.addi %2116, %c6_i32_836 : i32
    %c2_i32_837 = arith.constant 2 : i32
    %2118 = arith.addi %2117, %c2_i32_837 : i32
    %2119 = arith.index_cast %2118 : i32 to index
    %2120 = memref.load %arg2[%2119] : memref<72xf32, #tpu.memory_space<smem>>
    %2121 = vector.broadcast %2120 : f32 to vector<8x128xf32>
    %2122 = arith.mulf %2121, %2059 : vector<8x128xf32>
    %2123 = arith.addf %2115, %2122 : vector<8x128xf32>
    %c18_i32_838 = arith.constant 18 : i32
    %2124 = arith.addi %1269, %c18_i32_838 : i32
    %c6_i32_839 = arith.constant 6 : i32
    %2125 = arith.addi %2124, %c6_i32_839 : i32
    %c1_i32_840 = arith.constant 1 : i32
    %2126 = arith.addi %2125, %c1_i32_840 : i32
    %2127 = arith.index_cast %2126 : i32 to index
    %2128 = memref.load %arg2[%2127] : memref<72xf32, #tpu.memory_space<smem>>
    %2129 = vector.broadcast %2128 : f32 to vector<8x128xf32>
    %2130 = arith.mulf %2129, %2059 : vector<8x128xf32>
    %2131 = arith.addf %2107, %2130 : vector<8x128xf32>
    %c0_841 = arith.constant 0 : index
    %c11_842 = arith.constant 11 : index
    %c0_843 = arith.constant 0 : index
    %c0_844 = arith.constant 0 : index
    %2132 = vector.load %arg3[%c0_841, %c11_842, %c0_843, %c0_844] : memref<1x16x9x129xf32, #tpu.memory_space<vmem>>, vector<1x1x9x129xf32>
    %2133 = vector.shape_cast %2132 : vector<1x1x9x129xf32> to vector<9x129xf32>
    %2134 = vector.extract_strided_slice %2133 {offsets = [0, 0], sizes = [8, 128], strides = [1, 1]} : vector<9x129xf32> to vector<8x128xf32>
    %2135 = vector.extract_strided_slice %2133 {offsets = [0, 1], sizes = [8, 128], strides = [1, 1]} : vector<9x129xf32> to vector<8x128xf32>
    %2136 = vector.extract_strided_slice %2133 {offsets = [1, 0], sizes = [8, 128], strides = [1, 1]} : vector<9x129xf32> to vector<8x128xf32>
    %2137 = vector.extract_strided_slice %2133 {offsets = [1, 1], sizes = [8, 128], strides = [1, 1]} : vector<9x129xf32> to vector<8x128xf32>
    %c18_i32_845 = arith.constant 18 : i32
    %2138 = arith.addi %1269, %c18_i32_845 : i32
    %c3_i32_846 = arith.constant 3 : i32
    %2139 = arith.addi %2138, %c3_i32_846 : i32
    %c1_i32_847 = arith.constant 1 : i32
    %2140 = arith.addi %2139, %c1_i32_847 : i32
    %2141 = arith.index_cast %2140 : i32 to index
    %2142 = memref.load %arg2[%2141] : memref<72xf32, #tpu.memory_space<smem>>
    %2143 = vector.broadcast %2142 : f32 to vector<8x128xf32>
    %2144 = arith.mulf %2143, %2134 : vector<8x128xf32>
    %2145 = arith.addf %2075, %2144 : vector<8x128xf32>
    %c18_i32_848 = arith.constant 18 : i32
    %2146 = arith.addi %1269, %c18_i32_848 : i32
    %c3_i32_849 = arith.constant 3 : i32
    %2147 = arith.addi %2146, %c3_i32_849 : i32
    %c0_i32_850 = arith.constant 0 : i32
    %2148 = arith.addi %2147, %c0_i32_850 : i32
    %2149 = arith.index_cast %2148 : i32 to index
    %2150 = memref.load %arg2[%2149] : memref<72xf32, #tpu.memory_space<smem>>
    %2151 = vector.broadcast %2150 : f32 to vector<8x128xf32>
    %2152 = arith.mulf %2151, %2134 : vector<8x128xf32>
    %2153 = arith.addf %2083, %2152 : vector<8x128xf32>
    %c18_i32_851 = arith.constant 18 : i32
    %2154 = arith.addi %1269, %c18_i32_851 : i32
    %c3_i32_852 = arith.constant 3 : i32
    %2155 = arith.addi %2154, %c3_i32_852 : i32
    %c2_i32_853 = arith.constant 2 : i32
    %2156 = arith.addi %2155, %c2_i32_853 : i32
    %2157 = arith.index_cast %2156 : i32 to index
    %2158 = memref.load %arg2[%2157] : memref<72xf32, #tpu.memory_space<smem>>
    %2159 = vector.broadcast %2158 : f32 to vector<8x128xf32>
    %2160 = arith.mulf %2159, %2135 : vector<8x128xf32>
    %2161 = arith.addf %2153, %2160 : vector<8x128xf32>
    %c18_i32_854 = arith.constant 18 : i32
    %2162 = arith.addi %1269, %c18_i32_854 : i32
    %c0_i32_855 = arith.constant 0 : i32
    %2163 = arith.addi %2162, %c0_i32_855 : i32
    %c1_i32_856 = arith.constant 1 : i32
    %2164 = arith.addi %2163, %c1_i32_856 : i32
    %2165 = arith.index_cast %2164 : i32 to index
    %2166 = memref.load %arg2[%2165] : memref<72xf32, #tpu.memory_space<smem>>
    %2167 = vector.broadcast %2166 : f32 to vector<8x128xf32>
    %2168 = arith.mulf %2167, %2134 : vector<8x128xf32>
    %2169 = arith.addf %2123, %2168 : vector<8x128xf32>
    %c18_i32_857 = arith.constant 18 : i32
    %2170 = arith.addi %1269, %c18_i32_857 : i32
    %c0_i32_858 = arith.constant 0 : i32
    %2171 = arith.addi %2170, %c0_i32_858 : i32
    %c0_i32_859 = arith.constant 0 : i32
    %2172 = arith.addi %2171, %c0_i32_859 : i32
    %2173 = arith.index_cast %2172 : i32 to index
    %2174 = memref.load %arg2[%2173] : memref<72xf32, #tpu.memory_space<smem>>
    %2175 = vector.broadcast %2174 : f32 to vector<8x128xf32>
    %2176 = arith.mulf %2175, %2134 : vector<8x128xf32>
    %2177 = arith.addf %2131, %2176 : vector<8x128xf32>
    %c18_i32_860 = arith.constant 18 : i32
    %2178 = arith.addi %1269, %c18_i32_860 : i32
    %c0_i32_861 = arith.constant 0 : i32
    %2179 = arith.addi %2178, %c0_i32_861 : i32
    %c2_i32_862 = arith.constant 2 : i32
    %2180 = arith.addi %2179, %c2_i32_862 : i32
    %2181 = arith.index_cast %2180 : i32 to index
    %2182 = memref.load %arg2[%2181] : memref<72xf32, #tpu.memory_space<smem>>
    %2183 = vector.broadcast %2182 : f32 to vector<8x128xf32>
    %2184 = arith.mulf %2183, %2135 : vector<8x128xf32>
    %2185 = arith.addf %2177, %2184 : vector<8x128xf32>
    %c18_i32_863 = arith.constant 18 : i32
    %2186 = arith.addi %1269, %c18_i32_863 : i32
    %c6_i32_864 = arith.constant 6 : i32
    %2187 = arith.addi %2186, %c6_i32_864 : i32
    %c1_i32_865 = arith.constant 1 : i32
    %2188 = arith.addi %2187, %c1_i32_865 : i32
    %2189 = arith.index_cast %2188 : i32 to index
    %2190 = memref.load %arg2[%2189] : memref<72xf32, #tpu.memory_space<smem>>
    %2191 = vector.broadcast %2190 : f32 to vector<8x128xf32>
    %2192 = arith.mulf %2191, %2136 : vector<8x128xf32>
    %2193 = arith.addf %2169, %2192 : vector<8x128xf32>
    %c18_i32_866 = arith.constant 18 : i32
    %2194 = arith.addi %1269, %c18_i32_866 : i32
    %c6_i32_867 = arith.constant 6 : i32
    %2195 = arith.addi %2194, %c6_i32_867 : i32
    %c0_i32_868 = arith.constant 0 : i32
    %2196 = arith.addi %2195, %c0_i32_868 : i32
    %2197 = arith.index_cast %2196 : i32 to index
    %2198 = memref.load %arg2[%2197] : memref<72xf32, #tpu.memory_space<smem>>
    %2199 = vector.broadcast %2198 : f32 to vector<8x128xf32>
    %2200 = arith.mulf %2199, %2136 : vector<8x128xf32>
    %2201 = arith.addf %2185, %2200 : vector<8x128xf32>
    %c18_i32_869 = arith.constant 18 : i32
    %2202 = arith.addi %1269, %c18_i32_869 : i32
    %c6_i32_870 = arith.constant 6 : i32
    %2203 = arith.addi %2202, %c6_i32_870 : i32
    %c2_i32_871 = arith.constant 2 : i32
    %2204 = arith.addi %2203, %c2_i32_871 : i32
    %2205 = arith.index_cast %2204 : i32 to index
    %2206 = memref.load %arg2[%2205] : memref<72xf32, #tpu.memory_space<smem>>
    %2207 = vector.broadcast %2206 : f32 to vector<8x128xf32>
    %2208 = arith.mulf %2207, %2137 : vector<8x128xf32>
    %2209 = arith.addf %2201, %2208 : vector<8x128xf32>
    %c0_872 = arith.constant 0 : index
    %c12_873 = arith.constant 12 : index
    %c0_874 = arith.constant 0 : index
    %c0_875 = arith.constant 0 : index
    %2210 = vector.load %arg3[%c0_872, %c12_873, %c0_874, %c0_875] : memref<1x16x9x129xf32, #tpu.memory_space<vmem>>, vector<1x1x9x129xf32>
    %2211 = vector.shape_cast %2210 : vector<1x1x9x129xf32> to vector<9x129xf32>
    %2212 = vector.extract_strided_slice %2211 {offsets = [0, 0], sizes = [8, 128], strides = [1, 1]} : vector<9x129xf32> to vector<8x128xf32>
    %2213 = vector.extract_strided_slice %2211 {offsets = [0, 1], sizes = [8, 128], strides = [1, 1]} : vector<9x129xf32> to vector<8x128xf32>
    %2214 = vector.extract_strided_slice %2211 {offsets = [1, 0], sizes = [8, 128], strides = [1, 1]} : vector<9x129xf32> to vector<8x128xf32>
    %2215 = vector.extract_strided_slice %2211 {offsets = [1, 1], sizes = [8, 128], strides = [1, 1]} : vector<9x129xf32> to vector<8x128xf32>
    %c27_i32_876 = arith.constant 27 : i32
    %2216 = arith.addi %1269, %c27_i32_876 : i32
    %c0_i32_877 = arith.constant 0 : i32
    %2217 = arith.addi %2216, %c0_i32_877 : i32
    %c0_i32_878 = arith.constant 0 : i32
    %2218 = arith.addi %2217, %c0_i32_878 : i32
    %2219 = arith.index_cast %2218 : i32 to index
    %2220 = memref.load %arg2[%2219] : memref<72xf32, #tpu.memory_space<smem>>
    %2221 = vector.broadcast %2220 : f32 to vector<8x128xf32>
    %2222 = arith.mulf %2221, %2212 : vector<8x128xf32>
    %2223 = arith.addf %2145, %2222 : vector<8x128xf32>
    %c27_i32_879 = arith.constant 27 : i32
    %2224 = arith.addi %1269, %c27_i32_879 : i32
    %c0_i32_880 = arith.constant 0 : i32
    %2225 = arith.addi %2224, %c0_i32_880 : i32
    %c2_i32_881 = arith.constant 2 : i32
    %2226 = arith.addi %2225, %c2_i32_881 : i32
    %2227 = arith.index_cast %2226 : i32 to index
    %2228 = memref.load %arg2[%2227] : memref<72xf32, #tpu.memory_space<smem>>
    %2229 = vector.broadcast %2228 : f32 to vector<8x128xf32>
    %2230 = arith.mulf %2229, %2213 : vector<8x128xf32>
    %2231 = arith.addf %2223, %2230 : vector<8x128xf32>
    %c27_i32_882 = arith.constant 27 : i32
    %2232 = arith.addi %1269, %c27_i32_882 : i32
    %c0_i32_883 = arith.constant 0 : i32
    %2233 = arith.addi %2232, %c0_i32_883 : i32
    %c1_i32_884 = arith.constant 1 : i32
    %2234 = arith.addi %2233, %c1_i32_884 : i32
    %2235 = arith.index_cast %2234 : i32 to index
    %2236 = memref.load %arg2[%2235] : memref<72xf32, #tpu.memory_space<smem>>
    %2237 = vector.broadcast %2236 : f32 to vector<8x128xf32>
    %2238 = arith.mulf %2237, %2213 : vector<8x128xf32>
    %2239 = arith.addf %2161, %2238 : vector<8x128xf32>
    %c27_i32_885 = arith.constant 27 : i32
    %2240 = arith.addi %1269, %c27_i32_885 : i32
    %c6_i32_886 = arith.constant 6 : i32
    %2241 = arith.addi %2240, %c6_i32_886 : i32
    %c0_i32_887 = arith.constant 0 : i32
    %2242 = arith.addi %2241, %c0_i32_887 : i32
    %2243 = arith.index_cast %2242 : i32 to index
    %2244 = memref.load %arg2[%2243] : memref<72xf32, #tpu.memory_space<smem>>
    %2245 = vector.broadcast %2244 : f32 to vector<8x128xf32>
    %2246 = arith.mulf %2245, %2214 : vector<8x128xf32>
    %2247 = arith.addf %2231, %2246 : vector<8x128xf32>
    %c27_i32_888 = arith.constant 27 : i32
    %2248 = arith.addi %1269, %c27_i32_888 : i32
    %c6_i32_889 = arith.constant 6 : i32
    %2249 = arith.addi %2248, %c6_i32_889 : i32
    %c2_i32_890 = arith.constant 2 : i32
    %2250 = arith.addi %2249, %c2_i32_890 : i32
    %2251 = arith.index_cast %2250 : i32 to index
    %2252 = memref.load %arg2[%2251] : memref<72xf32, #tpu.memory_space<smem>>
    %2253 = vector.broadcast %2252 : f32 to vector<8x128xf32>
    %2254 = arith.mulf %2253, %2215 : vector<8x128xf32>
    %2255 = arith.addf %2247, %2254 : vector<8x128xf32>
    %c27_i32_891 = arith.constant 27 : i32
    %2256 = arith.addi %1269, %c27_i32_891 : i32
    %c6_i32_892 = arith.constant 6 : i32
    %2257 = arith.addi %2256, %c6_i32_892 : i32
    %c1_i32_893 = arith.constant 1 : i32
    %2258 = arith.addi %2257, %c1_i32_893 : i32
    %2259 = arith.index_cast %2258 : i32 to index
    %2260 = memref.load %arg2[%2259] : memref<72xf32, #tpu.memory_space<smem>>
    %2261 = vector.broadcast %2260 : f32 to vector<8x128xf32>
    %2262 = arith.mulf %2261, %2215 : vector<8x128xf32>
    %2263 = arith.addf %2239, %2262 : vector<8x128xf32>
    %c27_i32_894 = arith.constant 27 : i32
    %2264 = arith.addi %1269, %c27_i32_894 : i32
    %c3_i32_895 = arith.constant 3 : i32
    %2265 = arith.addi %2264, %c3_i32_895 : i32
    %c0_i32_896 = arith.constant 0 : i32
    %2266 = arith.addi %2265, %c0_i32_896 : i32
    %2267 = arith.index_cast %2266 : i32 to index
    %2268 = memref.load %arg2[%2267] : memref<72xf32, #tpu.memory_space<smem>>
    %2269 = vector.broadcast %2268 : f32 to vector<8x128xf32>
    %2270 = arith.mulf %2269, %2214 : vector<8x128xf32>
    %2271 = arith.addf %2193, %2270 : vector<8x128xf32>
    %c27_i32_897 = arith.constant 27 : i32
    %2272 = arith.addi %1269, %c27_i32_897 : i32
    %c3_i32_898 = arith.constant 3 : i32
    %2273 = arith.addi %2272, %c3_i32_898 : i32
    %c2_i32_899 = arith.constant 2 : i32
    %2274 = arith.addi %2273, %c2_i32_899 : i32
    %2275 = arith.index_cast %2274 : i32 to index
    %2276 = memref.load %arg2[%2275] : memref<72xf32, #tpu.memory_space<smem>>
    %2277 = vector.broadcast %2276 : f32 to vector<8x128xf32>
    %2278 = arith.mulf %2277, %2215 : vector<8x128xf32>
    %2279 = arith.addf %2271, %2278 : vector<8x128xf32>
    %c27_i32_900 = arith.constant 27 : i32
    %2280 = arith.addi %1269, %c27_i32_900 : i32
    %c3_i32_901 = arith.constant 3 : i32
    %2281 = arith.addi %2280, %c3_i32_901 : i32
    %c1_i32_902 = arith.constant 1 : i32
    %2282 = arith.addi %2281, %c1_i32_902 : i32
    %2283 = arith.index_cast %2282 : i32 to index
    %2284 = memref.load %arg2[%2283] : memref<72xf32, #tpu.memory_space<smem>>
    %2285 = vector.broadcast %2284 : f32 to vector<8x128xf32>
    %2286 = arith.mulf %2285, %2215 : vector<8x128xf32>
    %2287 = arith.addf %2209, %2286 : vector<8x128xf32>
    %c0_903 = arith.constant 0 : index
    %c13_904 = arith.constant 13 : index
    %c0_905 = arith.constant 0 : index
    %c0_906 = arith.constant 0 : index
    %2288 = vector.load %arg3[%c0_903, %c13_904, %c0_905, %c0_906] : memref<1x16x9x129xf32, #tpu.memory_space<vmem>>, vector<1x1x9x129xf32>
    %2289 = vector.shape_cast %2288 : vector<1x1x9x129xf32> to vector<9x129xf32>
    %2290 = vector.extract_strided_slice %2289 {offsets = [0, 0], sizes = [8, 128], strides = [1, 1]} : vector<9x129xf32> to vector<8x128xf32>
    %2291 = vector.extract_strided_slice %2289 {offsets = [0, 1], sizes = [8, 128], strides = [1, 1]} : vector<9x129xf32> to vector<8x128xf32>
    %2292 = vector.extract_strided_slice %2289 {offsets = [1, 0], sizes = [8, 128], strides = [1, 1]} : vector<9x129xf32> to vector<8x128xf32>
    %2293 = vector.extract_strided_slice %2289 {offsets = [1, 1], sizes = [8, 128], strides = [1, 1]} : vector<9x129xf32> to vector<8x128xf32>
    %c27_i32_907 = arith.constant 27 : i32
    %2294 = arith.addi %1269, %c27_i32_907 : i32
    %c0_i32_908 = arith.constant 0 : i32
    %2295 = arith.addi %2294, %c0_i32_908 : i32
    %c1_i32_909 = arith.constant 1 : i32
    %2296 = arith.addi %2295, %c1_i32_909 : i32
    %2297 = arith.index_cast %2296 : i32 to index
    %2298 = memref.load %arg2[%2297] : memref<72xf32, #tpu.memory_space<smem>>
    %2299 = vector.broadcast %2298 : f32 to vector<8x128xf32>
    %2300 = arith.mulf %2299, %2290 : vector<8x128xf32>
    %2301 = arith.addf %2255, %2300 : vector<8x128xf32>
    %c27_i32_910 = arith.constant 27 : i32
    %2302 = arith.addi %1269, %c27_i32_910 : i32
    %c0_i32_911 = arith.constant 0 : i32
    %2303 = arith.addi %2302, %c0_i32_911 : i32
    %c0_i32_912 = arith.constant 0 : i32
    %2304 = arith.addi %2303, %c0_i32_912 : i32
    %2305 = arith.index_cast %2304 : i32 to index
    %2306 = memref.load %arg2[%2305] : memref<72xf32, #tpu.memory_space<smem>>
    %2307 = vector.broadcast %2306 : f32 to vector<8x128xf32>
    %2308 = arith.mulf %2307, %2290 : vector<8x128xf32>
    %2309 = arith.addf %2263, %2308 : vector<8x128xf32>
    %c27_i32_913 = arith.constant 27 : i32
    %2310 = arith.addi %1269, %c27_i32_913 : i32
    %c0_i32_914 = arith.constant 0 : i32
    %2311 = arith.addi %2310, %c0_i32_914 : i32
    %c2_i32_915 = arith.constant 2 : i32
    %2312 = arith.addi %2311, %c2_i32_915 : i32
    %2313 = arith.index_cast %2312 : i32 to index
    %2314 = memref.load %arg2[%2313] : memref<72xf32, #tpu.memory_space<smem>>
    %2315 = vector.broadcast %2314 : f32 to vector<8x128xf32>
    %2316 = arith.mulf %2315, %2291 : vector<8x128xf32>
    %2317 = arith.addf %2309, %2316 : vector<8x128xf32>
    %c27_i32_916 = arith.constant 27 : i32
    %2318 = arith.addi %1269, %c27_i32_916 : i32
    %c6_i32_917 = arith.constant 6 : i32
    %2319 = arith.addi %2318, %c6_i32_917 : i32
    %c1_i32_918 = arith.constant 1 : i32
    %2320 = arith.addi %2319, %c1_i32_918 : i32
    %2321 = arith.index_cast %2320 : i32 to index
    %2322 = memref.load %arg2[%2321] : memref<72xf32, #tpu.memory_space<smem>>
    %2323 = vector.broadcast %2322 : f32 to vector<8x128xf32>
    %2324 = arith.mulf %2323, %2292 : vector<8x128xf32>
    %2325 = arith.addf %2301, %2324 : vector<8x128xf32>
    %c27_i32_919 = arith.constant 27 : i32
    %2326 = arith.addi %1269, %c27_i32_919 : i32
    %c6_i32_920 = arith.constant 6 : i32
    %2327 = arith.addi %2326, %c6_i32_920 : i32
    %c0_i32_921 = arith.constant 0 : i32
    %2328 = arith.addi %2327, %c0_i32_921 : i32
    %2329 = arith.index_cast %2328 : i32 to index
    %2330 = memref.load %arg2[%2329] : memref<72xf32, #tpu.memory_space<smem>>
    %2331 = vector.broadcast %2330 : f32 to vector<8x128xf32>
    %2332 = arith.mulf %2331, %2292 : vector<8x128xf32>
    %2333 = arith.addf %2317, %2332 : vector<8x128xf32>
    %c27_i32_922 = arith.constant 27 : i32
    %2334 = arith.addi %1269, %c27_i32_922 : i32
    %c6_i32_923 = arith.constant 6 : i32
    %2335 = arith.addi %2334, %c6_i32_923 : i32
    %c2_i32_924 = arith.constant 2 : i32
    %2336 = arith.addi %2335, %c2_i32_924 : i32
    %2337 = arith.index_cast %2336 : i32 to index
    %2338 = memref.load %arg2[%2337] : memref<72xf32, #tpu.memory_space<smem>>
    %2339 = vector.broadcast %2338 : f32 to vector<8x128xf32>
    %2340 = arith.mulf %2339, %2293 : vector<8x128xf32>
    %2341 = arith.addf %2333, %2340 : vector<8x128xf32>
    %c27_i32_925 = arith.constant 27 : i32
    %2342 = arith.addi %1269, %c27_i32_925 : i32
    %c3_i32_926 = arith.constant 3 : i32
    %2343 = arith.addi %2342, %c3_i32_926 : i32
    %c1_i32_927 = arith.constant 1 : i32
    %2344 = arith.addi %2343, %c1_i32_927 : i32
    %2345 = arith.index_cast %2344 : i32 to index
    %2346 = memref.load %arg2[%2345] : memref<72xf32, #tpu.memory_space<smem>>
    %2347 = vector.broadcast %2346 : f32 to vector<8x128xf32>
    %2348 = arith.mulf %2347, %2292 : vector<8x128xf32>
    %2349 = arith.addf %2279, %2348 : vector<8x128xf32>
    %c27_i32_928 = arith.constant 27 : i32
    %2350 = arith.addi %1269, %c27_i32_928 : i32
    %c3_i32_929 = arith.constant 3 : i32
    %2351 = arith.addi %2350, %c3_i32_929 : i32
    %c0_i32_930 = arith.constant 0 : i32
    %2352 = arith.addi %2351, %c0_i32_930 : i32
    %2353 = arith.index_cast %2352 : i32 to index
    %2354 = memref.load %arg2[%2353] : memref<72xf32, #tpu.memory_space<smem>>
    %2355 = vector.broadcast %2354 : f32 to vector<8x128xf32>
    %2356 = arith.mulf %2355, %2292 : vector<8x128xf32>
    %2357 = arith.addf %2287, %2356 : vector<8x128xf32>
    %c27_i32_931 = arith.constant 27 : i32
    %2358 = arith.addi %1269, %c27_i32_931 : i32
    %c3_i32_932 = arith.constant 3 : i32
    %2359 = arith.addi %2358, %c3_i32_932 : i32
    %c2_i32_933 = arith.constant 2 : i32
    %2360 = arith.addi %2359, %c2_i32_933 : i32
    %2361 = arith.index_cast %2360 : i32 to index
    %2362 = memref.load %arg2[%2361] : memref<72xf32, #tpu.memory_space<smem>>
    %2363 = vector.broadcast %2362 : f32 to vector<8x128xf32>
    %2364 = arith.mulf %2363, %2293 : vector<8x128xf32>
    %2365 = arith.addf %2357, %2364 : vector<8x128xf32>
    %c0_934 = arith.constant 0 : index
    %c14_935 = arith.constant 14 : index
    %c0_936 = arith.constant 0 : index
    %c0_937 = arith.constant 0 : index
    %2366 = vector.load %arg3[%c0_934, %c14_935, %c0_936, %c0_937] : memref<1x16x9x129xf32, #tpu.memory_space<vmem>>, vector<1x1x9x129xf32>
    %2367 = vector.shape_cast %2366 : vector<1x1x9x129xf32> to vector<9x129xf32>
    %2368 = vector.extract_strided_slice %2367 {offsets = [0, 0], sizes = [8, 128], strides = [1, 1]} : vector<9x129xf32> to vector<8x128xf32>
    %2369 = vector.extract_strided_slice %2367 {offsets = [0, 1], sizes = [8, 128], strides = [1, 1]} : vector<9x129xf32> to vector<8x128xf32>
    %2370 = vector.extract_strided_slice %2367 {offsets = [1, 0], sizes = [8, 128], strides = [1, 1]} : vector<9x129xf32> to vector<8x128xf32>
    %2371 = vector.extract_strided_slice %2367 {offsets = [1, 1], sizes = [8, 128], strides = [1, 1]} : vector<9x129xf32> to vector<8x128xf32>
    %c27_i32_938 = arith.constant 27 : i32
    %2372 = arith.addi %1269, %c27_i32_938 : i32
    %c3_i32_939 = arith.constant 3 : i32
    %2373 = arith.addi %2372, %c3_i32_939 : i32
    %c0_i32_940 = arith.constant 0 : i32
    %2374 = arith.addi %2373, %c0_i32_940 : i32
    %2375 = arith.index_cast %2374 : i32 to index
    %2376 = memref.load %arg2[%2375] : memref<72xf32, #tpu.memory_space<smem>>
    %2377 = vector.broadcast %2376 : f32 to vector<8x128xf32>
    %2378 = arith.mulf %2377, %2368 : vector<8x128xf32>
    %2379 = arith.addf %2325, %2378 : vector<8x128xf32>
    %c27_i32_941 = arith.constant 27 : i32
    %2380 = arith.addi %1269, %c27_i32_941 : i32
    %c3_i32_942 = arith.constant 3 : i32
    %2381 = arith.addi %2380, %c3_i32_942 : i32
    %c2_i32_943 = arith.constant 2 : i32
    %2382 = arith.addi %2381, %c2_i32_943 : i32
    %2383 = arith.index_cast %2382 : i32 to index
    %2384 = memref.load %arg2[%2383] : memref<72xf32, #tpu.memory_space<smem>>
    %2385 = vector.broadcast %2384 : f32 to vector<8x128xf32>
    %2386 = arith.mulf %2385, %2369 : vector<8x128xf32>
    %2387 = arith.addf %2379, %2386 : vector<8x128xf32>
    %c27_i32_944 = arith.constant 27 : i32
    %2388 = arith.addi %1269, %c27_i32_944 : i32
    %c3_i32_945 = arith.constant 3 : i32
    %2389 = arith.addi %2388, %c3_i32_945 : i32
    %c1_i32_946 = arith.constant 1 : i32
    %2390 = arith.addi %2389, %c1_i32_946 : i32
    %2391 = arith.index_cast %2390 : i32 to index
    %2392 = memref.load %arg2[%2391] : memref<72xf32, #tpu.memory_space<smem>>
    %2393 = vector.broadcast %2392 : f32 to vector<8x128xf32>
    %2394 = arith.mulf %2393, %2369 : vector<8x128xf32>
    %2395 = arith.addf %2341, %2394 : vector<8x128xf32>
    %c27_i32_947 = arith.constant 27 : i32
    %2396 = arith.addi %1269, %c27_i32_947 : i32
    %c0_i32_948 = arith.constant 0 : i32
    %2397 = arith.addi %2396, %c0_i32_948 : i32
    %c0_i32_949 = arith.constant 0 : i32
    %2398 = arith.addi %2397, %c0_i32_949 : i32
    %2399 = arith.index_cast %2398 : i32 to index
    %2400 = memref.load %arg2[%2399] : memref<72xf32, #tpu.memory_space<smem>>
    %2401 = vector.broadcast %2400 : f32 to vector<8x128xf32>
    %2402 = arith.mulf %2401, %2368 : vector<8x128xf32>
    %2403 = arith.addf %2349, %2402 : vector<8x128xf32>
    %c27_i32_950 = arith.constant 27 : i32
    %2404 = arith.addi %1269, %c27_i32_950 : i32
    %c0_i32_951 = arith.constant 0 : i32
    %2405 = arith.addi %2404, %c0_i32_951 : i32
    %c2_i32_952 = arith.constant 2 : i32
    %2406 = arith.addi %2405, %c2_i32_952 : i32
    %2407 = arith.index_cast %2406 : i32 to index
    %2408 = memref.load %arg2[%2407] : memref<72xf32, #tpu.memory_space<smem>>
    %2409 = vector.broadcast %2408 : f32 to vector<8x128xf32>
    %2410 = arith.mulf %2409, %2369 : vector<8x128xf32>
    %2411 = arith.addf %2403, %2410 : vector<8x128xf32>
    %c27_i32_953 = arith.constant 27 : i32
    %2412 = arith.addi %1269, %c27_i32_953 : i32
    %c0_i32_954 = arith.constant 0 : i32
    %2413 = arith.addi %2412, %c0_i32_954 : i32
    %c1_i32_955 = arith.constant 1 : i32
    %2414 = arith.addi %2413, %c1_i32_955 : i32
    %2415 = arith.index_cast %2414 : i32 to index
    %2416 = memref.load %arg2[%2415] : memref<72xf32, #tpu.memory_space<smem>>
    %2417 = vector.broadcast %2416 : f32 to vector<8x128xf32>
    %2418 = arith.mulf %2417, %2369 : vector<8x128xf32>
    %2419 = arith.addf %2365, %2418 : vector<8x128xf32>
    %c27_i32_956 = arith.constant 27 : i32
    %2420 = arith.addi %1269, %c27_i32_956 : i32
    %c6_i32_957 = arith.constant 6 : i32
    %2421 = arith.addi %2420, %c6_i32_957 : i32
    %c0_i32_958 = arith.constant 0 : i32
    %2422 = arith.addi %2421, %c0_i32_958 : i32
    %2423 = arith.index_cast %2422 : i32 to index
    %2424 = memref.load %arg2[%2423] : memref<72xf32, #tpu.memory_space<smem>>
    %2425 = vector.broadcast %2424 : f32 to vector<8x128xf32>
    %2426 = arith.mulf %2425, %2370 : vector<8x128xf32>
    %2427 = arith.addf %2411, %2426 : vector<8x128xf32>
    %c27_i32_959 = arith.constant 27 : i32
    %2428 = arith.addi %1269, %c27_i32_959 : i32
    %c6_i32_960 = arith.constant 6 : i32
    %2429 = arith.addi %2428, %c6_i32_960 : i32
    %c2_i32_961 = arith.constant 2 : i32
    %2430 = arith.addi %2429, %c2_i32_961 : i32
    %2431 = arith.index_cast %2430 : i32 to index
    %2432 = memref.load %arg2[%2431] : memref<72xf32, #tpu.memory_space<smem>>
    %2433 = vector.broadcast %2432 : f32 to vector<8x128xf32>
    %2434 = arith.mulf %2433, %2371 : vector<8x128xf32>
    %2435 = arith.addf %2427, %2434 : vector<8x128xf32>
    %c27_i32_962 = arith.constant 27 : i32
    %2436 = arith.addi %1269, %c27_i32_962 : i32
    %c6_i32_963 = arith.constant 6 : i32
    %2437 = arith.addi %2436, %c6_i32_963 : i32
    %c1_i32_964 = arith.constant 1 : i32
    %2438 = arith.addi %2437, %c1_i32_964 : i32
    %2439 = arith.index_cast %2438 : i32 to index
    %2440 = memref.load %arg2[%2439] : memref<72xf32, #tpu.memory_space<smem>>
    %2441 = vector.broadcast %2440 : f32 to vector<8x128xf32>
    %2442 = arith.mulf %2441, %2371 : vector<8x128xf32>
    %2443 = arith.addf %2419, %2442 : vector<8x128xf32>
    %c0_965 = arith.constant 0 : index
    %c15_966 = arith.constant 15 : index
    %c0_967 = arith.constant 0 : index
    %c0_968 = arith.constant 0 : index
    %2444 = vector.load %arg3[%c0_965, %c15_966, %c0_967, %c0_968] : memref<1x16x9x129xf32, #tpu.memory_space<vmem>>, vector<1x1x9x129xf32>
    %2445 = vector.shape_cast %2444 : vector<1x1x9x129xf32> to vector<9x129xf32>
    %2446 = vector.extract_strided_slice %2445 {offsets = [0, 0], sizes = [8, 128], strides = [1, 1]} : vector<9x129xf32> to vector<8x128xf32>
    %2447 = vector.extract_strided_slice %2445 {offsets = [0, 1], sizes = [8, 128], strides = [1, 1]} : vector<9x129xf32> to vector<8x128xf32>
    %2448 = vector.extract_strided_slice %2445 {offsets = [1, 0], sizes = [8, 128], strides = [1, 1]} : vector<9x129xf32> to vector<8x128xf32>
    %2449 = vector.extract_strided_slice %2445 {offsets = [1, 1], sizes = [8, 128], strides = [1, 1]} : vector<9x129xf32> to vector<8x128xf32>
    %c27_i32_969 = arith.constant 27 : i32
    %2450 = arith.addi %1269, %c27_i32_969 : i32
    %c3_i32_970 = arith.constant 3 : i32
    %2451 = arith.addi %2450, %c3_i32_970 : i32
    %c1_i32_971 = arith.constant 1 : i32
    %2452 = arith.addi %2451, %c1_i32_971 : i32
    %2453 = arith.index_cast %2452 : i32 to index
    %2454 = memref.load %arg2[%2453] : memref<72xf32, #tpu.memory_space<smem>>
    %2455 = vector.broadcast %2454 : f32 to vector<8x128xf32>
    %2456 = arith.mulf %2455, %2446 : vector<8x128xf32>
    %2457 = arith.addf %2387, %2456 : vector<8x128xf32>
    %c27_i32_972 = arith.constant 27 : i32
    %2458 = arith.addi %1269, %c27_i32_972 : i32
    %c3_i32_973 = arith.constant 3 : i32
    %2459 = arith.addi %2458, %c3_i32_973 : i32
    %c0_i32_974 = arith.constant 0 : i32
    %2460 = arith.addi %2459, %c0_i32_974 : i32
    %2461 = arith.index_cast %2460 : i32 to index
    %2462 = memref.load %arg2[%2461] : memref<72xf32, #tpu.memory_space<smem>>
    %2463 = vector.broadcast %2462 : f32 to vector<8x128xf32>
    %2464 = arith.mulf %2463, %2446 : vector<8x128xf32>
    %2465 = arith.addf %2395, %2464 : vector<8x128xf32>
    %c27_i32_975 = arith.constant 27 : i32
    %2466 = arith.addi %1269, %c27_i32_975 : i32
    %c3_i32_976 = arith.constant 3 : i32
    %2467 = arith.addi %2466, %c3_i32_976 : i32
    %c2_i32_977 = arith.constant 2 : i32
    %2468 = arith.addi %2467, %c2_i32_977 : i32
    %2469 = arith.index_cast %2468 : i32 to index
    %2470 = memref.load %arg2[%2469] : memref<72xf32, #tpu.memory_space<smem>>
    %2471 = vector.broadcast %2470 : f32 to vector<8x128xf32>
    %2472 = arith.mulf %2471, %2447 : vector<8x128xf32>
    %2473 = arith.addf %2465, %2472 : vector<8x128xf32>
    %c27_i32_978 = arith.constant 27 : i32
    %2474 = arith.addi %1269, %c27_i32_978 : i32
    %c0_i32_979 = arith.constant 0 : i32
    %2475 = arith.addi %2474, %c0_i32_979 : i32
    %c1_i32_980 = arith.constant 1 : i32
    %2476 = arith.addi %2475, %c1_i32_980 : i32
    %2477 = arith.index_cast %2476 : i32 to index
    %2478 = memref.load %arg2[%2477] : memref<72xf32, #tpu.memory_space<smem>>
    %2479 = vector.broadcast %2478 : f32 to vector<8x128xf32>
    %2480 = arith.mulf %2479, %2446 : vector<8x128xf32>
    %2481 = arith.addf %2435, %2480 : vector<8x128xf32>
    %c27_i32_981 = arith.constant 27 : i32
    %2482 = arith.addi %1269, %c27_i32_981 : i32
    %c0_i32_982 = arith.constant 0 : i32
    %2483 = arith.addi %2482, %c0_i32_982 : i32
    %c0_i32_983 = arith.constant 0 : i32
    %2484 = arith.addi %2483, %c0_i32_983 : i32
    %2485 = arith.index_cast %2484 : i32 to index
    %2486 = memref.load %arg2[%2485] : memref<72xf32, #tpu.memory_space<smem>>
    %2487 = vector.broadcast %2486 : f32 to vector<8x128xf32>
    %2488 = arith.mulf %2487, %2446 : vector<8x128xf32>
    %2489 = arith.addf %2443, %2488 : vector<8x128xf32>
    %c27_i32_984 = arith.constant 27 : i32
    %2490 = arith.addi %1269, %c27_i32_984 : i32
    %c0_i32_985 = arith.constant 0 : i32
    %2491 = arith.addi %2490, %c0_i32_985 : i32
    %c2_i32_986 = arith.constant 2 : i32
    %2492 = arith.addi %2491, %c2_i32_986 : i32
    %2493 = arith.index_cast %2492 : i32 to index
    %2494 = memref.load %arg2[%2493] : memref<72xf32, #tpu.memory_space<smem>>
    %2495 = vector.broadcast %2494 : f32 to vector<8x128xf32>
    %2496 = arith.mulf %2495, %2447 : vector<8x128xf32>
    %2497 = arith.addf %2489, %2496 : vector<8x128xf32>
    %c27_i32_987 = arith.constant 27 : i32
    %2498 = arith.addi %1269, %c27_i32_987 : i32
    %c6_i32_988 = arith.constant 6 : i32
    %2499 = arith.addi %2498, %c6_i32_988 : i32
    %c1_i32_989 = arith.constant 1 : i32
    %2500 = arith.addi %2499, %c1_i32_989 : i32
    %2501 = arith.index_cast %2500 : i32 to index
    %2502 = memref.load %arg2[%2501] : memref<72xf32, #tpu.memory_space<smem>>
    %2503 = vector.broadcast %2502 : f32 to vector<8x128xf32>
    %2504 = arith.mulf %2503, %2448 : vector<8x128xf32>
    %2505 = arith.addf %2481, %2504 : vector<8x128xf32>
    %c27_i32_990 = arith.constant 27 : i32
    %2506 = arith.addi %1269, %c27_i32_990 : i32
    %c6_i32_991 = arith.constant 6 : i32
    %2507 = arith.addi %2506, %c6_i32_991 : i32
    %c0_i32_992 = arith.constant 0 : i32
    %2508 = arith.addi %2507, %c0_i32_992 : i32
    %2509 = arith.index_cast %2508 : i32 to index
    %2510 = memref.load %arg2[%2509] : memref<72xf32, #tpu.memory_space<smem>>
    %2511 = vector.broadcast %2510 : f32 to vector<8x128xf32>
    %2512 = arith.mulf %2511, %2448 : vector<8x128xf32>
    %2513 = arith.addf %2497, %2512 : vector<8x128xf32>
    %c27_i32_993 = arith.constant 27 : i32
    %2514 = arith.addi %1269, %c27_i32_993 : i32
    %c6_i32_994 = arith.constant 6 : i32
    %2515 = arith.addi %2514, %c6_i32_994 : i32
    %c2_i32_995 = arith.constant 2 : i32
    %2516 = arith.addi %2515, %c2_i32_995 : i32
    %2517 = arith.index_cast %2516 : i32 to index
    %2518 = memref.load %arg2[%2517] : memref<72xf32, #tpu.memory_space<smem>>
    %2519 = vector.broadcast %2518 : f32 to vector<8x128xf32>
    %2520 = arith.mulf %2519, %2449 : vector<8x128xf32>
    %2521 = arith.addf %2513, %2520 : vector<8x128xf32>
    %c0_996 = arith.constant 0 : index
    %c4_997 = arith.constant 4 : index
    %c0_998 = arith.constant 0 : index
    %c0_999 = arith.constant 0 : index
    %2522 = vector.load %arg4[%c0_996, %c4_997, %c0_998, %c0_999] : memref<1x8x8x128xf32, #tpu.memory_space<vmem>>, vector<1x1x8x128xf32>
    %2523 = vector.shape_cast %2522 : vector<1x1x8x128xf32> to vector<8x128xf32>
    %2524 = vector.shape_cast %2457 : vector<8x128xf32> to vector<1x1x8x128xf32>
    tpu.vector_store %arg4[%c0_996, %c4_997, %c0_998, %c0_999], %2524 {strides = array<i32>} : memref<1x8x8x128xf32, #tpu.memory_space<vmem>>, vector<1x1x8x128xf32>,
    %c0_1000 = arith.constant 0 : index
    %c5_1001 = arith.constant 5 : index
    %c0_1002 = arith.constant 0 : index
    %c0_1003 = arith.constant 0 : index
    %2525 = vector.load %arg4[%c0_1000, %c5_1001, %c0_1002, %c0_1003] : memref<1x8x8x128xf32, #tpu.memory_space<vmem>>, vector<1x1x8x128xf32>
    %2526 = vector.shape_cast %2525 : vector<1x1x8x128xf32> to vector<8x128xf32>
    %2527 = vector.shape_cast %2473 : vector<8x128xf32> to vector<1x1x8x128xf32>
    tpu.vector_store %arg4[%c0_1000, %c5_1001, %c0_1002, %c0_1003], %2527 {strides = array<i32>} : memref<1x8x8x128xf32, #tpu.memory_space<vmem>>, vector<1x1x8x128xf32>,
    %c0_1004 = arith.constant 0 : index
    %c6_1005 = arith.constant 6 : index
    %c0_1006 = arith.constant 0 : index
    %c0_1007 = arith.constant 0 : index
    %2528 = vector.load %arg4[%c0_1004, %c6_1005, %c0_1006, %c0_1007] : memref<1x8x8x128xf32, #tpu.memory_space<vmem>>, vector<1x1x8x128xf32>
    %2529 = vector.shape_cast %2528 : vector<1x1x8x128xf32> to vector<8x128xf32>
    %2530 = vector.shape_cast %2505 : vector<8x128xf32> to vector<1x1x8x128xf32>
    tpu.vector_store %arg4[%c0_1004, %c6_1005, %c0_1006, %c0_1007], %2530 {strides = array<i32>} : memref<1x8x8x128xf32, #tpu.memory_space<vmem>>, vector<1x1x8x128xf32>,
    %c0_1008 = arith.constant 0 : index
    %c7_1009 = arith.constant 7 : index
    %c0_1010 = arith.constant 0 : index
    %c0_1011 = arith.constant 0 : index
    %2531 = vector.load %arg4[%c0_1008, %c7_1009, %c0_1010, %c0_1011] : memref<1x8x8x128xf32, #tpu.memory_space<vmem>>, vector<1x1x8x128xf32>
    %2532 = vector.shape_cast %2531 : vector<1x1x8x128xf32> to vector<8x128xf32>
    %2533 = vector.shape_cast %2521 : vector<8x128xf32> to vector<1x1x8x128xf32>
    tpu.vector_store %arg4[%c0_1008, %c7_1009, %c0_1010, %c0_1011], %2533 {strides = array<i32>} : memref<1x8x8x128xf32, #tpu.memory_space<vmem>>, vector<1x1x8x128xf32>,
    return
  }
  func.func @transform_0(%arg0: i32, %arg1: i32) -> i32 {
    %c0_i32 = arith.constant 0 : i32
    %c0_i32_0 = arith.constant 0 : i32
    return %c0_i32 : i32
  }
  func.func @transform_1(%arg0: i32, %arg1: i32) -> (i32, i32, i32, i32) {
    %c0_i32 = arith.constant 0 : i32
    %c0_i32_0 = arith.constant 0 : i32
    %c0_i32_1 = arith.constant 0 : i32
    %c0_i32_2 = arith.constant 0 : i32
    return %arg0, %c0_i32, %c0_i32_0, %c0_i32_1 : i32, i32, i32, i32
  }
  func.func @transform_2(%arg0: i32, %arg1: i32) -> (i32, i32, i32, i32) {
    %c0_i32 = arith.constant 0 : i32
    %c0_i32_0 = arith.constant 0 : i32
    %c0_i32_1 = arith.constant 0 : i32
    return %arg0, %arg1, %c0_i32, %c0_i32_0 : i32, i32, i32, i32
  }
}

</mosaic_0001>

<llo_original>
// kernel: tpu_custom_call.1
$region0: #{tpu_custom_call.1}
  #allocation0 [shape = 'u32[]', space=smem, size = 0x4, offset = 0x4, fixed_abs, tag = 'smem constant byte address 0x4 - core index']
  #allocation1 [shape = 'u32[144,128]{1,0:T(1,128)}', space=vmem, size = 0x12000, scoped, tag = 'internal scratch']
  %s0 = inlined_call_operand.hbm [shape: f32[72], index: 0, kind: input, shape index: {}]
  %s1 = inlined_call_operand.hbm [shape: f32[2,16,9,129], index: 1, kind: input, shape index: {}]
  %s2 = inlined_call_operand.hbm [shape: f32[2,8,8,128], index: 2, kind: output, shape index: {}]
  %s3 = sld [smem:[#allocation0]]
  $region49: #{tpu_custom_call.1} parent=0
    _
  %s5 = ssub.s32 1, %s3
  %s6 = scalar_select 0, %s5, %s3
  $region1: #{tpu_custom_call.1} parent=0
    #allocation2 [shape = 'u8[512]{0}', space=smem, size = 0x200, scoped, tag = 'input window, operand 0, single buffered']
    #allocation3 [shape = 's32[2]{0}', space=sflag, size = 0x8, scoped, tag = 'scoped memory for tpu_custom_call.1']
    #allocation4 [shape = 's32[2]{0}', space=sflag, size = 0x8, scoped, tag = 'scoped memory for tpu_custom_call.1']
    #allocation5 [shape = 's32[2]{0}', space=sflag, size = 0x8, scoped, tag = 'scoped memory for tpu_custom_call.1']
    #allocation6 [shape = 'u8[524288]{0}', space=vmem, size = 0x80000, scoped, tag = 'input window, operand 1']
    #allocation7 [shape = 'u8[65536]{0}', space=vmem, size = 0x10000, scoped, tag = 'output window, operand 0']
    %7 = vsyncpa [#allocation5], 0
    %8 = vsyncpa [#allocation3], 0
    %s9 = scalar_lea.sflag [#allocation3], 1
    %10 = vsyncpa %s9, 0
    %11 = vsyncpa [#allocation4], 0
    %s12 = scalar_lea.sflag [#allocation4], 1
    %13 = vsyncpa %s12, 0
    loop: start=0, step=1, limit=4
    $region2: #{tpu_custom_call.1} parent=1 // loop_pre_header
      _
    $region3: #{tpu_custom_call.1} parent=1 // loop_header
      %s15 = sphi 0, %s19
      %p16 = scmp.ge.s32.totalorder %s15, 4
      %s22 = sphi 0, %s34
      %s23 = sphi 0, %s30
      %s24 = sphi 0, %s22
      %s25 = sphi 0, %s23
      %s26 = sphi 0, %s24
      %s27 = sphi 0, %s25
      %s35 = sphi 0, %s35
      %s37 = sphi 0, %s35
      %s38 = sphi 0, %s37
      %s52 = sphi 0, %s38
      %s58 = sphi 0, %s60
      %s61 = sphi 0, %s58
      %s62 = sphi 0, %s61
      %s78 = sphi 0, %s62
      %s86 = sphi 0, %s88
      %s89 = sphi 0, %s86
      %s90 = sphi 0, %s89
      %s106 = sphi 0, %s90
    $region4: #{tpu_custom_call.1} parent=1 // loop_header_branch
      %18 = sbr.rel (%p16) target = $region8
    $region5: #{tpu_custom_call.1} parent=1 // loop_body
      %s20 = ssub.s32 %s15, 1
      %s21 = ssub.s32 %s15, 2
      %s28 = sadd.s32 1, %s23
      %p29 = scmp.ge.s32.totalorder %s28, 1
      %s30 = scalar_select %p29, 0, %s28
      %s31 = sadd.s32 1, %s22
      %s32 = scalar_select %p29, %s31, %s22
      %p33 = scmp.ge.s32.totalorder %s32, 2
      %s34 = scalar_select %p33, 0, %s32
      %s36 = sadd.s32 %s35, 1
      %p39 = scmp.eq.s32.totalorder %s15, 1
      %p40 = scmp.ne.s32.totalorder %s35, %s37
      %p41 = scmp.eq.s32.totalorder %s15, 0
      %p42 = por %p40, %p41
      %p43 = scmp.ne.s32.totalorder %s35, %s37
      %p44 = scmp.eq.s32.totalorder %s20, 1
      %p45 = por %p43, %p44
      %p46 = scmp.ne.s32.totalorder %s37, %s38
      %p47 = scmp.eq.s32.totalorder %s20, 0
      %p48 = por %p46, %p47
      %p49 = scmp.ne.s32.totalorder %s37, %s38
      %p50 = scmp.eq.s32.totalorder %s21, 1
      %p51 = por %p49, %p50
      %p53 = scmp.ne.s32.totalorder %s38, %s52
      %p54 = scmp.eq.s32.totalorder %s21, 0
      %p55 = por %p53, %p54
      %s56 = ssub.s32 %s22, %s34
      %p57 = scmp.eq.s32.totalorder %s56, 0
      %s59 = sadd.s32 %s58, 1
      %s60 = scalar_select %p57, %s58, %s59
      %p63 = pneg %p57
      %p64 = scmp.eq.s32.totalorder %s15, 1
      %p65 = por %p63, %p64
      %p66 = scmp.ne.s32.totalorder %s58, %s61
      %p67 = scmp.eq.s32.totalorder %s15, 0
      %p68 = por %p66, %p67
      %p69 = scmp.ne.s32.totalorder %s58, %s61
      %p70 = scmp.eq.s32.totalorder %s20, 1
      %p71 = por %p69, %p70
      %p72 = scmp.ne.s32.totalorder %s61, %s62
      %p73 = scmp.eq.s32.totalorder %s20, 0
      %p74 = por %p72, %p73
      %p75 = scmp.ne.s32.totalorder %s61, %s62
      %p76 = scmp.eq.s32.totalorder %s21, 1
      %p77 = por %p75, %p76
      %p79 = scmp.ne.s32.totalorder %s62, %s78
      %p80 = scmp.eq.s32.totalorder %s21, 0
      %p81 = por %p79, %p80
      %s82 = ssub.s32 %s22, %s34
      %s83 = ssub.s32 %s23, %s30
      %s84 = sor.u32 %s82, %s83
      %p85 = scmp.eq.s32.totalorder %s84, 0
      %s87 = sadd.s32 %s86, 1
      %s88 = scalar_select %p85, %s86, %s87
      %p91 = pneg %p85
      %p92 = scmp.eq.s32.totalorder %s15, 1
      %p93 = por %p91, %p92
      %p94 = scmp.ne.s32.totalorder %s86, %s89
      %p95 = scmp.eq.s32.totalorder %s15, 0
      %p96 = por %p94, %p95
      %p97 = scmp.ne.s32.totalorder %s86, %s89
      %p98 = scmp.eq.s32.totalorder %s20, 1
      %p99 = por %p97, %p98
      %p100 = scmp.ne.s32.totalorder %s89, %s90
      %p101 = scmp.eq.s32.totalorder %s20, 0
      %p102 = por %p100, %p101
      %p103 = scmp.ne.s32.totalorder %s89, %s90
      %p104 = scmp.eq.s32.totalorder %s21, 1
      %p105 = por %p103, %p104
      %p107 = scmp.ne.s32.totalorder %s90, %s106
      %p108 = scmp.eq.s32.totalorder %s21, 0
      %p109 = por %p107, %p108
      %p110 = scmp.le.s32.totalorder 1, %s15
      %p111 = scmp.lt.s32.totalorder %s15, 3
      %p112 = pnand %p110, %p111
      %p113 = pneg %p112
      // Predicated region
      $region9: #{tpu_custom_call.1} parent=5 // pred_check
        _
      $region10: #{tpu_custom_call.1} parent=5 // pred_check_branch
        %115 = sbr.rel (%p112) target = $region12
      $region11: #{tpu_custom_call.1} parent=5 // pred_region
        %s116 = ssub.s32 %s15, 1
        // Predicated region
        $region13: #{tpu_custom_call.1} parent=11 // pred_check
          %p117 = pneg %p48
        $region14: #{tpu_custom_call.1} parent=11 // pred_check_branch
          %119 = sbr.rel (%p117) target = $region16
        $region15: #{tpu_custom_call.1} parent=11 // pred_region
          %s121 = ssub.s32 16, 16
          %122 = vsyncadd [#allocation5], %s121
          %125 = dma.hbm_to_smem %s0, 16, [#allocation2], [#allocation5]
        $region16: #{tpu_custom_call.1} parent=11 // pred_fallthru
          _
      $region12: #{tpu_custom_call.1} parent=5 // pred_fallthru
        _
      %p126 = scmp.lt.s32.totalorder %s15, 2
      // Predicated region
      $region17: #{tpu_custom_call.1} parent=5 // pred_check
        %p127 = pneg %p126
      $region18: #{tpu_custom_call.1} parent=5 // pred_check_branch
        %129 = sbr.rel (%p127) target = $region20
      $region19: #{tpu_custom_call.1} parent=5 // pred_region
        // Predicated region
        $region21: #{tpu_custom_call.1} parent=19 // pred_check
          %p130 = pneg %p68
        $region22: #{tpu_custom_call.1} parent=19 // pred_check_branch
          %132 = sbr.rel (%p130) target = $region24
        $region23: #{tpu_custom_call.1} parent=19 // pred_region
          %s133 = sand.u32 %s58, 1
          %s134 = scalar_lea.sflag [#allocation3], %s133
          %s135 = sand.u32 %s58, 1
          %s136 = smul.addr %s135, 512
          %s137 = scalar_lea.vmem [#allocation6], %s136
          %s139 = ssub.s32 8192, 8192
          %140 = vsyncadd %s134, %s139
          %s141 = smul.addr %s22, 64
          %s142 = smul.addr %s141, 128
          %s143 = scalar_lea.hbm %s1, %s142
          %s144 = sshll.u32 %s137, 4
          %s145 = int_to_ptr.vmem [resolvable:$true] %s144
          %150 = dma.hbm_to_vmem [thread:$0]  %s143, 8192, %s145, %s134, 256, 256, 16
        $region24: #{tpu_custom_call.1} parent=19 // pred_fallthru
          _
      $region20: #{tpu_custom_call.1} parent=5 // pred_fallthru
        _
      %p151 = scmp.le.s32.totalorder 1, %s15
      %p152 = scmp.lt.s32.totalorder %s15, 3
      %p153 = pnand %p151, %p152
      %p154 = pneg %p153
      // Predicated region
      $region25: #{tpu_custom_call.1} parent=5 // pred_check
        _
      $region26: #{tpu_custom_call.1} parent=5 // pred_check_branch
        %156 = sbr.rel (%p153) target = $region28
      $region27: #{tpu_custom_call.1} parent=5 // pred_region
        %s157 = ssub.s32 %s15, 1
        // Predicated region
        $region29: #{tpu_custom_call.1} parent=27 // pred_check
          %p158 = pneg %p48
        $region30: #{tpu_custom_call.1} parent=27 // pred_check_branch
          %160 = sbr.rel (%p158) target = $region32
        $region31: #{tpu_custom_call.1} parent=27 // pred_region
          %161 = dma.done [#allocation5], 16
        $region32: #{tpu_custom_call.1} parent=27 // pred_fallthru
          _
        %s162 = sand.u32 %s61, 1
        %s163 = scalar_lea.sflag [#allocation3], %s162
        %s164 = sand.u32 %s61, 1
        %s165 = smul.addr %s164, 512
        %s166 = scalar_lea.vmem [#allocation6], %s165
        // Predicated region
        $region33: #{tpu_custom_call.1} parent=27 // pred_check
          %p167 = pneg %p74
        $region34: #{tpu_custom_call.1} parent=27 // pred_check_branch
          %169 = sbr.rel (%p167) target = $region36
        $region35: #{tpu_custom_call.1} parent=27 // pred_region
          %170 = dma.done %s163, 8192
        $region36: #{tpu_custom_call.1} parent=27 // pred_fallthru
          _
        %171 = sfence
        %p172 = pneg %p48
        %p173 = pneg %p45
        %s174 = sand.u32 %s61, 1
        %s175 = scalar_lea.sflag [#allocation3], %s174
        %s176 = sand.u32 %s61, 1
        %s177 = smul.addr %s176, 512
        %s178 = scalar_lea.vmem [#allocation6], %s177
        %p179 = pneg %p74
        %p180 = pneg %p71
        %p181 = pneg %p102
        %p182 = pneg %p99
        %s183 = sand.u32 %s89, 1
        %s184 = scalar_lea.sflag [#allocation4], %s183
        %s185 = sand.u32 %s89, 1
        %s186 = smul.addr %s185, 64
        %s187 = scalar_lea.vmem [#allocation7], %s186
        %s188 = smul.u32 8, %s25
        %s189 = smul.u32 %s25, 72
        %v190 = vld [vmem:[%s166] sm:$0xff]
        %v191 = vld [vmem:[%s166 + $0x8] sm:$0xff]
        %v192 = vld [vmem:[%s166 + $0x10] sm:$0x1]
        %v193 = vld [vmem:[%s166 + $0x18] sm:$0x1]
        %s194 = sld [smem:[#allocation2 + %s189]]
        %v195 = vstv %s194
        %v196 = vmul.f32 %v195, %v190
        %v197 = vadd.f32 %v196, 0.0
        %s198 = sadd.s32 %s189, 2
        %s199 = sld [smem:[#allocation2 + %s198]]
        %v200 = vstv %s199
        %v201 = vmul.f32 %v200, %v190
        %v202 = vmul.f32 %v200, %v191
        %205 = vrot.lane.b32.xlu0 %v201, 127
        %v206 = vpop.permute.xlu0 %205
        %207 = vrot.lane.b32.xlu0 %v202, 127
        %v208 = vpop.permute.xlu0 %207
        %vm209 = vcmask 1039360
        %v210 = vsel %vm209, %v206, %v208
        %v212 = vadd.f32 %v197, %v210
        %s213 = sadd.s32 %s189, 1
        %s214 = sld [smem:[#allocation2 + %s213]]
        %v215 = vstv %s214
        %v216 = vmul.f32 %v215, %v190
        %v217 = vmul.f32 %v215, %v191
        %v218 = vadd.f32 %v216, 0.0
        %v219 = vadd.f32 %v217, 0.0
        %s220 = sadd.s32 %s189, 6
        %s221 = sld [smem:[#allocation2 + %s220]]
        %v222 = vstv %s221
        %v223 = vmul.f32 %v222, %v190
        %v224 = vmul.f32 %v222, %v192
        %vm227 = vcmask 1046528
        %v228 = vrot.slane %v223, 1
        %v229 = vrot.slane %v224, 1
        %v230 = vsel %vm227, %v228, %v229
        %v232 = vadd.f32 %v212, %v230
        %s233 = sadd.s32 %s189, 8
        %s234 = sld [smem:[#allocation2 + %s233]]
        %v235 = vstv %s234
        %v236 = vmul.f32 %v235, %v190
        %v237 = vmul.f32 %v235, %v191
        %v238 = vmul.f32 %v235, %v192
        %v239 = vmul.f32 %v235, %v193
        %v244 = vrot.slane %v236, 1
        %v245 = vrot.slane %v238, 1
        %v246 = vsel %vm227, %v244, %v245
        %v247 = vrot.slane %v237, 1
        %v248 = vrot.slane %v239, 1
        %v249 = vsel %vm227, %v247, %v248
        %250 = vrot.lane.b32.xlu0 %v246, 127
        %v251 = vpop.permute.xlu0 %250
        %252 = vrot.lane.b32.xlu0 %v249, 127
        %v253 = vpop.permute.xlu0 %252
        %v254 = vsel %vm209, %v251, %v253
        %v256 = vadd.f32 %v232, %v254
        %s257 = sadd.s32 %s189, 7
        %s258 = sld [smem:[#allocation2 + %s257]]
        %v259 = vstv %s258
        %v260 = vmul.f32 %v259, %v190
        %v261 = vmul.f32 %v259, %v191
        %v262 = vmul.f32 %v259, %v192
        %v263 = vmul.f32 %v259, %v193
        %v268 = vrot.slane %v260, 1
        %v269 = vrot.slane %v262, 1
        %v270 = vsel %vm227, %v268, %v269
        %v271 = vrot.slane %v261, 1
        %v272 = vrot.slane %v263, 1
        %v273 = vsel %vm227, %v271, %v272
        %v276 = vadd.f32 %v218, %v270
        %v277 = vadd.f32 %v219, %v273
        %s278 = sadd.s32 %s189, 3
        %s279 = sld [smem:[#allocation2 + %s278]]
        %v280 = vstv %s279
        %v281 = vmul.f32 %v280, %v190
        %v282 = vmul.f32 %v280, %v192
        %v283 = vadd.f32 %v281, 0.0
        %v284 = vadd.f32 %v282, 0.0
        %s285 = sadd.s32 %s189, 5
        %s286 = sld [smem:[#allocation2 + %s285]]
        %v287 = vstv %s286
        %v288 = vmul.f32 %v287, %v190
        %v289 = vmul.f32 %v287, %v191
        %v290 = vmul.f32 %v287, %v192
        %v291 = vmul.f32 %v287, %v193
        %296 = vrot.lane.b32.xlu0 %v288, 127
        %v297 = vpop.permute.xlu0 %296
        %298 = vrot.lane.b32.xlu0 %v289, 127
        %v299 = vpop.permute.xlu0 %298
        %300 = vrot.lane.b32.xlu0 %v290, 127
        %v301 = vpop.permute.xlu0 %300
        %302 = vrot.lane.b32.xlu0 %v291, 127
        %v303 = vpop.permute.xlu0 %302
        %v304 = vsel %vm209, %v297, %v299
        %v305 = vsel %vm209, %v301, %v303
        %v308 = vadd.f32 %v283, %v304
        %v309 = vadd.f32 %v284, %v305
        %s310 = sadd.s32 %s189, 4
        %s311 = sld [smem:[#allocation2 + %s310]]
        %v312 = vstv %s311
        %v313 = vmul.f32 %v312, %v190
        %v314 = vmul.f32 %v312, %v191
        %v315 = vmul.f32 %v312, %v192
        %v316 = vmul.f32 %v312, %v193
        %v317 = vadd.f32 %v313, 0.0
        %v318 = vadd.f32 %v314, 0.0
        %v319 = vadd.f32 %v315, 0.0
        %v320 = vadd.f32 %v316, 0.0
        %s321 = scalar_lea.vmem %s166, 32 [#allocation6]
        %v322 = vld [vmem:[%s321] sm:$0xff]
        %v323 = vld [vmem:[%s321 + $0x8] sm:$0xff]
        %v324 = vld [vmem:[%s321 + $0x10] sm:$0x1]
        %v325 = vld [vmem:[%s321 + $0x18] sm:$0x1]
        %v326 = vmul.f32 %v215, %v322
        %v327 = vadd.f32 %v256, %v326
        %v328 = vmul.f32 %v195, %v322
        %330 = vrot.lane.b32.xlu0 %v328, 1
        %v331 = vpop.permute.xlu0 %330
        %v333 = vadd.f32 %v276, %v331
        %v334 = vadd.f32 %v277, %v331
        %v335 = vmul.f32 %v200, %v322
        %v336 = vmul.f32 %v200, %v323
        %v337 = vadd.f32 %v333, %v335
        %v338 = vadd.f32 %v334, %v336
        %v339 = vmul.f32 %v259, %v322
        %v340 = vmul.f32 %v259, %v324
        %v343 = vrot.slane %v339, 1
        %v344 = vrot.slane %v340, 1
        %v345 = vsel %vm227, %v343, %v344
        %v347 = vadd.f32 %v327, %v345
        %v348 = vmul.f32 %v222, %v322
        %v349 = vmul.f32 %v222, %v324
        %v352 = vrot.slane %v348, 1
        %v353 = vrot.slane %v349, 1
        %v354 = vsel %vm227, %v352, %v353
        %355 = vrot.lane.b32.xlu0 %v354, 1
        %v356 = vpop.permute.xlu0 %355
        %v358 = vadd.f32 %v337, %v356
        %v359 = vadd.f32 %v338, %v356
        %v360 = vmul.f32 %v235, %v322
        %v361 = vmul.f32 %v235, %v323
        %v362 = vmul.f32 %v235, %v324
        %v363 = vmul.f32 %v235, %v325
        %v368 = vrot.slane %v360, 1
        %v369 = vrot.slane %v362, 1
        %v370 = vsel %vm227, %v368, %v369
        %v371 = vrot.slane %v361, 1
        %v372 = vrot.slane %v363, 1
        %v373 = vsel %vm227, %v371, %v372
        %v376 = vadd.f32 %v358, %v370
        %v377 = vadd.f32 %v359, %v373
        %v378 = vmul.f32 %v312, %v322
        %v379 = vmul.f32 %v312, %v324
        %v380 = vadd.f32 %v308, %v378
        %v381 = vadd.f32 %v309, %v379
        %v382 = vmul.f32 %v280, %v322
        %v383 = vmul.f32 %v280, %v324
        %386 = vrot.lane.b32.xlu0 %v382, 1
        %v387 = vpop.permute.xlu0 %386
        %388 = vrot.lane.b32.xlu0 %v383, 1
        %v389 = vpop.permute.xlu0 %388
        %v392 = vadd.f32 %v317, %v387
        %v393 = vadd.f32 %v318, %v387
        %v394 = vadd.f32 %v319, %v389
        %v395 = vadd.f32 %v320, %v389
        %v396 = vmul.f32 %v287, %v322
        %v397 = vmul.f32 %v287, %v323
        %v398 = vmul.f32 %v287, %v324
        %v399 = vmul.f32 %v287, %v325
        %v400 = vadd.f32 %v392, %v396
        %v401 = vadd.f32 %v393, %v397
        %v402 = vadd.f32 %v394, %v398
        %v403 = vadd.f32 %v395, %v399
        %s404 = scalar_lea.vmem %s166, 64 [#allocation6]
        %v405 = vld [vmem:[%s404] sm:$0xff]
        %v406 = vld [vmem:[%s404 + $0x8] sm:$0xff]
        %v407 = vld [vmem:[%s404 + $0x10] sm:$0x1]
        %v408 = vld [vmem:[%s404 + $0x18] sm:$0x1]
        %v409 = vmul.f32 %v280, %v405
        %v410 = vadd.f32 %v347, %v409
        %v411 = vmul.f32 %v287, %v405
        %v412 = vmul.f32 %v287, %v406
        %415 = vrot.lane.b32.xlu0 %v411, 127
        %v416 = vpop.permute.xlu0 %415
        %417 = vrot.lane.b32.xlu0 %v412, 127
        %v418 = vpop.permute.xlu0 %417
        %v419 = vsel %vm209, %v416, %v418
        %v421 = vadd.f32 %v410, %v419
        %v422 = vmul.f32 %v312, %v405
        %v423 = vmul.f32 %v312, %v406
        %v424 = vadd.f32 %v376, %v422
        %v425 = vadd.f32 %v377, %v423
        %v426 = vmul.f32 %v195, %v405
        %v428 = vrot.slane %v426, 7
        %v430 = vadd.f32 %v380, %v428
        %v431 = vadd.f32 %v381, %v428
        %v432 = vmul.f32 %v200, %v405
        %v433 = vmul.f32 %v200, %v406
        %v436 = vrot.slane %v432, 7
        %v437 = vrot.slane %v433, 7
        %438 = vrot.lane.b32.xlu0 %v436, 127
        %v439 = vpop.permute.xlu0 %438
        %440 = vrot.lane.b32.xlu0 %v437, 127
        %v441 = vpop.permute.xlu0 %440
        %v442 = vsel %vm209, %v439, %v441
        %v444 = vadd.f32 %v430, %v442
        %v445 = vadd.f32 %v431, %v442
        %v446 = vmul.f32 %v215, %v405
        %v447 = vmul.f32 %v215, %v406
        %v450 = vrot.slane %v446, 7
        %v451 = vrot.slane %v447, 7
        %v454 = vadd.f32 %v400, %v450
        %v455 = vadd.f32 %v401, %v451
        %v456 = vadd.f32 %v402, %v450
        %v457 = vadd.f32 %v403, %v451
        %v458 = vmul.f32 %v222, %v405
        %v459 = vmul.f32 %v222, %v407
        %v460 = vadd.f32 %v444, %v458
        %v461 = vadd.f32 %v445, %v459
        %v462 = vmul.f32 %v235, %v405
        %v463 = vmul.f32 %v235, %v406
        %v464 = vmul.f32 %v235, %v407
        %v465 = vmul.f32 %v235, %v408
        %470 = vrot.lane.b32.xlu0 %v462, 127
        %v471 = vpop.permute.xlu0 %470
        %472 = vrot.lane.b32.xlu0 %v463, 127
        %v473 = vpop.permute.xlu0 %472
        %474 = vrot.lane.b32.xlu0 %v464, 127
        %v475 = vpop.permute.xlu0 %474
        %476 = vrot.lane.b32.xlu0 %v465, 127
        %v477 = vpop.permute.xlu0 %476
        %v478 = vsel %vm209, %v471, %v473
        %v479 = vsel %vm209, %v475, %v477
        %v482 = vadd.f32 %v460, %v478
        %v483 = vadd.f32 %v461, %v479
        %v484 = vmul.f32 %v259, %v405
        %v485 = vmul.f32 %v259, %v406
        %v486 = vmul.f32 %v259, %v407
        %v487 = vmul.f32 %v259, %v408
        %v488 = vadd.f32 %v454, %v484
        %v489 = vadd.f32 %v455, %v485
        %v490 = vadd.f32 %v456, %v486
        %v491 = vadd.f32 %v457, %v487
        %s492 = scalar_lea.vmem %s166, 96 [#allocation6]
        %v493 = vld [vmem:[%s492] sm:$0xff]
        %v494 = vld [vmem:[%s492 + $0x8] sm:$0xff]
        %v495 = vld [vmem:[%s492 + $0x10] sm:$0x1]
        %v496 = vld [vmem:[%s492 + $0x18] sm:$0x1]
        %v497 = vmul.f32 %v312, %v493
        %v498 = vadd.f32 %v421, %v497
        %v499 = vmul.f32 %v280, %v493
        %501 = vrot.lane.b32.xlu0 %v499, 1
        %v502 = vpop.permute.xlu0 %501
        %v504 = vadd.f32 %v424, %v502
        %v505 = vadd.f32 %v425, %v502
        %v506 = vmul.f32 %v287, %v493
        %v507 = vmul.f32 %v287, %v494
        %v508 = vadd.f32 %v504, %v506
        %v509 = vadd.f32 %v505, %v507
        %v510 = vmul.f32 %v215, %v493
        %v512 = vrot.slane %v510, 7
        %v514 = vadd.f32 %v482, %v512
        %v515 = vadd.f32 %v483, %v512
        %v516 = vmul.f32 %v195, %v493
        %v518 = vrot.slane %v516, 7
        %519 = vrot.lane.b32.xlu0 %v518, 1
        %v520 = vpop.permute.xlu0 %519
        %v522 = vadd.f32 %v488, %v520
        %v523 = vadd.f32 %v489, %v520
        %v524 = vadd.f32 %v490, %v520
        %v525 = vadd.f32 %v491, %v520
        %v526 = vmul.f32 %v200, %v493
        %v527 = vmul.f32 %v200, %v494
        %v530 = vrot.slane %v526, 7
        %v531 = vrot.slane %v527, 7
        %v534 = vadd.f32 %v522, %v530
        %v535 = vadd.f32 %v523, %v531
        %v536 = vadd.f32 %v524, %v530
        %v537 = vadd.f32 %v525, %v531
        %v538 = vmul.f32 %v259, %v493
        %v539 = vmul.f32 %v259, %v495
        %v540 = vadd.f32 %v514, %v538
        %v541 = vadd.f32 %v515, %v539
        %v542 = vmul.f32 %v222, %v493
        %v543 = vmul.f32 %v222, %v495
        %546 = vrot.lane.b32.xlu0 %v542, 1
        %v547 = vpop.permute.xlu0 %546
        %548 = vrot.lane.b32.xlu0 %v543, 1
        %v549 = vpop.permute.xlu0 %548
        %v552 = vadd.f32 %v534, %v547
        %v553 = vadd.f32 %v535, %v547
        %v554 = vadd.f32 %v536, %v549
        %v555 = vadd.f32 %v537, %v549
        %v556 = vmul.f32 %v235, %v493
        %v557 = vmul.f32 %v235, %v494
        %v558 = vmul.f32 %v235, %v495
        %v559 = vmul.f32 %v235, %v496
        %v560 = vadd.f32 %v552, %v556
        %v561 = vadd.f32 %v553, %v557
        %v562 = vadd.f32 %v554, %v558
        %v563 = vadd.f32 %v555, %v559
        %s564 = scalar_lea.vmem %s166, 128 [#allocation6]
        %v565 = vld [vmem:[%s564] sm:$0xff]
        %v566 = vld [vmem:[%s564 + $0x8] sm:$0xff]
        %v567 = vld [vmem:[%s564 + $0x10] sm:$0x1]
        %v568 = vld [vmem:[%s564 + $0x18] sm:$0x1]
        %s569 = sadd.s32 %s189, 9
        %s570 = sld [smem:[#allocation2 + %s569]]
        %v571 = vstv %s570
        %v572 = vmul.f32 %v571, %v565
        %v573 = vadd.f32 %v498, %v572
        %s574 = sadd.s32 %s189, 11
        %s575 = sld [smem:[#allocation2 + %s574]]
        %v576 = vstv %s575
        %v577 = vmul.f32 %v576, %v565
        %v578 = vmul.f32 %v576, %v566
        %581 = vrot.lane.b32.xlu0 %v577, 127
        %v582 = vpop.permute.xlu0 %581
        %583 = vrot.lane.b32.xlu0 %v578, 127
        %v584 = vpop.permute.xlu0 %583
        %v585 = vsel %vm209, %v582, %v584
        %v587 = vadd.f32 %v573, %v585
        %s588 = sadd.s32 %s189, 10
        %s589 = sld [smem:[#allocation2 + %s588]]
        %v590 = vstv %s589
        %v591 = vmul.f32 %v590, %v565
        %v592 = vmul.f32 %v590, %v566
        %v593 = vadd.f32 %v508, %v591
        %v594 = vadd.f32 %v509, %v592
        %s595 = sadd.s32 %s189, 15
        %s596 = sld [smem:[#allocation2 + %s595]]
        %v597 = vstv %s596
        %v598 = vmul.f32 %v597, %v565
        %v599 = vmul.f32 %v597, %v567
        %v602 = vrot.slane %v598, 1
        %v603 = vrot.slane %v599, 1
        %v604 = vsel %vm227, %v602, %v603
        %v606 = vadd.f32 %v587, %v604
        %s607 = sadd.s32 %s189, 17
        %s608 = sld [smem:[#allocation2 + %s607]]
        %v609 = vstv %s608
        %v610 = vmul.f32 %v609, %v565
        %v611 = vmul.f32 %v609, %v566
        %v612 = vmul.f32 %v609, %v567
        %v613 = vmul.f32 %v609, %v568
        %v618 = vrot.slane %v610, 1
        %v619 = vrot.slane %v612, 1
        %v620 = vsel %vm227, %v618, %v619
        %v621 = vrot.slane %v611, 1
        %v622 = vrot.slane %v613, 1
        %v623 = vsel %vm227, %v621, %v622
        %624 = vrot.lane.b32.xlu0 %v620, 127
        %v625 = vpop.permute.xlu0 %624
        %626 = vrot.lane.b32.xlu0 %v623, 127
        %v627 = vpop.permute.xlu0 %626
        %v628 = vsel %vm209, %v625, %v627
        %v630 = vadd.f32 %v606, %v628
        %s631 = sadd.s32 %s189, 16
        %s632 = sld [smem:[#allocation2 + %s631]]
        %v633 = vstv %s632
        %v634 = vmul.f32 %v633, %v565
        %v635 = vmul.f32 %v633, %v566
        %v636 = vmul.f32 %v633, %v567
        %v637 = vmul.f32 %v633, %v568
        %v642 = vrot.slane %v634, 1
        %v643 = vrot.slane %v636, 1
        %v644 = vsel %vm227, %v642, %v643
        %v645 = vrot.slane %v635, 1
        %v646 = vrot.slane %v637, 1
        %v647 = vsel %vm227, %v645, %v646
        %v650 = vadd.f32 %v593, %v644
        %v651 = vadd.f32 %v594, %v647
        %s652 = sadd.s32 %s189, 12
        %s653 = sld [smem:[#allocation2 + %s652]]
        %v654 = vstv %s653
        %v655 = vmul.f32 %v654, %v565
        %v656 = vmul.f32 %v654, %v567
        %v657 = vadd.f32 %v540, %v655
        %v658 = vadd.f32 %v541, %v656
        %s659 = sadd.s32 %s189, 14
        %s660 = sld [smem:[#allocation2 + %s659]]
        %v661 = vstv %s660
        %v662 = vmul.f32 %v661, %v565
        %v663 = vmul.f32 %v661, %v566
        %v664 = vmul.f32 %v661, %v567
        %v665 = vmul.f32 %v661, %v568
        %670 = vrot.lane.b32.xlu0 %v662, 127
        %v671 = vpop.permute.xlu0 %670
        %672 = vrot.lane.b32.xlu0 %v663, 127
        %v673 = vpop.permute.xlu0 %672
        %674 = vrot.lane.b32.xlu0 %v664, 127
        %v675 = vpop.permute.xlu0 %674
        %676 = vrot.lane.b32.xlu0 %v665, 127
        %v677 = vpop.permute.xlu0 %676
        %v678 = vsel %vm209, %v671, %v673
        %v679 = vsel %vm209, %v675, %v677
        %v682 = vadd.f32 %v657, %v678
        %v683 = vadd.f32 %v658, %v679
        %s684 = sadd.s32 %s189, 13
        %s685 = sld [smem:[#allocation2 + %s684]]
        %v686 = vstv %s685
        %v687 = vmul.f32 %v686, %v565
        %v688 = vmul.f32 %v686, %v566
        %v689 = vmul.f32 %v686, %v567
        %v690 = vmul.f32 %v686, %v568
        %v691 = vadd.f32 %v560, %v687
        %v692 = vadd.f32 %v561, %v688
        %v693 = vadd.f32 %v562, %v689
        %v694 = vadd.f32 %v563, %v690
        %s695 = scalar_lea.vmem %s166, 160 [#allocation6]
        %v696 = vld [vmem:[%s695] sm:$0xff]
        %v697 = vld [vmem:[%s695 + $0x8] sm:$0xff]
        %v698 = vld [vmem:[%s695 + $0x10] sm:$0x1]
        %v699 = vld [vmem:[%s695 + $0x18] sm:$0x1]
        %v700 = vmul.f32 %v590, %v696
        %v701 = vadd.f32 %v630, %v700
        %v702 = vmul.f32 %v571, %v696
        %704 = vrot.lane.b32.xlu0 %v702, 1
        %v705 = vpop.permute.xlu0 %704
        %v707 = vadd.f32 %v650, %v705
        %v708 = vadd.f32 %v651, %v705
        %v709 = vmul.f32 %v576, %v696
        %v710 = vmul.f32 %v576, %v697
        %v711 = vadd.f32 %v707, %v709
        %v712 = vadd.f32 %v708, %v710
        %v713 = vmul.f32 %v633, %v696
        %v714 = vmul.f32 %v633, %v698
        %v717 = vrot.slane %v713, 1
        %v718 = vrot.slane %v714, 1
        %v719 = vsel %vm227, %v717, %v718
        %v721 = vadd.f32 %v701, %v719
        %v722 = vmul.f32 %v597, %v696
        %v723 = vmul.f32 %v597, %v698
        %v726 = vrot.slane %v722, 1
        %v727 = vrot.slane %v723, 1
        %v728 = vsel %vm227, %v726, %v727
        %729 = vrot.lane.b32.xlu0 %v728, 1
        %v730 = vpop.permute.xlu0 %729
        %v732 = vadd.f32 %v711, %v730
        %v733 = vadd.f32 %v712, %v730
        %v734 = vmul.f32 %v609, %v696
        %v735 = vmul.f32 %v609, %v697
        %v736 = vmul.f32 %v609, %v698
        %v737 = vmul.f32 %v609, %v699
        %v742 = vrot.slane %v734, 1
        %v743 = vrot.slane %v736, 1
        %v744 = vsel %vm227, %v742, %v743
        %v745 = vrot.slane %v735, 1
        %v746 = vrot.slane %v737, 1
        %v747 = vsel %vm227, %v745, %v746
        %v750 = vadd.f32 %v732, %v744
        %v751 = vadd.f32 %v733, %v747
        %v752 = vmul.f32 %v686, %v696
        %v753 = vmul.f32 %v686, %v698
        %v754 = vadd.f32 %v682, %v752
        %v755 = vadd.f32 %v683, %v753
        %v756 = vmul.f32 %v654, %v696
        %v757 = vmul.f32 %v654, %v698
        %760 = vrot.lane.b32.xlu0 %v756, 1
        %v761 = vpop.permute.xlu0 %760
        %762 = vrot.lane.b32.xlu0 %v757, 1
        %v763 = vpop.permute.xlu0 %762
        %v766 = vadd.f32 %v691, %v761
        %v767 = vadd.f32 %v692, %v761
        %v768 = vadd.f32 %v693, %v763
        %v769 = vadd.f32 %v694, %v763
        %v770 = vmul.f32 %v661, %v696
        %v771 = vmul.f32 %v661, %v697
        %v772 = vmul.f32 %v661, %v698
        %v773 = vmul.f32 %v661, %v699
        %v774 = vadd.f32 %v766, %v770
        %v775 = vadd.f32 %v767, %v771
        %v776 = vadd.f32 %v768, %v772
        %v777 = vadd.f32 %v769, %v773
        %s778 = scalar_lea.vmem %s166, 192 [#allocation6]
        %v779 = vld [vmem:[%s778] sm:$0xff]
        %v780 = vld [vmem:[%s778 + $0x8] sm:$0xff]
        %v781 = vld [vmem:[%s778 + $0x10] sm:$0x1]
        %v782 = vld [vmem:[%s778 + $0x18] sm:$0x1]
        %v783 = vmul.f32 %v654, %v779
        %v784 = vadd.f32 %v721, %v783
        %v785 = vmul.f32 %v661, %v779
        %v786 = vmul.f32 %v661, %v780
        %789 = vrot.lane.b32.xlu0 %v785, 127
        %v790 = vpop.permute.xlu0 %789
        %791 = vrot.lane.b32.xlu0 %v786, 127
        %v792 = vpop.permute.xlu0 %791
        %v793 = vsel %vm209, %v790, %v792
        %v795 = vadd.f32 %v784, %v793
        %v796 = vmul.f32 %v686, %v779
        %v797 = vmul.f32 %v686, %v780
        %v798 = vadd.f32 %v750, %v796
        %v799 = vadd.f32 %v751, %v797
        %v800 = vmul.f32 %v571, %v779
        %v802 = vrot.slane %v800, 7
        %v804 = vadd.f32 %v754, %v802
        %v805 = vadd.f32 %v755, %v802
        %v806 = vmul.f32 %v576, %v779
        %v807 = vmul.f32 %v576, %v780
        %v810 = vrot.slane %v806, 7
        %v811 = vrot.slane %v807, 7
        %812 = vrot.lane.b32.xlu0 %v810, 127
        %v813 = vpop.permute.xlu0 %812
        %814 = vrot.lane.b32.xlu0 %v811, 127
        %v815 = vpop.permute.xlu0 %814
        %v816 = vsel %vm209, %v813, %v815
        %v818 = vadd.f32 %v804, %v816
        %v819 = vadd.f32 %v805, %v816
        %v820 = vmul.f32 %v590, %v779
        %v821 = vmul.f32 %v590, %v780
        %v824 = vrot.slane %v820, 7
        %v825 = vrot.slane %v821, 7
        %v828 = vadd.f32 %v774, %v824
        %v829 = vadd.f32 %v775, %v825
        %v830 = vadd.f32 %v776, %v824
        %v831 = vadd.f32 %v777, %v825
        %v832 = vmul.f32 %v597, %v779
        %v833 = vmul.f32 %v597, %v781
        %v834 = vadd.f32 %v818, %v832
        %v835 = vadd.f32 %v819, %v833
        %v836 = vmul.f32 %v609, %v779
        %v837 = vmul.f32 %v609, %v780
        %v838 = vmul.f32 %v609, %v781
        %v839 = vmul.f32 %v609, %v782
        %844 = vrot.lane.b32.xlu0 %v836, 127
        %v845 = vpop.permute.xlu0 %844
        %846 = vrot.lane.b32.xlu0 %v837, 127
        %v847 = vpop.permute.xlu0 %846
        %848 = vrot.lane.b32.xlu0 %v838, 127
        %v849 = vpop.permute.xlu0 %848
        %850 = vrot.lane.b32.xlu0 %v839, 127
        %v851 = vpop.permute.xlu0 %850
        %v852 = vsel %vm209, %v845, %v847
        %v853 = vsel %vm209, %v849, %v851
        %v856 = vadd.f32 %v834, %v852
        %v857 = vadd.f32 %v835, %v853
        %v858 = vmul.f32 %v633, %v779
        %v859 = vmul.f32 %v633, %v780
        %v860 = vmul.f32 %v633, %v781
        %v861 = vmul.f32 %v633, %v782
        %v862 = vadd.f32 %v828, %v858
        %v863 = vadd.f32 %v829, %v859
        %v864 = vadd.f32 %v830, %v860
        %v865 = vadd.f32 %v831, %v861
        %s866 = scalar_lea.vmem %s166, 224 [#allocation6]
        %v867 = vld [vmem:[%s866] sm:$0xff]
        %v868 = vld [vmem:[%s866 + $0x8] sm:$0xff]
        %v869 = vld [vmem:[%s866 + $0x10] sm:$0x1]
        %v870 = vld [vmem:[%s866 + $0x18] sm:$0x1]
        %v871 = vmul.f32 %v686, %v867
        %v872 = vadd.f32 %v795, %v871
        %v873 = vmul.f32 %v654, %v867
        %875 = vrot.lane.b32.xlu0 %v873, 1
        %v876 = vpop.permute.xlu0 %875
        %v878 = vadd.f32 %v798, %v876
        %v879 = vadd.f32 %v799, %v876
        %v880 = vmul.f32 %v661, %v867
        %v881 = vmul.f32 %v661, %v868
        %v882 = vadd.f32 %v878, %v880
        %v883 = vadd.f32 %v879, %v881
        %v884 = vmul.f32 %v590, %v867
        %v886 = vrot.slane %v884, 7
        %v888 = vadd.f32 %v856, %v886
        %v889 = vadd.f32 %v857, %v886
        %v890 = vmul.f32 %v571, %v867
        %v892 = vrot.slane %v890, 7
        %893 = vrot.lane.b32.xlu0 %v892, 1
        %v894 = vpop.permute.xlu0 %893
        %v896 = vadd.f32 %v862, %v894
        %v897 = vadd.f32 %v863, %v894
        %v898 = vadd.f32 %v864, %v894
        %v899 = vadd.f32 %v865, %v894
        %v900 = vmul.f32 %v576, %v867
        %v901 = vmul.f32 %v576, %v868
        %v904 = vrot.slane %v900, 7
        %v905 = vrot.slane %v901, 7
        %v908 = vadd.f32 %v896, %v904
        %v909 = vadd.f32 %v897, %v905
        %v910 = vadd.f32 %v898, %v904
        %v911 = vadd.f32 %v899, %v905
        %v912 = vmul.f32 %v633, %v867
        %v913 = vmul.f32 %v633, %v869
        %v914 = vadd.f32 %v888, %v912
        %v915 = vadd.f32 %v889, %v913
        %v916 = vmul.f32 %v597, %v867
        %v917 = vmul.f32 %v597, %v869
        %920 = vrot.lane.b32.xlu0 %v916, 1
        %v921 = vpop.permute.xlu0 %920
        %922 = vrot.lane.b32.xlu0 %v917, 1
        %v923 = vpop.permute.xlu0 %922
        %v926 = vadd.f32 %v908, %v921
        %v927 = vadd.f32 %v909, %v921
        %v928 = vadd.f32 %v910, %v923
        %v929 = vadd.f32 %v911, %v923
        %v930 = vmul.f32 %v609, %v867
        %v931 = vmul.f32 %v609, %v868
        %v932 = vmul.f32 %v609, %v869
        %v933 = vmul.f32 %v609, %v870
        %v934 = vadd.f32 %v926, %v930
        %v935 = vadd.f32 %v927, %v931
        %v936 = vadd.f32 %v928, %v932
        %v937 = vadd.f32 %v929, %v933
        %s938 = scalar_lea.vmem %s166, 256 [#allocation6]
        %v939 = vld [vmem:[%s938] sm:$0xff]
        %v940 = vld [vmem:[%s938 + $0x8] sm:$0xff]
        %v941 = vld [vmem:[%s938 + $0x10] sm:$0x1]
        %v942 = vld [vmem:[%s938 + $0x18] sm:$0x1]
        %s943 = sadd.s32 %s189, 18
        %s944 = sld [smem:[#allocation2 + %s943]]
        %v945 = vstv %s944
        %v946 = vmul.f32 %v945, %v939
        %v947 = vadd.f32 %v872, %v946
        %s948 = sadd.s32 %s189, 20
        %s949 = sld [smem:[#allocation2 + %s948]]
        %v950 = vstv %s949
        %v951 = vmul.f32 %v950, %v939
        %v952 = vmul.f32 %v950, %v940
        %955 = vrot.lane.b32.xlu0 %v951, 127
        %v956 = vpop.permute.xlu0 %955
        %957 = vrot.lane.b32.xlu0 %v952, 127
        %v958 = vpop.permute.xlu0 %957
        %v959 = vsel %vm209, %v956, %v958
        %v961 = vadd.f32 %v947, %v959
        %s962 = sadd.s32 %s189, 19
        %s963 = sld [smem:[#allocation2 + %s962]]
        %v964 = vstv %s963
        %v965 = vmul.f32 %v964, %v939
        %v966 = vmul.f32 %v964, %v940
        %v967 = vadd.f32 %v882, %v965
        %v968 = vadd.f32 %v883, %v966
        %s969 = sadd.s32 %s189, 24
        %s970 = sld [smem:[#allocation2 + %s969]]
        %v971 = vstv %s970
        %v972 = vmul.f32 %v971, %v939
        %v973 = vmul.f32 %v971, %v941
        %v976 = vrot.slane %v972, 1
        %v977 = vrot.slane %v973, 1
        %v978 = vsel %vm227, %v976, %v977
        %v980 = vadd.f32 %v961, %v978
        %s981 = sadd.s32 %s189, 26
        %s982 = sld [smem:[#allocation2 + %s981]]
        %v983 = vstv %s982
        %v984 = vmul.f32 %v983, %v939
        %v985 = vmul.f32 %v983, %v940
        %v986 = vmul.f32 %v983, %v941
        %v987 = vmul.f32 %v983, %v942
        %v992 = vrot.slane %v984, 1
        %v993 = vrot.slane %v986, 1
        %v994 = vsel %vm227, %v992, %v993
        %v995 = vrot.slane %v985, 1
        %v996 = vrot.slane %v987, 1
        %v997 = vsel %vm227, %v995, %v996
        %998 = vrot.lane.b32.xlu0 %v994, 127
        %v999 = vpop.permute.xlu0 %998
        %1000 = vrot.lane.b32.xlu0 %v997, 127
        %v1001 = vpop.permute.xlu0 %1000
        %v1002 = vsel %vm209, %v999, %v1001
        %v1004 = vadd.f32 %v980, %v1002
        %s1005 = sadd.s32 %s189, 25
        %s1006 = sld [smem:[#allocation2 + %s1005]]
        %v1007 = vstv %s1006
        %v1008 = vmul.f32 %v1007, %v939
        %v1009 = vmul.f32 %v1007, %v940
        %v1010 = vmul.f32 %v1007, %v941
        %v1011 = vmul.f32 %v1007, %v942
        %v1016 = vrot.slane %v1008, 1
        %v1017 = vrot.slane %v1010, 1
        %v1018 = vsel %vm227, %v1016, %v1017
        %v1019 = vrot.slane %v1009, 1
        %v1020 = vrot.slane %v1011, 1
        %v1021 = vsel %vm227, %v1019, %v1020
        %v1024 = vadd.f32 %v967, %v1018
        %v1025 = vadd.f32 %v968, %v1021
        %s1026 = sadd.s32 %s189, 21
        %s1027 = sld [smem:[#allocation2 + %s1026]]
        %v1028 = vstv %s1027
        %v1029 = vmul.f32 %v1028, %v939
        %v1030 = vmul.f32 %v1028, %v941
        %v1031 = vadd.f32 %v914, %v1029
        %v1032 = vadd.f32 %v915, %v1030
        %s1033 = sadd.s32 %s189, 23
        %s1034 = sld [smem:[#allocation2 + %s1033]]
        %v1035 = vstv %s1034
        %v1036 = vmul.f32 %v1035, %v939
        %v1037 = vmul.f32 %v1035, %v940
        %v1038 = vmul.f32 %v1035, %v941
        %v1039 = vmul.f32 %v1035, %v942
        %1044 = vrot.lane.b32.xlu0 %v1036, 127
        %v1045 = vpop.permute.xlu0 %1044
        %1046 = vrot.lane.b32.xlu0 %v1037, 127
        %v1047 = vpop.permute.xlu0 %1046
        %1048 = vrot.lane.b32.xlu0 %v1038, 127
        %v1049 = vpop.permute.xlu0 %1048
        %1050 = vrot.lane.b32.xlu0 %v1039, 127
        %v1051 = vpop.permute.xlu0 %1050
        %v1052 = vsel %vm209, %v1045, %v1047
        %v1053 = vsel %vm209, %v1049, %v1051
        %v1056 = vadd.f32 %v1031, %v1052
        %v1057 = vadd.f32 %v1032, %v1053
        %s1058 = sadd.s32 %s189, 22
        %s1059 = sld [smem:[#allocation2 + %s1058]]
        %v1060 = vstv %s1059
        %v1061 = vmul.f32 %v1060, %v939
        %v1062 = vmul.f32 %v1060, %v940
        %v1063 = vmul.f32 %v1060, %v941
        %v1064 = vmul.f32 %v1060, %v942
        %v1065 = vadd.f32 %v934, %v1061
        %v1066 = vadd.f32 %v935, %v1062
        %v1067 = vadd.f32 %v936, %v1063
        %v1068 = vadd.f32 %v937, %v1064
        %s1069 = scalar_lea.vmem %s166, 288 [#allocation6]
        %v1070 = vld [vmem:[%s1069] sm:$0xff]
        %v1071 = vld [vmem:[%s1069 + $0x8] sm:$0xff]
        %v1072 = vld [vmem:[%s1069 + $0x10] sm:$0x1]
        %v1073 = vld [vmem:[%s1069 + $0x18] sm:$0x1]
        %v1074 = vmul.f32 %v964, %v1070
        %v1075 = vadd.f32 %v1004, %v1074
        %v1076 = vmul.f32 %v945, %v1070
        %1078 = vrot.lane.b32.xlu0 %v1076, 1
        %v1079 = vpop.permute.xlu0 %1078
        %v1081 = vadd.f32 %v1024, %v1079
        %v1082 = vadd.f32 %v1025, %v1079
        %v1083 = vmul.f32 %v950, %v1070
        %v1084 = vmul.f32 %v950, %v1071
        %v1085 = vadd.f32 %v1081, %v1083
        %v1086 = vadd.f32 %v1082, %v1084
        %v1087 = vmul.f32 %v1007, %v1070
        %v1088 = vmul.f32 %v1007, %v1072
        %v1091 = vrot.slane %v1087, 1
        %v1092 = vrot.slane %v1088, 1
        %v1093 = vsel %vm227, %v1091, %v1092
        %v1095 = vadd.f32 %v1075, %v1093
        %v1096 = vmul.f32 %v971, %v1070
        %v1097 = vmul.f32 %v971, %v1072
        %v1100 = vrot.slane %v1096, 1
        %v1101 = vrot.slane %v1097, 1
        %v1102 = vsel %vm227, %v1100, %v1101
        %1103 = vrot.lane.b32.xlu0 %v1102, 1
        %v1104 = vpop.permute.xlu0 %1103
        %v1106 = vadd.f32 %v1085, %v1104
        %v1107 = vadd.f32 %v1086, %v1104
        %v1108 = vmul.f32 %v983, %v1070
        %v1109 = vmul.f32 %v983, %v1071
        %v1110 = vmul.f32 %v983, %v1072
        %v1111 = vmul.f32 %v983, %v1073
        %v1116 = vrot.slane %v1108, 1
        %v1117 = vrot.slane %v1110, 1
        %v1118 = vsel %vm227, %v1116, %v1117
        %v1119 = vrot.slane %v1109, 1
        %v1120 = vrot.slane %v1111, 1
        %v1121 = vsel %vm227, %v1119, %v1120
        %v1124 = vadd.f32 %v1106, %v1118
        %v1125 = vadd.f32 %v1107, %v1121
        %v1126 = vmul.f32 %v1060, %v1070
        %v1127 = vmul.f32 %v1060, %v1072
        %v1128 = vadd.f32 %v1056, %v1126
        %v1129 = vadd.f32 %v1057, %v1127
        %v1130 = vmul.f32 %v1028, %v1070
        %v1131 = vmul.f32 %v1028, %v1072
        %1134 = vrot.lane.b32.xlu0 %v1130, 1
        %v1135 = vpop.permute.xlu0 %1134
        %1136 = vrot.lane.b32.xlu0 %v1131, 1
        %v1137 = vpop.permute.xlu0 %1136
        %v1140 = vadd.f32 %v1065, %v1135
        %v1141 = vadd.f32 %v1066, %v1135
        %v1142 = vadd.f32 %v1067, %v1137
        %v1143 = vadd.f32 %v1068, %v1137
        %v1144 = vmul.f32 %v1035, %v1070
        %v1145 = vmul.f32 %v1035, %v1071
        %v1146 = vmul.f32 %v1035, %v1072
        %v1147 = vmul.f32 %v1035, %v1073
        %v1148 = vadd.f32 %v1140, %v1144
        %v1149 = vadd.f32 %v1141, %v1145
        %v1150 = vadd.f32 %v1142, %v1146
        %v1151 = vadd.f32 %v1143, %v1147
        %s1152 = scalar_lea.vmem %s166, 320 [#allocation6]
        %v1153 = vld [vmem:[%s1152] sm:$0xff]
        %v1154 = vld [vmem:[%s1152 + $0x8] sm:$0xff]
        %v1155 = vld [vmem:[%s1152 + $0x10] sm:$0x1]
        %v1156 = vld [vmem:[%s1152 + $0x18] sm:$0x1]
        %v1157 = vmul.f32 %v1028, %v1153
        %v1158 = vadd.f32 %v1095, %v1157
        %v1159 = vmul.f32 %v1035, %v1153
        %v1160 = vmul.f32 %v1035, %v1154
        %1163 = vrot.lane.b32.xlu0 %v1159, 127
        %v1164 = vpop.permute.xlu0 %1163
        %1165 = vrot.lane.b32.xlu0 %v1160, 127
        %v1166 = vpop.permute.xlu0 %1165
        %v1167 = vsel %vm209, %v1164, %v1166
        %v1169 = vadd.f32 %v1158, %v1167
        %v1170 = vmul.f32 %v1060, %v1153
        %v1171 = vmul.f32 %v1060, %v1154
        %v1172 = vadd.f32 %v1124, %v1170
        %v1173 = vadd.f32 %v1125, %v1171
        %v1174 = vmul.f32 %v945, %v1153
        %v1176 = vrot.slane %v1174, 7
        %v1178 = vadd.f32 %v1128, %v1176
        %v1179 = vadd.f32 %v1129, %v1176
        %v1180 = vmul.f32 %v950, %v1153
        %v1181 = vmul.f32 %v950, %v1154
        %v1184 = vrot.slane %v1180, 7
        %v1185 = vrot.slane %v1181, 7
        %1186 = vrot.lane.b32.xlu0 %v1184, 127
        %v1187 = vpop.permute.xlu0 %1186
        %1188 = vrot.lane.b32.xlu0 %v1185, 127
        %v1189 = vpop.permute.xlu0 %1188
        %v1190 = vsel %vm209, %v1187, %v1189
        %v1192 = vadd.f32 %v1178, %v1190
        %v1193 = vadd.f32 %v1179, %v1190
        %v1194 = vmul.f32 %v964, %v1153
        %v1195 = vmul.f32 %v964, %v1154
        %v1198 = vrot.slane %v1194, 7
        %v1199 = vrot.slane %v1195, 7
        %v1202 = vadd.f32 %v1148, %v1198
        %v1203 = vadd.f32 %v1149, %v1199
        %v1204 = vadd.f32 %v1150, %v1198
        %v1205 = vadd.f32 %v1151, %v1199
        %v1206 = vmul.f32 %v971, %v1153
        %v1207 = vmul.f32 %v971, %v1155
        %v1208 = vadd.f32 %v1192, %v1206
        %v1209 = vadd.f32 %v1193, %v1207
        %v1210 = vmul.f32 %v983, %v1153
        %v1211 = vmul.f32 %v983, %v1154
        %v1212 = vmul.f32 %v983, %v1155
        %v1213 = vmul.f32 %v983, %v1156
        %1218 = vrot.lane.b32.xlu0 %v1210, 127
        %v1219 = vpop.permute.xlu0 %1218
        %1220 = vrot.lane.b32.xlu0 %v1211, 127
        %v1221 = vpop.permute.xlu0 %1220
        %1222 = vrot.lane.b32.xlu0 %v1212, 127
        %v1223 = vpop.permute.xlu0 %1222
        %1224 = vrot.lane.b32.xlu0 %v1213, 127
        %v1225 = vpop.permute.xlu0 %1224
        %v1226 = vsel %vm209, %v1219, %v1221
        %v1227 = vsel %vm209, %v1223, %v1225
        %v1230 = vadd.f32 %v1208, %v1226
        %v1231 = vadd.f32 %v1209, %v1227
        %v1232 = vmul.f32 %v1007, %v1153
        %v1233 = vmul.f32 %v1007, %v1154
        %v1234 = vmul.f32 %v1007, %v1155
        %v1235 = vmul.f32 %v1007, %v1156
        %v1236 = vadd.f32 %v1202, %v1232
        %v1237 = vadd.f32 %v1203, %v1233
        %v1238 = vadd.f32 %v1204, %v1234
        %v1239 = vadd.f32 %v1205, %v1235
        %s1240 = scalar_lea.vmem %s166, 352 [#allocation6]
        %v1241 = vld [vmem:[%s1240] sm:$0xff]
        %v1242 = vld [vmem:[%s1240 + $0x8] sm:$0xff]
        %v1243 = vld [vmem:[%s1240 + $0x10] sm:$0x1]
        %v1244 = vld [vmem:[%s1240 + $0x18] sm:$0x1]
        %v1245 = vmul.f32 %v1060, %v1241
        %v1246 = vadd.f32 %v1169, %v1245
        %v1247 = vmul.f32 %v1028, %v1241
        %1249 = vrot.lane.b32.xlu0 %v1247, 1
        %v1250 = vpop.permute.xlu0 %1249
        %v1252 = vadd.f32 %v1172, %v1250
        %v1253 = vadd.f32 %v1173, %v1250
        %v1254 = vmul.f32 %v1035, %v1241
        %v1255 = vmul.f32 %v1035, %v1242
        %v1256 = vadd.f32 %v1252, %v1254
        %v1257 = vadd.f32 %v1253, %v1255
        %v1258 = vmul.f32 %v964, %v1241
        %v1260 = vrot.slane %v1258, 7
        %v1262 = vadd.f32 %v1230, %v1260
        %v1263 = vadd.f32 %v1231, %v1260
        %v1264 = vmul.f32 %v945, %v1241
        %v1266 = vrot.slane %v1264, 7
        %1267 = vrot.lane.b32.xlu0 %v1266, 1
        %v1268 = vpop.permute.xlu0 %1267
        %v1270 = vadd.f32 %v1236, %v1268
        %v1271 = vadd.f32 %v1237, %v1268
        %v1272 = vadd.f32 %v1238, %v1268
        %v1273 = vadd.f32 %v1239, %v1268
        %v1274 = vmul.f32 %v950, %v1241
        %v1275 = vmul.f32 %v950, %v1242
        %v1278 = vrot.slane %v1274, 7
        %v1279 = vrot.slane %v1275, 7
        %v1282 = vadd.f32 %v1270, %v1278
        %v1283 = vadd.f32 %v1271, %v1279
        %v1284 = vadd.f32 %v1272, %v1278
        %v1285 = vadd.f32 %v1273, %v1279
        %v1286 = vmul.f32 %v1007, %v1241
        %v1287 = vmul.f32 %v1007, %v1243
        %v1288 = vadd.f32 %v1262, %v1286
        %v1289 = vadd.f32 %v1263, %v1287
        %v1290 = vmul.f32 %v971, %v1241
        %v1291 = vmul.f32 %v971, %v1243
        %1294 = vrot.lane.b32.xlu0 %v1290, 1
        %v1295 = vpop.permute.xlu0 %1294
        %1296 = vrot.lane.b32.xlu0 %v1291, 1
        %v1297 = vpop.permute.xlu0 %1296
        %v1300 = vadd.f32 %v1282, %v1295
        %v1301 = vadd.f32 %v1283, %v1295
        %v1302 = vadd.f32 %v1284, %v1297
        %v1303 = vadd.f32 %v1285, %v1297
        %v1304 = vmul.f32 %v983, %v1241
        %v1305 = vmul.f32 %v983, %v1242
        %v1306 = vmul.f32 %v983, %v1243
        %v1307 = vmul.f32 %v983, %v1244
        %v1308 = vadd.f32 %v1300, %v1304
        %v1309 = vadd.f32 %v1301, %v1305
        %v1310 = vadd.f32 %v1302, %v1306
        %v1311 = vadd.f32 %v1303, %v1307
        %s1312 = scalar_lea.vmem %s166, 384 [#allocation6]
        %v1313 = vld [vmem:[%s1312] sm:$0xff]
        %v1314 = vld [vmem:[%s1312 + $0x8] sm:$0xff]
        %v1315 = vld [vmem:[%s1312 + $0x10] sm:$0x1]
        %v1316 = vld [vmem:[%s1312 + $0x18] sm:$0x1]
        %s1317 = sadd.s32 %s189, 27
        %s1318 = sld [smem:[#allocation2 + %s1317]]
        %v1319 = vstv %s1318
        %v1320 = vmul.f32 %v1319, %v1313
        %v1321 = vadd.f32 %v1246, %v1320
        %s1322 = sadd.s32 %s189, 29
        %s1323 = sld [smem:[#allocation2 + %s1322]]
        %v1324 = vstv %s1323
        %v1325 = vmul.f32 %v1324, %v1313
        %v1326 = vmul.f32 %v1324, %v1314
        %1329 = vrot.lane.b32.xlu0 %v1325, 127
        %v1330 = vpop.permute.xlu0 %1329
        %1331 = vrot.lane.b32.xlu0 %v1326, 127
        %v1332 = vpop.permute.xlu0 %1331
        %v1333 = vsel %vm209, %v1330, %v1332
        %v1335 = vadd.f32 %v1321, %v1333
        %s1336 = sadd.s32 %s189, 28
        %s1337 = sld [smem:[#allocation2 + %s1336]]
        %v1338 = vstv %s1337
        %v1339 = vmul.f32 %v1338, %v1313
        %v1340 = vmul.f32 %v1338, %v1314
        %v1341 = vadd.f32 %v1256, %v1339
        %v1342 = vadd.f32 %v1257, %v1340
        %s1343 = sadd.s32 %s189, 33
        %s1344 = sld [smem:[#allocation2 + %s1343]]
        %v1345 = vstv %s1344
        %v1346 = vmul.f32 %v1345, %v1313
        %v1347 = vmul.f32 %v1345, %v1315
        %v1350 = vrot.slane %v1346, 1
        %v1351 = vrot.slane %v1347, 1
        %v1352 = vsel %vm227, %v1350, %v1351
        %v1354 = vadd.f32 %v1335, %v1352
        %s1355 = sadd.s32 %s189, 35
        %s1356 = sld [smem:[#allocation2 + %s1355]]
        %v1357 = vstv %s1356
        %v1358 = vmul.f32 %v1357, %v1313
        %v1359 = vmul.f32 %v1357, %v1314
        %v1360 = vmul.f32 %v1357, %v1315
        %v1361 = vmul.f32 %v1357, %v1316
        %v1366 = vrot.slane %v1358, 1
        %v1367 = vrot.slane %v1360, 1
        %v1368 = vsel %vm227, %v1366, %v1367
        %v1369 = vrot.slane %v1359, 1
        %v1370 = vrot.slane %v1361, 1
        %v1371 = vsel %vm227, %v1369, %v1370
        %1372 = vrot.lane.b32.xlu0 %v1368, 127
        %v1373 = vpop.permute.xlu0 %1372
        %1374 = vrot.lane.b32.xlu0 %v1371, 127
        %v1375 = vpop.permute.xlu0 %1374
        %v1376 = vsel %vm209, %v1373, %v1375
        %v1378 = vadd.f32 %v1354, %v1376
        %s1379 = sadd.s32 %s189, 34
        %s1380 = sld [smem:[#allocation2 + %s1379]]
        %v1381 = vstv %s1380
        %v1382 = vmul.f32 %v1381, %v1313
        %v1383 = vmul.f32 %v1381, %v1314
        %v1384 = vmul.f32 %v1381, %v1315
        %v1385 = vmul.f32 %v1381, %v1316
        %v1390 = vrot.slane %v1382, 1
        %v1391 = vrot.slane %v1384, 1
        %v1392 = vsel %vm227, %v1390, %v1391
        %v1393 = vrot.slane %v1383, 1
        %v1394 = vrot.slane %v1385, 1
        %v1395 = vsel %vm227, %v1393, %v1394
        %v1398 = vadd.f32 %v1341, %v1392
        %v1399 = vadd.f32 %v1342, %v1395
        %s1400 = sadd.s32 %s189, 30
        %s1401 = sld [smem:[#allocation2 + %s1400]]
        %v1402 = vstv %s1401
        %v1403 = vmul.f32 %v1402, %v1313
        %v1404 = vmul.f32 %v1402, %v1315
        %v1405 = vadd.f32 %v1288, %v1403
        %v1406 = vadd.f32 %v1289, %v1404
        %s1407 = sadd.s32 %s189, 32
        %s1408 = sld [smem:[#allocation2 + %s1407]]
        %v1409 = vstv %s1408
        %v1410 = vmul.f32 %v1409, %v1313
        %v1411 = vmul.f32 %v1409, %v1314
        %v1412 = vmul.f32 %v1409, %v1315
        %v1413 = vmul.f32 %v1409, %v1316
        %1418 = vrot.lane.b32.xlu0 %v1410, 127
        %v1419 = vpop.permute.xlu0 %1418
        %1420 = vrot.lane.b32.xlu0 %v1411, 127
        %v1421 = vpop.permute.xlu0 %1420
        %1422 = vrot.lane.b32.xlu0 %v1412, 127
        %v1423 = vpop.permute.xlu0 %1422
        %1424 = vrot.lane.b32.xlu0 %v1413, 127
        %v1425 = vpop.permute.xlu0 %1424
        %v1426 = vsel %vm209, %v1419, %v1421
        %v1427 = vsel %vm209, %v1423, %v1425
        %v1430 = vadd.f32 %v1405, %v1426
        %v1431 = vadd.f32 %v1406, %v1427
        %s1432 = sadd.s32 %s189, 31
        %s1433 = sld [smem:[#allocation2 + %s1432]]
        %v1434 = vstv %s1433
        %v1435 = vmul.f32 %v1434, %v1313
        %v1436 = vmul.f32 %v1434, %v1314
        %v1437 = vmul.f32 %v1434, %v1315
        %v1438 = vmul.f32 %v1434, %v1316
        %v1439 = vadd.f32 %v1308, %v1435
        %v1440 = vadd.f32 %v1309, %v1436
        %v1441 = vadd.f32 %v1310, %v1437
        %v1442 = vadd.f32 %v1311, %v1438
        %s1443 = scalar_lea.vmem %s166, 416 [#allocation6]
        %v1444 = vld [vmem:[%s1443] sm:$0xff]
        %v1445 = vld [vmem:[%s1443 + $0x8] sm:$0xff]
        %v1446 = vld [vmem:[%s1443 + $0x10] sm:$0x1]
        %v1447 = vld [vmem:[%s1443 + $0x18] sm:$0x1]
        %v1448 = vmul.f32 %v1338, %v1444
        %v1449 = vadd.f32 %v1378, %v1448
        %v1450 = vmul.f32 %v1319, %v1444
        %1452 = vrot.lane.b32.xlu0 %v1450, 1
        %v1453 = vpop.permute.xlu0 %1452
        %v1455 = vadd.f32 %v1398, %v1453
        %v1456 = vadd.f32 %v1399, %v1453
        %v1457 = vmul.f32 %v1324, %v1444
        %v1458 = vmul.f32 %v1324, %v1445
        %v1459 = vadd.f32 %v1455, %v1457
        %v1460 = vadd.f32 %v1456, %v1458
        %v1461 = vmul.f32 %v1381, %v1444
        %v1462 = vmul.f32 %v1381, %v1446
        %v1465 = vrot.slane %v1461, 1
        %v1466 = vrot.slane %v1462, 1
        %v1467 = vsel %vm227, %v1465, %v1466
        %v1469 = vadd.f32 %v1449, %v1467
        %v1470 = vmul.f32 %v1345, %v1444
        %v1471 = vmul.f32 %v1345, %v1446
        %v1474 = vrot.slane %v1470, 1
        %v1475 = vrot.slane %v1471, 1
        %v1476 = vsel %vm227, %v1474, %v1475
        %1477 = vrot.lane.b32.xlu0 %v1476, 1
        %v1478 = vpop.permute.xlu0 %1477
        %v1480 = vadd.f32 %v1459, %v1478
        %v1481 = vadd.f32 %v1460, %v1478
        %v1482 = vmul.f32 %v1357, %v1444
        %v1483 = vmul.f32 %v1357, %v1445
        %v1484 = vmul.f32 %v1357, %v1446
        %v1485 = vmul.f32 %v1357, %v1447
        %v1490 = vrot.slane %v1482, 1
        %v1491 = vrot.slane %v1484, 1
        %v1492 = vsel %vm227, %v1490, %v1491
        %v1493 = vrot.slane %v1483, 1
        %v1494 = vrot.slane %v1485, 1
        %v1495 = vsel %vm227, %v1493, %v1494
        %v1498 = vadd.f32 %v1480, %v1492
        %v1499 = vadd.f32 %v1481, %v1495
        %v1500 = vmul.f32 %v1434, %v1444
        %v1501 = vmul.f32 %v1434, %v1446
        %v1502 = vadd.f32 %v1430, %v1500
        %v1503 = vadd.f32 %v1431, %v1501
        %v1504 = vmul.f32 %v1402, %v1444
        %v1505 = vmul.f32 %v1402, %v1446
        %1508 = vrot.lane.b32.xlu0 %v1504, 1
        %v1509 = vpop.permute.xlu0 %1508
        %1510 = vrot.lane.b32.xlu0 %v1505, 1
        %v1511 = vpop.permute.xlu0 %1510
        %v1514 = vadd.f32 %v1439, %v1509
        %v1515 = vadd.f32 %v1440, %v1509
        %v1516 = vadd.f32 %v1441, %v1511
        %v1517 = vadd.f32 %v1442, %v1511
        %v1518 = vmul.f32 %v1409, %v1444
        %v1519 = vmul.f32 %v1409, %v1445
        %v1520 = vmul.f32 %v1409, %v1446
        %v1521 = vmul.f32 %v1409, %v1447
        %v1522 = vadd.f32 %v1514, %v1518
        %v1523 = vadd.f32 %v1515, %v1519
        %v1524 = vadd.f32 %v1516, %v1520
        %v1525 = vadd.f32 %v1517, %v1521
        %s1526 = scalar_lea.vmem %s166, 448 [#allocation6]
        %v1527 = vld [vmem:[%s1526] sm:$0xff]
        %v1528 = vld [vmem:[%s1526 + $0x8] sm:$0xff]
        %v1529 = vld [vmem:[%s1526 + $0x10] sm:$0x1]
        %v1530 = vld [vmem:[%s1526 + $0x18] sm:$0x1]
        %v1531 = vmul.f32 %v1402, %v1527
        %v1532 = vadd.f32 %v1469, %v1531
        %v1533 = vmul.f32 %v1409, %v1527
        %v1534 = vmul.f32 %v1409, %v1528
        %1537 = vrot.lane.b32.xlu0 %v1533, 127
        %v1538 = vpop.permute.xlu0 %1537
        %1539 = vrot.lane.b32.xlu0 %v1534, 127
        %v1540 = vpop.permute.xlu0 %1539
        %v1541 = vsel %vm209, %v1538, %v1540
        %v1543 = vadd.f32 %v1532, %v1541
        %v1544 = vmul.f32 %v1434, %v1527
        %v1545 = vmul.f32 %v1434, %v1528
        %v1546 = vadd.f32 %v1498, %v1544
        %v1547 = vadd.f32 %v1499, %v1545
        %v1548 = vmul.f32 %v1319, %v1527
        %v1550 = vrot.slane %v1548, 7
        %v1552 = vadd.f32 %v1502, %v1550
        %v1553 = vadd.f32 %v1503, %v1550
        %v1554 = vmul.f32 %v1324, %v1527
        %v1555 = vmul.f32 %v1324, %v1528
        %v1558 = vrot.slane %v1554, 7
        %v1559 = vrot.slane %v1555, 7
        %1560 = vrot.lane.b32.xlu0 %v1558, 127
        %v1561 = vpop.permute.xlu0 %1560
        %1562 = vrot.lane.b32.xlu0 %v1559, 127
        %v1563 = vpop.permute.xlu0 %1562
        %v1564 = vsel %vm209, %v1561, %v1563
        %v1566 = vadd.f32 %v1552, %v1564
        %v1567 = vadd.f32 %v1553, %v1564
        %v1568 = vmul.f32 %v1338, %v1527
        %v1569 = vmul.f32 %v1338, %v1528
        %v1572 = vrot.slane %v1568, 7
        %v1573 = vrot.slane %v1569, 7
        %v1576 = vadd.f32 %v1522, %v1572
        %v1577 = vadd.f32 %v1523, %v1573
        %v1578 = vadd.f32 %v1524, %v1572
        %v1579 = vadd.f32 %v1525, %v1573
        %v1580 = vmul.f32 %v1345, %v1527
        %v1581 = vmul.f32 %v1345, %v1529
        %v1582 = vadd.f32 %v1566, %v1580
        %v1583 = vadd.f32 %v1567, %v1581
        %v1584 = vmul.f32 %v1357, %v1527
        %v1585 = vmul.f32 %v1357, %v1528
        %v1586 = vmul.f32 %v1357, %v1529
        %v1587 = vmul.f32 %v1357, %v1530
        %1592 = vrot.lane.b32.xlu0 %v1584, 127
        %v1593 = vpop.permute.xlu0 %1592
        %1594 = vrot.lane.b32.xlu0 %v1585, 127
        %v1595 = vpop.permute.xlu0 %1594
        %1596 = vrot.lane.b32.xlu0 %v1586, 127
        %v1597 = vpop.permute.xlu0 %1596
        %1598 = vrot.lane.b32.xlu0 %v1587, 127
        %v1599 = vpop.permute.xlu0 %1598
        %v1600 = vsel %vm209, %v1593, %v1595
        %v1601 = vsel %vm209, %v1597, %v1599
        %v1604 = vadd.f32 %v1582, %v1600
        %v1605 = vadd.f32 %v1583, %v1601
        %v1606 = vmul.f32 %v1381, %v1527
        %v1607 = vmul.f32 %v1381, %v1528
        %v1608 = vmul.f32 %v1381, %v1529
        %v1609 = vmul.f32 %v1381, %v1530
        %v1610 = vadd.f32 %v1576, %v1606
        %v1611 = vadd.f32 %v1577, %v1607
        %v1612 = vadd.f32 %v1578, %v1608
        %v1613 = vadd.f32 %v1579, %v1609
        %s1614 = scalar_lea.vmem %s166, 480 [#allocation6]
        %v1615 = vld [vmem:[%s1614] sm:$0xff]
        %v1616 = vld [vmem:[%s1614 + $0x8] sm:$0xff]
        %v1617 = vld [vmem:[%s1614 + $0x10] sm:$0x1]
        %v1618 = vld [vmem:[%s1614 + $0x18] sm:$0x1]
        %v1619 = vmul.f32 %v1434, %v1615
        %v1620 = vadd.f32 %v1543, %v1619
        %v1621 = vmul.f32 %v1402, %v1615
        %1623 = vrot.lane.b32.xlu0 %v1621, 1
        %v1624 = vpop.permute.xlu0 %1623
        %v1626 = vadd.f32 %v1546, %v1624
        %v1627 = vadd.f32 %v1547, %v1624
        %v1628 = vmul.f32 %v1409, %v1615
        %v1629 = vmul.f32 %v1409, %v1616
        %v1630 = vadd.f32 %v1626, %v1628
        %v1631 = vadd.f32 %v1627, %v1629
        %v1632 = vmul.f32 %v1338, %v1615
        %v1634 = vrot.slane %v1632, 7
        %v1636 = vadd.f32 %v1604, %v1634
        %v1637 = vadd.f32 %v1605, %v1634
        %v1638 = vmul.f32 %v1319, %v1615
        %v1640 = vrot.slane %v1638, 7
        %1641 = vrot.lane.b32.xlu0 %v1640, 1
        %v1642 = vpop.permute.xlu0 %1641
        %v1644 = vadd.f32 %v1610, %v1642
        %v1645 = vadd.f32 %v1611, %v1642
        %v1646 = vadd.f32 %v1612, %v1642
        %v1647 = vadd.f32 %v1613, %v1642
        %v1648 = vmul.f32 %v1324, %v1615
        %v1649 = vmul.f32 %v1324, %v1616
        %v1652 = vrot.slane %v1648, 7
        %v1653 = vrot.slane %v1649, 7
        %v1656 = vadd.f32 %v1644, %v1652
        %v1657 = vadd.f32 %v1645, %v1653
        %v1658 = vadd.f32 %v1646, %v1652
        %v1659 = vadd.f32 %v1647, %v1653
        %v1660 = vmul.f32 %v1381, %v1615
        %v1661 = vmul.f32 %v1381, %v1617
        %v1662 = vadd.f32 %v1636, %v1660
        %v1663 = vadd.f32 %v1637, %v1661
        %v1664 = vmul.f32 %v1345, %v1615
        %v1665 = vmul.f32 %v1345, %v1617
        %1668 = vrot.lane.b32.xlu0 %v1664, 1
        %v1669 = vpop.permute.xlu0 %1668
        %1670 = vrot.lane.b32.xlu0 %v1665, 1
        %v1671 = vpop.permute.xlu0 %1670
        %v1674 = vadd.f32 %v1656, %v1669
        %v1675 = vadd.f32 %v1657, %v1669
        %v1676 = vadd.f32 %v1658, %v1671
        %v1677 = vadd.f32 %v1659, %v1671
        %v1678 = vmul.f32 %v1357, %v1615
        %v1679 = vmul.f32 %v1357, %v1616
        %v1680 = vmul.f32 %v1357, %v1617
        %v1681 = vmul.f32 %v1357, %v1618
        %v1682 = vadd.f32 %v1674, %v1678
        %v1683 = vadd.f32 %v1675, %v1679
        %v1684 = vadd.f32 %v1676, %v1680
        %v1685 = vadd.f32 %v1677, %v1681
        %1686 = vst [vmem:[%s187] sm:$0xff] %v1620
        %1689 = vrot.lane.b32.xlu0 %v1630, 127
        %v1690 = vpop.permute.xlu0 %1689
        %1691 = vrot.lane.b32.xlu0 %v1631, 127
        %v1692 = vpop.permute.xlu0 %1691
        %v1693 = vsel %vm209, %v1690, %v1692
        %s1695 = scalar_lea.vmem %s187, 8 [#allocation7]
        %1696 = vst [vmem:[%s1695] sm:$0xff] %v1693
        %s1697 = scalar_lea.vmem %s187, 16 [#allocation7]
        %1698 = vst [vmem:[%s1697 - $0x1] sm:$0xfe] %v1662
        %1699 = vst [vmem:[%s1697 + $0x7] sm:$0x1] %v1663
        %1704 = vrot.lane.b32.xlu0 %v1682, 127
        %v1705 = vpop.permute.xlu0 %1704
        %1706 = vrot.lane.b32.xlu0 %v1683, 127
        %v1707 = vpop.permute.xlu0 %1706
        %1708 = vrot.lane.b32.xlu0 %v1684, 127
        %v1709 = vpop.permute.xlu0 %1708
        %1710 = vrot.lane.b32.xlu0 %v1685, 127
        %v1711 = vpop.permute.xlu0 %1710
        %v1712 = vsel %vm209, %v1705, %v1707
        %v1713 = vsel %vm209, %v1709, %v1711
        %s1716 = scalar_lea.vmem %s187, 24 [#allocation7]
        %1717 = vst [vmem:[%s1716 - $0x1] sm:$0xfe] %v1712
        %1718 = vst [vmem:[%s1716 + $0x7] sm:$0x1] %v1713
        %s1719 = smul.u32 %s25, 2
        %s1720 = sadd.s32 %s1719, 1
        %s1721 = smul.u32 %s1720, 36
        %v1722 = vld [vmem:[%s166] sm:$0xff]
        %v1723 = vld [vmem:[%s166 + $0x8] sm:$0xff]
        %v1724 = vld [vmem:[%s166 + $0x10] sm:$0x1]
        %v1725 = vld [vmem:[%s166 + $0x18] sm:$0x1]
        %s1726 = sld [smem:[#allocation2 + %s1721]]
        %v1727 = vstv %s1726
        %v1728 = vmul.f32 %v1727, %v1722
        %v1729 = vadd.f32 %v1728, 0.0
        %s1730 = sadd.s32 %s1721, 2
        %s1731 = sld [smem:[#allocation2 + %s1730]]
        %v1732 = vstv %s1731
        %v1733 = vmul.f32 %v1732, %v1722
        %v1734 = vmul.f32 %v1732, %v1723
        %1737 = vrot.lane.b32.xlu0 %v1733, 127
        %v1738 = vpop.permute.xlu0 %1737
        %1739 = vrot.lane.b32.xlu0 %v1734, 127
        %v1740 = vpop.permute.xlu0 %1739
        %v1741 = vsel %vm209, %v1738, %v1740
        %v1743 = vadd.f32 %v1729, %v1741
        %s1744 = sadd.s32 %s1721, 1
        %s1745 = sld [smem:[#allocation2 + %s1744]]
        %v1746 = vstv %s1745
        %v1747 = vmul.f32 %v1746, %v1722
        %v1748 = vmul.f32 %v1746, %v1723
        %v1749 = vadd.f32 %v1747, 0.0
        %v1750 = vadd.f32 %v1748, 0.0
        %s1751 = sadd.s32 %s1721, 6
        %s1752 = sld [smem:[#allocation2 + %s1751]]
        %v1753 = vstv %s1752
        %v1754 = vmul.f32 %v1753, %v1722
        %v1755 = vmul.f32 %v1753, %v1724
        %v1758 = vrot.slane %v1754, 1
        %v1759 = vrot.slane %v1755, 1
        %v1760 = vsel %vm227, %v1758, %v1759
        %v1762 = vadd.f32 %v1743, %v1760
        %s1763 = sadd.s32 %s1721, 8
        %s1764 = sld [smem:[#allocation2 + %s1763]]
        %v1765 = vstv %s1764
        %v1766 = vmul.f32 %v1765, %v1722
        %v1767 = vmul.f32 %v1765, %v1723
        %v1768 = vmul.f32 %v1765, %v1724
        %v1769 = vmul.f32 %v1765, %v1725
        %v1774 = vrot.slane %v1766, 1
        %v1775 = vrot.slane %v1768, 1
        %v1776 = vsel %vm227, %v1774, %v1775
        %v1777 = vrot.slane %v1767, 1
        %v1778 = vrot.slane %v1769, 1
        %v1779 = vsel %vm227, %v1777, %v1778
        %1780 = vrot.lane.b32.xlu0 %v1776, 127
        %v1781 = vpop.permute.xlu0 %1780
        %1782 = vrot.lane.b32.xlu0 %v1779, 127
        %v1783 = vpop.permute.xlu0 %1782
        %v1784 = vsel %vm209, %v1781, %v1783
        %v1786 = vadd.f32 %v1762, %v1784
        %s1787 = sadd.s32 %s1721, 7
        %s1788 = sld [smem:[#allocation2 + %s1787]]
        %v1789 = vstv %s1788
        %v1790 = vmul.f32 %v1789, %v1722
        %v1791 = vmul.f32 %v1789, %v1723
        %v1792 = vmul.f32 %v1789, %v1724
        %v1793 = vmul.f32 %v1789, %v1725
        %v1798 = vrot.slane %v1790, 1
        %v1799 = vrot.slane %v1792, 1
        %v1800 = vsel %vm227, %v1798, %v1799
        %v1801 = vrot.slane %v1791, 1
        %v1802 = vrot.slane %v1793, 1
        %v1803 = vsel %vm227, %v1801, %v1802
        %v1806 = vadd.f32 %v1749, %v1800
        %v1807 = vadd.f32 %v1750, %v1803
        %s1808 = sadd.s32 %s1721, 3
        %s1809 = sld [smem:[#allocation2 + %s1808]]
        %v1810 = vstv %s1809
        %v1811 = vmul.f32 %v1810, %v1722
        %v1812 = vmul.f32 %v1810, %v1724
        %v1813 = vadd.f32 %v1811, 0.0
        %v1814 = vadd.f32 %v1812, 0.0
        %s1815 = sadd.s32 %s1721, 5
        %s1816 = sld [smem:[#allocation2 + %s1815]]
        %v1817 = vstv %s1816
        %v1818 = vmul.f32 %v1817, %v1722
        %v1819 = vmul.f32 %v1817, %v1723
        %v1820 = vmul.f32 %v1817, %v1724
        %v1821 = vmul.f32 %v1817, %v1725
        %1826 = vrot.lane.b32.xlu0 %v1818, 127
        %v1827 = vpop.permute.xlu0 %1826
        %1828 = vrot.lane.b32.xlu0 %v1819, 127
        %v1829 = vpop.permute.xlu0 %1828
        %1830 = vrot.lane.b32.xlu0 %v1820, 127
        %v1831 = vpop.permute.xlu0 %1830
        %1832 = vrot.lane.b32.xlu0 %v1821, 127
        %v1833 = vpop.permute.xlu0 %1832
        %v1834 = vsel %vm209, %v1827, %v1829
        %v1835 = vsel %vm209, %v1831, %v1833
        %v1838 = vadd.f32 %v1813, %v1834
        %v1839 = vadd.f32 %v1814, %v1835
        %s1840 = sadd.s32 %s1721, 4
        %s1841 = sld [smem:[#allocation2 + %s1840]]
        %v1842 = vstv %s1841
        %v1843 = vmul.f32 %v1842, %v1722
        %v1844 = vmul.f32 %v1842, %v1723
        %v1845 = vmul.f32 %v1842, %v1724
        %v1846 = vmul.f32 %v1842, %v1725
        %v1847 = vadd.f32 %v1843, 0.0
        %v1848 = vadd.f32 %v1844, 0.0
        %v1849 = vadd.f32 %v1845, 0.0
        %v1850 = vadd.f32 %v1846, 0.0
        %v1851 = vld [vmem:[%s321] sm:$0xff]
        %v1852 = vld [vmem:[%s321 + $0x8] sm:$0xff]
        %v1853 = vld [vmem:[%s321 + $0x10] sm:$0x1]
        %v1854 = vld [vmem:[%s321 + $0x18] sm:$0x1]
        %v1855 = vmul.f32 %v1746, %v1851
        %v1856 = vadd.f32 %v1786, %v1855
        %v1857 = vmul.f32 %v1727, %v1851
        %1859 = vrot.lane.b32.xlu0 %v1857, 1
        %v1860 = vpop.permute.xlu0 %1859
        %v1862 = vadd.f32 %v1806, %v1860
        %v1863 = vadd.f32 %v1807, %v1860
        %v1864 = vmul.f32 %v1732, %v1851
        %v1865 = vmul.f32 %v1732, %v1852
        %v1866 = vadd.f32 %v1862, %v1864
        %v1867 = vadd.f32 %v1863, %v1865
        %v1868 = vmul.f32 %v1789, %v1851
        %v1869 = vmul.f32 %v1789, %v1853
        %v1872 = vrot.slane %v1868, 1
        %v1873 = vrot.slane %v1869, 1
        %v1874 = vsel %vm227, %v1872, %v1873
        %v1876 = vadd.f32 %v1856, %v1874
        %v1877 = vmul.f32 %v1753, %v1851
        %v1878 = vmul.f32 %v1753, %v1853
        %v1881 = vrot.slane %v1877, 1
        %v1882 = vrot.slane %v1878, 1
        %v1883 = vsel %vm227, %v1881, %v1882
        %1884 = vrot.lane.b32.xlu0 %v1883, 1
        %v1885 = vpop.permute.xlu0 %1884
        %v1887 = vadd.f32 %v1866, %v1885
        %v1888 = vadd.f32 %v1867, %v1885
        %v1889 = vmul.f32 %v1765, %v1851
        %v1890 = vmul.f32 %v1765, %v1852
        %v1891 = vmul.f32 %v1765, %v1853
        %v1892 = vmul.f32 %v1765, %v1854
        %v1897 = vrot.slane %v1889, 1
        %v1898 = vrot.slane %v1891, 1
        %v1899 = vsel %vm227, %v1897, %v1898
        %v1900 = vrot.slane %v1890, 1
        %v1901 = vrot.slane %v1892, 1
        %v1902 = vsel %vm227, %v1900, %v1901
        %v1905 = vadd.f32 %v1887, %v1899
        %v1906 = vadd.f32 %v1888, %v1902
        %v1907 = vmul.f32 %v1842, %v1851
        %v1908 = vmul.f32 %v1842, %v1853
        %v1909 = vadd.f32 %v1838, %v1907
        %v1910 = vadd.f32 %v1839, %v1908
        %v1911 = vmul.f32 %v1810, %v1851
        %v1912 = vmul.f32 %v1810, %v1853
        %1915 = vrot.lane.b32.xlu0 %v1911, 1
        %v1916 = vpop.permute.xlu0 %1915
        %1917 = vrot.lane.b32.xlu0 %v1912, 1
        %v1918 = vpop.permute.xlu0 %1917
        %v1921 = vadd.f32 %v1847, %v1916
        %v1922 = vadd.f32 %v1848, %v1916
        %v1923 = vadd.f32 %v1849, %v1918
        %v1924 = vadd.f32 %v1850, %v1918
        %v1925 = vmul.f32 %v1817, %v1851
        %v1926 = vmul.f32 %v1817, %v1852
        %v1927 = vmul.f32 %v1817, %v1853
        %v1928 = vmul.f32 %v1817, %v1854
        %v1929 = vadd.f32 %v1921, %v1925
        %v1930 = vadd.f32 %v1922, %v1926
        %v1931 = vadd.f32 %v1923, %v1927
        %v1932 = vadd.f32 %v1924, %v1928
        %v1933 = vld [vmem:[%s404] sm:$0xff]
        %v1934 = vld [vmem:[%s404 + $0x8] sm:$0xff]
        %v1935 = vld [vmem:[%s404 + $0x10] sm:$0x1]
        %v1936 = vld [vmem:[%s404 + $0x18] sm:$0x1]
        %v1937 = vmul.f32 %v1810, %v1933
        %v1938 = vadd.f32 %v1876, %v1937
        %v1939 = vmul.f32 %v1817, %v1933
        %v1940 = vmul.f32 %v1817, %v1934
        %1943 = vrot.lane.b32.xlu0 %v1939, 127
        %v1944 = vpop.permute.xlu0 %1943
        %1945 = vrot.lane.b32.xlu0 %v1940, 127
        %v1946 = vpop.permute.xlu0 %1945
        %v1947 = vsel %vm209, %v1944, %v1946
        %v1949 = vadd.f32 %v1938, %v1947
        %v1950 = vmul.f32 %v1842, %v1933
        %v1951 = vmul.f32 %v1842, %v1934
        %v1952 = vadd.f32 %v1905, %v1950
        %v1953 = vadd.f32 %v1906, %v1951
        %v1954 = vmul.f32 %v1727, %v1933
        %v1956 = vrot.slane %v1954, 7
        %v1958 = vadd.f32 %v1909, %v1956
        %v1959 = vadd.f32 %v1910, %v1956
        %v1960 = vmul.f32 %v1732, %v1933
        %v1961 = vmul.f32 %v1732, %v1934
        %v1964 = vrot.slane %v1960, 7
        %v1965 = vrot.slane %v1961, 7
        %1966 = vrot.lane.b32.xlu0 %v1964, 127
        %v1967 = vpop.permute.xlu0 %1966
        %1968 = vrot.lane.b32.xlu0 %v1965, 127
        %v1969 = vpop.permute.xlu0 %1968
        %v1970 = vsel %vm209, %v1967, %v1969
        %v1972 = vadd.f32 %v1958, %v1970
        %v1973 = vadd.f32 %v1959, %v1970
        %v1974 = vmul.f32 %v1746, %v1933
        %v1975 = vmul.f32 %v1746, %v1934
        %v1978 = vrot.slane %v1974, 7
        %v1979 = vrot.slane %v1975, 7
        %v1982 = vadd.f32 %v1929, %v1978
        %v1983 = vadd.f32 %v1930, %v1979
        %v1984 = vadd.f32 %v1931, %v1978
        %v1985 = vadd.f32 %v1932, %v1979
        %v1986 = vmul.f32 %v1753, %v1933
        %v1987 = vmul.f32 %v1753, %v1935
        %v1988 = vadd.f32 %v1972, %v1986
        %v1989 = vadd.f32 %v1973, %v1987
        %v1990 = vmul.f32 %v1765, %v1933
        %v1991 = vmul.f32 %v1765, %v1934
        %v1992 = vmul.f32 %v1765, %v1935
        %v1993 = vmul.f32 %v1765, %v1936
        %1998 = vrot.lane.b32.xlu0 %v1990, 127
        %v1999 = vpop.permute.xlu0 %1998
        %2000 = vrot.lane.b32.xlu0 %v1991, 127
        %v2001 = vpop.permute.xlu0 %2000
        %2002 = vrot.lane.b32.xlu0 %v1992, 127
        %v2003 = vpop.permute.xlu0 %2002
        %2004 = vrot.lane.b32.xlu0 %v1993, 127
        %v2005 = vpop.permute.xlu0 %2004
        %v2006 = vsel %vm209, %v1999, %v2001
        %v2007 = vsel %vm209, %v2003, %v2005
        %v2010 = vadd.f32 %v1988, %v2006
        %v2011 = vadd.f32 %v1989, %v2007
        %v2012 = vmul.f32 %v1789, %v1933
        %v2013 = vmul.f32 %v1789, %v1934
        %v2014 = vmul.f32 %v1789, %v1935
        %v2015 = vmul.f32 %v1789, %v1936
        %v2016 = vadd.f32 %v1982, %v2012
        %v2017 = vadd.f32 %v1983, %v2013
        %v2018 = vadd.f32 %v1984, %v2014
        %v2019 = vadd.f32 %v1985, %v2015
        %v2020 = vld [vmem:[%s492] sm:$0xff]
        %v2021 = vld [vmem:[%s492 + $0x8] sm:$0xff]
        %v2022 = vld [vmem:[%s492 + $0x10] sm:$0x1]
        %v2023 = vld [vmem:[%s492 + $0x18] sm:$0x1]
        %v2024 = vmul.f32 %v1842, %v2020
        %v2025 = vadd.f32 %v1949, %v2024
        %v2026 = vmul.f32 %v1810, %v2020
        %2028 = vrot.lane.b32.xlu0 %v2026, 1
        %v2029 = vpop.permute.xlu0 %2028
        %v2031 = vadd.f32 %v1952, %v2029
        %v2032 = vadd.f32 %v1953, %v2029
        %v2033 = vmul.f32 %v1817, %v2020
        %v2034 = vmul.f32 %v1817, %v2021
        %v2035 = vadd.f32 %v2031, %v2033
        %v2036 = vadd.f32 %v2032, %v2034
        %v2037 = vmul.f32 %v1746, %v2020
        %v2039 = vrot.slane %v2037, 7
        %v2041 = vadd.f32 %v2010, %v2039
        %v2042 = vadd.f32 %v2011, %v2039
        %v2043 = vmul.f32 %v1727, %v2020
        %v2045 = vrot.slane %v2043, 7
        %2046 = vrot.lane.b32.xlu0 %v2045, 1
        %v2047 = vpop.permute.xlu0 %2046
        %v2049 = vadd.f32 %v2016, %v2047
        %v2050 = vadd.f32 %v2017, %v2047
        %v2051 = vadd.f32 %v2018, %v2047
        %v2052 = vadd.f32 %v2019, %v2047
        %v2053 = vmul.f32 %v1732, %v2020
        %v2054 = vmul.f32 %v1732, %v2021
        %v2057 = vrot.slane %v2053, 7
        %v2058 = vrot.slane %v2054, 7
        %v2061 = vadd.f32 %v2049, %v2057
        %v2062 = vadd.f32 %v2050, %v2058
        %v2063 = vadd.f32 %v2051, %v2057
        %v2064 = vadd.f32 %v2052, %v2058
        %v2065 = vmul.f32 %v1789, %v2020
        %v2066 = vmul.f32 %v1789, %v2022
        %v2067 = vadd.f32 %v2041, %v2065
        %v2068 = vadd.f32 %v2042, %v2066
        %v2069 = vmul.f32 %v1753, %v2020
        %v2070 = vmul.f32 %v1753, %v2022
        %2073 = vrot.lane.b32.xlu0 %v2069, 1
        %v2074 = vpop.permute.xlu0 %2073
        %2075 = vrot.lane.b32.xlu0 %v2070, 1
        %v2076 = vpop.permute.xlu0 %2075
        %v2079 = vadd.f32 %v2061, %v2074
        %v2080 = vadd.f32 %v2062, %v2074
        %v2081 = vadd.f32 %v2063, %v2076
        %v2082 = vadd.f32 %v2064, %v2076
        %v2083 = vmul.f32 %v1765, %v2020
        %v2084 = vmul.f32 %v1765, %v2021
        %v2085 = vmul.f32 %v1765, %v2022
        %v2086 = vmul.f32 %v1765, %v2023
        %v2087 = vadd.f32 %v2079, %v2083
        %v2088 = vadd.f32 %v2080, %v2084
        %v2089 = vadd.f32 %v2081, %v2085
        %v2090 = vadd.f32 %v2082, %v2086
        %v2091 = vld [vmem:[%s564] sm:$0xff]
        %v2092 = vld [vmem:[%s564 + $0x8] sm:$0xff]
        %v2093 = vld [vmem:[%s564 + $0x10] sm:$0x1]
        %v2094 = vld [vmem:[%s564 + $0x18] sm:$0x1]
        %s2095 = sadd.s32 %s1721, 9
        %s2096 = sld [smem:[#allocation2 + %s2095]]
        %v2097 = vstv %s2096
        %v2098 = vmul.f32 %v2097, %v2091
        %v2099 = vadd.f32 %v2025, %v2098
        %s2100 = sadd.s32 %s1721, 11
        %s2101 = sld [smem:[#allocation2 + %s2100]]
        %v2102 = vstv %s2101
        %v2103 = vmul.f32 %v2102, %v2091
        %v2104 = vmul.f32 %v2102, %v2092
        %2107 = vrot.lane.b32.xlu0 %v2103, 127
        %v2108 = vpop.permute.xlu0 %2107
        %2109 = vrot.lane.b32.xlu0 %v2104, 127
        %v2110 = vpop.permute.xlu0 %2109
        %v2111 = vsel %vm209, %v2108, %v2110
        %v2113 = vadd.f32 %v2099, %v2111
        %s2114 = sadd.s32 %s1721, 10
        %s2115 = sld [smem:[#allocation2 + %s2114]]
        %v2116 = vstv %s2115
        %v2117 = vmul.f32 %v2116, %v2091
        %v2118 = vmul.f32 %v2116, %v2092
        %v2119 = vadd.f32 %v2035, %v2117
        %v2120 = vadd.f32 %v2036, %v2118
        %s2121 = sadd.s32 %s1721, 15
        %s2122 = sld [smem:[#allocation2 + %s2121]]
        %v2123 = vstv %s2122
        %v2124 = vmul.f32 %v2123, %v2091
        %v2125 = vmul.f32 %v2123, %v2093
        %v2128 = vrot.slane %v2124, 1
        %v2129 = vrot.slane %v2125, 1
        %v2130 = vsel %vm227, %v2128, %v2129
        %v2132 = vadd.f32 %v2113, %v2130
        %s2133 = sadd.s32 %s1721, 17
        %s2134 = sld [smem:[#allocation2 + %s2133]]
        %v2135 = vstv %s2134
        %v2136 = vmul.f32 %v2135, %v2091
        %v2137 = vmul.f32 %v2135, %v2092
        %v2138 = vmul.f32 %v2135, %v2093
        %v2139 = vmul.f32 %v2135, %v2094
        %v2144 = vrot.slane %v2136, 1
        %v2145 = vrot.slane %v2138, 1
        %v2146 = vsel %vm227, %v2144, %v2145
        %v2147 = vrot.slane %v2137, 1
        %v2148 = vrot.slane %v2139, 1
        %v2149 = vsel %vm227, %v2147, %v2148
        %2150 = vrot.lane.b32.xlu0 %v2146, 127
        %v2151 = vpop.permute.xlu0 %2150
        %2152 = vrot.lane.b32.xlu0 %v2149, 127
        %v2153 = vpop.permute.xlu0 %2152
        %v2154 = vsel %vm209, %v2151, %v2153
        %v2156 = vadd.f32 %v2132, %v2154
        %s2157 = sadd.s32 %s1721, 16
        %s2158 = sld [smem:[#allocation2 + %s2157]]
        %v2159 = vstv %s2158
        %v2160 = vmul.f32 %v2159, %v2091
        %v2161 = vmul.f32 %v2159, %v2092
        %v2162 = vmul.f32 %v2159, %v2093
        %v2163 = vmul.f32 %v2159, %v2094
        %v2168 = vrot.slane %v2160, 1
        %v2169 = vrot.slane %v2162, 1
        %v2170 = vsel %vm227, %v2168, %v2169
        %v2171 = vrot.slane %v2161, 1
        %v2172 = vrot.slane %v2163, 1
        %v2173 = vsel %vm227, %v2171, %v2172
        %v2176 = vadd.f32 %v2119, %v2170
        %v2177 = vadd.f32 %v2120, %v2173
        %s2178 = sadd.s32 %s1721, 12
        %s2179 = sld [smem:[#allocation2 + %s2178]]
        %v2180 = vstv %s2179
        %v2181 = vmul.f32 %v2180, %v2091
        %v2182 = vmul.f32 %v2180, %v2093
        %v2183 = vadd.f32 %v2067, %v2181
        %v2184 = vadd.f32 %v2068, %v2182
        %s2185 = sadd.s32 %s1721, 14
        %s2186 = sld [smem:[#allocation2 + %s2185]]
        %v2187 = vstv %s2186
        %v2188 = vmul.f32 %v2187, %v2091
        %v2189 = vmul.f32 %v2187, %v2092
        %v2190 = vmul.f32 %v2187, %v2093
        %v2191 = vmul.f32 %v2187, %v2094
        %2196 = vrot.lane.b32.xlu0 %v2188, 127
        %v2197 = vpop.permute.xlu0 %2196
        %2198 = vrot.lane.b32.xlu0 %v2189, 127
        %v2199 = vpop.permute.xlu0 %2198
        %2200 = vrot.lane.b32.xlu0 %v2190, 127
        %v2201 = vpop.permute.xlu0 %2200
        %2202 = vrot.lane.b32.xlu0 %v2191, 127
        %v2203 = vpop.permute.xlu0 %2202
        %v2204 = vsel %vm209, %v2197, %v2199
        %v2205 = vsel %vm209, %v2201, %v2203
        %v2208 = vadd.f32 %v2183, %v2204
        %v2209 = vadd.f32 %v2184, %v2205
        %s2210 = sadd.s32 %s1721, 13
        %s2211 = sld [smem:[#allocation2 + %s2210]]
        %v2212 = vstv %s2211
        %v2213 = vmul.f32 %v2212, %v2091
        %v2214 = vmul.f32 %v2212, %v2092
        %v2215 = vmul.f32 %v2212, %v2093
        %v2216 = vmul.f32 %v2212, %v2094
        %v2217 = vadd.f32 %v2087, %v2213
        %v2218 = vadd.f32 %v2088, %v2214
        %v2219 = vadd.f32 %v2089, %v2215
        %v2220 = vadd.f32 %v2090, %v2216
        %v2221 = vld [vmem:[%s695] sm:$0xff]
        %v2222 = vld [vmem:[%s695 + $0x8] sm:$0xff]
        %v2223 = vld [vmem:[%s695 + $0x10] sm:$0x1]
        %v2224 = vld [vmem:[%s695 + $0x18] sm:$0x1]
        %v2225 = vmul.f32 %v2116, %v2221
        %v2226 = vadd.f32 %v2156, %v2225
        %v2227 = vmul.f32 %v2097, %v2221
        %2229 = vrot.lane.b32.xlu0 %v2227, 1
        %v2230 = vpop.permute.xlu0 %2229
        %v2232 = vadd.f32 %v2176, %v2230
        %v2233 = vadd.f32 %v2177, %v2230
        %v2234 = vmul.f32 %v2102, %v2221
        %v2235 = vmul.f32 %v2102, %v2222
        %v2236 = vadd.f32 %v2232, %v2234
        %v2237 = vadd.f32 %v2233, %v2235
        %v2238 = vmul.f32 %v2159, %v2221
        %v2239 = vmul.f32 %v2159, %v2223
        %v2242 = vrot.slane %v2238, 1
        %v2243 = vrot.slane %v2239, 1
        %v2244 = vsel %vm227, %v2242, %v2243
        %v2246 = vadd.f32 %v2226, %v2244
        %v2247 = vmul.f32 %v2123, %v2221
        %v2248 = vmul.f32 %v2123, %v2223
        %v2251 = vrot.slane %v2247, 1
        %v2252 = vrot.slane %v2248, 1
        %v2253 = vsel %vm227, %v2251, %v2252
        %2254 = vrot.lane.b32.xlu0 %v2253, 1
        %v2255 = vpop.permute.xlu0 %2254
        %v2257 = vadd.f32 %v2236, %v2255
        %v2258 = vadd.f32 %v2237, %v2255
        %v2259 = vmul.f32 %v2135, %v2221
        %v2260 = vmul.f32 %v2135, %v2222
        %v2261 = vmul.f32 %v2135, %v2223
        %v2262 = vmul.f32 %v2135, %v2224
        %v2267 = vrot.slane %v2259, 1
        %v2268 = vrot.slane %v2261, 1
        %v2269 = vsel %vm227, %v2267, %v2268
        %v2270 = vrot.slane %v2260, 1
        %v2271 = vrot.slane %v2262, 1
        %v2272 = vsel %vm227, %v2270, %v2271
        %v2275 = vadd.f32 %v2257, %v2269
        %v2276 = vadd.f32 %v2258, %v2272
        %v2277 = vmul.f32 %v2212, %v2221
        %v2278 = vmul.f32 %v2212, %v2223
        %v2279 = vadd.f32 %v2208, %v2277
        %v2280 = vadd.f32 %v2209, %v2278
        %v2281 = vmul.f32 %v2180, %v2221
        %v2282 = vmul.f32 %v2180, %v2223
        %2285 = vrot.lane.b32.xlu0 %v2281, 1
        %v2286 = vpop.permute.xlu0 %2285
        %2287 = vrot.lane.b32.xlu0 %v2282, 1
        %v2288 = vpop.permute.xlu0 %2287
        %v2291 = vadd.f32 %v2217, %v2286
        %v2292 = vadd.f32 %v2218, %v2286
        %v2293 = vadd.f32 %v2219, %v2288
        %v2294 = vadd.f32 %v2220, %v2288
        %v2295 = vmul.f32 %v2187, %v2221
        %v2296 = vmul.f32 %v2187, %v2222
        %v2297 = vmul.f32 %v2187, %v2223
        %v2298 = vmul.f32 %v2187, %v2224
        %v2299 = vadd.f32 %v2291, %v2295
        %v2300 = vadd.f32 %v2292, %v2296
        %v2301 = vadd.f32 %v2293, %v2297
        %v2302 = vadd.f32 %v2294, %v2298
        %v2303 = vld [vmem:[%s778] sm:$0xff]
        %v2304 = vld [vmem:[%s778 + $0x8] sm:$0xff]
        %v2305 = vld [vmem:[%s778 + $0x10] sm:$0x1]
        %v2306 = vld [vmem:[%s778 + $0x18] sm:$0x1]
        %v2307 = vmul.f32 %v2180, %v2303
        %v2308 = vadd.f32 %v2246, %v2307
        %v2309 = vmul.f32 %v2187, %v2303
        %v2310 = vmul.f32 %v2187, %v2304
        %2313 = vrot.lane.b32.xlu0 %v2309, 127
        %v2314 = vpop.permute.xlu0 %2313
        %2315 = vrot.lane.b32.xlu0 %v2310, 127
        %v2316 = vpop.permute.xlu0 %2315
        %v2317 = vsel %vm209, %v2314, %v2316
        %v2319 = vadd.f32 %v2308, %v2317
        %v2320 = vmul.f32 %v2212, %v2303
        %v2321 = vmul.f32 %v2212, %v2304
        %v2322 = vadd.f32 %v2275, %v2320
        %v2323 = vadd.f32 %v2276, %v2321
        %v2324 = vmul.f32 %v2097, %v2303
        %v2326 = vrot.slane %v2324, 7
        %v2328 = vadd.f32 %v2279, %v2326
        %v2329 = vadd.f32 %v2280, %v2326
        %v2330 = vmul.f32 %v2102, %v2303
        %v2331 = vmul.f32 %v2102, %v2304
        %v2334 = vrot.slane %v2330, 7
        %v2335 = vrot.slane %v2331, 7
        %2336 = vrot.lane.b32.xlu0 %v2334, 127
        %v2337 = vpop.permute.xlu0 %2336
        %2338 = vrot.lane.b32.xlu0 %v2335, 127
        %v2339 = vpop.permute.xlu0 %2338
        %v2340 = vsel %vm209, %v2337, %v2339
        %v2342 = vadd.f32 %v2328, %v2340
        %v2343 = vadd.f32 %v2329, %v2340
        %v2344 = vmul.f32 %v2116, %v2303
        %v2345 = vmul.f32 %v2116, %v2304
        %v2348 = vrot.slane %v2344, 7
        %v2349 = vrot.slane %v2345, 7
        %v2352 = vadd.f32 %v2299, %v2348
        %v2353 = vadd.f32 %v2300, %v2349
        %v2354 = vadd.f32 %v2301, %v2348
        %v2355 = vadd.f32 %v2302, %v2349
        %v2356 = vmul.f32 %v2123, %v2303
        %v2357 = vmul.f32 %v2123, %v2305
        %v2358 = vadd.f32 %v2342, %v2356
        %v2359 = vadd.f32 %v2343, %v2357
        %v2360 = vmul.f32 %v2135, %v2303
        %v2361 = vmul.f32 %v2135, %v2304
        %v2362 = vmul.f32 %v2135, %v2305
        %v2363 = vmul.f32 %v2135, %v2306
        %2368 = vrot.lane.b32.xlu0 %v2360, 127
        %v2369 = vpop.permute.xlu0 %2368
        %2370 = vrot.lane.b32.xlu0 %v2361, 127
        %v2371 = vpop.permute.xlu0 %2370
        %2372 = vrot.lane.b32.xlu0 %v2362, 127
        %v2373 = vpop.permute.xlu0 %2372
        %2374 = vrot.lane.b32.xlu0 %v2363, 127
        %v2375 = vpop.permute.xlu0 %2374
        %v2376 = vsel %vm209, %v2369, %v2371
        %v2377 = vsel %vm209, %v2373, %v2375
        %v2380 = vadd.f32 %v2358, %v2376
        %v2381 = vadd.f32 %v2359, %v2377
        %v2382 = vmul.f32 %v2159, %v2303
        %v2383 = vmul.f32 %v2159, %v2304
        %v2384 = vmul.f32 %v2159, %v2305
        %v2385 = vmul.f32 %v2159, %v2306
        %v2386 = vadd.f32 %v2352, %v2382
        %v2387 = vadd.f32 %v2353, %v2383
        %v2388 = vadd.f32 %v2354, %v2384
        %v2389 = vadd.f32 %v2355, %v2385
        %v2390 = vld [vmem:[%s866] sm:$0xff]
        %v2391 = vld [vmem:[%s866 + $0x8] sm:$0xff]
        %v2392 = vld [vmem:[%s866 + $0x10] sm:$0x1]
        %v2393 = vld [vmem:[%s866 + $0x18] sm:$0x1]
        %v2394 = vmul.f32 %v2212, %v2390
        %v2395 = vadd.f32 %v2319, %v2394
        %v2396 = vmul.f32 %v2180, %v2390
        %2398 = vrot.lane.b32.xlu0 %v2396, 1
        %v2399 = vpop.permute.xlu0 %2398
        %v2401 = vadd.f32 %v2322, %v2399
        %v2402 = vadd.f32 %v2323, %v2399
        %v2403 = vmul.f32 %v2187, %v2390
        %v2404 = vmul.f32 %v2187, %v2391
        %v2405 = vadd.f32 %v2401, %v2403
        %v2406 = vadd.f32 %v2402, %v2404
        %v2407 = vmul.f32 %v2116, %v2390
        %v2409 = vrot.slane %v2407, 7
        %v2411 = vadd.f32 %v2380, %v2409
        %v2412 = vadd.f32 %v2381, %v2409
        %v2413 = vmul.f32 %v2097, %v2390
        %v2415 = vrot.slane %v2413, 7
        %2416 = vrot.lane.b32.xlu0 %v2415, 1
        %v2417 = vpop.permute.xlu0 %2416
        %v2419 = vadd.f32 %v2386, %v2417
        %v2420 = vadd.f32 %v2387, %v2417
        %v2421 = vadd.f32 %v2388, %v2417
        %v2422 = vadd.f32 %v2389, %v2417
        %v2423 = vmul.f32 %v2102, %v2390
        %v2424 = vmul.f32 %v2102, %v2391
        %v2427 = vrot.slane %v2423, 7
        %v2428 = vrot.slane %v2424, 7
        %v2431 = vadd.f32 %v2419, %v2427
        %v2432 = vadd.f32 %v2420, %v2428
        %v2433 = vadd.f32 %v2421, %v2427
        %v2434 = vadd.f32 %v2422, %v2428
        %v2435 = vmul.f32 %v2159, %v2390
        %v2436 = vmul.f32 %v2159, %v2392
        %v2437 = vadd.f32 %v2411, %v2435
        %v2438 = vadd.f32 %v2412, %v2436
        %v2439 = vmul.f32 %v2123, %v2390
        %v2440 = vmul.f32 %v2123, %v2392
        %2443 = vrot.lane.b32.xlu0 %v2439, 1
        %v2444 = vpop.permute.xlu0 %2443
        %2445 = vrot.lane.b32.xlu0 %v2440, 1
        %v2446 = vpop.permute.xlu0 %2445
        %v2449 = vadd.f32 %v2431, %v2444
        %v2450 = vadd.f32 %v2432, %v2444
        %v2451 = vadd.f32 %v2433, %v2446
        %v2452 = vadd.f32 %v2434, %v2446
        %v2453 = vmul.f32 %v2135, %v2390
        %v2454 = vmul.f32 %v2135, %v2391
        %v2455 = vmul.f32 %v2135, %v2392
        %v2456 = vmul.f32 %v2135, %v2393
        %v2457 = vadd.f32 %v2449, %v2453
        %v2458 = vadd.f32 %v2450, %v2454
        %v2459 = vadd.f32 %v2451, %v2455
        %v2460 = vadd.f32 %v2452, %v2456
        %v2461 = vld [vmem:[%s938] sm:$0xff]
        %v2462 = vld [vmem:[%s938 + $0x8] sm:$0xff]
        %v2463 = vld [vmem:[%s938 + $0x10] sm:$0x1]
        %v2464 = vld [vmem:[%s938 + $0x18] sm:$0x1]
        %s2465 = sadd.s32 %s1721, 18
        %s2466 = sld [smem:[#allocation2 + %s2465]]
        %v2467 = vstv %s2466
        %v2468 = vmul.f32 %v2467, %v2461
        %v2469 = vadd.f32 %v2395, %v2468
        %s2470 = sadd.s32 %s1721, 20
        %s2471 = sld [smem:[#allocation2 + %s2470]]
        %v2472 = vstv %s2471
        %v2473 = vmul.f32 %v2472, %v2461
        %v2474 = vmul.f32 %v2472, %v2462
        %2477 = vrot.lane.b32.xlu0 %v2473, 127
        %v2478 = vpop.permute.xlu0 %2477
        %2479 = vrot.lane.b32.xlu0 %v2474, 127
        %v2480 = vpop.permute.xlu0 %2479
        %v2481 = vsel %vm209, %v2478, %v2480
        %v2483 = vadd.f32 %v2469, %v2481
        %s2484 = sadd.s32 %s1721, 19
        %s2485 = sld [smem:[#allocation2 + %s2484]]
        %v2486 = vstv %s2485
        %v2487 = vmul.f32 %v2486, %v2461
        %v2488 = vmul.f32 %v2486, %v2462
        %v2489 = vadd.f32 %v2405, %v2487
        %v2490 = vadd.f32 %v2406, %v2488
        %s2491 = sadd.s32 %s1721, 24
        %s2492 = sld [smem:[#allocation2 + %s2491]]
        %v2493 = vstv %s2492
        %v2494 = vmul.f32 %v2493, %v2461
        %v2495 = vmul.f32 %v2493, %v2463
        %v2498 = vrot.slane %v2494, 1
        %v2499 = vrot.slane %v2495, 1
        %v2500 = vsel %vm227, %v2498, %v2499
        %v2502 = vadd.f32 %v2483, %v2500
        %s2503 = sadd.s32 %s1721, 26
        %s2504 = sld [smem:[#allocation2 + %s2503]]
        %v2505 = vstv %s2504
        %v2506 = vmul.f32 %v2505, %v2461
        %v2507 = vmul.f32 %v2505, %v2462
        %v2508 = vmul.f32 %v2505, %v2463
        %v2509 = vmul.f32 %v2505, %v2464
        %v2514 = vrot.slane %v2506, 1
        %v2515 = vrot.slane %v2508, 1
        %v2516 = vsel %vm227, %v2514, %v2515
        %v2517 = vrot.slane %v2507, 1
        %v2518 = vrot.slane %v2509, 1
        %v2519 = vsel %vm227, %v2517, %v2518
        %2520 = vrot.lane.b32.xlu0 %v2516, 127
        %v2521 = vpop.permute.xlu0 %2520
        %2522 = vrot.lane.b32.xlu0 %v2519, 127
        %v2523 = vpop.permute.xlu0 %2522
        %v2524 = vsel %vm209, %v2521, %v2523
        %v2526 = vadd.f32 %v2502, %v2524
        %s2527 = sadd.s32 %s1721, 25
        %s2528 = sld [smem:[#allocation2 + %s2527]]
        %v2529 = vstv %s2528
        %v2530 = vmul.f32 %v2529, %v2461
        %v2531 = vmul.f32 %v2529, %v2462
        %v2532 = vmul.f32 %v2529, %v2463
        %v2533 = vmul.f32 %v2529, %v2464
        %v2538 = vrot.slane %v2530, 1
        %v2539 = vrot.slane %v2532, 1
        %v2540 = vsel %vm227, %v2538, %v2539
        %v2541 = vrot.slane %v2531, 1
        %v2542 = vrot.slane %v2533, 1
        %v2543 = vsel %vm227, %v2541, %v2542
        %v2546 = vadd.f32 %v2489, %v2540
        %v2547 = vadd.f32 %v2490, %v2543
        %s2548 = sadd.s32 %s1721, 21
        %s2549 = sld [smem:[#allocation2 + %s2548]]
        %v2550 = vstv %s2549
        %v2551 = vmul.f32 %v2550, %v2461
        %v2552 = vmul.f32 %v2550, %v2463
        %v2553 = vadd.f32 %v2437, %v2551
        %v2554 = vadd.f32 %v2438, %v2552
        %s2555 = sadd.s32 %s1721, 23
        %s2556 = sld [smem:[#allocation2 + %s2555]]
        %v2557 = vstv %s2556
        %v2558 = vmul.f32 %v2557, %v2461
        %v2559 = vmul.f32 %v2557, %v2462
        %v2560 = vmul.f32 %v2557, %v2463
        %v2561 = vmul.f32 %v2557, %v2464
        %2566 = vrot.lane.b32.xlu0 %v2558, 127
        %v2567 = vpop.permute.xlu0 %2566
        %2568 = vrot.lane.b32.xlu0 %v2559, 127
        %v2569 = vpop.permute.xlu0 %2568
        %2570 = vrot.lane.b32.xlu0 %v2560, 127
        %v2571 = vpop.permute.xlu0 %2570
        %2572 = vrot.lane.b32.xlu0 %v2561, 127
        %v2573 = vpop.permute.xlu0 %2572
        %v2574 = vsel %vm209, %v2567, %v2569
        %v2575 = vsel %vm209, %v2571, %v2573
        %v2578 = vadd.f32 %v2553, %v2574
        %v2579 = vadd.f32 %v2554, %v2575
        %s2580 = sadd.s32 %s1721, 22
        %s2581 = sld [smem:[#allocation2 + %s2580]]
        %v2582 = vstv %s2581
        %v2583 = vmul.f32 %v2582, %v2461
        %v2584 = vmul.f32 %v2582, %v2462
        %v2585 = vmul.f32 %v2582, %v2463
        %v2586 = vmul.f32 %v2582, %v2464
        %v2587 = vadd.f32 %v2457, %v2583
        %v2588 = vadd.f32 %v2458, %v2584
        %v2589 = vadd.f32 %v2459, %v2585
        %v2590 = vadd.f32 %v2460, %v2586
        %v2591 = vld [vmem:[%s1069] sm:$0xff]
        %v2592 = vld [vmem:[%s1069 + $0x8] sm:$0xff]
        %v2593 = vld [vmem:[%s1069 + $0x10] sm:$0x1]
        %v2594 = vld [vmem:[%s1069 + $0x18] sm:$0x1]
        %v2595 = vmul.f32 %v2486, %v2591
        %v2596 = vadd.f32 %v2526, %v2595
        %v2597 = vmul.f32 %v2467, %v2591
        %2599 = vrot.lane.b32.xlu0 %v2597, 1
        %v2600 = vpop.permute.xlu0 %2599
        %v2602 = vadd.f32 %v2546, %v2600
        %v2603 = vadd.f32 %v2547, %v2600
        %v2604 = vmul.f32 %v2472, %v2591
        %v2605 = vmul.f32 %v2472, %v2592
        %v2606 = vadd.f32 %v2602, %v2604
        %v2607 = vadd.f32 %v2603, %v2605
        %v2608 = vmul.f32 %v2529, %v2591
        %v2609 = vmul.f32 %v2529, %v2593
        %v2612 = vrot.slane %v2608, 1
        %v2613 = vrot.slane %v2609, 1
        %v2614 = vsel %vm227, %v2612, %v2613
        %v2616 = vadd.f32 %v2596, %v2614
        %v2617 = vmul.f32 %v2493, %v2591
        %v2618 = vmul.f32 %v2493, %v2593
        %v2621 = vrot.slane %v2617, 1
        %v2622 = vrot.slane %v2618, 1
        %v2623 = vsel %vm227, %v2621, %v2622
        %2624 = vrot.lane.b32.xlu0 %v2623, 1
        %v2625 = vpop.permute.xlu0 %2624
        %v2627 = vadd.f32 %v2606, %v2625
        %v2628 = vadd.f32 %v2607, %v2625
        %v2629 = vmul.f32 %v2505, %v2591
        %v2630 = vmul.f32 %v2505, %v2592
        %v2631 = vmul.f32 %v2505, %v2593
        %v2632 = vmul.f32 %v2505, %v2594
        %v2637 = vrot.slane %v2629, 1
        %v2638 = vrot.slane %v2631, 1
        %v2639 = vsel %vm227, %v2637, %v2638
        %v2640 = vrot.slane %v2630, 1
        %v2641 = vrot.slane %v2632, 1
        %v2642 = vsel %vm227, %v2640, %v2641
        %v2645 = vadd.f32 %v2627, %v2639
        %v2646 = vadd.f32 %v2628, %v2642
        %v2647 = vmul.f32 %v2582, %v2591
        %v2648 = vmul.f32 %v2582, %v2593
        %v2649 = vadd.f32 %v2578, %v2647
        %v2650 = vadd.f32 %v2579, %v2648
        %v2651 = vmul.f32 %v2550, %v2591
        %v2652 = vmul.f32 %v2550, %v2593
        %2655 = vrot.lane.b32.xlu0 %v2651, 1
        %v2656 = vpop.permute.xlu0 %2655
        %2657 = vrot.lane.b32.xlu0 %v2652, 1
        %v2658 = vpop.permute.xlu0 %2657
        %v2661 = vadd.f32 %v2587, %v2656
        %v2662 = vadd.f32 %v2588, %v2656
        %v2663 = vadd.f32 %v2589, %v2658
        %v2664 = vadd.f32 %v2590, %v2658
        %v2665 = vmul.f32 %v2557, %v2591
        %v2666 = vmul.f32 %v2557, %v2592
        %v2667 = vmul.f32 %v2557, %v2593
        %v2668 = vmul.f32 %v2557, %v2594
        %v2669 = vadd.f32 %v2661, %v2665
        %v2670 = vadd.f32 %v2662, %v2666
        %v2671 = vadd.f32 %v2663, %v2667
        %v2672 = vadd.f32 %v2664, %v2668
        %v2673 = vld [vmem:[%s1152] sm:$0xff]
        %v2674 = vld [vmem:[%s1152 + $0x8] sm:$0xff]
        %v2675 = vld [vmem:[%s1152 + $0x10] sm:$0x1]
        %v2676 = vld [vmem:[%s1152 + $0x18] sm:$0x1]
        %v2677 = vmul.f32 %v2550, %v2673
        %v2678 = vadd.f32 %v2616, %v2677
        %v2679 = vmul.f32 %v2557, %v2673
        %v2680 = vmul.f32 %v2557, %v2674
        %2683 = vrot.lane.b32.xlu0 %v2679, 127
        %v2684 = vpop.permute.xlu0 %2683
        %2685 = vrot.lane.b32.xlu0 %v2680, 127
        %v2686 = vpop.permute.xlu0 %2685
        %v2687 = vsel %vm209, %v2684, %v2686
        %v2689 = vadd.f32 %v2678, %v2687
        %v2690 = vmul.f32 %v2582, %v2673
        %v2691 = vmul.f32 %v2582, %v2674
        %v2692 = vadd.f32 %v2645, %v2690
        %v2693 = vadd.f32 %v2646, %v2691
        %v2694 = vmul.f32 %v2467, %v2673
        %v2696 = vrot.slane %v2694, 7
        %v2698 = vadd.f32 %v2649, %v2696
        %v2699 = vadd.f32 %v2650, %v2696
        %v2700 = vmul.f32 %v2472, %v2673
        %v2701 = vmul.f32 %v2472, %v2674
        %v2704 = vrot.slane %v2700, 7
        %v2705 = vrot.slane %v2701, 7
        %2706 = vrot.lane.b32.xlu0 %v2704, 127
        %v2707 = vpop.permute.xlu0 %2706
        %2708 = vrot.lane.b32.xlu0 %v2705, 127
        %v2709 = vpop.permute.xlu0 %2708
        %v2710 = vsel %vm209, %v2707, %v2709
        %v2712 = vadd.f32 %v2698, %v2710
        %v2713 = vadd.f32 %v2699, %v2710
        %v2714 = vmul.f32 %v2486, %v2673
        %v2715 = vmul.f32 %v2486, %v2674
        %v2718 = vrot.slane %v2714, 7
        %v2719 = vrot.slane %v2715, 7
        %v2722 = vadd.f32 %v2669, %v2718
        %v2723 = vadd.f32 %v2670, %v2719
        %v2724 = vadd.f32 %v2671, %v2718
        %v2725 = vadd.f32 %v2672, %v2719
        %v2726 = vmul.f32 %v2493, %v2673
        %v2727 = vmul.f32 %v2493, %v2675
        %v2728 = vadd.f32 %v2712, %v2726
        %v2729 = vadd.f32 %v2713, %v2727
        %v2730 = vmul.f32 %v2505, %v2673
        %v2731 = vmul.f32 %v2505, %v2674
        %v2732 = vmul.f32 %v2505, %v2675
        %v2733 = vmul.f32 %v2505, %v2676
        %2738 = vrot.lane.b32.xlu0 %v2730, 127
        %v2739 = vpop.permute.xlu0 %2738
        %2740 = vrot.lane.b32.xlu0 %v2731, 127
        %v2741 = vpop.permute.xlu0 %2740
        %2742 = vrot.lane.b32.xlu0 %v2732, 127
        %v2743 = vpop.permute.xlu0 %2742
        %2744 = vrot.lane.b32.xlu0 %v2733, 127
        %v2745 = vpop.permute.xlu0 %2744
        %v2746 = vsel %vm209, %v2739, %v2741
        %v2747 = vsel %vm209, %v2743, %v2745
        %v2750 = vadd.f32 %v2728, %v2746
        %v2751 = vadd.f32 %v2729, %v2747
        %v2752 = vmul.f32 %v2529, %v2673
        %v2753 = vmul.f32 %v2529, %v2674
        %v2754 = vmul.f32 %v2529, %v2675
        %v2755 = vmul.f32 %v2529, %v2676
        %v2756 = vadd.f32 %v2722, %v2752
        %v2757 = vadd.f32 %v2723, %v2753
        %v2758 = vadd.f32 %v2724, %v2754
        %v2759 = vadd.f32 %v2725, %v2755
        %v2760 = vld [vmem:[%s1240] sm:$0xff]
        %v2761 = vld [vmem:[%s1240 + $0x8] sm:$0xff]
        %v2762 = vld [vmem:[%s1240 + $0x10] sm:$0x1]
        %v2763 = vld [vmem:[%s1240 + $0x18] sm:$0x1]
        %v2764 = vmul.f32 %v2582, %v2760
        %v2765 = vadd.f32 %v2689, %v2764
        %v2766 = vmul.f32 %v2550, %v2760
        %2768 = vrot.lane.b32.xlu0 %v2766, 1
        %v2769 = vpop.permute.xlu0 %2768
        %v2771 = vadd.f32 %v2692, %v2769
        %v2772 = vadd.f32 %v2693, %v2769
        %v2773 = vmul.f32 %v2557, %v2760
        %v2774 = vmul.f32 %v2557, %v2761
        %v2775 = vadd.f32 %v2771, %v2773
        %v2776 = vadd.f32 %v2772, %v2774
        %v2777 = vmul.f32 %v2486, %v2760
        %v2779 = vrot.slane %v2777, 7
        %v2781 = vadd.f32 %v2750, %v2779
        %v2782 = vadd.f32 %v2751, %v2779
        %v2783 = vmul.f32 %v2467, %v2760
        %v2785 = vrot.slane %v2783, 7
        %2786 = vrot.lane.b32.xlu0 %v2785, 1
        %v2787 = vpop.permute.xlu0 %2786
        %v2789 = vadd.f32 %v2756, %v2787
        %v2790 = vadd.f32 %v2757, %v2787
        %v2791 = vadd.f32 %v2758, %v2787
        %v2792 = vadd.f32 %v2759, %v2787
        %v2793 = vmul.f32 %v2472, %v2760
        %v2794 = vmul.f32 %v2472, %v2761
        %v2797 = vrot.slane %v2793, 7
        %v2798 = vrot.slane %v2794, 7
        %v2801 = vadd.f32 %v2789, %v2797
        %v2802 = vadd.f32 %v2790, %v2798
        %v2803 = vadd.f32 %v2791, %v2797
        %v2804 = vadd.f32 %v2792, %v2798
        %v2805 = vmul.f32 %v2529, %v2760
        %v2806 = vmul.f32 %v2529, %v2762
        %v2807 = vadd.f32 %v2781, %v2805
        %v2808 = vadd.f32 %v2782, %v2806
        %v2809 = vmul.f32 %v2493, %v2760
        %v2810 = vmul.f32 %v2493, %v2762
        %2813 = vrot.lane.b32.xlu0 %v2809, 1
        %v2814 = vpop.permute.xlu0 %2813
        %2815 = vrot.lane.b32.xlu0 %v2810, 1
        %v2816 = vpop.permute.xlu0 %2815
        %v2819 = vadd.f32 %v2801, %v2814
        %v2820 = vadd.f32 %v2802, %v2814
        %v2821 = vadd.f32 %v2803, %v2816
        %v2822 = vadd.f32 %v2804, %v2816
        %v2823 = vmul.f32 %v2505, %v2760
        %v2824 = vmul.f32 %v2505, %v2761
        %v2825 = vmul.f32 %v2505, %v2762
        %v2826 = vmul.f32 %v2505, %v2763
        %v2827 = vadd.f32 %v2819, %v2823
        %v2828 = vadd.f32 %v2820, %v2824
        %v2829 = vadd.f32 %v2821, %v2825
        %v2830 = vadd.f32 %v2822, %v2826
        %v2831 = vld [vmem:[%s1312] sm:$0xff]
        %v2832 = vld [vmem:[%s1312 + $0x8] sm:$0xff]
        %v2833 = vld [vmem:[%s1312 + $0x10] sm:$0x1]
        %v2834 = vld [vmem:[%s1312 + $0x18] sm:$0x1]
        %s2835 = sadd.s32 %s1721, 27
        %s2836 = sld [smem:[#allocation2 + %s2835]]
        %v2837 = vstv %s2836
        %v2838 = vmul.f32 %v2837, %v2831
        %v2839 = vadd.f32 %v2765, %v2838
        %s2840 = sadd.s32 %s1721, 29
        %s2841 = sld [smem:[#allocation2 + %s2840]]
        %v2842 = vstv %s2841
        %v2843 = vmul.f32 %v2842, %v2831
        %v2844 = vmul.f32 %v2842, %v2832
        %2847 = vrot.lane.b32.xlu0 %v2843, 127
        %v2848 = vpop.permute.xlu0 %2847
        %2849 = vrot.lane.b32.xlu0 %v2844, 127
        %v2850 = vpop.permute.xlu0 %2849
        %v2851 = vsel %vm209, %v2848, %v2850
        %v2853 = vadd.f32 %v2839, %v2851
        %s2854 = sadd.s32 %s1721, 28
        %s2855 = sld [smem:[#allocation2 + %s2854]]
        %v2856 = vstv %s2855
        %v2857 = vmul.f32 %v2856, %v2831
        %v2858 = vmul.f32 %v2856, %v2832
        %v2859 = vadd.f32 %v2775, %v2857
        %v2860 = vadd.f32 %v2776, %v2858
        %s2861 = sadd.s32 %s1721, 33
        %s2862 = sld [smem:[#allocation2 + %s2861]]
        %v2863 = vstv %s2862
        %v2864 = vmul.f32 %v2863, %v2831
        %v2865 = vmul.f32 %v2863, %v2833
        %v2868 = vrot.slane %v2864, 1
        %v2869 = vrot.slane %v2865, 1
        %v2870 = vsel %vm227, %v2868, %v2869
        %v2872 = vadd.f32 %v2853, %v2870
        %s2873 = sadd.s32 %s1721, 35
        %s2874 = sld [smem:[#allocation2 + %s2873]]
        %v2875 = vstv %s2874
        %v2876 = vmul.f32 %v2875, %v2831
        %v2877 = vmul.f32 %v2875, %v2832
        %v2878 = vmul.f32 %v2875, %v2833
        %v2879 = vmul.f32 %v2875, %v2834
        %v2884 = vrot.slane %v2876, 1
        %v2885 = vrot.slane %v2878, 1
        %v2886 = vsel %vm227, %v2884, %v2885
        %v2887 = vrot.slane %v2877, 1
        %v2888 = vrot.slane %v2879, 1
        %v2889 = vsel %vm227, %v2887, %v2888
        %2890 = vrot.lane.b32.xlu0 %v2886, 127
        %v2891 = vpop.permute.xlu0 %2890
        %2892 = vrot.lane.b32.xlu0 %v2889, 127
        %v2893 = vpop.permute.xlu0 %2892
        %v2894 = vsel %vm209, %v2891, %v2893
        %v2896 = vadd.f32 %v2872, %v2894
        %s2897 = sadd.s32 %s1721, 34
        %s2898 = sld [smem:[#allocation2 + %s2897]]
        %v2899 = vstv %s2898
        %v2900 = vmul.f32 %v2899, %v2831
        %v2901 = vmul.f32 %v2899, %v2832
        %v2902 = vmul.f32 %v2899, %v2833
        %v2903 = vmul.f32 %v2899, %v2834
        %v2908 = vrot.slane %v2900, 1
        %v2909 = vrot.slane %v2902, 1
        %v2910 = vsel %vm227, %v2908, %v2909
        %v2911 = vrot.slane %v2901, 1
        %v2912 = vrot.slane %v2903, 1
        %v2913 = vsel %vm227, %v2911, %v2912
        %v2916 = vadd.f32 %v2859, %v2910
        %v2917 = vadd.f32 %v2860, %v2913
        %s2918 = sadd.s32 %s1721, 30
        %s2919 = sld [smem:[#allocation2 + %s2918]]
        %v2920 = vstv %s2919
        %v2921 = vmul.f32 %v2920, %v2831
        %v2922 = vmul.f32 %v2920, %v2833
        %v2923 = vadd.f32 %v2807, %v2921
        %v2924 = vadd.f32 %v2808, %v2922
        %s2925 = sadd.s32 %s1721, 32
        %s2926 = sld [smem:[#allocation2 + %s2925]]
        %v2927 = vstv %s2926
        %v2928 = vmul.f32 %v2927, %v2831
        %v2929 = vmul.f32 %v2927, %v2832
        %v2930 = vmul.f32 %v2927, %v2833
        %v2931 = vmul.f32 %v2927, %v2834
        %2936 = vrot.lane.b32.xlu0 %v2928, 127
        %v2937 = vpop.permute.xlu0 %2936
        %2938 = vrot.lane.b32.xlu0 %v2929, 127
        %v2939 = vpop.permute.xlu0 %2938
        %2940 = vrot.lane.b32.xlu0 %v2930, 127
        %v2941 = vpop.permute.xlu0 %2940
        %2942 = vrot.lane.b32.xlu0 %v2931, 127
        %v2943 = vpop.permute.xlu0 %2942
        %v2944 = vsel %vm209, %v2937, %v2939
        %v2945 = vsel %vm209, %v2941, %v2943
        %v2948 = vadd.f32 %v2923, %v2944
        %v2949 = vadd.f32 %v2924, %v2945
        %s2950 = sadd.s32 %s1721, 31
        %s2951 = sld [smem:[#allocation2 + %s2950]]
        %v2952 = vstv %s2951
        %v2953 = vmul.f32 %v2952, %v2831
        %v2954 = vmul.f32 %v2952, %v2832
        %v2955 = vmul.f32 %v2952, %v2833
        %v2956 = vmul.f32 %v2952, %v2834
        %v2957 = vadd.f32 %v2827, %v2953
        %v2958 = vadd.f32 %v2828, %v2954
        %v2959 = vadd.f32 %v2829, %v2955
        %v2960 = vadd.f32 %v2830, %v2956
        %v2961 = vld [vmem:[%s1443] sm:$0xff]
        %v2962 = vld [vmem:[%s1443 + $0x8] sm:$0xff]
        %v2963 = vld [vmem:[%s1443 + $0x10] sm:$0x1]
        %v2964 = vld [vmem:[%s1443 + $0x18] sm:$0x1]
        %v2965 = vmul.f32 %v2856, %v2961
        %v2966 = vadd.f32 %v2896, %v2965
        %v2967 = vmul.f32 %v2837, %v2961
        %2969 = vrot.lane.b32.xlu0 %v2967, 1
        %v2970 = vpop.permute.xlu0 %2969
        %v2972 = vadd.f32 %v2916, %v2970
        %v2973 = vadd.f32 %v2917, %v2970
        %v2974 = vmul.f32 %v2842, %v2961
        %v2975 = vmul.f32 %v2842, %v2962
        %v2976 = vadd.f32 %v2972, %v2974
        %v2977 = vadd.f32 %v2973, %v2975
        %v2978 = vmul.f32 %v2899, %v2961
        %v2979 = vmul.f32 %v2899, %v2963
        %v2982 = vrot.slane %v2978, 1
        %v2983 = vrot.slane %v2979, 1
        %v2984 = vsel %vm227, %v2982, %v2983
        %v2986 = vadd.f32 %v2966, %v2984
        %v2987 = vmul.f32 %v2863, %v2961
        %v2988 = vmul.f32 %v2863, %v2963
        %v2991 = vrot.slane %v2987, 1
        %v2992 = vrot.slane %v2988, 1
        %v2993 = vsel %vm227, %v2991, %v2992
        %2994 = vrot.lane.b32.xlu0 %v2993, 1
        %v2995 = vpop.permute.xlu0 %2994
        %v2997 = vadd.f32 %v2976, %v2995
        %v2998 = vadd.f32 %v2977, %v2995
        %v2999 = vmul.f32 %v2875, %v2961
        %v3000 = vmul.f32 %v2875, %v2962
        %v3001 = vmul.f32 %v2875, %v2963
        %v3002 = vmul.f32 %v2875, %v2964
        %v3007 = vrot.slane %v2999, 1
        %v3008 = vrot.slane %v3001, 1
        %v3009 = vsel %vm227, %v3007, %v3008
        %v3010 = vrot.slane %v3000, 1
        %v3011 = vrot.slane %v3002, 1
        %v3012 = vsel %vm227, %v3010, %v3011
        %v3015 = vadd.f32 %v2997, %v3009
        %v3016 = vadd.f32 %v2998, %v3012
        %v3017 = vmul.f32 %v2952, %v2961
        %v3018 = vmul.f32 %v2952, %v2963
        %v3019 = vadd.f32 %v2948, %v3017
        %v3020 = vadd.f32 %v2949, %v3018
        %v3021 = vmul.f32 %v2920, %v2961
        %v3022 = vmul.f32 %v2920, %v2963
        %3025 = vrot.lane.b32.xlu0 %v3021, 1
        %v3026 = vpop.permute.xlu0 %3025
        %3027 = vrot.lane.b32.xlu0 %v3022, 1
        %v3028 = vpop.permute.xlu0 %3027
        %v3031 = vadd.f32 %v2957, %v3026
        %v3032 = vadd.f32 %v2958, %v3026
        %v3033 = vadd.f32 %v2959, %v3028
        %v3034 = vadd.f32 %v2960, %v3028
        %v3035 = vmul.f32 %v2927, %v2961
        %v3036 = vmul.f32 %v2927, %v2962
        %v3037 = vmul.f32 %v2927, %v2963
        %v3038 = vmul.f32 %v2927, %v2964
        %v3039 = vadd.f32 %v3031, %v3035
        %v3040 = vadd.f32 %v3032, %v3036
        %v3041 = vadd.f32 %v3033, %v3037
        %v3042 = vadd.f32 %v3034, %v3038
        %v3043 = vld [vmem:[%s1526] sm:$0xff]
        %v3044 = vld [vmem:[%s1526 + $0x8] sm:$0xff]
        %v3045 = vld [vmem:[%s1526 + $0x10] sm:$0x1]
        %v3046 = vld [vmem:[%s1526 + $0x18] sm:$0x1]
        %v3047 = vmul.f32 %v2920, %v3043
        %v3048 = vadd.f32 %v2986, %v3047
        %v3049 = vmul.f32 %v2927, %v3043
        %v3050 = vmul.f32 %v2927, %v3044
        %3053 = vrot.lane.b32.xlu0 %v3049, 127
        %v3054 = vpop.permute.xlu0 %3053
        %3055 = vrot.lane.b32.xlu0 %v3050, 127
        %v3056 = vpop.permute.xlu0 %3055
        %v3057 = vsel %vm209, %v3054, %v3056
        %v3059 = vadd.f32 %v3048, %v3057
        %v3060 = vmul.f32 %v2952, %v3043
        %v3061 = vmul.f32 %v2952, %v3044
        %v3062 = vadd.f32 %v3015, %v3060
        %v3063 = vadd.f32 %v3016, %v3061
        %v3064 = vmul.f32 %v2837, %v3043
        %v3066 = vrot.slane %v3064, 7
        %v3068 = vadd.f32 %v3019, %v3066
        %v3069 = vadd.f32 %v3020, %v3066
        %v3070 = vmul.f32 %v2842, %v3043
        %v3071 = vmul.f32 %v2842, %v3044
        %v3074 = vrot.slane %v3070, 7
        %v3075 = vrot.slane %v3071, 7
        %3076 = vrot.lane.b32.xlu0 %v3074, 127
        %v3077 = vpop.permute.xlu0 %3076
        %3078 = vrot.lane.b32.xlu0 %v3075, 127
        %v3079 = vpop.permute.xlu0 %3078
        %v3080 = vsel %vm209, %v3077, %v3079
        %v3082 = vadd.f32 %v3068, %v3080
        %v3083 = vadd.f32 %v3069, %v3080
        %v3084 = vmul.f32 %v2856, %v3043
        %v3085 = vmul.f32 %v2856, %v3044
        %v3088 = vrot.slane %v3084, 7
        %v3089 = vrot.slane %v3085, 7
        %v3092 = vadd.f32 %v3039, %v3088
        %v3093 = vadd.f32 %v3040, %v3089
        %v3094 = vadd.f32 %v3041, %v3088
        %v3095 = vadd.f32 %v3042, %v3089
        %v3096 = vmul.f32 %v2863, %v3043
        %v3097 = vmul.f32 %v2863, %v3045
        %v3098 = vadd.f32 %v3082, %v3096
        %v3099 = vadd.f32 %v3083, %v3097
        %v3100 = vmul.f32 %v2875, %v3043
        %v3101 = vmul.f32 %v2875, %v3044
        %v3102 = vmul.f32 %v2875, %v3045
        %v3103 = vmul.f32 %v2875, %v3046
        %3108 = vrot.lane.b32.xlu0 %v3100, 127
        %v3109 = vpop.permute.xlu0 %3108
        %3110 = vrot.lane.b32.xlu0 %v3101, 127
        %v3111 = vpop.permute.xlu0 %3110
        %3112 = vrot.lane.b32.xlu0 %v3102, 127
        %v3113 = vpop.permute.xlu0 %3112
        %3114 = vrot.lane.b32.xlu0 %v3103, 127
        %v3115 = vpop.permute.xlu0 %3114
        %v3116 = vsel %vm209, %v3109, %v3111
        %v3117 = vsel %vm209, %v3113, %v3115
        %v3120 = vadd.f32 %v3098, %v3116
        %v3121 = vadd.f32 %v3099, %v3117
        %v3122 = vmul.f32 %v2899, %v3043
        %v3123 = vmul.f32 %v2899, %v3044
        %v3124 = vmul.f32 %v2899, %v3045
        %v3125 = vmul.f32 %v2899, %v3046
        %v3126 = vadd.f32 %v3092, %v3122
        %v3127 = vadd.f32 %v3093, %v3123
        %v3128 = vadd.f32 %v3094, %v3124
        %v3129 = vadd.f32 %v3095, %v3125
        %v3130 = vld [vmem:[%s1614] sm:$0xff]
        %v3131 = vld [vmem:[%s1614 + $0x8] sm:$0xff]
        %v3132 = vld [vmem:[%s1614 + $0x10] sm:$0x1]
        %v3133 = vld [vmem:[%s1614 + $0x18] sm:$0x1]
        %v3134 = vmul.f32 %v2952, %v3130
        %v3135 = vadd.f32 %v3059, %v3134
        %v3136 = vmul.f32 %v2920, %v3130
        %3138 = vrot.lane.b32.xlu0 %v3136, 1
        %v3139 = vpop.permute.xlu0 %3138
        %v3141 = vadd.f32 %v3062, %v3139
        %v3142 = vadd.f32 %v3063, %v3139
        %v3143 = vmul.f32 %v2927, %v3130
        %v3144 = vmul.f32 %v2927, %v3131
        %v3145 = vadd.f32 %v3141, %v3143
        %v3146 = vadd.f32 %v3142, %v3144
        %v3147 = vmul.f32 %v2856, %v3130
        %v3149 = vrot.slane %v3147, 7
        %v3151 = vadd.f32 %v3120, %v3149
        %v3152 = vadd.f32 %v3121, %v3149
        %v3153 = vmul.f32 %v2837, %v3130
        %v3155 = vrot.slane %v3153, 7
        %3156 = vrot.lane.b32.xlu0 %v3155, 1
        %v3157 = vpop.permute.xlu0 %3156
        %v3159 = vadd.f32 %v3126, %v3157
        %v3160 = vadd.f32 %v3127, %v3157
        %v3161 = vadd.f32 %v3128, %v3157
        %v3162 = vadd.f32 %v3129, %v3157
        %v3163 = vmul.f32 %v2842, %v3130
        %v3164 = vmul.f32 %v2842, %v3131
        %v3167 = vrot.slane %v3163, 7
        %v3168 = vrot.slane %v3164, 7
        %v3171 = vadd.f32 %v3159, %v3167
        %v3172 = vadd.f32 %v3160, %v3168
        %v3173 = vadd.f32 %v3161, %v3167
        %v3174 = vadd.f32 %v3162, %v3168
        %v3175 = vmul.f32 %v2899, %v3130
        %v3176 = vmul.f32 %v2899, %v3132
        %v3177 = vadd.f32 %v3151, %v3175
        %v3178 = vadd.f32 %v3152, %v3176
        %v3179 = vmul.f32 %v2863, %v3130
        %v3180 = vmul.f32 %v2863, %v3132
        %3183 = vrot.lane.b32.xlu0 %v3179, 1
        %v3184 = vpop.permute.xlu0 %3183
        %3185 = vrot.lane.b32.xlu0 %v3180, 1
        %v3186 = vpop.permute.xlu0 %3185
        %v3189 = vadd.f32 %v3171, %v3184
        %v3190 = vadd.f32 %v3172, %v3184
        %v3191 = vadd.f32 %v3173, %v3186
        %v3192 = vadd.f32 %v3174, %v3186
        %v3193 = vmul.f32 %v2875, %v3130
        %v3194 = vmul.f32 %v2875, %v3131
        %v3195 = vmul.f32 %v2875, %v3132
        %v3196 = vmul.f32 %v2875, %v3133
        %v3197 = vadd.f32 %v3189, %v3193
        %v3198 = vadd.f32 %v3190, %v3194
        %v3199 = vadd.f32 %v3191, %v3195
        %v3200 = vadd.f32 %v3192, %v3196
        %s3201 = scalar_lea.vmem %s187, 32 [#allocation7]
        %3202 = vst [vmem:[%s3201] sm:$0xff] %v3135
        %3205 = vrot.lane.b32.xlu0 %v3145, 127
        %v3206 = vpop.permute.xlu0 %3205
        %3207 = vrot.lane.b32.xlu0 %v3146, 127
        %v3208 = vpop.permute.xlu0 %3207
        %v3209 = vsel %vm209, %v3206, %v3208
        %s3211 = scalar_lea.vmem %s187, 40 [#allocation7]
        %3212 = vst [vmem:[%s3211] sm:$0xff] %v3209
        %s3213 = scalar_lea.vmem %s187, 48 [#allocation7]
        %3214 = vst [vmem:[%s3213 - $0x1] sm:$0xfe] %v3177
        %3215 = vst [vmem:[%s3213 + $0x7] sm:$0x1] %v3178
        %3220 = vrot.lane.b32.xlu0 %v3197, 127
        %v3221 = vpop.permute.xlu0 %3220
        %3222 = vrot.lane.b32.xlu0 %v3198, 127
        %v3223 = vpop.permute.xlu0 %3222
        %3224 = vrot.lane.b32.xlu0 %v3199, 127
        %v3225 = vpop.permute.xlu0 %3224
        %3226 = vrot.lane.b32.xlu0 %v3200, 127
        %v3227 = vpop.permute.xlu0 %3226
        %v3228 = vsel %vm209, %v3221, %v3223
        %v3229 = vsel %vm209, %v3225, %v3227
        %s3232 = scalar_lea.vmem %s187, 56 [#allocation7]
        %3233 = vst [vmem:[%s3232 - $0x1] sm:$0xfe] %v3228
        %3234 = vst [vmem:[%s3232 + $0x7] sm:$0x1] %v3229
        %s3235 = sand.u32 %s89, 1
        %s3236 = scalar_lea.sflag [#allocation4], %s3235
        %s3237 = sand.u32 %s89, 1
        %s3238 = smul.addr %s3237, 64
        %s3239 = scalar_lea.vmem [#allocation7], %s3238
        // Predicated region
        $region37: #{tpu_custom_call.1} parent=27 // pred_check
          %p3240 = pneg %p99
        $region38: #{tpu_custom_call.1} parent=27 // pred_check_branch
          %3242 = sbr.rel (%p3240) target = $region40
        $region39: #{tpu_custom_call.1} parent=27 // pred_region
          %s3243 = smul.u32 8, %s25
          %s3245 = ssub.s32 1024, 1024
          %3246 = vsyncadd %s3236, %s3245
          %s3247 = smul.addr %s24, 8
          %s3248 = sadd.s32 %s3243, %s3247
          %s3249 = smul.addr %s3248, 128
          %s3250 = scalar_lea.hbm %s2, %s3249
          %s3251 = sshll.u32 %s3239, 4
          %s3252 = int_to_ptr.vmem [resolvable:$true] %s3251
          %3257 = dma.vmem_to_hbm [thread:$0]  %s3252, 1024, %s3250, %s3236, 128, 128, 8
        $region40: #{tpu_custom_call.1} parent=27 // pred_fallthru
          _
      $region28: #{tpu_custom_call.1} parent=5 // pred_fallthru
        _
      %p3258 = scmp.le.s32.totalorder 2, %s15
      // Predicated region
      $region41: #{tpu_custom_call.1} parent=5 // pred_check
        %p3259 = pneg %p3258
      $region42: #{tpu_custom_call.1} parent=5 // pred_check_branch
        %3261 = sbr.rel (%p3259) target = $region44
      $region43: #{tpu_custom_call.1} parent=5 // pred_region
        %s3262 = ssub.s32 %s15, 2
        // Predicated region
        $region45: #{tpu_custom_call.1} parent=43 // pred_check
          %p3263 = pneg %p105
        $region46: #{tpu_custom_call.1} parent=43 // pred_check_branch
          %3265 = sbr.rel (%p3263) target = $region48
        $region47: #{tpu_custom_call.1} parent=43 // pred_region
          %s3266 = sand.u32 %s90, 1
          %s3267 = scalar_lea.sflag [#allocation4], %s3266
          %s3268 = sand.u32 %s90, 1
          %s3269 = smul.addr %s3268, 64
          %s3270 = scalar_lea.vmem [#allocation7], %s3269
          %3271 = dma.done %s3267, 1024
        $region48: #{tpu_custom_call.1} parent=43 // pred_fallthru
          _
      $region44: #{tpu_custom_call.1} parent=5 // pred_fallthru
        _
    $region6: #{tpu_custom_call.1} parent=1 // loop_footer
      %s19 = sadd.s32 1, %s15
    $region7: #{tpu_custom_call.1} parent=1 // loop_footer_branch
      %14 = sbr.rel target = $region3
    $region8: #{tpu_custom_call.1} parent=1 // loop_exit
      _
    %3272 = vsyncpa [#allocation3], 1
    %s3273 = scalar_lea.sflag [#allocation3], 1
    %3274 = vsyncpa %s3273, 1
    %3275 = vsyncpa [#allocation4], 1
    %s3276 = scalar_lea.sflag [#allocation4], 1
    %3277 = vsyncpa %s3276, 1
    %3278 = vsyncpa [#allocation5], 1
    %s3279 = scalar_lea.sflag [#allocation5], 1
    %3280 = vsyncpa %s3279, 1

</llo_original>
